<compile_context>
chip_gen: v7x
topology: tpu7x:2x2x1
jax: 0.10.0
libtpu: 0.0.40
codegen_flags: <defaults>
</compile_context>

<pallas_src>
import functools

import numpy as np
import jax
import jax.numpy as jnp
from jax import lax
from jax.experimental import pallas as pl
from jax.experimental.pallas import tpu as pltpu


_EN_CFG = [(2, 1), (4, 2), (8, 3)]   # (padding, dilation) hardcoded in the PyTorch module
_MAX_PAD = 8                          # max encoder padding -> single wrapper-side ROW pad of x


# ----------------------------------------------------------------------------
# Fused kernel: 3 x (dilated Conv2d + ReLU + dilated ConvTranspose2d + ReLU)
# + channel concat, for one image per grid step.
# ----------------------------------------------------------------------------
def _contextual_kernel(x_ref,
                       te0_ref, te1_ref, te2_ref,
                       td0_ref, td1_ref, td2_ref,
                       be0_ref, be1_ref, be2_ref, bd_ref,
                       o_ref,
                       h0_ref, h1_ref, h2_ref,
                       *, K, cfg, hout, out_cols):
    te = (te0_ref, te1_ref, te2_ref)
    td = (td0_ref, td1_ref, td2_ref)
    be = (be0_ref, be1_ref, be2_ref)
    hs = (h0_ref, h1_ref, h2_ref)

    # Shared lane-packed output accumulator (Hout, W*3*Cout).  Each branch's
    # decoder table is zero outside its own Cout column slice (asserted on the
    # host), so accumulating all branches and applying one ReLU is exact.
    # TODO(synk): with >=128-row tiles move this into an f32 VMEM scratch
    # accumulator to avoid vreg spill.
    acc_out = jnp.zeros((hout, out_cols), jnp.float32)

    for b in range(3):
        c = cfg[b]
        He, p_de, en_cols, d = c["He"], c["p_de"], c["en_cols"], c["d"]

        # ---- encoder: dilated Conv2d + bias + ReLU (hidden stays on-chip) ----
        # bf16 LHS x bf16 Toeplitz table on the MXU, f32 accumulation.
        # TODO(synk): on v6e merge pairs of ky taps into one 256-deep
        # contraction for better MXU fill.
        acc = jnp.zeros((He, en_cols), jnp.float32)
        for ky in range(K):
            lhs = x_ref[pl.ds(c["r0"] + ky * d, He), :].astype(jnp.bfloat16)
            acc = acc + jnp.dot(lhs, te[b][ky],
                                preferred_element_type=jnp.float32)
        hidden = jnp.maximum(acc + be[b][...], 0.0)              # (He, en_cols) f32

        # Zero ONLY the p_de-row halos; interior rows are written exactly once.
        h_ref = hs[b]
        if p_de > 0:
            zhalo = jnp.zeros((p_de, en_cols), jnp.float32)
            h_ref[pl.ds(0, p_de), :] = zhalo
            h_ref[pl.ds(p_de + He, p_de), :] = zhalo
        h_ref[pl.ds(p_de, He), :] = hidden

        # ---- decoder: ConvTranspose2d (as flipped conv), bf16 MXU ------------
        for ky in range(K):
            lhs = h_ref[pl.ds(ky * d, hout), :].astype(jnp.bfloat16)
            acc_out = acc_out + jnp.dot(lhs, td[b][ky],
                                        preferred_element_type=jnp.float32)

    # NOTE: out_cols = W*3*Cout (192 at the toy size) -> one masked trailing
    # store per row; at production W (multiple of ~11 lanes of 128) the slab is
    # already lane-dense, so no padding is added here.
    o_ref[...] = jnp.maximum(acc_out + bd_ref[...], 0.0).astype(o_ref.dtype)


# ----------------------------------------------------------------------------
# Module wrapper
# ----------------------------------------------------------------------------
class ContextualLayerPallas:
    def __init__(self, input_channels, hidden_channels, out_channels,
                 kernel_size=5, key=None):
        self.cin, self.chid, self.cout = input_channels, hidden_channels, out_channels
        self.K = kernel_size
        if key is None:
            key = jax.random.PRNGKey(0)
        ks = jax.random.split(key, 12)
        K = kernel_size

        def w(k, shape):
            return jax.random.normal(k, shape, jnp.float32) * 0.1

        # same parameter layouts as the PyTorch module
        self.w_en = [w(ks[i], (hidden_channels, input_channels, K, K)) for i in range(3)]
        self.b_en = [w(ks[3 + i], (hidden_channels,)) for i in range(3)]
        self.w_de = [w(ks[6 + i], (hidden_channels, out_channels, K, K)) for i in range(3)]
        self.b_de = [w(ks[9 + i], (out_channels,)) for i in range(3)]
        self.en_cfg = list(_EN_CFG)
        self._table_cache = {}
        self._single_buffer_consts = None   # resolved on first call

    # ---- host-side (numpy, once per spatial size) Toeplitz / bias tables ----
    def _tables(self, H, W):
        if (H, W) in self._table_cache:
            return self._table_cache[(H, W)]
        K, Cin, Chid, Cout = self.K, self.cin, self.chid, self.cout
        CC = 3 * Cout
        t_en, t_de, be_rows, cfg, bd_blocks, col_masks = [], [], [], [], [], []

        for b, (p, d) in enumerate(self.en_cfg):
            He = H + 2 * p - d * (K - 1)
            We = W + 2 * p - d * (K - 1)
            p_de = d * (K - 1) - p
            assert He > 0 and We > 0
            assert p_de >= 0, "table construction assumes dilation*(K-1) >= padding"
            assert He + 2 * p_de - d * (K - 1) == H
            assert We + 2 * p_de - d * (K - 1) == W

            # encoder table: (K, W*Cin, We*Chid); kx, cin AND the column (W)
            # zero-padding folded into the contraction (x is only row-padded).
            w_en = np.asarray(self.w_en[b], np.float32)           # (Chid, Cin, K, K)
            te = np.zeros((K, W * Cin, We * Chid), np.float32)
            for ky in range(K):
                for kx in range(K):
                    blk = w_en[:, :, ky, kx].T                    # (Cin, Chid)
                    for ox in range(We):
                        wx = ox + kx * d - p                      # unpadded input col
                        if 0 <= wx < W:
                            te[ky, wx * Cin:(wx + 1) * Cin,
                               ox * Chid:(ox + 1) * Chid] = blk
            t_en.append(jnp.asarray(te, jnp.bfloat16))

            # decoder (ConvTranspose == flipped/swapped conv, pad d*(K-1)-p);
            # column padding folded in, output columns interleaved at this
            # branch's slice of the concatenated slab.
            w_de = np.asarray(self.w_de[b], np.float32)           # (Chid, Cout, K, K)
            w_conv = np.transpose(w_de[:, :, ::-1, ::-1], (1, 0, 2, 3))  # (Cout, Chid, K, K)
            td = np.zeros((K, We * Chid, W * CC), np.float32)
            mask = np.zeros((W * CC,), bool)
            for ky in range(K):
                for kx in range(K):
                    blk = w_conv[:, :, ky, kx].T                  # (Chid, Cout)
                    for ox in range(W):
                        wxu = ox + kx * d - p_de
                        if 0 <= wxu < We:
                            td[ky, wxu * Chid:(wxu + 1) * Chid,
                               ox * CC + b * Cout: ox * CC + (b + 1) * Cout] = blk
                            mask[ox * CC + b * Cout: ox * CC + (b + 1) * Cout] = True
            t_de.append(jnp.asarray(td, jnp.bfloat16))
            col_masks.append(mask)

            be_rows.append(jnp.asarray(
                np.tile(np.asarray(self.b_en[b], np.float32), We)[None, :]))
            bd_blocks.append(np.asarray(self.b_de[b], np.float32))
            cfg.append(dict(r0=_MAX_PAD - p, d=d, He=He, en_cols=We * Chid,
                            p_de=p_de, Hh=He + 2 * p_de))

        # shared acc_out + single ReLU is only exact if branch column blocks
        # are pairwise disjoint.
        for i in range(3):
            for j in range(i + 1, 3):
                assert not np.any(col_masks[i] & col_masks[j]), "branch output columns overlap"

        bd_row = jnp.asarray(np.tile(np.concatenate(bd_blocks), W)[None, :])
        tables = dict(t_en=t_en, t_de=t_de, be=be_rows, bd=bd_row, cfg=tuple(cfg))
        self._table_cache[(H, W)] = tables
        return tables

    # ---- build one pallas_call (optionally single-buffered constants) -------
    def _build_call(self, kernel, consts, N, Hp, xcols, H, out_cols, cfg,
                    out_dtype, single_buffer):
        def const_spec(a):
            zeros = (0,) * a.ndim
            if single_buffer:
                # constant index_map => block never re-fetched; Buffered(1)
                # drops the pointless second buffer (halves table VMEM).
                return pl.BlockSpec(a.shape, lambda n, _z=zeros: _z,
                                    pipeline_mode=pl.Buffered(1))
            return pl.BlockSpec(a.shape, lambda n, _z=zeros: _z)

        in_specs = [pl.BlockSpec((None, Hp, xcols), lambda n: (n, 0, 0))]
        in_specs += [const_spec(a) for a in consts]
        out_specs = pl.BlockSpec((None, H, out_cols), lambda n: (n, 0, 0))
        scratch = [pltpu.VMEM((c["Hh"], c["en_cols"]), jnp.float32) for c in cfg]

        const_bytes = sum(int(a.size) * a.dtype.itemsize for a in consts)
        buf = 1 if single_buffer else 2
        need = (buf * const_bytes
                + 2 * Hp * xcols * 4 + 2 * H * out_cols * 4
                + sum(c["Hh"] * c["en_cols"] * 4 for c in cfg)
                + (4 << 20))                          # headroom
        vmem_limit = int(min(max(need, 32 << 20), 60 << 20))   # safe on v5e/v6e/v7x

        return pl.pallas_call(
            kernel,
            out_shape=jax.ShapeDtypeStruct((N, H, out_cols), out_dtype),
            grid_spec=pltpu.PrefetchScalarGridSpec(
                num_scalar_prefetch=0,
                grid=(N,),
                in_specs=in_specs,
                out_specs=out_specs,
                scratch_shapes=scratch),
            compiler_params=pltpu.CompilerParams(
                dimension_semantics=("parallel",),
                vmem_limit_bytes=vmem_limit),
        )

    def __call__(self, x_nchw):
        N, Cin, H, W = x_nchw.shape
        assert Cin == self.cin
        tb = self._tables(H, W)
        Hp = H + 2 * _MAX_PAD
        xcols = W * Cin
        out_cols = W * 3 * self.cout

        kernel = functools.partial(_contextual_kernel, K=self.K, cfg=tb["cfg"],
                                   hout=H, out_cols=out_cols)
        consts = list(tb["t_en"]) + list(tb["t_de"]) + list(tb["be"]) + [tb["bd"]]

        # x: NCHW -> NHWC, pad rows only (column padding lives in the tables),
        # lane-dense (rows, W*Cin) slab; stays f32 (kernel casts loaded slabs
        # to bf16 so no packed-dtype misaligned loads are needed).
        x = jnp.transpose(x_nchw, (0, 2, 3, 1))
        xp = jnp.pad(x, ((0, 0), (_MAX_PAD, _MAX_PAD), (0, 0), (0, 0)))
        x2d = xp.reshape(N, Hp, xcols)

        out2d = None
        if self._single_buffer_consts is not False:
            try:
                call = self._build_call(kernel, consts, N, Hp, xcols, H,
                                        out_cols, tb["cfg"], x_nchw.dtype,
                                        single_buffer=True)
                out2d = call(x2d, *consts)
                self._single_buffer_consts = True
            except Exception:
                # pl.Buffered(1) not supported by this jax build; fall back to
                # default (double-buffered) resident constants.
                self._single_buffer_consts = False
        if out2d is None:
            call = self._build_call(kernel, consts, N, Hp, xcols, H, out_cols,
                                    tb["cfg"], x_nchw.dtype, single_buffer=False)
            out2d = call(x2d, *consts)

        out = out2d.reshape(N, H, W, 3 * self.cout)
        return jnp.transpose(out, (0, 3, 1, 2))                  # NHWC -> NCHW


# ----------------------------------------------------------------------------
# Pure-JAX reference (lax.conv, f32) for correctness check
# ----------------------------------------------------------------------------
def _ref_branch(x_nhwc, w_en, b_en, w_de, b_de, p, d, K):
    def conv(x, w_oikk, bvec, pad, dil):
        w_hwio = jnp.transpose(w_oikk, (2, 3, 1, 0))
        y = lax.conv_general_dilated(
            x, w_hwio, window_strides=(1, 1),
            padding=[(pad, pad), (pad, pad)], rhs_dilation=(dil, dil),
            dimension_numbers=("NHWC", "HWIO", "NHWC"))
        return jnp.maximum(y + bvec[None, None, None, :], 0.0)

    h = conv(x_nhwc, w_en, b_en, p, d)
    w_eq = jnp.transpose(w_de[:, :, ::-1, ::-1], (1, 0, 2, 3))        # (O,I,K,K)
    return conv(h, w_eq, b_de, d * (K - 1) - p, d)


def reference_forward(layer, x_nchw):
    x = jnp.transpose(x_nchw, (0, 2, 3, 1))
    outs = [_ref_branch(x, layer.w_en[i], layer.b_en[i],
                        layer.w_de[i], layer.b_de[i],
                        layer.en_cfg[i][0], layer.en_cfg[i][1], layer.K)
            for i in range(3)]
    return jnp.transpose(jnp.concatenate(outs, axis=-1), (0, 3, 1, 2))


if __name__ == "__main__":
    key = jax.random.PRNGKey(0)
    k_x, k_p = jax.random.split(key)

    N, Cin, H, W = 2, 4, 16, 16
    hidden, cout = 8, 4

    x = jax.random.normal(k_x, (N, Cin, H, W), jnp.float32)
    layer = ContextualLayerPallas(Cin, hidden, cout, kernel_size=5, key=k_p)

    out = jax.block_until_ready(layer(x))
    assert out.shape == (N, 3 * cout, H, W), out.shape

    ref = jax.block_until_ready(reference_forward(layer, x))
    err_max = float(jnp.max(jnp.abs(out - ref)))
    rel = float(jnp.linalg.norm(out - ref) / (jnp.linalg.norm(ref) + 1e-12))
    # bf16 tables / bf16 MXU vs f32 lax.conv reference -> loosened tolerance
    # (precision tradeoff flagged in the perf review, not a bug).
    assert rel < 3e-2 and err_max < 2e-1, (rel, err_max)

    print("KERNEL_OK")
</pallas_src>

<mosaic_0001>
module attributes {stable_mosaic.version = 11 : i64} {
  func.func @_contextual_kernel(%arg0: i32, %arg1: memref<1x32x64xf32, #tpu.memory_space<vmem>>, %arg2: memref<5x64x128xbf16, #tpu.memory_space<vmem>>, %arg3: memref<5x64x128xbf16, #tpu.memory_space<vmem>>, %arg4: memref<5x64x160xbf16, #tpu.memory_space<vmem>>, %arg5: memref<5x128x192xbf16, #tpu.memory_space<vmem>>, %arg6: memref<5x128x192xbf16, #tpu.memory_space<vmem>>, %arg7: memref<5x160x192xbf16, #tpu.memory_space<vmem>>, %arg8: memref<1x128xf32, #tpu.memory_space<vmem>>, %arg9: memref<1x128xf32, #tpu.memory_space<vmem>>, %arg10: memref<1x160xf32, #tpu.memory_space<vmem>>, %arg11: memref<1x192xf32, #tpu.memory_space<vmem>>, %arg12: memref<1x16x192xf32, #tpu.memory_space<vmem>>, %arg13: memref<20x128xf32, #tpu.memory_space<vmem>>, %arg14: memref<24x128xf32, #tpu.memory_space<vmem>>, %arg15: memref<28x160xf32, #tpu.memory_space<vmem>>) attributes {dimension_semantics = [#tpu.dimension_semantics<parallel>], iteration_bounds = array<i64: 2>, scalar_prefetch = 0 : i64, scratch_operands = 3 : i64, tpu.core_type = #tpu.core_type<tc>, window_params = [{transform_indices = @transform_0, window_bounds = array<i64: 1, 32, 64>}, {pipeline_mode = #tpu.pipeline_mode<synchronous>, transform_indices = @transform_1, window_bounds = array<i64: 5, 64, 128>}, {pipeline_mode = #tpu.pipeline_mode<synchronous>, transform_indices = @transform_2, window_bounds = array<i64: 5, 64, 128>}, {pipeline_mode = #tpu.pipeline_mode<synchronous>, transform_indices = @transform_3, window_bounds = array<i64: 5, 64, 160>}, {pipeline_mode = #tpu.pipeline_mode<synchronous>, transform_indices = @transform_4, window_bounds = array<i64: 5, 128, 192>}, {pipeline_mode = #tpu.pipeline_mode<synchronous>, transform_indices = @transform_5, window_bounds = array<i64: 5, 128, 192>}, {pipeline_mode = #tpu.pipeline_mode<synchronous>, transform_indices = @transform_6, window_bounds = array<i64: 5, 160, 192>}, {pipeline_mode = #tpu.pipeline_mode<synchronous>, transform_indices = @transform_7, window_bounds = array<i64: 1, 128>}, {pipeline_mode = #tpu.pipeline_mode<synchronous>, transform_indices = @transform_8, window_bounds = array<i64: 1, 128>}, {pipeline_mode = #tpu.pipeline_mode<synchronous>, transform_indices = @transform_9, window_bounds = array<i64: 1, 160>}, {pipeline_mode = #tpu.pipeline_mode<synchronous>, transform_indices = @transform_10, window_bounds = array<i64: 1, 192>}, {transform_indices = @transform_11, window_bounds = array<i64: 1, 16, 192>}]} {
    %cst = arith.constant 0.000000e+00 : f32
    %0 = vector.broadcast %cst : f32 to vector<16x192xf32>
    %cst_0 = arith.constant 0.000000e+00 : f32
    %1 = vector.broadcast %cst_0 : f32 to vector<16x128xf32>
    %c0 = arith.constant 0 : index
    %c6 = arith.constant 6 : index
    %c0_1 = arith.constant 0 : index
    %2 = vector.load %arg1[%c0, %c6, %c0_1] : memref<1x32x64xf32, #tpu.memory_space<vmem>>, vector<1x16x64xf32>
    %3 = vector.shape_cast %2 : vector<1x16x64xf32> to vector<16x64xf32>
    %4 = arith.truncf %3 : vector<16x64xf32> to vector<16x64xbf16>
    %c0_2 = arith.constant 0 : index
    %c0_3 = arith.constant 0 : index
    %c0_4 = arith.constant 0 : index
    %5 = vector.load %arg2[%c0_2, %c0_3, %c0_4] : memref<5x64x128xbf16, #tpu.memory_space<vmem>>, vector<1x64x128xbf16>
    %6 = vector.shape_cast %5 : vector<1x64x128xbf16> to vector<64x128xbf16>
    %cst_5 = arith.constant dense<0.000000e+00> : vector<16x128xf32>
    %7 = tpu.matmul %4, %6, %cst_5 {dimension_numbers = #tpu.dot_dimension_numbers<[1], [0], [0], [1], [0, 0, 1, 1], [], []>} : vector<16x64xbf16>, vector<64x128xbf16>, vector<16x128xf32> -> vector<16x128xf32>
    %8 = arith.addf %1, %7 : vector<16x128xf32>
    %c0_6 = arith.constant 0 : index
    %c7 = arith.constant 7 : index
    %c0_7 = arith.constant 0 : index
    %9 = vector.load %arg1[%c0_6, %c7, %c0_7] : memref<1x32x64xf32, #tpu.memory_space<vmem>>, vector<1x16x64xf32>
    %10 = vector.shape_cast %9 : vector<1x16x64xf32> to vector<16x64xf32>
    %11 = arith.truncf %10 : vector<16x64xf32> to vector<16x64xbf16>
    %c1 = arith.constant 1 : index
    %c0_8 = arith.constant 0 : index
    %c0_9 = arith.constant 0 : index
    %12 = vector.load %arg2[%c1, %c0_8, %c0_9] : memref<5x64x128xbf16, #tpu.memory_space<vmem>>, vector<1x64x128xbf16>
    %13 = vector.shape_cast %12 : vector<1x64x128xbf16> to vector<64x128xbf16>
    %cst_10 = arith.constant dense<0.000000e+00> : vector<16x128xf32>
    %14 = tpu.matmul %11, %13, %cst_10 {dimension_numbers = #tpu.dot_dimension_numbers<[1], [0], [0], [1], [0, 0, 1, 1], [], []>} : vector<16x64xbf16>, vector<64x128xbf16>, vector<16x128xf32> -> vector<16x128xf32>
    %15 = arith.addf %8, %14 : vector<16x128xf32>
    %c0_11 = arith.constant 0 : index
    %c8 = arith.constant 8 : index
    %c0_12 = arith.constant 0 : index
    %16 = vector.load %arg1[%c0_11, %c8, %c0_12] : memref<1x32x64xf32, #tpu.memory_space<vmem>>, vector<1x16x64xf32>
    %17 = vector.shape_cast %16 : vector<1x16x64xf32> to vector<16x64xf32>
    %18 = arith.truncf %17 : vector<16x64xf32> to vector<16x64xbf16>
    %c2 = arith.constant 2 : index
    %c0_13 = arith.constant 0 : index
    %c0_14 = arith.constant 0 : index
    %19 = vector.load %arg2[%c2, %c0_13, %c0_14] : memref<5x64x128xbf16, #tpu.memory_space<vmem>>, vector<1x64x128xbf16>
    %20 = vector.shape_cast %19 : vector<1x64x128xbf16> to vector<64x128xbf16>
    %cst_15 = arith.constant dense<0.000000e+00> : vector<16x128xf32>
    %21 = tpu.matmul %18, %20, %cst_15 {dimension_numbers = #tpu.dot_dimension_numbers<[1], [0], [0], [1], [0, 0, 1, 1], [], []>} : vector<16x64xbf16>, vector<64x128xbf16>, vector<16x128xf32> -> vector<16x128xf32>
    %22 = arith.addf %15, %21 : vector<16x128xf32>
    %c0_16 = arith.constant 0 : index
    %c9 = arith.constant 9 : index
    %c0_17 = arith.constant 0 : index
    %23 = vector.load %arg1[%c0_16, %c9, %c0_17] : memref<1x32x64xf32, #tpu.memory_space<vmem>>, vector<1x16x64xf32>
    %24 = vector.shape_cast %23 : vector<1x16x64xf32> to vector<16x64xf32>
    %25 = arith.truncf %24 : vector<16x64xf32> to vector<16x64xbf16>
    %c3 = arith.constant 3 : index
    %c0_18 = arith.constant 0 : index
    %c0_19 = arith.constant 0 : index
    %26 = vector.load %arg2[%c3, %c0_18, %c0_19] : memref<5x64x128xbf16, #tpu.memory_space<vmem>>, vector<1x64x128xbf16>
    %27 = vector.shape_cast %26 : vector<1x64x128xbf16> to vector<64x128xbf16>
    %cst_20 = arith.constant dense<0.000000e+00> : vector<16x128xf32>
    %28 = tpu.matmul %25, %27, %cst_20 {dimension_numbers = #tpu.dot_dimension_numbers<[1], [0], [0], [1], [0, 0, 1, 1], [], []>} : vector<16x64xbf16>, vector<64x128xbf16>, vector<16x128xf32> -> vector<16x128xf32>
    %29 = arith.addf %22, %28 : vector<16x128xf32>
    %c0_21 = arith.constant 0 : index
    %c10 = arith.constant 10 : index
    %c0_22 = arith.constant 0 : index
    %30 = vector.load %arg1[%c0_21, %c10, %c0_22] : memref<1x32x64xf32, #tpu.memory_space<vmem>>, vector<1x16x64xf32>
    %31 = vector.shape_cast %30 : vector<1x16x64xf32> to vector<16x64xf32>
    %32 = arith.truncf %31 : vector<16x64xf32> to vector<16x64xbf16>
    %c4 = arith.constant 4 : index
    %c0_23 = arith.constant 0 : index
    %c0_24 = arith.constant 0 : index
    %33 = vector.load %arg2[%c4, %c0_23, %c0_24] : memref<5x64x128xbf16, #tpu.memory_space<vmem>>, vector<1x64x128xbf16>
    %34 = vector.shape_cast %33 : vector<1x64x128xbf16> to vector<64x128xbf16>
    %cst_25 = arith.constant dense<0.000000e+00> : vector<16x128xf32>
    %35 = tpu.matmul %32, %34, %cst_25 {dimension_numbers = #tpu.dot_dimension_numbers<[1], [0], [0], [1], [0, 0, 1, 1], [], []>} : vector<16x64xbf16>, vector<64x128xbf16>, vector<16x128xf32> -> vector<16x128xf32>
    %36 = arith.addf %29, %35 : vector<16x128xf32>
    %c0_26 = arith.constant 0 : index
    %c0_27 = arith.constant 0 : index
    %37 = vector.load %arg8[%c0_26, %c0_27] : memref<1x128xf32, #tpu.memory_space<vmem>>, vector<1x128xf32>
    %38 = vector.broadcast %37 : vector<1x128xf32> to vector<16x128xf32>
    %39 = arith.addf %36, %38 : vector<16x128xf32>
    %cst_28 = arith.constant 0.000000e+00 : f32
    %40 = vector.broadcast %cst_28 : f32 to vector<16x128xf32>
    %41 = arith.maximumf %39, %40 : vector<16x128xf32>
    %cst_29 = arith.constant 0.000000e+00 : f32
    %42 = vector.broadcast %cst_29 : f32 to vector<2x128xf32>
    %c0_30 = arith.constant 0 : index
    %c0_31 = arith.constant 0 : index
    %43 = vector.load %arg13[%c0_30, %c0_31] : memref<20x128xf32, #tpu.memory_space<vmem>>, vector<2x128xf32>
    tpu.vector_store %arg13[%c0_30, %c0_31], %42 {strides = array<i32>} : memref<20x128xf32, #tpu.memory_space<vmem>>, vector<2x128xf32>,
    %c18 = arith.constant 18 : index
    %c0_32 = arith.constant 0 : index
    %44 = vector.load %arg13[%c18, %c0_32] : memref<20x128xf32, #tpu.memory_space<vmem>>, vector<2x128xf32>
    tpu.vector_store %arg13[%c18, %c0_32], %42 {strides = array<i32>} : memref<20x128xf32, #tpu.memory_space<vmem>>, vector<2x128xf32>,
    %c2_33 = arith.constant 2 : index
    %c0_34 = arith.constant 0 : index
    %45 = vector.load %arg13[%c2_33, %c0_34] : memref<20x128xf32, #tpu.memory_space<vmem>>, vector<16x128xf32>
    tpu.vector_store %arg13[%c2_33, %c0_34], %41 {strides = array<i32>} : memref<20x128xf32, #tpu.memory_space<vmem>>, vector<16x128xf32>,
    %c0_35 = arith.constant 0 : index
    %c0_36 = arith.constant 0 : index
    %46 = vector.load %arg13[%c0_35, %c0_36] : memref<20x128xf32, #tpu.memory_space<vmem>>, vector<16x128xf32>
    %47 = arith.truncf %46 : vector<16x128xf32> to vector<16x128xbf16>
    %c0_37 = arith.constant 0 : index
    %c0_38 = arith.constant 0 : index
    %c0_39 = arith.constant 0 : index
    %48 = vector.load %arg5[%c0_37, %c0_38, %c0_39] : memref<5x128x192xbf16, #tpu.memory_space<vmem>>, vector<1x128x192xbf16>
    %49 = vector.shape_cast %48 : vector<1x128x192xbf16> to vector<128x192xbf16>
    %cst_40 = arith.constant dense<0.000000e+00> : vector<16x192xf32>
    %50 = tpu.matmul %47, %49, %cst_40 {dimension_numbers = #tpu.dot_dimension_numbers<[1], [0], [0], [1], [0, 0, 1, 1], [], []>} : vector<16x128xbf16>, vector<128x192xbf16>, vector<16x192xf32> -> vector<16x192xf32>
    %51 = arith.addf %0, %50 : vector<16x192xf32>
    %c1_41 = arith.constant 1 : index
    %c0_42 = arith.constant 0 : index
    %52 = vector.load %arg13[%c1_41, %c0_42] : memref<20x128xf32, #tpu.memory_space<vmem>>, vector<16x128xf32>
    %53 = arith.truncf %52 : vector<16x128xf32> to vector<16x128xbf16>
    %c1_43 = arith.constant 1 : index
    %c0_44 = arith.constant 0 : index
    %c0_45 = arith.constant 0 : index
    %54 = vector.load %arg5[%c1_43, %c0_44, %c0_45] : memref<5x128x192xbf16, #tpu.memory_space<vmem>>, vector<1x128x192xbf16>
    %55 = vector.shape_cast %54 : vector<1x128x192xbf16> to vector<128x192xbf16>
    %cst_46 = arith.constant dense<0.000000e+00> : vector<16x192xf32>
    %56 = tpu.matmul %53, %55, %cst_46 {dimension_numbers = #tpu.dot_dimension_numbers<[1], [0], [0], [1], [0, 0, 1, 1], [], []>} : vector<16x128xbf16>, vector<128x192xbf16>, vector<16x192xf32> -> vector<16x192xf32>
    %57 = arith.addf %51, %56 : vector<16x192xf32>
    %c2_47 = arith.constant 2 : index
    %c0_48 = arith.constant 0 : index
    %58 = vector.load %arg13[%c2_47, %c0_48] : memref<20x128xf32, #tpu.memory_space<vmem>>, vector<16x128xf32>
    %59 = arith.truncf %58 : vector<16x128xf32> to vector<16x128xbf16>
    %c2_49 = arith.constant 2 : index
    %c0_50 = arith.constant 0 : index
    %c0_51 = arith.constant 0 : index
    %60 = vector.load %arg5[%c2_49, %c0_50, %c0_51] : memref<5x128x192xbf16, #tpu.memory_space<vmem>>, vector<1x128x192xbf16>
    %61 = vector.shape_cast %60 : vector<1x128x192xbf16> to vector<128x192xbf16>
    %cst_52 = arith.constant dense<0.000000e+00> : vector<16x192xf32>
    %62 = tpu.matmul %59, %61, %cst_52 {dimension_numbers = #tpu.dot_dimension_numbers<[1], [0], [0], [1], [0, 0, 1, 1], [], []>} : vector<16x128xbf16>, vector<128x192xbf16>, vector<16x192xf32> -> vector<16x192xf32>
    %63 = arith.addf %57, %62 : vector<16x192xf32>
    %c3_53 = arith.constant 3 : index
    %c0_54 = arith.constant 0 : index
    %64 = vector.load %arg13[%c3_53, %c0_54] : memref<20x128xf32, #tpu.memory_space<vmem>>, vector<16x128xf32>
    %65 = arith.truncf %64 : vector<16x128xf32> to vector<16x128xbf16>
    %c3_55 = arith.constant 3 : index
    %c0_56 = arith.constant 0 : index
    %c0_57 = arith.constant 0 : index
    %66 = vector.load %arg5[%c3_55, %c0_56, %c0_57] : memref<5x128x192xbf16, #tpu.memory_space<vmem>>, vector<1x128x192xbf16>
    %67 = vector.shape_cast %66 : vector<1x128x192xbf16> to vector<128x192xbf16>
    %cst_58 = arith.constant dense<0.000000e+00> : vector<16x192xf32>
    %68 = tpu.matmul %65, %67, %cst_58 {dimension_numbers = #tpu.dot_dimension_numbers<[1], [0], [0], [1], [0, 0, 1, 1], [], []>} : vector<16x128xbf16>, vector<128x192xbf16>, vector<16x192xf32> -> vector<16x192xf32>
    %69 = arith.addf %63, %68 : vector<16x192xf32>
    %c4_59 = arith.constant 4 : index
    %c0_60 = arith.constant 0 : index
    %70 = vector.load %arg13[%c4_59, %c0_60] : memref<20x128xf32, #tpu.memory_space<vmem>>, vector<16x128xf32>
    %71 = arith.truncf %70 : vector<16x128xf32> to vector<16x128xbf16>
    %c4_61 = arith.constant 4 : index
    %c0_62 = arith.constant 0 : index
    %c0_63 = arith.constant 0 : index
    %72 = vector.load %arg5[%c4_61, %c0_62, %c0_63] : memref<5x128x192xbf16, #tpu.memory_space<vmem>>, vector<1x128x192xbf16>
    %73 = vector.shape_cast %72 : vector<1x128x192xbf16> to vector<128x192xbf16>
    %cst_64 = arith.constant dense<0.000000e+00> : vector<16x192xf32>
    %74 = tpu.matmul %71, %73, %cst_64 {dimension_numbers = #tpu.dot_dimension_numbers<[1], [0], [0], [1], [0, 0, 1, 1], [], []>} : vector<16x128xbf16>, vector<128x192xbf16>, vector<16x192xf32> -> vector<16x192xf32>
    %75 = arith.addf %69, %74 : vector<16x192xf32>
    %cst_65 = arith.constant 0.000000e+00 : f32
    %76 = vector.broadcast %cst_65 : f32 to vector<16x128xf32>
    %c0_66 = arith.constant 0 : index
    %c4_67 = arith.constant 4 : index
    %c0_68 = arith.constant 0 : index
    %77 = vector.load %arg1[%c0_66, %c4_67, %c0_68] : memref<1x32x64xf32, #tpu.memory_space<vmem>>, vector<1x16x64xf32>
    %78 = vector.shape_cast %77 : vector<1x16x64xf32> to vector<16x64xf32>
    %79 = arith.truncf %78 : vector<16x64xf32> to vector<16x64xbf16>
    %c0_69 = arith.constant 0 : index
    %c0_70 = arith.constant 0 : index
    %c0_71 = arith.constant 0 : index
    %80 = vector.load %arg3[%c0_69, %c0_70, %c0_71] : memref<5x64x128xbf16, #tpu.memory_space<vmem>>, vector<1x64x128xbf16>
    %81 = vector.shape_cast %80 : vector<1x64x128xbf16> to vector<64x128xbf16>
    %cst_72 = arith.constant dense<0.000000e+00> : vector<16x128xf32>
    %82 = tpu.matmul %79, %81, %cst_72 {dimension_numbers = #tpu.dot_dimension_numbers<[1], [0], [0], [1], [0, 0, 1, 1], [], []>} : vector<16x64xbf16>, vector<64x128xbf16>, vector<16x128xf32> -> vector<16x128xf32>
    %83 = arith.addf %76, %82 : vector<16x128xf32>
    %c0_73 = arith.constant 0 : index
    %c6_74 = arith.constant 6 : index
    %c0_75 = arith.constant 0 : index
    %84 = vector.load %arg1[%c0_73, %c6_74, %c0_75] : memref<1x32x64xf32, #tpu.memory_space<vmem>>, vector<1x16x64xf32>
    %85 = vector.shape_cast %84 : vector<1x16x64xf32> to vector<16x64xf32>
    %86 = arith.truncf %85 : vector<16x64xf32> to vector<16x64xbf16>
    %c1_76 = arith.constant 1 : index
    %c0_77 = arith.constant 0 : index
    %c0_78 = arith.constant 0 : index
    %87 = vector.load %arg3[%c1_76, %c0_77, %c0_78] : memref<5x64x128xbf16, #tpu.memory_space<vmem>>, vector<1x64x128xbf16>
    %88 = vector.shape_cast %87 : vector<1x64x128xbf16> to vector<64x128xbf16>
    %cst_79 = arith.constant dense<0.000000e+00> : vector<16x128xf32>
    %89 = tpu.matmul %86, %88, %cst_79 {dimension_numbers = #tpu.dot_dimension_numbers<[1], [0], [0], [1], [0, 0, 1, 1], [], []>} : vector<16x64xbf16>, vector<64x128xbf16>, vector<16x128xf32> -> vector<16x128xf32>
    %90 = arith.addf %83, %89 : vector<16x128xf32>
    %c0_80 = arith.constant 0 : index
    %c8_81 = arith.constant 8 : index
    %c0_82 = arith.constant 0 : index
    %91 = vector.load %arg1[%c0_80, %c8_81, %c0_82] : memref<1x32x64xf32, #tpu.memory_space<vmem>>, vector<1x16x64xf32>
    %92 = vector.shape_cast %91 : vector<1x16x64xf32> to vector<16x64xf32>
    %93 = arith.truncf %92 : vector<16x64xf32> to vector<16x64xbf16>
    %c2_83 = arith.constant 2 : index
    %c0_84 = arith.constant 0 : index
    %c0_85 = arith.constant 0 : index
    %94 = vector.load %arg3[%c2_83, %c0_84, %c0_85] : memref<5x64x128xbf16, #tpu.memory_space<vmem>>, vector<1x64x128xbf16>
    %95 = vector.shape_cast %94 : vector<1x64x128xbf16> to vector<64x128xbf16>
    %cst_86 = arith.constant dense<0.000000e+00> : vector<16x128xf32>
    %96 = tpu.matmul %93, %95, %cst_86 {dimension_numbers = #tpu.dot_dimension_numbers<[1], [0], [0], [1], [0, 0, 1, 1], [], []>} : vector<16x64xbf16>, vector<64x128xbf16>, vector<16x128xf32> -> vector<16x128xf32>
    %97 = arith.addf %90, %96 : vector<16x128xf32>
    %c0_87 = arith.constant 0 : index
    %c10_88 = arith.constant 10 : index
    %c0_89 = arith.constant 0 : index
    %98 = vector.load %arg1[%c0_87, %c10_88, %c0_89] : memref<1x32x64xf32, #tpu.memory_space<vmem>>, vector<1x16x64xf32>
    %99 = vector.shape_cast %98 : vector<1x16x64xf32> to vector<16x64xf32>
    %100 = arith.truncf %99 : vector<16x64xf32> to vector<16x64xbf16>
    %c3_90 = arith.constant 3 : index
    %c0_91 = arith.constant 0 : index
    %c0_92 = arith.constant 0 : index
    %101 = vector.load %arg3[%c3_90, %c0_91, %c0_92] : memref<5x64x128xbf16, #tpu.memory_space<vmem>>, vector<1x64x128xbf16>
    %102 = vector.shape_cast %101 : vector<1x64x128xbf16> to vector<64x128xbf16>
    %cst_93 = arith.constant dense<0.000000e+00> : vector<16x128xf32>
    %103 = tpu.matmul %100, %102, %cst_93 {dimension_numbers = #tpu.dot_dimension_numbers<[1], [0], [0], [1], [0, 0, 1, 1], [], []>} : vector<16x64xbf16>, vector<64x128xbf16>, vector<16x128xf32> -> vector<16x128xf32>
    %104 = arith.addf %97, %103 : vector<16x128xf32>
    %c0_94 = arith.constant 0 : index
    %c12 = arith.constant 12 : index
    %c0_95 = arith.constant 0 : index
    %105 = vector.load %arg1[%c0_94, %c12, %c0_95] : memref<1x32x64xf32, #tpu.memory_space<vmem>>, vector<1x16x64xf32>
    %106 = vector.shape_cast %105 : vector<1x16x64xf32> to vector<16x64xf32>
    %107 = arith.truncf %106 : vector<16x64xf32> to vector<16x64xbf16>
    %c4_96 = arith.constant 4 : index
    %c0_97 = arith.constant 0 : index
    %c0_98 = arith.constant 0 : index
    %108 = vector.load %arg3[%c4_96, %c0_97, %c0_98] : memref<5x64x128xbf16, #tpu.memory_space<vmem>>, vector<1x64x128xbf16>
    %109 = vector.shape_cast %108 : vector<1x64x128xbf16> to vector<64x128xbf16>
    %cst_99 = arith.constant dense<0.000000e+00> : vector<16x128xf32>
    %110 = tpu.matmul %107, %109, %cst_99 {dimension_numbers = #tpu.dot_dimension_numbers<[1], [0], [0], [1], [0, 0, 1, 1], [], []>} : vector<16x64xbf16>, vector<64x128xbf16>, vector<16x128xf32> -> vector<16x128xf32>
    %111 = arith.addf %104, %110 : vector<16x128xf32>
    %c0_100 = arith.constant 0 : index
    %c0_101 = arith.constant 0 : index
    %112 = vector.load %arg9[%c0_100, %c0_101] : memref<1x128xf32, #tpu.memory_space<vmem>>, vector<1x128xf32>
    %113 = vector.broadcast %112 : vector<1x128xf32> to vector<16x128xf32>
    %114 = arith.addf %111, %113 : vector<16x128xf32>
    %cst_102 = arith.constant 0.000000e+00 : f32
    %115 = vector.broadcast %cst_102 : f32 to vector<16x128xf32>
    %116 = arith.maximumf %114, %115 : vector<16x128xf32>
    %cst_103 = arith.constant 0.000000e+00 : f32
    %117 = vector.broadcast %cst_103 : f32 to vector<4x128xf32>
    %c0_104 = arith.constant 0 : index
    %c0_105 = arith.constant 0 : index
    %118 = vector.load %arg14[%c0_104, %c0_105] : memref<24x128xf32, #tpu.memory_space<vmem>>, vector<4x128xf32>
    tpu.vector_store %arg14[%c0_104, %c0_105], %117 {strides = array<i32>} : memref<24x128xf32, #tpu.memory_space<vmem>>, vector<4x128xf32>,
    %c20 = arith.constant 20 : index
    %c0_106 = arith.constant 0 : index
    %119 = vector.load %arg14[%c20, %c0_106] : memref<24x128xf32, #tpu.memory_space<vmem>>, vector<4x128xf32>
    tpu.vector_store %arg14[%c20, %c0_106], %117 {strides = array<i32>} : memref<24x128xf32, #tpu.memory_space<vmem>>, vector<4x128xf32>,
    %c4_107 = arith.constant 4 : index
    %c0_108 = arith.constant 0 : index
    %120 = vector.load %arg14[%c4_107, %c0_108] : memref<24x128xf32, #tpu.memory_space<vmem>>, vector<16x128xf32>
    tpu.vector_store %arg14[%c4_107, %c0_108], %116 {strides = array<i32>} : memref<24x128xf32, #tpu.memory_space<vmem>>, vector<16x128xf32>,
    %c0_109 = arith.constant 0 : index
    %c0_110 = arith.constant 0 : index
    %121 = vector.load %arg14[%c0_109, %c0_110] : memref<24x128xf32, #tpu.memory_space<vmem>>, vector<16x128xf32>
    %122 = arith.truncf %121 : vector<16x128xf32> to vector<16x128xbf16>
    %c0_111 = arith.constant 0 : index
    %c0_112 = arith.constant 0 : index
    %c0_113 = arith.constant 0 : index
    %123 = vector.load %arg6[%c0_111, %c0_112, %c0_113] : memref<5x128x192xbf16, #tpu.memory_space<vmem>>, vector<1x128x192xbf16>
    %124 = vector.shape_cast %123 : vector<1x128x192xbf16> to vector<128x192xbf16>
    %cst_114 = arith.constant dense<0.000000e+00> : vector<16x192xf32>
    %125 = tpu.matmul %122, %124, %cst_114 {dimension_numbers = #tpu.dot_dimension_numbers<[1], [0], [0], [1], [0, 0, 1, 1], [], []>} : vector<16x128xbf16>, vector<128x192xbf16>, vector<16x192xf32> -> vector<16x192xf32>
    %126 = arith.addf %75, %125 : vector<16x192xf32>
    %c2_115 = arith.constant 2 : index
    %c0_116 = arith.constant 0 : index
    %127 = vector.load %arg14[%c2_115, %c0_116] : memref<24x128xf32, #tpu.memory_space<vmem>>, vector<16x128xf32>
    %128 = arith.truncf %127 : vector<16x128xf32> to vector<16x128xbf16>
    %c1_117 = arith.constant 1 : index
    %c0_118 = arith.constant 0 : index
    %c0_119 = arith.constant 0 : index
    %129 = vector.load %arg6[%c1_117, %c0_118, %c0_119] : memref<5x128x192xbf16, #tpu.memory_space<vmem>>, vector<1x128x192xbf16>
    %130 = vector.shape_cast %129 : vector<1x128x192xbf16> to vector<128x192xbf16>
    %cst_120 = arith.constant dense<0.000000e+00> : vector<16x192xf32>
    %131 = tpu.matmul %128, %130, %cst_120 {dimension_numbers = #tpu.dot_dimension_numbers<[1], [0], [0], [1], [0, 0, 1, 1], [], []>} : vector<16x128xbf16>, vector<128x192xbf16>, vector<16x192xf32> -> vector<16x192xf32>
    %132 = arith.addf %126, %131 : vector<16x192xf32>
    %c4_121 = arith.constant 4 : index
    %c0_122 = arith.constant 0 : index
    %133 = vector.load %arg14[%c4_121, %c0_122] : memref<24x128xf32, #tpu.memory_space<vmem>>, vector<16x128xf32>
    %134 = arith.truncf %133 : vector<16x128xf32> to vector<16x128xbf16>
    %c2_123 = arith.constant 2 : index
    %c0_124 = arith.constant 0 : index
    %c0_125 = arith.constant 0 : index
    %135 = vector.load %arg6[%c2_123, %c0_124, %c0_125] : memref<5x128x192xbf16, #tpu.memory_space<vmem>>, vector<1x128x192xbf16>
    %136 = vector.shape_cast %135 : vector<1x128x192xbf16> to vector<128x192xbf16>
    %cst_126 = arith.constant dense<0.000000e+00> : vector<16x192xf32>
    %137 = tpu.matmul %134, %136, %cst_126 {dimension_numbers = #tpu.dot_dimension_numbers<[1], [0], [0], [1], [0, 0, 1, 1], [], []>} : vector<16x128xbf16>, vector<128x192xbf16>, vector<16x192xf32> -> vector<16x192xf32>
    %138 = arith.addf %132, %137 : vector<16x192xf32>
    %c6_127 = arith.constant 6 : index
    %c0_128 = arith.constant 0 : index
    %139 = vector.load %arg14[%c6_127, %c0_128] : memref<24x128xf32, #tpu.memory_space<vmem>>, vector<16x128xf32>
    %140 = arith.truncf %139 : vector<16x128xf32> to vector<16x128xbf16>
    %c3_129 = arith.constant 3 : index
    %c0_130 = arith.constant 0 : index
    %c0_131 = arith.constant 0 : index
    %141 = vector.load %arg6[%c3_129, %c0_130, %c0_131] : memref<5x128x192xbf16, #tpu.memory_space<vmem>>, vector<1x128x192xbf16>
    %142 = vector.shape_cast %141 : vector<1x128x192xbf16> to vector<128x192xbf16>
    %cst_132 = arith.constant dense<0.000000e+00> : vector<16x192xf32>
    %143 = tpu.matmul %140, %142, %cst_132 {dimension_numbers = #tpu.dot_dimension_numbers<[1], [0], [0], [1], [0, 0, 1, 1], [], []>} : vector<16x128xbf16>, vector<128x192xbf16>, vector<16x192xf32> -> vector<16x192xf32>
    %144 = arith.addf %138, %143 : vector<16x192xf32>
    %c8_133 = arith.constant 8 : index
    %c0_134 = arith.constant 0 : index
    %145 = vector.load %arg14[%c8_133, %c0_134] : memref<24x128xf32, #tpu.memory_space<vmem>>, vector<16x128xf32>
    %146 = arith.truncf %145 : vector<16x128xf32> to vector<16x128xbf16>
    %c4_135 = arith.constant 4 : index
    %c0_136 = arith.constant 0 : index
    %c0_137 = arith.constant 0 : index
    %147 = vector.load %arg6[%c4_135, %c0_136, %c0_137] : memref<5x128x192xbf16, #tpu.memory_space<vmem>>, vector<1x128x192xbf16>
    %148 = vector.shape_cast %147 : vector<1x128x192xbf16> to vector<128x192xbf16>
    %cst_138 = arith.constant dense<0.000000e+00> : vector<16x192xf32>
    %149 = tpu.matmul %146, %148, %cst_138 {dimension_numbers = #tpu.dot_dimension_numbers<[1], [0], [0], [1], [0, 0, 1, 1], [], []>} : vector<16x128xbf16>, vector<128x192xbf16>, vector<16x192xf32> -> vector<16x192xf32>
    %150 = arith.addf %144, %149 : vector<16x192xf32>
    %cst_139 = arith.constant 0.000000e+00 : f32
    %151 = vector.broadcast %cst_139 : f32 to vector<20x160xf32>
    %c0_140 = arith.constant 0 : index
    %c0_141 = arith.constant 0 : index
    %c0_142 = arith.constant 0 : index
    %152 = vector.load %arg1[%c0_140, %c0_141, %c0_142] : memref<1x32x64xf32, #tpu.memory_space<vmem>>, vector<1x20x64xf32>
    %153 = vector.shape_cast %152 : vector<1x20x64xf32> to vector<20x64xf32>
    %154 = arith.truncf %153 : vector<20x64xf32> to vector<20x64xbf16>
    %c0_143 = arith.constant 0 : index
    %c0_144 = arith.constant 0 : index
    %c0_145 = arith.constant 0 : index
    %155 = vector.load %arg4[%c0_143, %c0_144, %c0_145] : memref<5x64x160xbf16, #tpu.memory_space<vmem>>, vector<1x64x160xbf16>
    %156 = vector.shape_cast %155 : vector<1x64x160xbf16> to vector<64x160xbf16>
    %cst_146 = arith.constant dense<0.000000e+00> : vector<20x160xf32>
    %157 = tpu.matmul %154, %156, %cst_146 {dimension_numbers = #tpu.dot_dimension_numbers<[1], [0], [0], [1], [0, 0, 1, 1], [], []>} : vector<20x64xbf16>, vector<64x160xbf16>, vector<20x160xf32> -> vector<20x160xf32>
    %158 = arith.addf %151, %157 : vector<20x160xf32>
    %c0_147 = arith.constant 0 : index
    %c3_148 = arith.constant 3 : index
    %c0_149 = arith.constant 0 : index
    %159 = vector.load %arg1[%c0_147, %c3_148, %c0_149] : memref<1x32x64xf32, #tpu.memory_space<vmem>>, vector<1x20x64xf32>
    %160 = vector.shape_cast %159 : vector<1x20x64xf32> to vector<20x64xf32>
    %161 = arith.truncf %160 : vector<20x64xf32> to vector<20x64xbf16>
    %c1_150 = arith.constant 1 : index
    %c0_151 = arith.constant 0 : index
    %c0_152 = arith.constant 0 : index
    %162 = vector.load %arg4[%c1_150, %c0_151, %c0_152] : memref<5x64x160xbf16, #tpu.memory_space<vmem>>, vector<1x64x160xbf16>
    %163 = vector.shape_cast %162 : vector<1x64x160xbf16> to vector<64x160xbf16>
    %cst_153 = arith.constant dense<0.000000e+00> : vector<20x160xf32>
    %164 = tpu.matmul %161, %163, %cst_153 {dimension_numbers = #tpu.dot_dimension_numbers<[1], [0], [0], [1], [0, 0, 1, 1], [], []>} : vector<20x64xbf16>, vector<64x160xbf16>, vector<20x160xf32> -> vector<20x160xf32>
    %165 = arith.addf %158, %164 : vector<20x160xf32>
    %c0_154 = arith.constant 0 : index
    %c6_155 = arith.constant 6 : index
    %c0_156 = arith.constant 0 : index
    %166 = vector.load %arg1[%c0_154, %c6_155, %c0_156] : memref<1x32x64xf32, #tpu.memory_space<vmem>>, vector<1x20x64xf32>
    %167 = vector.shape_cast %166 : vector<1x20x64xf32> to vector<20x64xf32>
    %168 = arith.truncf %167 : vector<20x64xf32> to vector<20x64xbf16>
    %c2_157 = arith.constant 2 : index
    %c0_158 = arith.constant 0 : index
    %c0_159 = arith.constant 0 : index
    %169 = vector.load %arg4[%c2_157, %c0_158, %c0_159] : memref<5x64x160xbf16, #tpu.memory_space<vmem>>, vector<1x64x160xbf16>
    %170 = vector.shape_cast %169 : vector<1x64x160xbf16> to vector<64x160xbf16>
    %cst_160 = arith.constant dense<0.000000e+00> : vector<20x160xf32>
    %171 = tpu.matmul %168, %170, %cst_160 {dimension_numbers = #tpu.dot_dimension_numbers<[1], [0], [0], [1], [0, 0, 1, 1], [], []>} : vector<20x64xbf16>, vector<64x160xbf16>, vector<20x160xf32> -> vector<20x160xf32>
    %172 = arith.addf %165, %171 : vector<20x160xf32>
    %c0_161 = arith.constant 0 : index
    %c9_162 = arith.constant 9 : index
    %c0_163 = arith.constant 0 : index
    %173 = vector.load %arg1[%c0_161, %c9_162, %c0_163] : memref<1x32x64xf32, #tpu.memory_space<vmem>>, vector<1x20x64xf32>
    %174 = vector.shape_cast %173 : vector<1x20x64xf32> to vector<20x64xf32>
    %175 = arith.truncf %174 : vector<20x64xf32> to vector<20x64xbf16>
    %c3_164 = arith.constant 3 : index
    %c0_165 = arith.constant 0 : index
    %c0_166 = arith.constant 0 : index
    %176 = vector.load %arg4[%c3_164, %c0_165, %c0_166] : memref<5x64x160xbf16, #tpu.memory_space<vmem>>, vector<1x64x160xbf16>
    %177 = vector.shape_cast %176 : vector<1x64x160xbf16> to vector<64x160xbf16>
    %cst_167 = arith.constant dense<0.000000e+00> : vector<20x160xf32>
    %178 = tpu.matmul %175, %177, %cst_167 {dimension_numbers = #tpu.dot_dimension_numbers<[1], [0], [0], [1], [0, 0, 1, 1], [], []>} : vector<20x64xbf16>, vector<64x160xbf16>, vector<20x160xf32> -> vector<20x160xf32>
    %179 = arith.addf %172, %178 : vector<20x160xf32>
    %c0_168 = arith.constant 0 : index
    %c12_169 = arith.constant 12 : index
    %c0_170 = arith.constant 0 : index
    %180 = vector.load %arg1[%c0_168, %c12_169, %c0_170] : memref<1x32x64xf32, #tpu.memory_space<vmem>>, vector<1x20x64xf32>
    %181 = vector.shape_cast %180 : vector<1x20x64xf32> to vector<20x64xf32>
    %182 = arith.truncf %181 : vector<20x64xf32> to vector<20x64xbf16>
    %c4_171 = arith.constant 4 : index
    %c0_172 = arith.constant 0 : index
    %c0_173 = arith.constant 0 : index
    %183 = vector.load %arg4[%c4_171, %c0_172, %c0_173] : memref<5x64x160xbf16, #tpu.memory_space<vmem>>, vector<1x64x160xbf16>
    %184 = vector.shape_cast %183 : vector<1x64x160xbf16> to vector<64x160xbf16>
    %cst_174 = arith.constant dense<0.000000e+00> : vector<20x160xf32>
    %185 = tpu.matmul %182, %184, %cst_174 {dimension_numbers = #tpu.dot_dimension_numbers<[1], [0], [0], [1], [0, 0, 1, 1], [], []>} : vector<20x64xbf16>, vector<64x160xbf16>, vector<20x160xf32> -> vector<20x160xf32>
    %186 = arith.addf %179, %185 : vector<20x160xf32>
    %c0_175 = arith.constant 0 : index
    %c0_176 = arith.constant 0 : index
    %187 = vector.load %arg10[%c0_175, %c0_176] : memref<1x160xf32, #tpu.memory_space<vmem>>, vector<1x160xf32>
    %188 = vector.broadcast %187 : vector<1x160xf32> to vector<20x160xf32>
    %189 = arith.addf %186, %188 : vector<20x160xf32>
    %cst_177 = arith.constant 0.000000e+00 : f32
    %190 = vector.broadcast %cst_177 : f32 to vector<20x160xf32>
    %191 = arith.maximumf %189, %190 : vector<20x160xf32>
    %cst_178 = arith.constant 0.000000e+00 : f32
    %192 = vector.broadcast %cst_178 : f32 to vector<4x160xf32>
    %c0_179 = arith.constant 0 : index
    %c0_180 = arith.constant 0 : index
    %193 = vector.load %arg15[%c0_179, %c0_180] : memref<28x160xf32, #tpu.memory_space<vmem>>, vector<4x160xf32>
    tpu.vector_store %arg15[%c0_179, %c0_180], %192 {strides = array<i32>} : memref<28x160xf32, #tpu.memory_space<vmem>>, vector<4x160xf32>,
    %c24 = arith.constant 24 : index
    %c0_181 = arith.constant 0 : index
    %194 = vector.load %arg15[%c24, %c0_181] : memref<28x160xf32, #tpu.memory_space<vmem>>, vector<4x160xf32>
    tpu.vector_store %arg15[%c24, %c0_181], %192 {strides = array<i32>} : memref<28x160xf32, #tpu.memory_space<vmem>>, vector<4x160xf32>,
    %c4_182 = arith.constant 4 : index
    %c0_183 = arith.constant 0 : index
    %195 = vector.load %arg15[%c4_182, %c0_183] : memref<28x160xf32, #tpu.memory_space<vmem>>, vector<20x160xf32>
    tpu.vector_store %arg15[%c4_182, %c0_183], %191 {strides = array<i32>} : memref<28x160xf32, #tpu.memory_space<vmem>>, vector<20x160xf32>,
    %c0_184 = arith.constant 0 : index
    %c0_185 = arith.constant 0 : index
    %196 = vector.load %arg15[%c0_184, %c0_185] : memref<28x160xf32, #tpu.memory_space<vmem>>, vector<16x160xf32>
    %197 = arith.truncf %196 : vector<16x160xf32> to vector<16x160xbf16>
    %c0_186 = arith.constant 0 : index
    %c0_187 = arith.constant 0 : index
    %c0_188 = arith.constant 0 : index
    %198 = vector.load %arg7[%c0_186, %c0_187, %c0_188] : memref<5x160x192xbf16, #tpu.memory_space<vmem>>, vector<1x160x192xbf16>
    %199 = vector.shape_cast %198 : vector<1x160x192xbf16> to vector<160x192xbf16>
    %cst_189 = arith.constant dense<0.000000e+00> : vector<16x192xf32>
    %200 = tpu.matmul %197, %199, %cst_189 {dimension_numbers = #tpu.dot_dimension_numbers<[1], [0], [0], [1], [0, 0, 1, 1], [], []>} : vector<16x160xbf16>, vector<160x192xbf16>, vector<16x192xf32> -> vector<16x192xf32>
    %201 = arith.addf %150, %200 : vector<16x192xf32>
    %c3_190 = arith.constant 3 : index
    %c0_191 = arith.constant 0 : index
    %202 = vector.load %arg15[%c3_190, %c0_191] : memref<28x160xf32, #tpu.memory_space<vmem>>, vector<16x160xf32>
    %203 = arith.truncf %202 : vector<16x160xf32> to vector<16x160xbf16>
    %c1_192 = arith.constant 1 : index
    %c0_193 = arith.constant 0 : index
    %c0_194 = arith.constant 0 : index
    %204 = vector.load %arg7[%c1_192, %c0_193, %c0_194] : memref<5x160x192xbf16, #tpu.memory_space<vmem>>, vector<1x160x192xbf16>
    %205 = vector.shape_cast %204 : vector<1x160x192xbf16> to vector<160x192xbf16>
    %cst_195 = arith.constant dense<0.000000e+00> : vector<16x192xf32>
    %206 = tpu.matmul %203, %205, %cst_195 {dimension_numbers = #tpu.dot_dimension_numbers<[1], [0], [0], [1], [0, 0, 1, 1], [], []>} : vector<16x160xbf16>, vector<160x192xbf16>, vector<16x192xf32> -> vector<16x192xf32>
    %207 = arith.addf %201, %206 : vector<16x192xf32>
    %c6_196 = arith.constant 6 : index
    %c0_197 = arith.constant 0 : index
    %208 = vector.load %arg15[%c6_196, %c0_197] : memref<28x160xf32, #tpu.memory_space<vmem>>, vector<16x160xf32>
    %209 = arith.truncf %208 : vector<16x160xf32> to vector<16x160xbf16>
    %c2_198 = arith.constant 2 : index
    %c0_199 = arith.constant 0 : index
    %c0_200 = arith.constant 0 : index
    %210 = vector.load %arg7[%c2_198, %c0_199, %c0_200] : memref<5x160x192xbf16, #tpu.memory_space<vmem>>, vector<1x160x192xbf16>
    %211 = vector.shape_cast %210 : vector<1x160x192xbf16> to vector<160x192xbf16>
    %cst_201 = arith.constant dense<0.000000e+00> : vector<16x192xf32>
    %212 = tpu.matmul %209, %211, %cst_201 {dimension_numbers = #tpu.dot_dimension_numbers<[1], [0], [0], [1], [0, 0, 1, 1], [], []>} : vector<16x160xbf16>, vector<160x192xbf16>, vector<16x192xf32> -> vector<16x192xf32>
    %213 = arith.addf %207, %212 : vector<16x192xf32>
    %c9_202 = arith.constant 9 : index
    %c0_203 = arith.constant 0 : index
    %214 = vector.load %arg15[%c9_202, %c0_203] : memref<28x160xf32, #tpu.memory_space<vmem>>, vector<16x160xf32>
    %215 = arith.truncf %214 : vector<16x160xf32> to vector<16x160xbf16>
    %c3_204 = arith.constant 3 : index
    %c0_205 = arith.constant 0 : index
    %c0_206 = arith.constant 0 : index
    %216 = vector.load %arg7[%c3_204, %c0_205, %c0_206] : memref<5x160x192xbf16, #tpu.memory_space<vmem>>, vector<1x160x192xbf16>
    %217 = vector.shape_cast %216 : vector<1x160x192xbf16> to vector<160x192xbf16>
    %cst_207 = arith.constant dense<0.000000e+00> : vector<16x192xf32>
    %218 = tpu.matmul %215, %217, %cst_207 {dimension_numbers = #tpu.dot_dimension_numbers<[1], [0], [0], [1], [0, 0, 1, 1], [], []>} : vector<16x160xbf16>, vector<160x192xbf16>, vector<16x192xf32> -> vector<16x192xf32>
    %219 = arith.addf %213, %218 : vector<16x192xf32>
    %c12_208 = arith.constant 12 : index
    %c0_209 = arith.constant 0 : index
    %220 = vector.load %arg15[%c12_208, %c0_209] : memref<28x160xf32, #tpu.memory_space<vmem>>, vector<16x160xf32>
    %221 = arith.truncf %220 : vector<16x160xf32> to vector<16x160xbf16>
    %c4_210 = arith.constant 4 : index
    %c0_211 = arith.constant 0 : index
    %c0_212 = arith.constant 0 : index
    %222 = vector.load %arg7[%c4_210, %c0_211, %c0_212] : memref<5x160x192xbf16, #tpu.memory_space<vmem>>, vector<1x160x192xbf16>
    %223 = vector.shape_cast %222 : vector<1x160x192xbf16> to vector<160x192xbf16>
    %cst_213 = arith.constant dense<0.000000e+00> : vector<16x192xf32>
    %224 = tpu.matmul %221, %223, %cst_213 {dimension_numbers = #tpu.dot_dimension_numbers<[1], [0], [0], [1], [0, 0, 1, 1], [], []>} : vector<16x160xbf16>, vector<160x192xbf16>, vector<16x192xf32> -> vector<16x192xf32>
    %225 = arith.addf %219, %224 : vector<16x192xf32>
    %c0_214 = arith.constant 0 : index
    %c0_215 = arith.constant 0 : index
    %226 = vector.load %arg11[%c0_214, %c0_215] : memref<1x192xf32, #tpu.memory_space<vmem>>, vector<1x192xf32>
    %227 = vector.broadcast %226 : vector<1x192xf32> to vector<16x192xf32>
    %228 = arith.addf %225, %227 : vector<16x192xf32>
    %cst_216 = arith.constant 0.000000e+00 : f32
    %229 = vector.broadcast %cst_216 : f32 to vector<16x192xf32>
    %230 = arith.maximumf %228, %229 : vector<16x192xf32>
    %c0_217 = arith.constant 0 : index
    %c0_218 = arith.constant 0 : index
    %c0_219 = arith.constant 0 : index
    %231 = vector.load %arg12[%c0_217, %c0_218, %c0_219] : memref<1x16x192xf32, #tpu.memory_space<vmem>>, vector<1x16x192xf32>
    %232 = vector.shape_cast %231 : vector<1x16x192xf32> to vector<16x192xf32>
    %233 = vector.shape_cast %230 : vector<16x192xf32> to vector<1x16x192xf32>
    tpu.vector_store %arg12[%c0_217, %c0_218, %c0_219], %233 {strides = array<i32>} : memref<1x16x192xf32, #tpu.memory_space<vmem>>, vector<1x16x192xf32>,
    return
  }
  func.func @transform_0(%arg0: i32) -> (i32, i32, i32) {
    %c0_i32 = arith.constant 0 : i32
    %c0_i32_0 = arith.constant 0 : i32
    %c0_i32_1 = arith.constant 0 : i32
    return %arg0, %c0_i32, %c0_i32_0 : i32, i32, i32
  }
  func.func @transform_1(%arg0: i32) -> (i32, i32, i32) {
    %c0_i32 = arith.constant 0 : i32
    %c0_i32_0 = arith.constant 0 : i32
    %c0_i32_1 = arith.constant 0 : i32
    %c0_i32_2 = arith.constant 0 : i32
    return %c0_i32, %c0_i32_0, %c0_i32_1 : i32, i32, i32
  }
  func.func @transform_2(%arg0: i32) -> (i32, i32, i32) {
    %c0_i32 = arith.constant 0 : i32
    %c0_i32_0 = arith.constant 0 : i32
    %c0_i32_1 = arith.constant 0 : i32
    %c0_i32_2 = arith.constant 0 : i32
    return %c0_i32, %c0_i32_0, %c0_i32_1 : i32, i32, i32
  }
  func.func @transform_3(%arg0: i32) -> (i32, i32, i32) {
    %c0_i32 = arith.constant 0 : i32
    %c0_i32_0 = arith.constant 0 : i32
    %c0_i32_1 = arith.constant 0 : i32
    %c0_i32_2 = arith.constant 0 : i32
    return %c0_i32, %c0_i32_0, %c0_i32_1 : i32, i32, i32
  }
  func.func @transform_4(%arg0: i32) -> (i32, i32, i32) {
    %c0_i32 = arith.constant 0 : i32
    %c0_i32_0 = arith.constant 0 : i32
    %c0_i32_1 = arith.constant 0 : i32
    %c0_i32_2 = arith.constant 0 : i32
    return %c0_i32, %c0_i32_0, %c0_i32_1 : i32, i32, i32
  }
  func.func @transform_5(%arg0: i32) -> (i32, i32, i32) {
    %c0_i32 = arith.constant 0 : i32
    %c0_i32_0 = arith.constant 0 : i32
    %c0_i32_1 = arith.constant 0 : i32
    %c0_i32_2 = arith.constant 0 : i32
    return %c0_i32, %c0_i32_0, %c0_i32_1 : i32, i32, i32
  }
  func.func @transform_6(%arg0: i32) -> (i32, i32, i32) {
    %c0_i32 = arith.constant 0 : i32
    %c0_i32_0 = arith.constant 0 : i32
    %c0_i32_1 = arith.constant 0 : i32
    %c0_i32_2 = arith.constant 0 : i32
    return %c0_i32, %c0_i32_0, %c0_i32_1 : i32, i32, i32
  }
  func.func @transform_7(%arg0: i32) -> (i32, i32) {
    %c0_i32 = arith.constant 0 : i32
    %c0_i32_0 = arith.constant 0 : i32
    %c0_i32_1 = arith.constant 0 : i32
    return %c0_i32, %c0_i32_0 : i32, i32
  }
  func.func @transform_8(%arg0: i32) -> (i32, i32) {
    %c0_i32 = arith.constant 0 : i32
    %c0_i32_0 = arith.constant 0 : i32
    %c0_i32_1 = arith.constant 0 : i32
    return %c0_i32, %c0_i32_0 : i32, i32
  }
  func.func @transform_9(%arg0: i32) -> (i32, i32) {
    %c0_i32 = arith.constant 0 : i32
    %c0_i32_0 = arith.constant 0 : i32
    %c0_i32_1 = arith.constant 0 : i32
    return %c0_i32, %c0_i32_0 : i32, i32
  }
  func.func @transform_10(%arg0: i32) -> (i32, i32) {
    %c0_i32 = arith.constant 0 : i32
    %c0_i32_0 = arith.constant 0 : i32
    %c0_i32_1 = arith.constant 0 : i32
    return %c0_i32, %c0_i32_0 : i32, i32
  }
  func.func @transform_11(%arg0: i32) -> (i32, i32, i32) {
    %c0_i32 = arith.constant 0 : i32
    %c0_i32_0 = arith.constant 0 : i32
    %c0_i32_1 = arith.constant 0 : i32
    return %arg0, %c0_i32, %c0_i32_0 : i32, i32, i32
  }
}

module attributes {stable_mosaic.version = 11 : i64} {
  func.func @_contextual_kernel(%arg0: i32, %arg1: memref<1x32x64xf32, #tpu.memory_space<vmem>>, %arg2: memref<5x64x128xbf16, #tpu.memory_space<vmem>>, %arg3: memref<5x64x128xbf16, #tpu.memory_space<vmem>>, %arg4: memref<5x64x160xbf16, #tpu.memory_space<vmem>>, %arg5: memref<5x128x192xbf16, #tpu.memory_space<vmem>>, %arg6: memref<5x128x192xbf16, #tpu.memory_space<vmem>>, %arg7: memref<5x160x192xbf16, #tpu.memory_space<vmem>>, %arg8: memref<1x128xf32, #tpu.memory_space<vmem>>, %arg9: memref<1x128xf32, #tpu.memory_space<vmem>>, %arg10: memref<1x160xf32, #tpu.memory_space<vmem>>, %arg11: memref<1x192xf32, #tpu.memory_space<vmem>>, %arg12: memref<1x16x192xf32, #tpu.memory_space<vmem>>, %arg13: memref<20x128xf32, #tpu.memory_space<vmem>>, %arg14: memref<24x128xf32, #tpu.memory_space<vmem>>, %arg15: memref<28x160xf32, #tpu.memory_space<vmem>>) attributes {dimension_semantics = [#tpu.dimension_semantics<parallel>], iteration_bounds = array<i64: 2>, scalar_prefetch = 0 : i64, scratch_operands = 3 : i64, tpu.core_type = #tpu.core_type<tc>, window_params = [{transform_indices = @transform_0, window_bounds = array<i64: 1, 32, 64>}, {pipeline_mode = #tpu.pipeline_mode<synchronous>, transform_indices = @transform_1, window_bounds = array<i64: 5, 64, 128>}, {pipeline_mode = #tpu.pipeline_mode<synchronous>, transform_indices = @transform_2, window_bounds = array<i64: 5, 64, 128>}, {pipeline_mode = #tpu.pipeline_mode<synchronous>, transform_indices = @transform_3, window_bounds = array<i64: 5, 64, 160>}, {pipeline_mode = #tpu.pipeline_mode<synchronous>, transform_indices = @transform_4, window_bounds = array<i64: 5, 128, 192>}, {pipeline_mode = #tpu.pipeline_mode<synchronous>, transform_indices = @transform_5, window_bounds = array<i64: 5, 128, 192>}, {pipeline_mode = #tpu.pipeline_mode<synchronous>, transform_indices = @transform_6, window_bounds = array<i64: 5, 160, 192>}, {pipeline_mode = #tpu.pipeline_mode<synchronous>, transform_indices = @transform_7, window_bounds = array<i64: 1, 128>}, {pipeline_mode = #tpu.pipeline_mode<synchronous>, transform_indices = @transform_8, window_bounds = array<i64: 1, 128>}, {pipeline_mode = #tpu.pipeline_mode<synchronous>, transform_indices = @transform_9, window_bounds = array<i64: 1, 160>}, {pipeline_mode = #tpu.pipeline_mode<synchronous>, transform_indices = @transform_10, window_bounds = array<i64: 1, 192>}, {transform_indices = @transform_11, window_bounds = array<i64: 1, 16, 192>}]} {
    %cst = arith.constant 0.000000e+00 : f32
    %0 = vector.broadcast %cst : f32 to vector<16x192xf32>
    %cst_0 = arith.constant 0.000000e+00 : f32
    %1 = vector.broadcast %cst_0 : f32 to vector<16x128xf32>
    %c0 = arith.constant 0 : index
    %c6 = arith.constant 6 : index
    %c0_1 = arith.constant 0 : index
    %2 = vector.load %arg1[%c0, %c6, %c0_1] : memref<1x32x64xf32, #tpu.memory_space<vmem>>, vector<1x16x64xf32>
    %3 = vector.shape_cast %2 : vector<1x16x64xf32> to vector<16x64xf32>
    %4 = arith.truncf %3 : vector<16x64xf32> to vector<16x64xbf16>
    %c0_2 = arith.constant 0 : index
    %c0_3 = arith.constant 0 : index
    %c0_4 = arith.constant 0 : index
    %5 = vector.load %arg2[%c0_2, %c0_3, %c0_4] : memref<5x64x128xbf16, #tpu.memory_space<vmem>>, vector<1x64x128xbf16>
    %6 = vector.shape_cast %5 : vector<1x64x128xbf16> to vector<64x128xbf16>
    %cst_5 = arith.constant dense<0.000000e+00> : vector<16x128xf32>
    %7 = tpu.matmul %4, %6, %cst_5 {dimension_numbers = #tpu.dot_dimension_numbers<[1], [0], [0], [1], [0, 0, 1, 1], [], []>} : vector<16x64xbf16>, vector<64x128xbf16>, vector<16x128xf32> -> vector<16x128xf32>
    %8 = arith.addf %1, %7 : vector<16x128xf32>
    %c0_6 = arith.constant 0 : index
    %c7 = arith.constant 7 : index
    %c0_7 = arith.constant 0 : index
    %9 = vector.load %arg1[%c0_6, %c7, %c0_7] : memref<1x32x64xf32, #tpu.memory_space<vmem>>, vector<1x16x64xf32>
    %10 = vector.shape_cast %9 : vector<1x16x64xf32> to vector<16x64xf32>
    %11 = arith.truncf %10 : vector<16x64xf32> to vector<16x64xbf16>
    %c1 = arith.constant 1 : index
    %c0_8 = arith.constant 0 : index
    %c0_9 = arith.constant 0 : index
    %12 = vector.load %arg2[%c1, %c0_8, %c0_9] : memref<5x64x128xbf16, #tpu.memory_space<vmem>>, vector<1x64x128xbf16>
    %13 = vector.shape_cast %12 : vector<1x64x128xbf16> to vector<64x128xbf16>
    %cst_10 = arith.constant dense<0.000000e+00> : vector<16x128xf32>
    %14 = tpu.matmul %11, %13, %cst_10 {dimension_numbers = #tpu.dot_dimension_numbers<[1], [0], [0], [1], [0, 0, 1, 1], [], []>} : vector<16x64xbf16>, vector<64x128xbf16>, vector<16x128xf32> -> vector<16x128xf32>
    %15 = arith.addf %8, %14 : vector<16x128xf32>
    %c0_11 = arith.constant 0 : index
    %c8 = arith.constant 8 : index
    %c0_12 = arith.constant 0 : index
    %16 = vector.load %arg1[%c0_11, %c8, %c0_12] : memref<1x32x64xf32, #tpu.memory_space<vmem>>, vector<1x16x64xf32>
    %17 = vector.shape_cast %16 : vector<1x16x64xf32> to vector<16x64xf32>
    %18 = arith.truncf %17 : vector<16x64xf32> to vector<16x64xbf16>
    %c2 = arith.constant 2 : index
    %c0_13 = arith.constant 0 : index
    %c0_14 = arith.constant 0 : index
    %19 = vector.load %arg2[%c2, %c0_13, %c0_14] : memref<5x64x128xbf16, #tpu.memory_space<vmem>>, vector<1x64x128xbf16>
    %20 = vector.shape_cast %19 : vector<1x64x128xbf16> to vector<64x128xbf16>
    %cst_15 = arith.constant dense<0.000000e+00> : vector<16x128xf32>
    %21 = tpu.matmul %18, %20, %cst_15 {dimension_numbers = #tpu.dot_dimension_numbers<[1], [0], [0], [1], [0, 0, 1, 1], [], []>} : vector<16x64xbf16>, vector<64x128xbf16>, vector<16x128xf32> -> vector<16x128xf32>
    %22 = arith.addf %15, %21 : vector<16x128xf32>
    %c0_16 = arith.constant 0 : index
    %c9 = arith.constant 9 : index
    %c0_17 = arith.constant 0 : index
    %23 = vector.load %arg1[%c0_16, %c9, %c0_17] : memref<1x32x64xf32, #tpu.memory_space<vmem>>, vector<1x16x64xf32>
    %24 = vector.shape_cast %23 : vector<1x16x64xf32> to vector<16x64xf32>
    %25 = arith.truncf %24 : vector<16x64xf32> to vector<16x64xbf16>
    %c3 = arith.constant 3 : index
    %c0_18 = arith.constant 0 : index
    %c0_19 = arith.constant 0 : index
    %26 = vector.load %arg2[%c3, %c0_18, %c0_19] : memref<5x64x128xbf16, #tpu.memory_space<vmem>>, vector<1x64x128xbf16>
    %27 = vector.shape_cast %26 : vector<1x64x128xbf16> to vector<64x128xbf16>
    %cst_20 = arith.constant dense<0.000000e+00> : vector<16x128xf32>
    %28 = tpu.matmul %25, %27, %cst_20 {dimension_numbers = #tpu.dot_dimension_numbers<[1], [0], [0], [1], [0, 0, 1, 1], [], []>} : vector<16x64xbf16>, vector<64x128xbf16>, vector<16x128xf32> -> vector<16x128xf32>
    %29 = arith.addf %22, %28 : vector<16x128xf32>
    %c0_21 = arith.constant 0 : index
    %c10 = arith.constant 10 : index
    %c0_22 = arith.constant 0 : index
    %30 = vector.load %arg1[%c0_21, %c10, %c0_22] : memref<1x32x64xf32, #tpu.memory_space<vmem>>, vector<1x16x64xf32>
    %31 = vector.shape_cast %30 : vector<1x16x64xf32> to vector<16x64xf32>
    %32 = arith.truncf %31 : vector<16x64xf32> to vector<16x64xbf16>
    %c4 = arith.constant 4 : index
    %c0_23 = arith.constant 0 : index
    %c0_24 = arith.constant 0 : index
    %33 = vector.load %arg2[%c4, %c0_23, %c0_24] : memref<5x64x128xbf16, #tpu.memory_space<vmem>>, vector<1x64x128xbf16>
    %34 = vector.shape_cast %33 : vector<1x64x128xbf16> to vector<64x128xbf16>
    %cst_25 = arith.constant dense<0.000000e+00> : vector<16x128xf32>
    %35 = tpu.matmul %32, %34, %cst_25 {dimension_numbers = #tpu.dot_dimension_numbers<[1], [0], [0], [1], [0, 0, 1, 1], [], []>} : vector<16x64xbf16>, vector<64x128xbf16>, vector<16x128xf32> -> vector<16x128xf32>
    %36 = arith.addf %29, %35 : vector<16x128xf32>
    %c0_26 = arith.constant 0 : index
    %c0_27 = arith.constant 0 : index
    %37 = vector.load %arg8[%c0_26, %c0_27] : memref<1x128xf32, #tpu.memory_space<vmem>>, vector<1x128xf32>
    %38 = vector.broadcast %37 : vector<1x128xf32> to vector<16x128xf32>
    %39 = arith.addf %36, %38 : vector<16x128xf32>
    %cst_28 = arith.constant 0.000000e+00 : f32
    %40 = vector.broadcast %cst_28 : f32 to vector<16x128xf32>
    %41 = arith.maximumf %39, %40 : vector<16x128xf32>
    %cst_29 = arith.constant 0.000000e+00 : f32
    %42 = vector.broadcast %cst_29 : f32 to vector<2x128xf32>
    %c0_30 = arith.constant 0 : index
    %c0_31 = arith.constant 0 : index
    %43 = vector.load %arg13[%c0_30, %c0_31] : memref<20x128xf32, #tpu.memory_space<vmem>>, vector<2x128xf32>
    tpu.vector_store %arg13[%c0_30, %c0_31], %42 {strides = array<i32>} : memref<20x128xf32, #tpu.memory_space<vmem>>, vector<2x128xf32>,
    %c18 = arith.constant 18 : index
    %c0_32 = arith.constant 0 : index
    %44 = vector.load %arg13[%c18, %c0_32] : memref<20x128xf32, #tpu.memory_space<vmem>>, vector<2x128xf32>
    tpu.vector_store %arg13[%c18, %c0_32], %42 {strides = array<i32>} : memref<20x128xf32, #tpu.memory_space<vmem>>, vector<2x128xf32>,
    %c2_33 = arith.constant 2 : index
    %c0_34 = arith.constant 0 : index
    %45 = vector.load %arg13[%c2_33, %c0_34] : memref<20x128xf32, #tpu.memory_space<vmem>>, vector<16x128xf32>
    tpu.vector_store %arg13[%c2_33, %c0_34], %41 {strides = array<i32>} : memref<20x128xf32, #tpu.memory_space<vmem>>, vector<16x128xf32>,
    %c0_35 = arith.constant 0 : index
    %c0_36 = arith.constant 0 : index
    %46 = vector.load %arg13[%c0_35, %c0_36] : memref<20x128xf32, #tpu.memory_space<vmem>>, vector<16x128xf32>
    %47 = arith.truncf %46 : vector<16x128xf32> to vector<16x128xbf16>
    %c0_37 = arith.constant 0 : index
    %c0_38 = arith.constant 0 : index
    %c0_39 = arith.constant 0 : index
    %48 = vector.load %arg5[%c0_37, %c0_38, %c0_39] : memref<5x128x192xbf16, #tpu.memory_space<vmem>>, vector<1x128x192xbf16>
    %49 = vector.shape_cast %48 : vector<1x128x192xbf16> to vector<128x192xbf16>
    %cst_40 = arith.constant dense<0.000000e+00> : vector<16x192xf32>
    %50 = tpu.matmul %47, %49, %cst_40 {dimension_numbers = #tpu.dot_dimension_numbers<[1], [0], [0], [1], [0, 0, 1, 1], [], []>} : vector<16x128xbf16>, vector<128x192xbf16>, vector<16x192xf32> -> vector<16x192xf32>
    %51 = arith.addf %0, %50 : vector<16x192xf32>
    %c1_41 = arith.constant 1 : index
    %c0_42 = arith.constant 0 : index
    %52 = vector.load %arg13[%c1_41, %c0_42] : memref<20x128xf32, #tpu.memory_space<vmem>>, vector<16x128xf32>
    %53 = arith.truncf %52 : vector<16x128xf32> to vector<16x128xbf16>
    %c1_43 = arith.constant 1 : index
    %c0_44 = arith.constant 0 : index
    %c0_45 = arith.constant 0 : index
    %54 = vector.load %arg5[%c1_43, %c0_44, %c0_45] : memref<5x128x192xbf16, #tpu.memory_space<vmem>>, vector<1x128x192xbf16>
    %55 = vector.shape_cast %54 : vector<1x128x192xbf16> to vector<128x192xbf16>
    %cst_46 = arith.constant dense<0.000000e+00> : vector<16x192xf32>
    %56 = tpu.matmul %53, %55, %cst_46 {dimension_numbers = #tpu.dot_dimension_numbers<[1], [0], [0], [1], [0, 0, 1, 1], [], []>} : vector<16x128xbf16>, vector<128x192xbf16>, vector<16x192xf32> -> vector<16x192xf32>
    %57 = arith.addf %51, %56 : vector<16x192xf32>
    %c2_47 = arith.constant 2 : index
    %c0_48 = arith.constant 0 : index
    %58 = vector.load %arg13[%c2_47, %c0_48] : memref<20x128xf32, #tpu.memory_space<vmem>>, vector<16x128xf32>
    %59 = arith.truncf %58 : vector<16x128xf32> to vector<16x128xbf16>
    %c2_49 = arith.constant 2 : index
    %c0_50 = arith.constant 0 : index
    %c0_51 = arith.constant 0 : index
    %60 = vector.load %arg5[%c2_49, %c0_50, %c0_51] : memref<5x128x192xbf16, #tpu.memory_space<vmem>>, vector<1x128x192xbf16>
    %61 = vector.shape_cast %60 : vector<1x128x192xbf16> to vector<128x192xbf16>
    %cst_52 = arith.constant dense<0.000000e+00> : vector<16x192xf32>
    %62 = tpu.matmul %59, %61, %cst_52 {dimension_numbers = #tpu.dot_dimension_numbers<[1], [0], [0], [1], [0, 0, 1, 1], [], []>} : vector<16x128xbf16>, vector<128x192xbf16>, vector<16x192xf32> -> vector<16x192xf32>
    %63 = arith.addf %57, %62 : vector<16x192xf32>
    %c3_53 = arith.constant 3 : index
    %c0_54 = arith.constant 0 : index
    %64 = vector.load %arg13[%c3_53, %c0_54] : memref<20x128xf32, #tpu.memory_space<vmem>>, vector<16x128xf32>
    %65 = arith.truncf %64 : vector<16x128xf32> to vector<16x128xbf16>
    %c3_55 = arith.constant 3 : index
    %c0_56 = arith.constant 0 : index
    %c0_57 = arith.constant 0 : index
    %66 = vector.load %arg5[%c3_55, %c0_56, %c0_57] : memref<5x128x192xbf16, #tpu.memory_space<vmem>>, vector<1x128x192xbf16>
    %67 = vector.shape_cast %66 : vector<1x128x192xbf16> to vector<128x192xbf16>
    %cst_58 = arith.constant dense<0.000000e+00> : vector<16x192xf32>
    %68 = tpu.matmul %65, %67, %cst_58 {dimension_numbers = #tpu.dot_dimension_numbers<[1], [0], [0], [1], [0, 0, 1, 1], [], []>} : vector<16x128xbf16>, vector<128x192xbf16>, vector<16x192xf32> -> vector<16x192xf32>
    %69 = arith.addf %63, %68 : vector<16x192xf32>
    %c4_59 = arith.constant 4 : index
    %c0_60 = arith.constant 0 : index
    %70 = vector.load %arg13[%c4_59, %c0_60] : memref<20x128xf32, #tpu.memory_space<vmem>>, vector<16x128xf32>
    %71 = arith.truncf %70 : vector<16x128xf32> to vector<16x128xbf16>
    %c4_61 = arith.constant 4 : index
    %c0_62 = arith.constant 0 : index
    %c0_63 = arith.constant 0 : index
    %72 = vector.load %arg5[%c4_61, %c0_62, %c0_63] : memref<5x128x192xbf16, #tpu.memory_space<vmem>>, vector<1x128x192xbf16>
    %73 = vector.shape_cast %72 : vector<1x128x192xbf16> to vector<128x192xbf16>
    %cst_64 = arith.constant dense<0.000000e+00> : vector<16x192xf32>
    %74 = tpu.matmul %71, %73, %cst_64 {dimension_numbers = #tpu.dot_dimension_numbers<[1], [0], [0], [1], [0, 0, 1, 1], [], []>} : vector<16x128xbf16>, vector<128x192xbf16>, vector<16x192xf32> -> vector<16x192xf32>
    %75 = arith.addf %69, %74 : vector<16x192xf32>
    %cst_65 = arith.constant 0.000000e+00 : f32
    %76 = vector.broadcast %cst_65 : f32 to vector<16x128xf32>
    %c0_66 = arith.constant 0 : index
    %c4_67 = arith.constant 4 : index
    %c0_68 = arith.constant 0 : index
    %77 = vector.load %arg1[%c0_66, %c4_67, %c0_68] : memref<1x32x64xf32, #tpu.memory_space<vmem>>, vector<1x16x64xf32>
    %78 = vector.shape_cast %77 : vector<1x16x64xf32> to vector<16x64xf32>
    %79 = arith.truncf %78 : vector<16x64xf32> to vector<16x64xbf16>
    %c0_69 = arith.constant 0 : index
    %c0_70 = arith.constant 0 : index
    %c0_71 = arith.constant 0 : index
    %80 = vector.load %arg3[%c0_69, %c0_70, %c0_71] : memref<5x64x128xbf16, #tpu.memory_space<vmem>>, vector<1x64x128xbf16>
    %81 = vector.shape_cast %80 : vector<1x64x128xbf16> to vector<64x128xbf16>
    %cst_72 = arith.constant dense<0.000000e+00> : vector<16x128xf32>
    %82 = tpu.matmul %79, %81, %cst_72 {dimension_numbers = #tpu.dot_dimension_numbers<[1], [0], [0], [1], [0, 0, 1, 1], [], []>} : vector<16x64xbf16>, vector<64x128xbf16>, vector<16x128xf32> -> vector<16x128xf32>
    %83 = arith.addf %76, %82 : vector<16x128xf32>
    %c0_73 = arith.constant 0 : index
    %c6_74 = arith.constant 6 : index
    %c0_75 = arith.constant 0 : index
    %84 = vector.load %arg1[%c0_73, %c6_74, %c0_75] : memref<1x32x64xf32, #tpu.memory_space<vmem>>, vector<1x16x64xf32>
    %85 = vector.shape_cast %84 : vector<1x16x64xf32> to vector<16x64xf32>
    %86 = arith.truncf %85 : vector<16x64xf32> to vector<16x64xbf16>
    %c1_76 = arith.constant 1 : index
    %c0_77 = arith.constant 0 : index
    %c0_78 = arith.constant 0 : index
    %87 = vector.load %arg3[%c1_76, %c0_77, %c0_78] : memref<5x64x128xbf16, #tpu.memory_space<vmem>>, vector<1x64x128xbf16>
    %88 = vector.shape_cast %87 : vector<1x64x128xbf16> to vector<64x128xbf16>
    %cst_79 = arith.constant dense<0.000000e+00> : vector<16x128xf32>
    %89 = tpu.matmul %86, %88, %cst_79 {dimension_numbers = #tpu.dot_dimension_numbers<[1], [0], [0], [1], [0, 0, 1, 1], [], []>} : vector<16x64xbf16>, vector<64x128xbf16>, vector<16x128xf32> -> vector<16x128xf32>
    %90 = arith.addf %83, %89 : vector<16x128xf32>
    %c0_80 = arith.constant 0 : index
    %c8_81 = arith.constant 8 : index
    %c0_82 = arith.constant 0 : index
    %91 = vector.load %arg1[%c0_80, %c8_81, %c0_82] : memref<1x32x64xf32, #tpu.memory_space<vmem>>, vector<1x16x64xf32>
    %92 = vector.shape_cast %91 : vector<1x16x64xf32> to vector<16x64xf32>
    %93 = arith.truncf %92 : vector<16x64xf32> to vector<16x64xbf16>
    %c2_83 = arith.constant 2 : index
    %c0_84 = arith.constant 0 : index
    %c0_85 = arith.constant 0 : index
    %94 = vector.load %arg3[%c2_83, %c0_84, %c0_85] : memref<5x64x128xbf16, #tpu.memory_space<vmem>>, vector<1x64x128xbf16>
    %95 = vector.shape_cast %94 : vector<1x64x128xbf16> to vector<64x128xbf16>
    %cst_86 = arith.constant dense<0.000000e+00> : vector<16x128xf32>
    %96 = tpu.matmul %93, %95, %cst_86 {dimension_numbers = #tpu.dot_dimension_numbers<[1], [0], [0], [1], [0, 0, 1, 1], [], []>} : vector<16x64xbf16>, vector<64x128xbf16>, vector<16x128xf32> -> vector<16x128xf32>
    %97 = arith.addf %90, %96 : vector<16x128xf32>
    %c0_87 = arith.constant 0 : index
    %c10_88 = arith.constant 10 : index
    %c0_89 = arith.constant 0 : index
    %98 = vector.load %arg1[%c0_87, %c10_88, %c0_89] : memref<1x32x64xf32, #tpu.memory_space<vmem>>, vector<1x16x64xf32>
    %99 = vector.shape_cast %98 : vector<1x16x64xf32> to vector<16x64xf32>
    %100 = arith.truncf %99 : vector<16x64xf32> to vector<16x64xbf16>
    %c3_90 = arith.constant 3 : index
    %c0_91 = arith.constant 0 : index
    %c0_92 = arith.constant 0 : index
    %101 = vector.load %arg3[%c3_90, %c0_91, %c0_92] : memref<5x64x128xbf16, #tpu.memory_space<vmem>>, vector<1x64x128xbf16>
    %102 = vector.shape_cast %101 : vector<1x64x128xbf16> to vector<64x128xbf16>
    %cst_93 = arith.constant dense<0.000000e+00> : vector<16x128xf32>
    %103 = tpu.matmul %100, %102, %cst_93 {dimension_numbers = #tpu.dot_dimension_numbers<[1], [0], [0], [1], [0, 0, 1, 1], [], []>} : vector<16x64xbf16>, vector<64x128xbf16>, vector<16x128xf32> -> vector<16x128xf32>
    %104 = arith.addf %97, %103 : vector<16x128xf32>
    %c0_94 = arith.constant 0 : index
    %c12 = arith.constant 12 : index
    %c0_95 = arith.constant 0 : index
    %105 = vector.load %arg1[%c0_94, %c12, %c0_95] : memref<1x32x64xf32, #tpu.memory_space<vmem>>, vector<1x16x64xf32>
    %106 = vector.shape_cast %105 : vector<1x16x64xf32> to vector<16x64xf32>
    %107 = arith.truncf %106 : vector<16x64xf32> to vector<16x64xbf16>
    %c4_96 = arith.constant 4 : index
    %c0_97 = arith.constant 0 : index
    %c0_98 = arith.constant 0 : index
    %108 = vector.load %arg3[%c4_96, %c0_97, %c0_98] : memref<5x64x128xbf16, #tpu.memory_space<vmem>>, vector<1x64x128xbf16>
    %109 = vector.shape_cast %108 : vector<1x64x128xbf16> to vector<64x128xbf16>
    %cst_99 = arith.constant dense<0.000000e+00> : vector<16x128xf32>
    %110 = tpu.matmul %107, %109, %cst_99 {dimension_numbers = #tpu.dot_dimension_numbers<[1], [0], [0], [1], [0, 0, 1, 1], [], []>} : vector<16x64xbf16>, vector<64x128xbf16>, vector<16x128xf32> -> vector<16x128xf32>
    %111 = arith.addf %104, %110 : vector<16x128xf32>
    %c0_100 = arith.constant 0 : index
    %c0_101 = arith.constant 0 : index
    %112 = vector.load %arg9[%c0_100, %c0_101] : memref<1x128xf32, #tpu.memory_space<vmem>>, vector<1x128xf32>
    %113 = vector.broadcast %112 : vector<1x128xf32> to vector<16x128xf32>
    %114 = arith.addf %111, %113 : vector<16x128xf32>
    %cst_102 = arith.constant 0.000000e+00 : f32
    %115 = vector.broadcast %cst_102 : f32 to vector<16x128xf32>
    %116 = arith.maximumf %114, %115 : vector<16x128xf32>
    %cst_103 = arith.constant 0.000000e+00 : f32
    %117 = vector.broadcast %cst_103 : f32 to vector<4x128xf32>
    %c0_104 = arith.constant 0 : index
    %c0_105 = arith.constant 0 : index
    %118 = vector.load %arg14[%c0_104, %c0_105] : memref<24x128xf32, #tpu.memory_space<vmem>>, vector<4x128xf32>
    tpu.vector_store %arg14[%c0_104, %c0_105], %117 {strides = array<i32>} : memref<24x128xf32, #tpu.memory_space<vmem>>, vector<4x128xf32>,
    %c20 = arith.constant 20 : index
    %c0_106 = arith.constant 0 : index
    %119 = vector.load %arg14[%c20, %c0_106] : memref<24x128xf32, #tpu.memory_space<vmem>>, vector<4x128xf32>
    tpu.vector_store %arg14[%c20, %c0_106], %117 {strides = array<i32>} : memref<24x128xf32, #tpu.memory_space<vmem>>, vector<4x128xf32>,
    %c4_107 = arith.constant 4 : index
    %c0_108 = arith.constant 0 : index
    %120 = vector.load %arg14[%c4_107, %c0_108] : memref<24x128xf32, #tpu.memory_space<vmem>>, vector<16x128xf32>
    tpu.vector_store %arg14[%c4_107, %c0_108], %116 {strides = array<i32>} : memref<24x128xf32, #tpu.memory_space<vmem>>, vector<16x128xf32>,
    %c0_109 = arith.constant 0 : index
    %c0_110 = arith.constant 0 : index
    %121 = vector.load %arg14[%c0_109, %c0_110] : memref<24x128xf32, #tpu.memory_space<vmem>>, vector<16x128xf32>
    %122 = arith.truncf %121 : vector<16x128xf32> to vector<16x128xbf16>
    %c0_111 = arith.constant 0 : index
    %c0_112 = arith.constant 0 : index
    %c0_113 = arith.constant 0 : index
    %123 = vector.load %arg6[%c0_111, %c0_112, %c0_113] : memref<5x128x192xbf16, #tpu.memory_space<vmem>>, vector<1x128x192xbf16>
    %124 = vector.shape_cast %123 : vector<1x128x192xbf16> to vector<128x192xbf16>
    %cst_114 = arith.constant dense<0.000000e+00> : vector<16x192xf32>
    %125 = tpu.matmul %122, %124, %cst_114 {dimension_numbers = #tpu.dot_dimension_numbers<[1], [0], [0], [1], [0, 0, 1, 1], [], []>} : vector<16x128xbf16>, vector<128x192xbf16>, vector<16x192xf32> -> vector<16x192xf32>
    %126 = arith.addf %75, %125 : vector<16x192xf32>
    %c2_115 = arith.constant 2 : index
    %c0_116 = arith.constant 0 : index
    %127 = vector.load %arg14[%c2_115, %c0_116] : memref<24x128xf32, #tpu.memory_space<vmem>>, vector<16x128xf32>
    %128 = arith.truncf %127 : vector<16x128xf32> to vector<16x128xbf16>
    %c1_117 = arith.constant 1 : index
    %c0_118 = arith.constant 0 : index
    %c0_119 = arith.constant 0 : index
    %129 = vector.load %arg6[%c1_117, %c0_118, %c0_119] : memref<5x128x192xbf16, #tpu.memory_space<vmem>>, vector<1x128x192xbf16>
    %130 = vector.shape_cast %129 : vector<1x128x192xbf16> to vector<128x192xbf16>
    %cst_120 = arith.constant dense<0.000000e+00> : vector<16x192xf32>
    %131 = tpu.matmul %128, %130, %cst_120 {dimension_numbers = #tpu.dot_dimension_numbers<[1], [0], [0], [1], [0, 0, 1, 1], [], []>} : vector<16x128xbf16>, vector<128x192xbf16>, vector<16x192xf32> -> vector<16x192xf32>
    %132 = arith.addf %126, %131 : vector<16x192xf32>
    %c4_121 = arith.constant 4 : index
    %c0_122 = arith.constant 0 : index
    %133 = vector.load %arg14[%c4_121, %c0_122] : memref<24x128xf32, #tpu.memory_space<vmem>>, vector<16x128xf32>
    %134 = arith.truncf %133 : vector<16x128xf32> to vector<16x128xbf16>
    %c2_123 = arith.constant 2 : index
    %c0_124 = arith.constant 0 : index
    %c0_125 = arith.constant 0 : index
    %135 = vector.load %arg6[%c2_123, %c0_124, %c0_125] : memref<5x128x192xbf16, #tpu.memory_space<vmem>>, vector<1x128x192xbf16>
    %136 = vector.shape_cast %135 : vector<1x128x192xbf16> to vector<128x192xbf16>
    %cst_126 = arith.constant dense<0.000000e+00> : vector<16x192xf32>
    %137 = tpu.matmul %134, %136, %cst_126 {dimension_numbers = #tpu.dot_dimension_numbers<[1], [0], [0], [1], [0, 0, 1, 1], [], []>} : vector<16x128xbf16>, vector<128x192xbf16>, vector<16x192xf32> -> vector<16x192xf32>
    %138 = arith.addf %132, %137 : vector<16x192xf32>
    %c6_127 = arith.constant 6 : index
    %c0_128 = arith.constant 0 : index
    %139 = vector.load %arg14[%c6_127, %c0_128] : memref<24x128xf32, #tpu.memory_space<vmem>>, vector<16x128xf32>
    %140 = arith.truncf %139 : vector<16x128xf32> to vector<16x128xbf16>
    %c3_129 = arith.constant 3 : index
    %c0_130 = arith.constant 0 : index
    %c0_131 = arith.constant 0 : index
    %141 = vector.load %arg6[%c3_129, %c0_130, %c0_131] : memref<5x128x192xbf16, #tpu.memory_space<vmem>>, vector<1x128x192xbf16>
    %142 = vector.shape_cast %141 : vector<1x128x192xbf16> to vector<128x192xbf16>
    %cst_132 = arith.constant dense<0.000000e+00> : vector<16x192xf32>
    %143 = tpu.matmul %140, %142, %cst_132 {dimension_numbers = #tpu.dot_dimension_numbers<[1], [0], [0], [1], [0, 0, 1, 1], [], []>} : vector<16x128xbf16>, vector<128x192xbf16>, vector<16x192xf32> -> vector<16x192xf32>
    %144 = arith.addf %138, %143 : vector<16x192xf32>
    %c8_133 = arith.constant 8 : index
    %c0_134 = arith.constant 0 : index
    %145 = vector.load %arg14[%c8_133, %c0_134] : memref<24x128xf32, #tpu.memory_space<vmem>>, vector<16x128xf32>
    %146 = arith.truncf %145 : vector<16x128xf32> to vector<16x128xbf16>
    %c4_135 = arith.constant 4 : index
    %c0_136 = arith.constant 0 : index
    %c0_137 = arith.constant 0 : index
    %147 = vector.load %arg6[%c4_135, %c0_136, %c0_137] : memref<5x128x192xbf16, #tpu.memory_space<vmem>>, vector<1x128x192xbf16>
    %148 = vector.shape_cast %147 : vector<1x128x192xbf16> to vector<128x192xbf16>
    %cst_138 = arith.constant dense<0.000000e+00> : vector<16x192xf32>
    %149 = tpu.matmul %146, %148, %cst_138 {dimension_numbers = #tpu.dot_dimension_numbers<[1], [0], [0], [1], [0, 0, 1, 1], [], []>} : vector<16x128xbf16>, vector<128x192xbf16>, vector<16x192xf32> -> vector<16x192xf32>
    %150 = arith.addf %144, %149 : vector<16x192xf32>
    %cst_139 = arith.constant 0.000000e+00 : f32
    %151 = vector.broadcast %cst_139 : f32 to vector<20x160xf32>
    %c0_140 = arith.constant 0 : index
    %c0_141 = arith.constant 0 : index
    %c0_142 = arith.constant 0 : index
    %152 = vector.load %arg1[%c0_140, %c0_141, %c0_142] : memref<1x32x64xf32, #tpu.memory_space<vmem>>, vector<1x20x64xf32>
    %153 = vector.shape_cast %152 : vector<1x20x64xf32> to vector<20x64xf32>
    %154 = arith.truncf %153 : vector<20x64xf32> to vector<20x64xbf16>
    %c0_143 = arith.constant 0 : index
    %c0_144 = arith.constant 0 : index
    %c0_145 = arith.constant 0 : index
    %155 = vector.load %arg4[%c0_143, %c0_144, %c0_145] : memref<5x64x160xbf16, #tpu.memory_space<vmem>>, vector<1x64x160xbf16>
    %156 = vector.shape_cast %155 : vector<1x64x160xbf16> to vector<64x160xbf16>
    %cst_146 = arith.constant dense<0.000000e+00> : vector<20x160xf32>
    %157 = tpu.matmul %154, %156, %cst_146 {dimension_numbers = #tpu.dot_dimension_numbers<[1], [0], [0], [1], [0, 0, 1, 1], [], []>} : vector<20x64xbf16>, vector<64x160xbf16>, vector<20x160xf32> -> vector<20x160xf32>
    %158 = arith.addf %151, %157 : vector<20x160xf32>
    %c0_147 = arith.constant 0 : index
    %c3_148 = arith.constant 3 : index
    %c0_149 = arith.constant 0 : index
    %159 = vector.load %arg1[%c0_147, %c3_148, %c0_149] : memref<1x32x64xf32, #tpu.memory_space<vmem>>, vector<1x20x64xf32>
    %160 = vector.shape_cast %159 : vector<1x20x64xf32> to vector<20x64xf32>
    %161 = arith.truncf %160 : vector<20x64xf32> to vector<20x64xbf16>
    %c1_150 = arith.constant 1 : index
    %c0_151 = arith.constant 0 : index
    %c0_152 = arith.constant 0 : index
    %162 = vector.load %arg4[%c1_150, %c0_151, %c0_152] : memref<5x64x160xbf16, #tpu.memory_space<vmem>>, vector<1x64x160xbf16>
    %163 = vector.shape_cast %162 : vector<1x64x160xbf16> to vector<64x160xbf16>
    %cst_153 = arith.constant dense<0.000000e+00> : vector<20x160xf32>
    %164 = tpu.matmul %161, %163, %cst_153 {dimension_numbers = #tpu.dot_dimension_numbers<[1], [0], [0], [1], [0, 0, 1, 1], [], []>} : vector<20x64xbf16>, vector<64x160xbf16>, vector<20x160xf32> -> vector<20x160xf32>
    %165 = arith.addf %158, %164 : vector<20x160xf32>
    %c0_154 = arith.constant 0 : index
    %c6_155 = arith.constant 6 : index
    %c0_156 = arith.constant 0 : index
    %166 = vector.load %arg1[%c0_154, %c6_155, %c0_156] : memref<1x32x64xf32, #tpu.memory_space<vmem>>, vector<1x20x64xf32>
    %167 = vector.shape_cast %166 : vector<1x20x64xf32> to vector<20x64xf32>
    %168 = arith.truncf %167 : vector<20x64xf32> to vector<20x64xbf16>
    %c2_157 = arith.constant 2 : index
    %c0_158 = arith.constant 0 : index
    %c0_159 = arith.constant 0 : index
    %169 = vector.load %arg4[%c2_157, %c0_158, %c0_159] : memref<5x64x160xbf16, #tpu.memory_space<vmem>>, vector<1x64x160xbf16>
    %170 = vector.shape_cast %169 : vector<1x64x160xbf16> to vector<64x160xbf16>
    %cst_160 = arith.constant dense<0.000000e+00> : vector<20x160xf32>
    %171 = tpu.matmul %168, %170, %cst_160 {dimension_numbers = #tpu.dot_dimension_numbers<[1], [0], [0], [1], [0, 0, 1, 1], [], []>} : vector<20x64xbf16>, vector<64x160xbf16>, vector<20x160xf32> -> vector<20x160xf32>
    %172 = arith.addf %165, %171 : vector<20x160xf32>
    %c0_161 = arith.constant 0 : index
    %c9_162 = arith.constant 9 : index
    %c0_163 = arith.constant 0 : index
    %173 = vector.load %arg1[%c0_161, %c9_162, %c0_163] : memref<1x32x64xf32, #tpu.memory_space<vmem>>, vector<1x20x64xf32>
    %174 = vector.shape_cast %173 : vector<1x20x64xf32> to vector<20x64xf32>
    %175 = arith.truncf %174 : vector<20x64xf32> to vector<20x64xbf16>
    %c3_164 = arith.constant 3 : index
    %c0_165 = arith.constant 0 : index
    %c0_166 = arith.constant 0 : index
    %176 = vector.load %arg4[%c3_164, %c0_165, %c0_166] : memref<5x64x160xbf16, #tpu.memory_space<vmem>>, vector<1x64x160xbf16>
    %177 = vector.shape_cast %176 : vector<1x64x160xbf16> to vector<64x160xbf16>
    %cst_167 = arith.constant dense<0.000000e+00> : vector<20x160xf32>
    %178 = tpu.matmul %175, %177, %cst_167 {dimension_numbers = #tpu.dot_dimension_numbers<[1], [0], [0], [1], [0, 0, 1, 1], [], []>} : vector<20x64xbf16>, vector<64x160xbf16>, vector<20x160xf32> -> vector<20x160xf32>
    %179 = arith.addf %172, %178 : vector<20x160xf32>
    %c0_168 = arith.constant 0 : index
    %c12_169 = arith.constant 12 : index
    %c0_170 = arith.constant 0 : index
    %180 = vector.load %arg1[%c0_168, %c12_169, %c0_170] : memref<1x32x64xf32, #tpu.memory_space<vmem>>, vector<1x20x64xf32>
    %181 = vector.shape_cast %180 : vector<1x20x64xf32> to vector<20x64xf32>
    %182 = arith.truncf %181 : vector<20x64xf32> to vector<20x64xbf16>
    %c4_171 = arith.constant 4 : index
    %c0_172 = arith.constant 0 : index
    %c0_173 = arith.constant 0 : index
    %183 = vector.load %arg4[%c4_171, %c0_172, %c0_173] : memref<5x64x160xbf16, #tpu.memory_space<vmem>>, vector<1x64x160xbf16>
    %184 = vector.shape_cast %183 : vector<1x64x160xbf16> to vector<64x160xbf16>
    %cst_174 = arith.constant dense<0.000000e+00> : vector<20x160xf32>
    %185 = tpu.matmul %182, %184, %cst_174 {dimension_numbers = #tpu.dot_dimension_numbers<[1], [0], [0], [1], [0, 0, 1, 1], [], []>} : vector<20x64xbf16>, vector<64x160xbf16>, vector<20x160xf32> -> vector<20x160xf32>
    %186 = arith.addf %179, %185 : vector<20x160xf32>
    %c0_175 = arith.constant 0 : index
    %c0_176 = arith.constant 0 : index
    %187 = vector.load %arg10[%c0_175, %c0_176] : memref<1x160xf32, #tpu.memory_space<vmem>>, vector<1x160xf32>
    %188 = vector.broadcast %187 : vector<1x160xf32> to vector<20x160xf32>
    %189 = arith.addf %186, %188 : vector<20x160xf32>
    %cst_177 = arith.constant 0.000000e+00 : f32
    %190 = vector.broadcast %cst_177 : f32 to vector<20x160xf32>
    %191 = arith.maximumf %189, %190 : vector<20x160xf32>
    %cst_178 = arith.constant 0.000000e+00 : f32
    %192 = vector.broadcast %cst_178 : f32 to vector<4x160xf32>
    %c0_179 = arith.constant 0 : index
    %c0_180 = arith.constant 0 : index
    %193 = vector.load %arg15[%c0_179, %c0_180] : memref<28x160xf32, #tpu.memory_space<vmem>>, vector<4x160xf32>
    tpu.vector_store %arg15[%c0_179, %c0_180], %192 {strides = array<i32>} : memref<28x160xf32, #tpu.memory_space<vmem>>, vector<4x160xf32>,
    %c24 = arith.constant 24 : index
    %c0_181 = arith.constant 0 : index
    %194 = vector.load %arg15[%c24, %c0_181] : memref<28x160xf32, #tpu.memory_space<vmem>>, vector<4x160xf32>
    tpu.vector_store %arg15[%c24, %c0_181], %192 {strides = array<i32>} : memref<28x160xf32, #tpu.memory_space<vmem>>, vector<4x160xf32>,
    %c4_182 = arith.constant 4 : index
    %c0_183 = arith.constant 0 : index
    %195 = vector.load %arg15[%c4_182, %c0_183] : memref<28x160xf32, #tpu.memory_space<vmem>>, vector<20x160xf32>
    tpu.vector_store %arg15[%c4_182, %c0_183], %191 {strides = array<i32>} : memref<28x160xf32, #tpu.memory_space<vmem>>, vector<20x160xf32>,
    %c0_184 = arith.constant 0 : index
    %c0_185 = arith.constant 0 : index
    %196 = vector.load %arg15[%c0_184, %c0_185] : memref<28x160xf32, #tpu.memory_space<vmem>>, vector<16x160xf32>
    %197 = arith.truncf %196 : vector<16x160xf32> to vector<16x160xbf16>
    %c0_186 = arith.constant 0 : index
    %c0_187 = arith.constant 0 : index
    %c0_188 = arith.constant 0 : index
    %198 = vector.load %arg7[%c0_186, %c0_187, %c0_188] : memref<5x160x192xbf16, #tpu.memory_space<vmem>>, vector<1x160x192xbf16>
    %199 = vector.shape_cast %198 : vector<1x160x192xbf16> to vector<160x192xbf16>
    %cst_189 = arith.constant dense<0.000000e+00> : vector<16x192xf32>
    %200 = tpu.matmul %197, %199, %cst_189 {dimension_numbers = #tpu.dot_dimension_numbers<[1], [0], [0], [1], [0, 0, 1, 1], [], []>} : vector<16x160xbf16>, vector<160x192xbf16>, vector<16x192xf32> -> vector<16x192xf32>
    %201 = arith.addf %150, %200 : vector<16x192xf32>
    %c3_190 = arith.constant 3 : index
    %c0_191 = arith.constant 0 : index
    %202 = vector.load %arg15[%c3_190, %c0_191] : memref<28x160xf32, #tpu.memory_space<vmem>>, vector<16x160xf32>
    %203 = arith.truncf %202 : vector<16x160xf32> to vector<16x160xbf16>
    %c1_192 = arith.constant 1 : index
    %c0_193 = arith.constant 0 : index
    %c0_194 = arith.constant 0 : index
    %204 = vector.load %arg7[%c1_192, %c0_193, %c0_194] : memref<5x160x192xbf16, #tpu.memory_space<vmem>>, vector<1x160x192xbf16>
    %205 = vector.shape_cast %204 : vector<1x160x192xbf16> to vector<160x192xbf16>
    %cst_195 = arith.constant dense<0.000000e+00> : vector<16x192xf32>
    %206 = tpu.matmul %203, %205, %cst_195 {dimension_numbers = #tpu.dot_dimension_numbers<[1], [0], [0], [1], [0, 0, 1, 1], [], []>} : vector<16x160xbf16>, vector<160x192xbf16>, vector<16x192xf32> -> vector<16x192xf32>
    %207 = arith.addf %201, %206 : vector<16x192xf32>
    %c6_196 = arith.constant 6 : index
    %c0_197 = arith.constant 0 : index
    %208 = vector.load %arg15[%c6_196, %c0_197] : memref<28x160xf32, #tpu.memory_space<vmem>>, vector<16x160xf32>
    %209 = arith.truncf %208 : vector<16x160xf32> to vector<16x160xbf16>
    %c2_198 = arith.constant 2 : index
    %c0_199 = arith.constant 0 : index
    %c0_200 = arith.constant 0 : index
    %210 = vector.load %arg7[%c2_198, %c0_199, %c0_200] : memref<5x160x192xbf16, #tpu.memory_space<vmem>>, vector<1x160x192xbf16>
    %211 = vector.shape_cast %210 : vector<1x160x192xbf16> to vector<160x192xbf16>
    %cst_201 = arith.constant dense<0.000000e+00> : vector<16x192xf32>
    %212 = tpu.matmul %209, %211, %cst_201 {dimension_numbers = #tpu.dot_dimension_numbers<[1], [0], [0], [1], [0, 0, 1, 1], [], []>} : vector<16x160xbf16>, vector<160x192xbf16>, vector<16x192xf32> -> vector<16x192xf32>
    %213 = arith.addf %207, %212 : vector<16x192xf32>
    %c9_202 = arith.constant 9 : index
    %c0_203 = arith.constant 0 : index
    %214 = vector.load %arg15[%c9_202, %c0_203] : memref<28x160xf32, #tpu.memory_space<vmem>>, vector<16x160xf32>
    %215 = arith.truncf %214 : vector<16x160xf32> to vector<16x160xbf16>
    %c3_204 = arith.constant 3 : index
    %c0_205 = arith.constant 0 : index
    %c0_206 = arith.constant 0 : index
    %216 = vector.load %arg7[%c3_204, %c0_205, %c0_206] : memref<5x160x192xbf16, #tpu.memory_space<vmem>>, vector<1x160x192xbf16>
    %217 = vector.shape_cast %216 : vector<1x160x192xbf16> to vector<160x192xbf16>
    %cst_207 = arith.constant dense<0.000000e+00> : vector<16x192xf32>
    %218 = tpu.matmul %215, %217, %cst_207 {dimension_numbers = #tpu.dot_dimension_numbers<[1], [0], [0], [1], [0, 0, 1, 1], [], []>} : vector<16x160xbf16>, vector<160x192xbf16>, vector<16x192xf32> -> vector<16x192xf32>
    %219 = arith.addf %213, %218 : vector<16x192xf32>
    %c12_208 = arith.constant 12 : index
    %c0_209 = arith.constant 0 : index
    %220 = vector.load %arg15[%c12_208, %c0_209] : memref<28x160xf32, #tpu.memory_space<vmem>>, vector<16x160xf32>
    %221 = arith.truncf %220 : vector<16x160xf32> to vector<16x160xbf16>
    %c4_210 = arith.constant 4 : index
    %c0_211 = arith.constant 0 : index
    %c0_212 = arith.constant 0 : index
    %222 = vector.load %arg7[%c4_210, %c0_211, %c0_212] : memref<5x160x192xbf16, #tpu.memory_space<vmem>>, vector<1x160x192xbf16>
    %223 = vector.shape_cast %222 : vector<1x160x192xbf16> to vector<160x192xbf16>
    %cst_213 = arith.constant dense<0.000000e+00> : vector<16x192xf32>
    %224 = tpu.matmul %221, %223, %cst_213 {dimension_numbers = #tpu.dot_dimension_numbers<[1], [0], [0], [1], [0, 0, 1, 1], [], []>} : vector<16x160xbf16>, vector<160x192xbf16>, vector<16x192xf32> -> vector<16x192xf32>
    %225 = arith.addf %219, %224 : vector<16x192xf32>
    %c0_214 = arith.constant 0 : index
    %c0_215 = arith.constant 0 : index
    %226 = vector.load %arg11[%c0_214, %c0_215] : memref<1x192xf32, #tpu.memory_space<vmem>>, vector<1x192xf32>
    %227 = vector.broadcast %226 : vector<1x192xf32> to vector<16x192xf32>
    %228 = arith.addf %225, %227 : vector<16x192xf32>
    %cst_216 = arith.constant 0.000000e+00 : f32
    %229 = vector.broadcast %cst_216 : f32 to vector<16x192xf32>
    %230 = arith.maximumf %228, %229 : vector<16x192xf32>
    %c0_217 = arith.constant 0 : index
    %c0_218 = arith.constant 0 : index
    %c0_219 = arith.constant 0 : index
    %231 = vector.load %arg12[%c0_217, %c0_218, %c0_219] : memref<1x16x192xf32, #tpu.memory_space<vmem>>, vector<1x16x192xf32>
    %232 = vector.shape_cast %231 : vector<1x16x192xf32> to vector<16x192xf32>
    %233 = vector.shape_cast %230 : vector<16x192xf32> to vector<1x16x192xf32>
    tpu.vector_store %arg12[%c0_217, %c0_218, %c0_219], %233 {strides = array<i32>} : memref<1x16x192xf32, #tpu.memory_space<vmem>>, vector<1x16x192xf32>,
    return
  }
  func.func @transform_0(%arg0: i32) -> (i32, i32, i32) {
    %c0_i32 = arith.constant 0 : i32
    %c0_i32_0 = arith.constant 0 : i32
    %c0_i32_1 = arith.constant 0 : i32
    return %arg0, %c0_i32, %c0_i32_0 : i32, i32, i32
  }
  func.func @transform_1(%arg0: i32) -> (i32, i32, i32) {
    %c0_i32 = arith.constant 0 : i32
    %c0_i32_0 = arith.constant 0 : i32
    %c0_i32_1 = arith.constant 0 : i32
    %c0_i32_2 = arith.constant 0 : i32
    return %c0_i32, %c0_i32_0, %c0_i32_1 : i32, i32, i32
  }
  func.func @transform_2(%arg0: i32) -> (i32, i32, i32) {
    %c0_i32 = arith.constant 0 : i32
    %c0_i32_0 = arith.constant 0 : i32
    %c0_i32_1 = arith.constant 0 : i32
    %c0_i32_2 = arith.constant 0 : i32
    return %c0_i32, %c0_i32_0, %c0_i32_1 : i32, i32, i32
  }
  func.func @transform_3(%arg0: i32) -> (i32, i32, i32) {
    %c0_i32 = arith.constant 0 : i32
    %c0_i32_0 = arith.constant 0 : i32
    %c0_i32_1 = arith.constant 0 : i32
    %c0_i32_2 = arith.constant 0 : i32
    return %c0_i32, %c0_i32_0, %c0_i32_1 : i32, i32, i32
  }
  func.func @transform_4(%arg0: i32) -> (i32, i32, i32) {
    %c0_i32 = arith.constant 0 : i32
    %c0_i32_0 = arith.constant 0 : i32
    %c0_i32_1 = arith.constant 0 : i32
    %c0_i32_2 = arith.constant 0 : i32
    return %c0_i32, %c0_i32_0, %c0_i32_1 : i32, i32, i32
  }
  func.func @transform_5(%arg0: i32) -> (i32, i32, i32) {
    %c0_i32 = arith.constant 0 : i32
    %c0_i32_0 = arith.constant 0 : i32
    %c0_i32_1 = arith.constant 0 : i32
    %c0_i32_2 = arith.constant 0 : i32
    return %c0_i32, %c0_i32_0, %c0_i32_1 : i32, i32, i32
  }
  func.func @transform_6(%arg0: i32) -> (i32, i32, i32) {
    %c0_i32 = arith.constant 0 : i32
    %c0_i32_0 = arith.constant 0 : i32
    %c0_i32_1 = arith.constant 0 : i32
    %c0_i32_2 = arith.constant 0 : i32
    return %c0_i32, %c0_i32_0, %c0_i32_1 : i32, i32, i32
  }
  func.func @transform_7(%arg0: i32) -> (i32, i32) {
    %c0_i32 = arith.constant 0 : i32
    %c0_i32_0 = arith.constant 0 : i32
    %c0_i32_1 = arith.constant 0 : i32
    return %c0_i32, %c0_i32_0 : i32, i32
  }
  func.func @transform_8(%arg0: i32) -> (i32, i32) {
    %c0_i32 = arith.constant 0 : i32
    %c0_i32_0 = arith.constant 0 : i32
    %c0_i32_1 = arith.constant 0 : i32
    return %c0_i32, %c0_i32_0 : i32, i32
  }
  func.func @transform_9(%arg0: i32) -> (i32, i32) {
    %c0_i32 = arith.constant 0 : i32
    %c0_i32_0 = arith.constant 0 : i32
    %c0_i32_1 = arith.constant 0 : i32
    return %c0_i32, %c0_i32_0 : i32, i32
  }
  func.func @transform_10(%arg0: i32) -> (i32, i32) {
    %c0_i32 = arith.constant 0 : i32
    %c0_i32_0 = arith.constant 0 : i32
    %c0_i32_1 = arith.constant 0 : i32
    return %c0_i32, %c0_i32_0 : i32, i32
  }
  func.func @transform_11(%arg0: i32) -> (i32, i32, i32) {
    %c0_i32 = arith.constant 0 : i32
    %c0_i32_0 = arith.constant 0 : i32
    %c0_i32_1 = arith.constant 0 : i32
    return %arg0, %c0_i32, %c0_i32_0 : i32, i32, i32
  }
}

</mosaic_0001>

<llo_original>
// kernel: tpu_custom_call.1
$region0: #{tpu_custom_call.1}
  #allocation0 [shape = 'u32[]', space=smem, size = 0x4, offset = 0x4, fixed_abs, tag = 'smem constant byte address 0x4 - core index']
  #allocation1 [shape = 'u32[144,128]{1,0:T(1,128)}', space=vmem, size = 0x12000, scoped, tag = 'internal scratch']
  #allocation2 [shape = 'f32[20,128]{1,0:T(8,128)}', space=vmem, size = 0x3000, scoped, tag = 'scratch operand']
  #allocation3 [shape = 'f32[24,128]{1,0:T(8,128)}', space=vmem, size = 0x3000, scoped, tag = 'scratch operand']
  #allocation4 [shape = 'f32[28,160]{1,0:T(8,128)}', space=vmem, size = 0x8000, scoped, tag = 'scratch operand']
  %s0 = inlined_call_operand.vmem [shape: f32[2,32,64], index: 0, kind: input, shape index: {}]
  %s1 = inlined_call_operand.vmem [shape: bf16[5,64,128], index: 1, kind: input, shape index: {}]
  %s2 = inlined_call_operand.vmem [shape: bf16[5,64,128], index: 2, kind: input, shape index: {}]
  %s3 = inlined_call_operand.vmem [shape: bf16[5,64,160], index: 3, kind: input, shape index: {}]
  %s4 = inlined_call_operand.vmem [shape: bf16[5,128,192], index: 4, kind: input, shape index: {}]
  %s5 = inlined_call_operand.vmem [shape: bf16[5,128,192], index: 5, kind: input, shape index: {}]
  %s6 = inlined_call_operand.vmem [shape: bf16[5,160,192], index: 6, kind: input, shape index: {}]
  %s7 = inlined_call_operand.vmem [shape: f32[1,128], index: 7, kind: input, shape index: {}]
  %s8 = inlined_call_operand.vmem [shape: f32[1,128], index: 8, kind: input, shape index: {}]
  %s9 = inlined_call_operand.vmem [shape: f32[1,160], index: 9, kind: input, shape index: {}]
  %s10 = inlined_call_operand.vmem [shape: f32[1,192], index: 10, kind: input, shape index: {}]
  %s11 = inlined_call_operand.hbm [shape: f32[2,16,192], index: 11, kind: output, shape index: {}]
  %s12 = sld [smem:[#allocation0]]
  $region77: #{tpu_custom_call.1} parent=0
    _
  %s14 = ssub.s32 1, %s12
  %s15 = scalar_select 0, %s14, %s12
  $region1: #{tpu_custom_call.1} parent=0
    #allocation5 [shape = 'u8[32768]{0}', space=vmem, size = 0x8000, scoped, tag = 'output window, operand 0']
    #allocation6 [shape = 's32[2]{0}', space=sflag, size = 0x8, scoped, tag = 'scoped memory for tpu_custom_call.1']
    %16 = vsyncpa [#allocation6], 0
    %s17 = scalar_lea.sflag [#allocation6], 1
    %18 = vsyncpa %s17, 0
    loop: start=0, step=1, limit=4
    $region2: #{tpu_custom_call.1} parent=1 // loop_pre_header
      _
    $region3: #{tpu_custom_call.1} parent=1 // loop_header
      %s20 = sphi 0, %s24
      %p21 = scmp.ge.s32.totalorder %s20, 4
      %s30 = sphi 0, %s32
      %s33 = sphi 0, %s30
      %s34 = sphi 0, %s33
      %s50 = sphi 0, %s34
      %s54 = sphi 0, %s54
      %s56 = sphi 0, %s54
      %s57 = sphi 0, %s56
      %s71 = sphi 0, %s57
      %s75 = sphi 0, %s75
      %s77 = sphi 0, %s75
      %s78 = sphi 0, %s77
      %s92 = sphi 0, %s78
      %s96 = sphi 0, %s96
      %s98 = sphi 0, %s96
      %s99 = sphi 0, %s98
      %s113 = sphi 0, %s99
      %s117 = sphi 0, %s117
      %s119 = sphi 0, %s117
      %s120 = sphi 0, %s119
      %s134 = sphi 0, %s120
      %s138 = sphi 0, %s138
      %s140 = sphi 0, %s138
      %s141 = sphi 0, %s140
      %s155 = sphi 0, %s141
      %s159 = sphi 0, %s159
      %s161 = sphi 0, %s159
      %s162 = sphi 0, %s161
      %s176 = sphi 0, %s162
      %s180 = sphi 0, %s180
      %s182 = sphi 0, %s180
      %s183 = sphi 0, %s182
      %s197 = sphi 0, %s183
      %s201 = sphi 0, %s201
      %s203 = sphi 0, %s201
      %s204 = sphi 0, %s203
      %s218 = sphi 0, %s204
      %s222 = sphi 0, %s222
      %s224 = sphi 0, %s222
      %s225 = sphi 0, %s224
      %s239 = sphi 0, %s225
      %s243 = sphi 0, %s243
      %s245 = sphi 0, %s243
      %s246 = sphi 0, %s245
      %s260 = sphi 0, %s246
      %s266 = sphi 0, %s268
      %s269 = sphi 0, %s266
      %s270 = sphi 0, %s269
      %s286 = sphi 0, %s270
    $region4: #{tpu_custom_call.1} parent=1 // loop_header_branch
      %23 = sbr.rel (%p21) target = $region8
    $region5: #{tpu_custom_call.1} parent=1 // loop_body
      %s25 = ssub.s32 %s20, 1
      %s26 = ssub.s32 %s20, 2
      %s27 = sadd.s32 %s20, 1
      %s28 = ssub.s32 %s20, %s27
      %p29 = scmp.eq.s32.totalorder %s28, 0
      %s31 = sadd.s32 %s30, 1
      %s32 = scalar_select %p29, %s30, %s31
      %p35 = pneg %p29
      %p36 = scmp.eq.s32.totalorder %s20, 1
      %p37 = por %p35, %p36
      %p38 = scmp.ne.s32.totalorder %s30, %s33
      %p39 = scmp.eq.s32.totalorder %s20, 0
      %p40 = por %p38, %p39
      %p41 = scmp.ne.s32.totalorder %s30, %s33
      %p42 = scmp.eq.s32.totalorder %s25, 1
      %p43 = por %p41, %p42
      %p44 = scmp.ne.s32.totalorder %s33, %s34
      %p45 = scmp.eq.s32.totalorder %s25, 0
      %p46 = por %p44, %p45
      %p47 = scmp.ne.s32.totalorder %s33, %s34
      %p48 = scmp.eq.s32.totalorder %s26, 1
      %p49 = por %p47, %p48
      %p51 = scmp.ne.s32.totalorder %s34, %s50
      %p52 = scmp.eq.s32.totalorder %s26, 0
      %p53 = por %p51, %p52
      %s55 = sadd.s32 %s54, 1
      %p58 = scmp.eq.s32.totalorder %s20, 1
      %p59 = scmp.ne.s32.totalorder %s54, %s56
      %p60 = scmp.eq.s32.totalorder %s20, 0
      %p61 = por %p59, %p60
      %p62 = scmp.ne.s32.totalorder %s54, %s56
      %p63 = scmp.eq.s32.totalorder %s25, 1
      %p64 = por %p62, %p63
      %p65 = scmp.ne.s32.totalorder %s56, %s57
      %p66 = scmp.eq.s32.totalorder %s25, 0
      %p67 = por %p65, %p66
      %p68 = scmp.ne.s32.totalorder %s56, %s57
      %p69 = scmp.eq.s32.totalorder %s26, 1
      %p70 = por %p68, %p69
      %p72 = scmp.ne.s32.totalorder %s57, %s71
      %p73 = scmp.eq.s32.totalorder %s26, 0
      %p74 = por %p72, %p73
      %s76 = sadd.s32 %s75, 1
      %p79 = scmp.eq.s32.totalorder %s20, 1
      %p80 = scmp.ne.s32.totalorder %s75, %s77
      %p81 = scmp.eq.s32.totalorder %s20, 0
      %p82 = por %p80, %p81
      %p83 = scmp.ne.s32.totalorder %s75, %s77
      %p84 = scmp.eq.s32.totalorder %s25, 1
      %p85 = por %p83, %p84
      %p86 = scmp.ne.s32.totalorder %s77, %s78
      %p87 = scmp.eq.s32.totalorder %s25, 0
      %p88 = por %p86, %p87
      %p89 = scmp.ne.s32.totalorder %s77, %s78
      %p90 = scmp.eq.s32.totalorder %s26, 1
      %p91 = por %p89, %p90
      %p93 = scmp.ne.s32.totalorder %s78, %s92
      %p94 = scmp.eq.s32.totalorder %s26, 0
      %p95 = por %p93, %p94
      %s97 = sadd.s32 %s96, 1
      %p100 = scmp.eq.s32.totalorder %s20, 1
      %p101 = scmp.ne.s32.totalorder %s96, %s98
      %p102 = scmp.eq.s32.totalorder %s20, 0
      %p103 = por %p101, %p102
      %p104 = scmp.ne.s32.totalorder %s96, %s98
      %p105 = scmp.eq.s32.totalorder %s25, 1
      %p106 = por %p104, %p105
      %p107 = scmp.ne.s32.totalorder %s98, %s99
      %p108 = scmp.eq.s32.totalorder %s25, 0
      %p109 = por %p107, %p108
      %p110 = scmp.ne.s32.totalorder %s98, %s99
      %p111 = scmp.eq.s32.totalorder %s26, 1
      %p112 = por %p110, %p111
      %p114 = scmp.ne.s32.totalorder %s99, %s113
      %p115 = scmp.eq.s32.totalorder %s26, 0
      %p116 = por %p114, %p115
      %s118 = sadd.s32 %s117, 1
      %p121 = scmp.eq.s32.totalorder %s20, 1
      %p122 = scmp.ne.s32.totalorder %s117, %s119
      %p123 = scmp.eq.s32.totalorder %s20, 0
      %p124 = por %p122, %p123
      %p125 = scmp.ne.s32.totalorder %s117, %s119
      %p126 = scmp.eq.s32.totalorder %s25, 1
      %p127 = por %p125, %p126
      %p128 = scmp.ne.s32.totalorder %s119, %s120
      %p129 = scmp.eq.s32.totalorder %s25, 0
      %p130 = por %p128, %p129
      %p131 = scmp.ne.s32.totalorder %s119, %s120
      %p132 = scmp.eq.s32.totalorder %s26, 1
      %p133 = por %p131, %p132
      %p135 = scmp.ne.s32.totalorder %s120, %s134
      %p136 = scmp.eq.s32.totalorder %s26, 0
      %p137 = por %p135, %p136
      %s139 = sadd.s32 %s138, 1
      %p142 = scmp.eq.s32.totalorder %s20, 1
      %p143 = scmp.ne.s32.totalorder %s138, %s140
      %p144 = scmp.eq.s32.totalorder %s20, 0
      %p145 = por %p143, %p144
      %p146 = scmp.ne.s32.totalorder %s138, %s140
      %p147 = scmp.eq.s32.totalorder %s25, 1
      %p148 = por %p146, %p147
      %p149 = scmp.ne.s32.totalorder %s140, %s141
      %p150 = scmp.eq.s32.totalorder %s25, 0
      %p151 = por %p149, %p150
      %p152 = scmp.ne.s32.totalorder %s140, %s141
      %p153 = scmp.eq.s32.totalorder %s26, 1
      %p154 = por %p152, %p153
      %p156 = scmp.ne.s32.totalorder %s141, %s155
      %p157 = scmp.eq.s32.totalorder %s26, 0
      %p158 = por %p156, %p157
      %s160 = sadd.s32 %s159, 1
      %p163 = scmp.eq.s32.totalorder %s20, 1
      %p164 = scmp.ne.s32.totalorder %s159, %s161
      %p165 = scmp.eq.s32.totalorder %s20, 0
      %p166 = por %p164, %p165
      %p167 = scmp.ne.s32.totalorder %s159, %s161
      %p168 = scmp.eq.s32.totalorder %s25, 1
      %p169 = por %p167, %p168
      %p170 = scmp.ne.s32.totalorder %s161, %s162
      %p171 = scmp.eq.s32.totalorder %s25, 0
      %p172 = por %p170, %p171
      %p173 = scmp.ne.s32.totalorder %s161, %s162
      %p174 = scmp.eq.s32.totalorder %s26, 1
      %p175 = por %p173, %p174
      %p177 = scmp.ne.s32.totalorder %s162, %s176
      %p178 = scmp.eq.s32.totalorder %s26, 0
      %p179 = por %p177, %p178
      %s181 = sadd.s32 %s180, 1
      %p184 = scmp.eq.s32.totalorder %s20, 1
      %p185 = scmp.ne.s32.totalorder %s180, %s182
      %p186 = scmp.eq.s32.totalorder %s20, 0
      %p187 = por %p185, %p186
      %p188 = scmp.ne.s32.totalorder %s180, %s182
      %p189 = scmp.eq.s32.totalorder %s25, 1
      %p190 = por %p188, %p189
      %p191 = scmp.ne.s32.totalorder %s182, %s183
      %p192 = scmp.eq.s32.totalorder %s25, 0
      %p193 = por %p191, %p192
      %p194 = scmp.ne.s32.totalorder %s182, %s183
      %p195 = scmp.eq.s32.totalorder %s26, 1
      %p196 = por %p194, %p195
      %p198 = scmp.ne.s32.totalorder %s183, %s197
      %p199 = scmp.eq.s32.totalorder %s26, 0
      %p200 = por %p198, %p199
      %s202 = sadd.s32 %s201, 1
      %p205 = scmp.eq.s32.totalorder %s20, 1
      %p206 = scmp.ne.s32.totalorder %s201, %s203
      %p207 = scmp.eq.s32.totalorder %s20, 0
      %p208 = por %p206, %p207
      %p209 = scmp.ne.s32.totalorder %s201, %s203
      %p210 = scmp.eq.s32.totalorder %s25, 1
      %p211 = por %p209, %p210
      %p212 = scmp.ne.s32.totalorder %s203, %s204
      %p213 = scmp.eq.s32.totalorder %s25, 0
      %p214 = por %p212, %p213
      %p215 = scmp.ne.s32.totalorder %s203, %s204
      %p216 = scmp.eq.s32.totalorder %s26, 1
      %p217 = por %p215, %p216
      %p219 = scmp.ne.s32.totalorder %s204, %s218
      %p220 = scmp.eq.s32.totalorder %s26, 0
      %p221 = por %p219, %p220
      %s223 = sadd.s32 %s222, 1
      %p226 = scmp.eq.s32.totalorder %s20, 1
      %p227 = scmp.ne.s32.totalorder %s222, %s224
      %p228 = scmp.eq.s32.totalorder %s20, 0
      %p229 = por %p227, %p228
      %p230 = scmp.ne.s32.totalorder %s222, %s224
      %p231 = scmp.eq.s32.totalorder %s25, 1
      %p232 = por %p230, %p231
      %p233 = scmp.ne.s32.totalorder %s224, %s225
      %p234 = scmp.eq.s32.totalorder %s25, 0
      %p235 = por %p233, %p234
      %p236 = scmp.ne.s32.totalorder %s224, %s225
      %p237 = scmp.eq.s32.totalorder %s26, 1
      %p238 = por %p236, %p237
      %p240 = scmp.ne.s32.totalorder %s225, %s239
      %p241 = scmp.eq.s32.totalorder %s26, 0
      %p242 = por %p240, %p241
      %s244 = sadd.s32 %s243, 1
      %p247 = scmp.eq.s32.totalorder %s20, 1
      %p248 = scmp.ne.s32.totalorder %s243, %s245
      %p249 = scmp.eq.s32.totalorder %s20, 0
      %p250 = por %p248, %p249
      %p251 = scmp.ne.s32.totalorder %s243, %s245
      %p252 = scmp.eq.s32.totalorder %s25, 1
      %p253 = por %p251, %p252
      %p254 = scmp.ne.s32.totalorder %s245, %s246
      %p255 = scmp.eq.s32.totalorder %s25, 0
      %p256 = por %p254, %p255
      %p257 = scmp.ne.s32.totalorder %s245, %s246
      %p258 = scmp.eq.s32.totalorder %s26, 1
      %p259 = por %p257, %p258
      %p261 = scmp.ne.s32.totalorder %s246, %s260
      %p262 = scmp.eq.s32.totalorder %s26, 0
      %p263 = por %p261, %p262
      %s264 = ssub.s32 %s20, %s27
      %p265 = scmp.eq.s32.totalorder %s264, 0
      %s267 = sadd.s32 %s266, 1
      %s268 = scalar_select %p265, %s266, %s267
      %p271 = pneg %p265
      %p272 = scmp.eq.s32.totalorder %s20, 1
      %p273 = por %p271, %p272
      %p274 = scmp.ne.s32.totalorder %s266, %s269
      %p275 = scmp.eq.s32.totalorder %s20, 0
      %p276 = por %p274, %p275
      %p277 = scmp.ne.s32.totalorder %s266, %s269
      %p278 = scmp.eq.s32.totalorder %s25, 1
      %p279 = por %p277, %p278
      %p280 = scmp.ne.s32.totalorder %s269, %s270
      %p281 = scmp.eq.s32.totalorder %s25, 0
      %p282 = por %p280, %p281
      %p283 = scmp.ne.s32.totalorder %s269, %s270
      %p284 = scmp.eq.s32.totalorder %s26, 1
      %p285 = por %p283, %p284
      %p287 = scmp.ne.s32.totalorder %s270, %s286
      %p288 = scmp.eq.s32.totalorder %s26, 0
      %p289 = por %p287, %p288
      %p290 = scmp.le.s32.totalorder 1, %s20
      %p291 = scmp.lt.s32.totalorder %s20, 3
      %p292 = pnand %p290, %p291
      %p293 = pneg %p292
      // Predicated region
      $region9: #{tpu_custom_call.1} parent=5 // pred_check
        _
      $region10: #{tpu_custom_call.1} parent=5 // pred_check_branch
        %295 = sbr.rel (%p292) target = $region12
      $region11: #{tpu_custom_call.1} parent=5 // pred_region
        %s296 = ssub.s32 %s20, 1
        // Predicated region
        $region13: #{tpu_custom_call.1} parent=11 // pred_check
          %p297 = pneg %p67
        $region14: #{tpu_custom_call.1} parent=11 // pred_check_branch
          %299 = sbr.rel (%p297) target = $region16
        $region15: #{tpu_custom_call.1} parent=11 // pred_region
          _
        $region16: #{tpu_custom_call.1} parent=11 // pred_fallthru
          _
        // Predicated region
        $region17: #{tpu_custom_call.1} parent=11 // pred_check
          %p300 = pneg %p88
        $region18: #{tpu_custom_call.1} parent=11 // pred_check_branch
          %302 = sbr.rel (%p300) target = $region20
        $region19: #{tpu_custom_call.1} parent=11 // pred_region
          _
        $region20: #{tpu_custom_call.1} parent=11 // pred_fallthru
          _
        // Predicated region
        $region21: #{tpu_custom_call.1} parent=11 // pred_check
          %p303 = pneg %p109
        $region22: #{tpu_custom_call.1} parent=11 // pred_check_branch
          %305 = sbr.rel (%p303) target = $region24
        $region23: #{tpu_custom_call.1} parent=11 // pred_region
          _
        $region24: #{tpu_custom_call.1} parent=11 // pred_fallthru
          _
        // Predicated region
        $region25: #{tpu_custom_call.1} parent=11 // pred_check
          %p306 = pneg %p130
        $region26: #{tpu_custom_call.1} parent=11 // pred_check_branch
          %308 = sbr.rel (%p306) target = $region28
        $region27: #{tpu_custom_call.1} parent=11 // pred_region
          _
        $region28: #{tpu_custom_call.1} parent=11 // pred_fallthru
          _
        // Predicated region
        $region29: #{tpu_custom_call.1} parent=11 // pred_check
          %p309 = pneg %p151
        $region30: #{tpu_custom_call.1} parent=11 // pred_check_branch
          %311 = sbr.rel (%p309) target = $region32
        $region31: #{tpu_custom_call.1} parent=11 // pred_region
          _
        $region32: #{tpu_custom_call.1} parent=11 // pred_fallthru
          _
        // Predicated region
        $region33: #{tpu_custom_call.1} parent=11 // pred_check
          %p312 = pneg %p172
        $region34: #{tpu_custom_call.1} parent=11 // pred_check_branch
          %314 = sbr.rel (%p312) target = $region36
        $region35: #{tpu_custom_call.1} parent=11 // pred_region
          _
        $region36: #{tpu_custom_call.1} parent=11 // pred_fallthru
          _
        // Predicated region
        $region37: #{tpu_custom_call.1} parent=11 // pred_check
          %p315 = pneg %p193
        $region38: #{tpu_custom_call.1} parent=11 // pred_check_branch
          %317 = sbr.rel (%p315) target = $region40
        $region39: #{tpu_custom_call.1} parent=11 // pred_region
          _
        $region40: #{tpu_custom_call.1} parent=11 // pred_fallthru
          _
        // Predicated region
        $region41: #{tpu_custom_call.1} parent=11 // pred_check
          %p318 = pneg %p214
        $region42: #{tpu_custom_call.1} parent=11 // pred_check_branch
          %320 = sbr.rel (%p318) target = $region44
        $region43: #{tpu_custom_call.1} parent=11 // pred_region
          _
        $region44: #{tpu_custom_call.1} parent=11 // pred_fallthru
          _
        // Predicated region
        $region45: #{tpu_custom_call.1} parent=11 // pred_check
          %p321 = pneg %p235
        $region46: #{tpu_custom_call.1} parent=11 // pred_check_branch
          %323 = sbr.rel (%p321) target = $region48
        $region47: #{tpu_custom_call.1} parent=11 // pred_region
          _
        $region48: #{tpu_custom_call.1} parent=11 // pred_fallthru
          _
        // Predicated region
        $region49: #{tpu_custom_call.1} parent=11 // pred_check
          %p324 = pneg %p256
        $region50: #{tpu_custom_call.1} parent=11 // pred_check_branch
          %326 = sbr.rel (%p324) target = $region52
        $region51: #{tpu_custom_call.1} parent=11 // pred_region
          _
        $region52: #{tpu_custom_call.1} parent=11 // pred_fallthru
          _
      $region12: #{tpu_custom_call.1} parent=5 // pred_fallthru
        _
      %p327 = scmp.lt.s32.totalorder %s20, 2
      // Predicated region
      $region53: #{tpu_custom_call.1} parent=5 // pred_check
        %p328 = pneg %p327
      $region54: #{tpu_custom_call.1} parent=5 // pred_check_branch
        %330 = sbr.rel (%p328) target = $region56
      $region55: #{tpu_custom_call.1} parent=5 // pred_region
        // Predicated region
        $region57: #{tpu_custom_call.1} parent=55 // pred_check
          %p331 = pneg %p40
        $region58: #{tpu_custom_call.1} parent=55 // pred_check_branch
          %333 = sbr.rel (%p331) target = $region60
        $region59: #{tpu_custom_call.1} parent=55 // pred_region
          %p334 = scmp.lt.s32.totalorder %s20, 1
          %s335 = scalar_select %p334, %s20, 1
          %s336 = smul.addr %s335, 4
          %s337 = smul.addr %s336, 8
          %s338 = scalar_lea.vmem %s0, %s337
        $region60: #{tpu_custom_call.1} parent=55 // pred_fallthru
          _
      $region56: #{tpu_custom_call.1} parent=5 // pred_fallthru
        _
      %p339 = scmp.le.s32.totalorder 1, %s20
      %p340 = scmp.lt.s32.totalorder %s20, 3
      %p341 = pnand %p339, %p340
      %p342 = pneg %p341
      // Predicated region
      $region61: #{tpu_custom_call.1} parent=5 // pred_check
        _
      $region62: #{tpu_custom_call.1} parent=5 // pred_check_branch
        %344 = sbr.rel (%p341) target = $region64
      $region63: #{tpu_custom_call.1} parent=5 // pred_region
        %s345 = ssub.s32 %s20, 1
        %p346 = scmp.lt.s32.totalorder %s25, 1
        %s347 = scalar_select %p346, %s25, 1
        %s348 = smul.addr %s347, 4
        %s349 = smul.addr %s348, 8
        %s350 = scalar_lea.vmem %s0, %s349
        %p351 = pneg %p46
        %p352 = pneg %p43
        %p353 = pneg %p67
        %p354 = pneg %p64
        %p355 = pneg %p88
        %p356 = pneg %p85
        %p357 = pneg %p109
        %p358 = pneg %p106
        %p359 = pneg %p130
        %p360 = pneg %p127
        %p361 = pneg %p151
        %p362 = pneg %p148
        %p363 = pneg %p172
        %p364 = pneg %p169
        %p365 = pneg %p193
        %p366 = pneg %p190
        %p367 = pneg %p214
        %p368 = pneg %p211
        %p369 = pneg %p235
        %p370 = pneg %p232
        %p371 = pneg %p256
        %p372 = pneg %p253
        %p373 = pneg %p282
        %p374 = pneg %p279
        %s375 = sand.u32 %s269, 1
        %s376 = scalar_lea.sflag [#allocation6], %s375
        %s377 = sand.u32 %s269, 1
        %s378 = smul.addr %s377, 32
        %s379 = scalar_lea.vmem [#allocation5], %s378
        %p380 = scmp.lt.s32.totalorder %s25, 1
        %s381 = scalar_select %p380, %s25, 1
        %s382 = smul.addr %s381, 4
        %s383 = smul.addr %s382, 8
        %s384 = scalar_lea.vmem %s0, %s383
        %v386 = vld [vmem:[%s384 + $0x6] sm:$0xff]
        %v387 = vld [vmem:[%s384 + $0xe] sm:$0xff]
        %v388 = vpack.c.bf16 %v387, %v386
        %v389 = vld [vmem:[%s1] sm:$0xf]
        %v390 = vld [vmem:[%s1 + $0x4] sm:$0xf]
        %v391 = vld [vmem:[%s1 + $0x8] sm:$0xf]
        %v392 = vld [vmem:[%s1 + $0xc] sm:$0xf]
        %v393 = vld [vmem:[%s1 + $0x10] sm:$0xf]
        %v394 = vld [vmem:[%s1 + $0x14] sm:$0xf]
        %v395 = vld [vmem:[%s1 + $0x18] sm:$0xf]
        %v396 = vld [vmem:[%s1 + $0x1c] sm:$0xf]
        %v397 = vld [vmem:[%s384 + $0x7] sm:$0xff]
        %v398 = vld [vmem:[%s384 + $0xf] sm:$0xff]
        %v399 = vpack.c.bf16 %v398, %v397
        %s400 = scalar_lea.vmem %s1, 32
        %v401 = vld [vmem:[%s400] sm:$0xf]
        %v402 = vld [vmem:[%s400 + $0x4] sm:$0xf]
        %v403 = vld [vmem:[%s400 + $0x8] sm:$0xf]
        %v404 = vld [vmem:[%s400 + $0xc] sm:$0xf]
        %v405 = vld [vmem:[%s400 + $0x10] sm:$0xf]
        %v406 = vld [vmem:[%s400 + $0x14] sm:$0xf]
        %v407 = vld [vmem:[%s400 + $0x18] sm:$0xf]
        %v408 = vld [vmem:[%s400 + $0x1c] sm:$0xf]
        %v417 = vunpack.c.l.b16 %v401
        %v418 = vunpack.c.l.b16 %v402
        %v419 = vunpack.c.l.b16 %v403
        %v420 = vunpack.c.l.b16 %v404
        %v421 = vunpack.c.l.b16 %v405
        %v422 = vunpack.c.l.b16 %v406
        %v423 = vunpack.c.l.b16 %v407
        %v424 = vunpack.c.l.b16 %v408
        %v425 = vpack.c.b16 %v418, %v417
        %v426 = vpack.c.b16 %v420, %v419
        %v427 = vpack.c.b16 %v422, %v421
        %v428 = vpack.c.b16 %v424, %v423
        %vm433 = vcmask 523264
        %v435 = vsel %vm433, %v399, 0
        %437 = vmatprep.subr.bf16.mxu0 0
        %438 = vmatpush1.bf16.msra.mxu0 %v425
        %439 = vmatprep.subr.bf16.mxu0 0
        %440 = vmatpush1.bf16.msra.mxu0 %v426
        %441 = vmatprep.subr.bf16.mxu0 0
        %442 = vmatpush1.bf16.msra.mxu0 %v427
        %443 = vmatprep.subr.bf16.mxu0 0
        %444 = vmatpush1.bf16.msra.mxu0 %v428
        %445 = vmatprep.subr.bf16.mxu0 0
        %446 = vmatpush1.bf16.msra.mxu0 0
        %447 = vmatprep.subr.bf16.mxu0 0
        %448 = vmatpush1.bf16.msra.mxu0 0
        %449 = vmatprep.subr.bf16.mxu0 0
        %450 = vmatpush1.bf16.msra.mxu0 0
        %451 = vmatprep.subr.bf16.mxu0 0
        %452 = vmatpush1.bf16.msra.mxu0 0
        %453 = vmatprep.subr.bf16.mxu0 0
        %454 = vmatpush1.bf16.msra.mxu0 0
        %455 = vmatprep.subr.bf16.mxu0 0
        %456 = vmatpush1.bf16.msra.mxu0 0
        %457 = vmatprep.subr.bf16.mxu0 0
        %458 = vmatpush1.bf16.msra.mxu0 0
        %459 = vmatprep.subr.bf16.mxu0 0
        %460 = vmatpush1.bf16.msra.mxu0 0
        %461 = vmatprep.subr.bf16.mxu0 0
        %462 = vmatpush1.bf16.msra.mxu0 0
        %463 = vmatprep.subr.bf16.mxu0 0
        %464 = vmatpush1.bf16.msra.mxu0 0
        %465 = vmatprep.subr.bf16.mxu0 0
        %466 = vmatpush1.bf16.msra.mxu0 0
        %467 = vmatprep.subr.bf16.mxu0 0
        %468 = vmatpush1.bf16.msra.mxu0 0
        %469 = vmatprep.mubr.bf16.mxu0 0
        %470 = vmatmul.mubr.bf16.gmra.mrb[0].mxu0 %v435
        %v471 = vpop.f32.mrb[0].mxu0
        %v472 = vadd.f32 0.0, %v471
        %v473 = vpop.f32.mrb[0].mxu0
        %v474 = vpop.f32.mrb[0].mxu0
        %v475 = vadd.f32 0.0, %v474
        %v476 = vpop.f32.mrb[0].mxu0
        %477 = vdwg.mxu0
        %v486 = vunpack.c.l.b16 %v389
        %v487 = vunpack.c.l.b16 %v390
        %v488 = vunpack.c.l.b16 %v391
        %v489 = vunpack.c.l.b16 %v392
        %v490 = vunpack.c.l.b16 %v393
        %v491 = vunpack.c.l.b16 %v394
        %v492 = vunpack.c.l.b16 %v395
        %v493 = vunpack.c.l.b16 %v396
        %v494 = vpack.c.b16 %v487, %v486
        %v495 = vpack.c.b16 %v489, %v488
        %v496 = vpack.c.b16 %v491, %v490
        %v497 = vpack.c.b16 %v493, %v492
        %v503 = vsel %vm433, %v388, 0
        %505 = vmatprep.subr.bf16.mxu0 0
        %506 = vmatpush1.bf16.msra.mxu0 %v494
        %507 = vmatprep.subr.bf16.mxu0 0
        %508 = vmatpush1.bf16.msra.mxu0 %v495
        %509 = vmatprep.subr.bf16.mxu0 0
        %510 = vmatpush1.bf16.msra.mxu0 %v496
        %511 = vmatprep.subr.bf16.mxu0 0
        %512 = vmatpush1.bf16.msra.mxu0 %v497
        %513 = vmatprep.subr.bf16.mxu0 0
        %514 = vmatpush1.bf16.msra.mxu0 0
        %515 = vmatprep.subr.bf16.mxu0 0
        %516 = vmatpush1.bf16.msra.mxu0 0
        %517 = vmatprep.subr.bf16.mxu0 0
        %518 = vmatpush1.bf16.msra.mxu0 0
        %519 = vmatprep.subr.bf16.mxu0 0
        %520 = vmatpush1.bf16.msra.mxu0 0
        %521 = vmatprep.subr.bf16.mxu0 0
        %522 = vmatpush1.bf16.msra.mxu0 0
        %523 = vmatprep.subr.bf16.mxu0 0
        %524 = vmatpush1.bf16.msra.mxu0 0
        %525 = vmatprep.subr.bf16.mxu0 0
        %526 = vmatpush1.bf16.msra.mxu0 0
        %527 = vmatprep.subr.bf16.mxu0 0
        %528 = vmatpush1.bf16.msra.mxu0 0
        %529 = vmatprep.subr.bf16.mxu0 0
        %530 = vmatpush1.bf16.msra.mxu0 0
        %531 = vmatprep.subr.bf16.mxu0 0
        %532 = vmatpush1.bf16.msra.mxu0 0
        %533 = vmatprep.subr.bf16.mxu0 0
        %534 = vmatpush1.bf16.msra.mxu0 0
        %535 = vmatprep.subr.bf16.mxu0 0
        %536 = vmatpush1.bf16.msra.mxu0 0
        %537 = vmatprep.mubr.bf16.mxu0 0
        %538 = vmatmul.mubr.bf16.gmra.mrb[0].mxu0 %v503
        %v539 = vpop.f32.mrb[0].mxu0
        %v540 = vadd.f32 %v472, %v539
        %v541 = vpop.f32.mrb[0].mxu0
        %v542 = vpop.f32.mrb[0].mxu0
        %v543 = vadd.f32 %v475, %v542
        %v544 = vpop.f32.mrb[0].mxu0
        %545 = vdwg.mxu0
        %v546 = vld [vmem:[%s384 + $0x8] sm:$0xff]
        %v547 = vld [vmem:[%s384 + $0x10] sm:$0xff]
        %v548 = vpack.c.bf16 %v547, %v546
        %s549 = scalar_lea.vmem %s1, 64
        %v550 = vld [vmem:[%s549] sm:$0xf]
        %v551 = vld [vmem:[%s549 + $0x4] sm:$0xf]
        %v552 = vld [vmem:[%s549 + $0x8] sm:$0xf]
        %v553 = vld [vmem:[%s549 + $0xc] sm:$0xf]
        %v554 = vld [vmem:[%s549 + $0x10] sm:$0xf]
        %v555 = vld [vmem:[%s549 + $0x14] sm:$0xf]
        %v556 = vld [vmem:[%s549 + $0x18] sm:$0xf]
        %v557 = vld [vmem:[%s549 + $0x1c] sm:$0xf]
        %v566 = vunpack.c.l.b16 %v550
        %v567 = vunpack.c.l.b16 %v551
        %v568 = vunpack.c.l.b16 %v552
        %v569 = vunpack.c.l.b16 %v553
        %v570 = vunpack.c.l.b16 %v554
        %v571 = vunpack.c.l.b16 %v555
        %v572 = vunpack.c.l.b16 %v556
        %v573 = vunpack.c.l.b16 %v557
        %v574 = vpack.c.b16 %v567, %v566
        %v575 = vpack.c.b16 %v569, %v568
        %v576 = vpack.c.b16 %v571, %v570
        %v577 = vpack.c.b16 %v573, %v572
        %v583 = vsel %vm433, %v548, 0
        %585 = vmatprep.subr.bf16.mxu0 0
        %586 = vmatpush1.bf16.msra.mxu0 %v574
        %587 = vmatprep.subr.bf16.mxu0 0
        %588 = vmatpush1.bf16.msra.mxu0 %v575
        %589 = vmatprep.subr.bf16.mxu0 0
        %590 = vmatpush1.bf16.msra.mxu0 %v576
        %591 = vmatprep.subr.bf16.mxu0 0
        %592 = vmatpush1.bf16.msra.mxu0 %v577
        %593 = vmatprep.subr.bf16.mxu0 0
        %594 = vmatpush1.bf16.msra.mxu0 0
        %595 = vmatprep.subr.bf16.mxu0 0
        %596 = vmatpush1.bf16.msra.mxu0 0
        %597 = vmatprep.subr.bf16.mxu0 0
        %598 = vmatpush1.bf16.msra.mxu0 0
        %599 = vmatprep.subr.bf16.mxu0 0
        %600 = vmatpush1.bf16.msra.mxu0 0
        %601 = vmatprep.subr.bf16.mxu0 0
        %602 = vmatpush1.bf16.msra.mxu0 0
        %603 = vmatprep.subr.bf16.mxu0 0
        %604 = vmatpush1.bf16.msra.mxu0 0
        %605 = vmatprep.subr.bf16.mxu0 0
        %606 = vmatpush1.bf16.msra.mxu0 0
        %607 = vmatprep.subr.bf16.mxu0 0
        %608 = vmatpush1.bf16.msra.mxu0 0
        %609 = vmatprep.subr.bf16.mxu0 0
        %610 = vmatpush1.bf16.msra.mxu0 0
        %611 = vmatprep.subr.bf16.mxu0 0
        %612 = vmatpush1.bf16.msra.mxu0 0
        %613 = vmatprep.subr.bf16.mxu0 0
        %614 = vmatpush1.bf16.msra.mxu0 0
        %615 = vmatprep.subr.bf16.mxu0 0
        %616 = vmatpush1.bf16.msra.mxu0 0
        %617 = vmatprep.mubr.bf16.mxu0 0
        %618 = vmatmul.mubr.bf16.gmra.mrb[0].mxu0 %v583
        %v619 = vpop.f32.mrb[0].mxu0
        %v620 = vadd.f32 0.0, %v619
        %v621 = vpop.f32.mrb[0].mxu0
        %v622 = vpop.f32.mrb[0].mxu0
        %v623 = vadd.f32 0.0, %v622
        %v624 = vpop.f32.mrb[0].mxu0
        %625 = vdwg.mxu0
        %v626 = vadd.f32 %v540, %v620
        %v627 = vadd.f32 %v543, %v623
        %v628 = vld [vmem:[%s384 + $0x9] sm:$0xff]
        %v629 = vld [vmem:[%s384 + $0x11] sm:$0xff]
        %v630 = vpack.c.bf16 %v629, %v628
        %s631 = scalar_lea.vmem %s1, 96
        %v632 = vld [vmem:[%s631] sm:$0xf]
        %v633 = vld [vmem:[%s631 + $0x4] sm:$0xf]
        %v634 = vld [vmem:[%s631 + $0x8] sm:$0xf]
        %v635 = vld [vmem:[%s631 + $0xc] sm:$0xf]
        %v636 = vld [vmem:[%s631 + $0x10] sm:$0xf]
        %v637 = vld [vmem:[%s631 + $0x14] sm:$0xf]
        %v638 = vld [vmem:[%s631 + $0x18] sm:$0xf]
        %v639 = vld [vmem:[%s631 + $0x1c] sm:$0xf]
        %v648 = vunpack.c.l.b16 %v632
        %v649 = vunpack.c.l.b16 %v633
        %v650 = vunpack.c.l.b16 %v634
        %v651 = vunpack.c.l.b16 %v635
        %v652 = vunpack.c.l.b16 %v636
        %v653 = vunpack.c.l.b16 %v637
        %v654 = vunpack.c.l.b16 %v638
        %v655 = vunpack.c.l.b16 %v639
        %v656 = vpack.c.b16 %v649, %v648
        %v657 = vpack.c.b16 %v651, %v650
        %v658 = vpack.c.b16 %v653, %v652
        %v659 = vpack.c.b16 %v655, %v654
        %v665 = vsel %vm433, %v630, 0
        %667 = vmatprep.subr.bf16.mxu0 0
        %668 = vmatpush1.bf16.msra.mxu0 %v656
        %669 = vmatprep.subr.bf16.mxu0 0
        %670 = vmatpush1.bf16.msra.mxu0 %v657
        %671 = vmatprep.subr.bf16.mxu0 0
        %672 = vmatpush1.bf16.msra.mxu0 %v658
        %673 = vmatprep.subr.bf16.mxu0 0
        %674 = vmatpush1.bf16.msra.mxu0 %v659
        %675 = vmatprep.subr.bf16.mxu0 0
        %676 = vmatpush1.bf16.msra.mxu0 0
        %677 = vmatprep.subr.bf16.mxu0 0
        %678 = vmatpush1.bf16.msra.mxu0 0
        %679 = vmatprep.subr.bf16.mxu0 0
        %680 = vmatpush1.bf16.msra.mxu0 0
        %681 = vmatprep.subr.bf16.mxu0 0
        %682 = vmatpush1.bf16.msra.mxu0 0
        %683 = vmatprep.subr.bf16.mxu0 0
        %684 = vmatpush1.bf16.msra.mxu0 0
        %685 = vmatprep.subr.bf16.mxu0 0
        %686 = vmatpush1.bf16.msra.mxu0 0
        %687 = vmatprep.subr.bf16.mxu0 0
        %688 = vmatpush1.bf16.msra.mxu0 0
        %689 = vmatprep.subr.bf16.mxu0 0
        %690 = vmatpush1.bf16.msra.mxu0 0
        %691 = vmatprep.subr.bf16.mxu0 0
        %692 = vmatpush1.bf16.msra.mxu0 0
        %693 = vmatprep.subr.bf16.mxu0 0
        %694 = vmatpush1.bf16.msra.mxu0 0
        %695 = vmatprep.subr.bf16.mxu0 0
        %696 = vmatpush1.bf16.msra.mxu0 0
        %697 = vmatprep.subr.bf16.mxu0 0
        %698 = vmatpush1.bf16.msra.mxu0 0
        %699 = vmatprep.mubr.bf16.mxu0 0
        %700 = vmatmul.mubr.bf16.gmra.mrb[0].mxu0 %v665
        %v701 = vpop.f32.mrb[0].mxu0
        %v702 = vadd.f32 0.0, %v701
        %v703 = vpop.f32.mrb[0].mxu0
        %v704 = vpop.f32.mrb[0].mxu0
        %v705 = vadd.f32 0.0, %v704
        %v706 = vpop.f32.mrb[0].mxu0
        %707 = vdwg.mxu0
        %v708 = vadd.f32 %v626, %v702
        %v709 = vadd.f32 %v627, %v705
        %v710 = vld [vmem:[%s384 + $0xa] sm:$0xff]
        %v711 = vld [vmem:[%s384 + $0x12] sm:$0xff]
        %v712 = vpack.c.bf16 %v711, %v710
        %s713 = scalar_lea.vmem %s1, 128
        %v714 = vld [vmem:[%s713] sm:$0xf]
        %v715 = vld [vmem:[%s713 + $0x4] sm:$0xf]
        %v716 = vld [vmem:[%s713 + $0x8] sm:$0xf]
        %v717 = vld [vmem:[%s713 + $0xc] sm:$0xf]
        %v718 = vld [vmem:[%s713 + $0x10] sm:$0xf]
        %v719 = vld [vmem:[%s713 + $0x14] sm:$0xf]
        %v720 = vld [vmem:[%s713 + $0x18] sm:$0xf]
        %v721 = vld [vmem:[%s713 + $0x1c] sm:$0xf]
        %v730 = vunpack.c.l.b16 %v714
        %v731 = vunpack.c.l.b16 %v715
        %v732 = vunpack.c.l.b16 %v716
        %v733 = vunpack.c.l.b16 %v717
        %v734 = vunpack.c.l.b16 %v718
        %v735 = vunpack.c.l.b16 %v719
        %v736 = vunpack.c.l.b16 %v720
        %v737 = vunpack.c.l.b16 %v721
        %v738 = vpack.c.b16 %v731, %v730
        %v739 = vpack.c.b16 %v733, %v732
        %v740 = vpack.c.b16 %v735, %v734
        %v741 = vpack.c.b16 %v737, %v736
        %v747 = vsel %vm433, %v712, 0
        %749 = vmatprep.subr.bf16.mxu0 0
        %750 = vmatpush1.bf16.msra.mxu0 %v738
        %751 = vmatprep.subr.bf16.mxu0 0
        %752 = vmatpush1.bf16.msra.mxu0 %v739
        %753 = vmatprep.subr.bf16.mxu0 0
        %754 = vmatpush1.bf16.msra.mxu0 %v740
        %755 = vmatprep.subr.bf16.mxu0 0
        %756 = vmatpush1.bf16.msra.mxu0 %v741
        %757 = vmatprep.subr.bf16.mxu0 0
        %758 = vmatpush1.bf16.msra.mxu0 0
        %759 = vmatprep.subr.bf16.mxu0 0
        %760 = vmatpush1.bf16.msra.mxu0 0
        %761 = vmatprep.subr.bf16.mxu0 0
        %762 = vmatpush1.bf16.msra.mxu0 0
        %763 = vmatprep.subr.bf16.mxu0 0
        %764 = vmatpush1.bf16.msra.mxu0 0
        %765 = vmatprep.subr.bf16.mxu0 0
        %766 = vmatpush1.bf16.msra.mxu0 0
        %767 = vmatprep.subr.bf16.mxu0 0
        %768 = vmatpush1.bf16.msra.mxu0 0
        %769 = vmatprep.subr.bf16.mxu0 0
        %770 = vmatpush1.bf16.msra.mxu0 0
        %771 = vmatprep.subr.bf16.mxu0 0
        %772 = vmatpush1.bf16.msra.mxu0 0
        %773 = vmatprep.subr.bf16.mxu0 0
        %774 = vmatpush1.bf16.msra.mxu0 0
        %775 = vmatprep.subr.bf16.mxu0 0
        %776 = vmatpush1.bf16.msra.mxu0 0
        %777 = vmatprep.subr.bf16.mxu0 0
        %778 = vmatpush1.bf16.msra.mxu0 0
        %779 = vmatprep.subr.bf16.mxu0 0
        %780 = vmatpush1.bf16.msra.mxu0 0
        %781 = vmatprep.mubr.bf16.mxu0 0
        %782 = vmatmul.mubr.bf16.gmra.mrb[0].mxu0 %v747
        %v783 = vpop.f32.mrb[0].mxu0
        %v784 = vadd.f32 0.0, %v783
        %v785 = vpop.f32.mrb[0].mxu0
        %v786 = vpop.f32.mrb[0].mxu0
        %v787 = vadd.f32 0.0, %v786
        %v788 = vpop.f32.mrb[0].mxu0
        %789 = vdwg.mxu0
        %v790 = vadd.f32 %v708, %v784
        %v791 = vadd.f32 %v709, %v787
        %v792 = vld [vmem:[%s7] sm:$0x1]
        %v794 = vlaneseq
        %v795 = vshrl.u32 %v794, 7
        %v796 = vsub.s32 0, %v795
        %v797 = vrot.slane %v792, %v796
        %v799 = vadd.f32 %v790, %v797
        %v800 = vadd.f32 %v791, %v797
        %v801 = vmax.f32 %v799, 0.0
        %v802 = vmax.f32 %v800, 0.0
        %803 = vst [vmem:[#allocation2] sm:$0x3] 0.0
        %804 = vst [vmem:[#allocation2 + $0x12] sm:$0x3] 0.0
        %805 = vst [vmem:[#allocation2 + $0x2] sm:$0xff] %v801
        %806 = vst [vmem:[#allocation2 + $0xa] sm:$0xff] %v802
        %v807 = vld [vmem:[#allocation2] sm:$0xff]
        %v808 = vld [vmem:[#allocation2 + $0x8] sm:$0xff]
        %v809 = vpack.c.bf16 %v808, %v807
        %v810 = vld [vmem:[%s4] sm:$0xff]
        %v811 = vld [vmem:[%s4 + $0x8] sm:$0xff]
        %v812 = vld [vmem:[%s4 + $0x10] sm:$0xff]
        %v813 = vld [vmem:[%s4 + $0x18] sm:$0xff]
        %v814 = vld [vmem:[%s4 + $0x20] sm:$0xff]
        %v815 = vld [vmem:[%s4 + $0x28] sm:$0xff]
        %v816 = vld [vmem:[%s4 + $0x30] sm:$0xff]
        %v817 = vld [vmem:[%s4 + $0x38] sm:$0xff]
        %v818 = vld [vmem:[%s4 + $0x40] sm:$0xff]
        %v819 = vld [vmem:[%s4 + $0x48] sm:$0xff]
        %v820 = vld [vmem:[%s4 + $0x50] sm:$0xff]
        %v821 = vld [vmem:[%s4 + $0x58] sm:$0xff]
        %v822 = vld [vmem:[%s4 + $0x60] sm:$0xff]
        %v823 = vld [vmem:[%s4 + $0x68] sm:$0xff]
        %v824 = vld [vmem:[%s4 + $0x70] sm:$0xff]
        %v825 = vld [vmem:[%s4 + $0x78] sm:$0xff]
        %v826 = vld [vmem:[#allocation2 + $0x1] sm:$0xff]
        %v827 = vld [vmem:[#allocation2 + $0x9] sm:$0xff]
        %v828 = vpack.c.bf16 %v827, %v826
        %s829 = scalar_lea.vmem %s4, 128
        %v830 = vld [vmem:[%s829] sm:$0xff]
        %v831 = vld [vmem:[%s829 + $0x8] sm:$0xff]
        %v832 = vld [vmem:[%s829 + $0x10] sm:$0xff]
        %v833 = vld [vmem:[%s829 + $0x18] sm:$0xff]
        %v834 = vld [vmem:[%s829 + $0x20] sm:$0xff]
        %v835 = vld [vmem:[%s829 + $0x28] sm:$0xff]
        %v836 = vld [vmem:[%s829 + $0x30] sm:$0xff]
        %v837 = vld [vmem:[%s829 + $0x38] sm:$0xff]
        %v838 = vld [vmem:[%s829 + $0x40] sm:$0xff]
        %v839 = vld [vmem:[%s829 + $0x48] sm:$0xff]
        %v840 = vld [vmem:[%s829 + $0x50] sm:$0xff]
        %v841 = vld [vmem:[%s829 + $0x58] sm:$0xff]
        %v842 = vld [vmem:[%s829 + $0x60] sm:$0xff]
        %v843 = vld [vmem:[%s829 + $0x68] sm:$0xff]
        %v844 = vld [vmem:[%s829 + $0x70] sm:$0xff]
        %v845 = vld [vmem:[%s829 + $0x78] sm:$0xff]
        %v862 = vunpack.c.l.b16 %v830
        %v863 = vunpack.c.h.b16 %v830
        %v864 = vunpack.c.l.b16 %v831
        %v865 = vunpack.c.h.b16 %v831
        %v866 = vunpack.c.l.b16 %v832
        %v867 = vunpack.c.h.b16 %v832
        %v868 = vunpack.c.l.b16 %v833
        %v869 = vunpack.c.h.b16 %v833
        %v870 = vunpack.c.l.b16 %v834
        %v871 = vunpack.c.h.b16 %v834
        %v872 = vunpack.c.l.b16 %v835
        %v873 = vunpack.c.h.b16 %v835
        %v874 = vunpack.c.l.b16 %v836
        %v875 = vunpack.c.h.b16 %v836
        %v876 = vunpack.c.l.b16 %v837
        %v877 = vunpack.c.h.b16 %v837
        %v878 = vunpack.c.l.b16 %v838
        %v879 = vunpack.c.h.b16 %v838
        %v880 = vunpack.c.l.b16 %v839
        %v881 = vunpack.c.h.b16 %v839
        %v882 = vunpack.c.l.b16 %v840
        %v883 = vunpack.c.h.b16 %v840
        %v884 = vunpack.c.l.b16 %v841
        %v885 = vunpack.c.h.b16 %v841
        %v886 = vunpack.c.l.b16 %v842
        %v887 = vunpack.c.h.b16 %v842
        %v888 = vunpack.c.l.b16 %v843
        %v889 = vunpack.c.h.b16 %v843
        %v890 = vunpack.c.l.b16 %v844
        %v891 = vunpack.c.h.b16 %v844
        %v892 = vunpack.c.l.b16 %v845
        %v893 = vunpack.c.h.b16 %v845
        %v894 = vpack.c.b16 %v864, %v862
        %v895 = vpack.c.b16 %v865, %v863
        %v896 = vpack.c.b16 %v868, %v866
        %v897 = vpack.c.b16 %v869, %v867
        %v898 = vpack.c.b16 %v872, %v870
        %v899 = vpack.c.b16 %v873, %v871
        %v900 = vpack.c.b16 %v876, %v874
        %v901 = vpack.c.b16 %v877, %v875
        %v902 = vpack.c.b16 %v880, %v878
        %v903 = vpack.c.b16 %v881, %v879
        %v904 = vpack.c.b16 %v884, %v882
        %v905 = vpack.c.b16 %v885, %v883
        %v906 = vpack.c.b16 %v888, %v886
        %v907 = vpack.c.b16 %v889, %v887
        %v908 = vpack.c.b16 %v892, %v890
        %v909 = vpack.c.b16 %v893, %v891
        %926 = vmatprep.subr.bf16.mxu0 %v895
        %927 = vmatpush1.bf16.msra.mxu0 %v894
        %928 = vmatprep.subr.bf16.mxu0 %v897
        %929 = vmatpush1.bf16.msra.mxu0 %v896
        %930 = vmatprep.subr.bf16.mxu0 %v899
        %931 = vmatpush1.bf16.msra.mxu0 %v898
        %932 = vmatprep.subr.bf16.mxu0 %v901
        %933 = vmatpush1.bf16.msra.mxu0 %v900
        %934 = vmatprep.subr.bf16.mxu0 %v903
        %935 = vmatpush1.bf16.msra.mxu0 %v902
        %936 = vmatprep.subr.bf16.mxu0 %v905
        %937 = vmatpush1.bf16.msra.mxu0 %v904
        %938 = vmatprep.subr.bf16.mxu0 %v907
        %939 = vmatpush1.bf16.msra.mxu0 %v906
        %940 = vmatprep.subr.bf16.mxu0 %v909
        %941 = vmatpush1.bf16.msra.mxu0 %v908
        %942 = vmatprep.subr.bf16.mxu0 0
        %943 = vmatpush1.bf16.msra.mxu0 0
        %944 = vmatprep.subr.bf16.mxu0 0
        %945 = vmatpush1.bf16.msra.mxu0 0
        %946 = vmatprep.subr.bf16.mxu0 0
        %947 = vmatpush1.bf16.msra.mxu0 0
        %948 = vmatprep.subr.bf16.mxu0 0
        %949 = vmatpush1.bf16.msra.mxu0 0
        %950 = vmatprep.subr.bf16.mxu0 0
        %951 = vmatpush1.bf16.msra.mxu0 0
        %952 = vmatprep.subr.bf16.mxu0 0
        %953 = vmatpush1.bf16.msra.mxu0 0
        %954 = vmatprep.subr.bf16.mxu0 0
        %955 = vmatpush1.bf16.msra.mxu0 0
        %956 = vmatprep.subr.bf16.mxu0 0
        %957 = vmatpush1.bf16.msra.mxu0 0
        %958 = vmatprep.mubr.bf16.mxu0 0
        %959 = vmatmul.mubr.bf16.gmra.mrb[0].mxu0 %v828
        %v960 = vpop.f32.mrb[0].mxu0
        %v961 = vadd.f32 0.0, %v960
        %v962 = vpop.f32.mrb[0].mxu0
        %v963 = vadd.f32 0.0, %v962
        %v964 = vpop.f32.mrb[0].mxu0
        %v965 = vadd.f32 0.0, %v964
        %v966 = vpop.f32.mrb[0].mxu0
        %v967 = vadd.f32 0.0, %v966
        %968 = vdwg.mxu0
        %v985 = vunpack.c.l.b16 %v810
        %v986 = vunpack.c.h.b16 %v810
        %v987 = vunpack.c.l.b16 %v811
        %v988 = vunpack.c.h.b16 %v811
        %v989 = vunpack.c.l.b16 %v812
        %v990 = vunpack.c.h.b16 %v812
        %v991 = vunpack.c.l.b16 %v813
        %v992 = vunpack.c.h.b16 %v813
        %v993 = vunpack.c.l.b16 %v814
        %v994 = vunpack.c.h.b16 %v814
        %v995 = vunpack.c.l.b16 %v815
        %v996 = vunpack.c.h.b16 %v815
        %v997 = vunpack.c.l.b16 %v816
        %v998 = vunpack.c.h.b16 %v816
        %v999 = vunpack.c.l.b16 %v817
        %v1000 = vunpack.c.h.b16 %v817
        %v1001 = vunpack.c.l.b16 %v818
        %v1002 = vunpack.c.h.b16 %v818
        %v1003 = vunpack.c.l.b16 %v819
        %v1004 = vunpack.c.h.b16 %v819
        %v1005 = vunpack.c.l.b16 %v820
        %v1006 = vunpack.c.h.b16 %v820
        %v1007 = vunpack.c.l.b16 %v821
        %v1008 = vunpack.c.h.b16 %v821
        %v1009 = vunpack.c.l.b16 %v822
        %v1010 = vunpack.c.h.b16 %v822
        %v1011 = vunpack.c.l.b16 %v823
        %v1012 = vunpack.c.h.b16 %v823
        %v1013 = vunpack.c.l.b16 %v824
        %v1014 = vunpack.c.h.b16 %v824
        %v1015 = vunpack.c.l.b16 %v825
        %v1016 = vunpack.c.h.b16 %v825
        %v1017 = vpack.c.b16 %v987, %v985
        %v1018 = vpack.c.b16 %v988, %v986
        %v1019 = vpack.c.b16 %v991, %v989
        %v1020 = vpack.c.b16 %v992, %v990
        %v1021 = vpack.c.b16 %v995, %v993
        %v1022 = vpack.c.b16 %v996, %v994
        %v1023 = vpack.c.b16 %v999, %v997
        %v1024 = vpack.c.b16 %v1000, %v998
        %v1025 = vpack.c.b16 %v1003, %v1001
        %v1026 = vpack.c.b16 %v1004, %v1002
        %v1027 = vpack.c.b16 %v1007, %v1005
        %v1028 = vpack.c.b16 %v1008, %v1006
        %v1029 = vpack.c.b16 %v1011, %v1009
        %v1030 = vpack.c.b16 %v1012, %v1010
        %v1031 = vpack.c.b16 %v1015, %v1013
        %v1032 = vpack.c.b16 %v1016, %v1014
        %1049 = vmatprep.subr.bf16.mxu0 %v1018
        %1050 = vmatpush1.bf16.msra.mxu0 %v1017
        %1051 = vmatprep.subr.bf16.mxu0 %v1020
        %1052 = vmatpush1.bf16.msra.mxu0 %v1019
        %1053 = vmatprep.subr.bf16.mxu0 %v1022
        %1054 = vmatpush1.bf16.msra.mxu0 %v1021
        %1055 = vmatprep.subr.bf16.mxu0 %v1024
        %1056 = vmatpush1.bf16.msra.mxu0 %v1023
        %1057 = vmatprep.subr.bf16.mxu0 %v1026
        %1058 = vmatpush1.bf16.msra.mxu0 %v1025
        %1059 = vmatprep.subr.bf16.mxu0 %v1028
        %1060 = vmatpush1.bf16.msra.mxu0 %v1027
        %1061 = vmatprep.subr.bf16.mxu0 %v1030
        %1062 = vmatpush1.bf16.msra.mxu0 %v1029
        %1063 = vmatprep.subr.bf16.mxu0 %v1032
        %1064 = vmatpush1.bf16.msra.mxu0 %v1031
        %1065 = vmatprep.subr.bf16.mxu0 0
        %1066 = vmatpush1.bf16.msra.mxu0 0
        %1067 = vmatprep.subr.bf16.mxu0 0
        %1068 = vmatpush1.bf16.msra.mxu0 0
        %1069 = vmatprep.subr.bf16.mxu0 0
        %1070 = vmatpush1.bf16.msra.mxu0 0
        %1071 = vmatprep.subr.bf16.mxu0 0
        %1072 = vmatpush1.bf16.msra.mxu0 0
        %1073 = vmatprep.subr.bf16.mxu0 0
        %1074 = vmatpush1.bf16.msra.mxu0 0
        %1075 = vmatprep.subr.bf16.mxu0 0
        %1076 = vmatpush1.bf16.msra.mxu0 0
        %1077 = vmatprep.subr.bf16.mxu0 0
        %1078 = vmatpush1.bf16.msra.mxu0 0
        %1079 = vmatprep.subr.bf16.mxu0 0
        %1080 = vmatpush1.bf16.msra.mxu0 0
        %1081 = vmatprep.mubr.bf16.mxu0 0
        %1082 = vmatmul.mubr.bf16.gmra.mrb[0].mxu0 %v809
        %v1083 = vpop.f32.mrb[0].mxu0
        %v1084 = vadd.f32 %v961, %v1083
        %v1085 = vpop.f32.mrb[0].mxu0
        %v1086 = vadd.f32 %v963, %v1085
        %v1087 = vpop.f32.mrb[0].mxu0
        %v1088 = vadd.f32 %v965, %v1087
        %v1089 = vpop.f32.mrb[0].mxu0
        %v1090 = vadd.f32 %v967, %v1089
        %1091 = vdwg.mxu0
        %v1092 = vld [vmem:[#allocation2 + $0x2] sm:$0xff]
        %v1093 = vld [vmem:[#allocation2 + $0xa] sm:$0xff]
        %v1094 = vpack.c.bf16 %v1093, %v1092
        %s1095 = scalar_lea.vmem %s4, 256
        %v1096 = vld [vmem:[%s1095] sm:$0xff]
        %v1097 = vld [vmem:[%s1095 + $0x8] sm:$0xff]
        %v1098 = vld [vmem:[%s1095 + $0x10] sm:$0xff]
        %v1099 = vld [vmem:[%s1095 + $0x18] sm:$0xff]
        %v1100 = vld [vmem:[%s1095 + $0x20] sm:$0xff]
        %v1101 = vld [vmem:[%s1095 + $0x28] sm:$0xff]
        %v1102 = vld [vmem:[%s1095 + $0x30] sm:$0xff]
        %v1103 = vld [vmem:[%s1095 + $0x38] sm:$0xff]
        %v1104 = vld [vmem:[%s1095 + $0x40] sm:$0xff]
        %v1105 = vld [vmem:[%s1095 + $0x48] sm:$0xff]
        %v1106 = vld [vmem:[%s1095 + $0x50] sm:$0xff]
        %v1107 = vld [vmem:[%s1095 + $0x58] sm:$0xff]
        %v1108 = vld [vmem:[%s1095 + $0x60] sm:$0xff]
        %v1109 = vld [vmem:[%s1095 + $0x68] sm:$0xff]
        %v1110 = vld [vmem:[%s1095 + $0x70] sm:$0xff]
        %v1111 = vld [vmem:[%s1095 + $0x78] sm:$0xff]
        %v1128 = vunpack.c.l.b16 %v1096
        %v1129 = vunpack.c.h.b16 %v1096
        %v1130 = vunpack.c.l.b16 %v1097
        %v1131 = vunpack.c.h.b16 %v1097
        %v1132 = vunpack.c.l.b16 %v1098
        %v1133 = vunpack.c.h.b16 %v1098
        %v1134 = vunpack.c.l.b16 %v1099
        %v1135 = vunpack.c.h.b16 %v1099
        %v1136 = vunpack.c.l.b16 %v1100
        %v1137 = vunpack.c.h.b16 %v1100
        %v1138 = vunpack.c.l.b16 %v1101
        %v1139 = vunpack.c.h.b16 %v1101
        %v1140 = vunpack.c.l.b16 %v1102
        %v1141 = vunpack.c.h.b16 %v1102
        %v1142 = vunpack.c.l.b16 %v1103
        %v1143 = vunpack.c.h.b16 %v1103
        %v1144 = vunpack.c.l.b16 %v1104
        %v1145 = vunpack.c.h.b16 %v1104
        %v1146 = vunpack.c.l.b16 %v1105
        %v1147 = vunpack.c.h.b16 %v1105
        %v1148 = vunpack.c.l.b16 %v1106
        %v1149 = vunpack.c.h.b16 %v1106
        %v1150 = vunpack.c.l.b16 %v1107
        %v1151 = vunpack.c.h.b16 %v1107
        %v1152 = vunpack.c.l.b16 %v1108
        %v1153 = vunpack.c.h.b16 %v1108
        %v1154 = vunpack.c.l.b16 %v1109
        %v1155 = vunpack.c.h.b16 %v1109
        %v1156 = vunpack.c.l.b16 %v1110
        %v1157 = vunpack.c.h.b16 %v1110
        %v1158 = vunpack.c.l.b16 %v1111
        %v1159 = vunpack.c.h.b16 %v1111
        %v1160 = vpack.c.b16 %v1130, %v1128
        %v1161 = vpack.c.b16 %v1131, %v1129
        %v1162 = vpack.c.b16 %v1134, %v1132
        %v1163 = vpack.c.b16 %v1135, %v1133
        %v1164 = vpack.c.b16 %v1138, %v1136
        %v1165 = vpack.c.b16 %v1139, %v1137
        %v1166 = vpack.c.b16 %v1142, %v1140
        %v1167 = vpack.c.b16 %v1143, %v1141
        %v1168 = vpack.c.b16 %v1146, %v1144
        %v1169 = vpack.c.b16 %v1147, %v1145
        %v1170 = vpack.c.b16 %v1150, %v1148
        %v1171 = vpack.c.b16 %v1151, %v1149
        %v1172 = vpack.c.b16 %v1154, %v1152
        %v1173 = vpack.c.b16 %v1155, %v1153
        %v1174 = vpack.c.b16 %v1158, %v1156
        %v1175 = vpack.c.b16 %v1159, %v1157
        %1192 = vmatprep.subr.bf16.mxu0 %v1161
        %1193 = vmatpush1.bf16.msra.mxu0 %v1160
        %1194 = vmatprep.subr.bf16.mxu0 %v1163
        %1195 = vmatpush1.bf16.msra.mxu0 %v1162
        %1196 = vmatprep.subr.bf16.mxu0 %v1165
        %1197 = vmatpush1.bf16.msra.mxu0 %v1164
        %1198 = vmatprep.subr.bf16.mxu0 %v1167
        %1199 = vmatpush1.bf16.msra.mxu0 %v1166
        %1200 = vmatprep.subr.bf16.mxu0 %v1169
        %1201 = vmatpush1.bf16.msra.mxu0 %v1168
        %1202 = vmatprep.subr.bf16.mxu0 %v1171
        %1203 = vmatpush1.bf16.msra.mxu0 %v1170
        %1204 = vmatprep.subr.bf16.mxu0 %v1173
        %1205 = vmatpush1.bf16.msra.mxu0 %v1172
        %1206 = vmatprep.subr.bf16.mxu0 %v1175
        %1207 = vmatpush1.bf16.msra.mxu0 %v1174
        %1208 = vmatprep.subr.bf16.mxu0 0
        %1209 = vmatpush1.bf16.msra.mxu0 0
        %1210 = vmatprep.subr.bf16.mxu0 0
        %1211 = vmatpush1.bf16.msra.mxu0 0
        %1212 = vmatprep.subr.bf16.mxu0 0
        %1213 = vmatpush1.bf16.msra.mxu0 0
        %1214 = vmatprep.subr.bf16.mxu0 0
        %1215 = vmatpush1.bf16.msra.mxu0 0
        %1216 = vmatprep.subr.bf16.mxu0 0
        %1217 = vmatpush1.bf16.msra.mxu0 0
        %1218 = vmatprep.subr.bf16.mxu0 0
        %1219 = vmatpush1.bf16.msra.mxu0 0
        %1220 = vmatprep.subr.bf16.mxu0 0
        %1221 = vmatpush1.bf16.msra.mxu0 0
        %1222 = vmatprep.subr.bf16.mxu0 0
        %1223 = vmatpush1.bf16.msra.mxu0 0
        %1224 = vmatprep.mubr.bf16.mxu0 0
        %1225 = vmatmul.mubr.bf16.gmra.mrb[0].mxu0 %v1094
        %v1226 = vpop.f32.mrb[0].mxu0
        %v1227 = vadd.f32 0.0, %v1226
        %v1228 = vpop.f32.mrb[0].mxu0
        %v1229 = vadd.f32 0.0, %v1228
        %v1230 = vpop.f32.mrb[0].mxu0
        %v1231 = vadd.f32 0.0, %v1230
        %v1232 = vpop.f32.mrb[0].mxu0
        %v1233 = vadd.f32 0.0, %v1232
        %1234 = vdwg.mxu0
        %v1235 = vadd.f32 %v1084, %v1227
        %v1236 = vadd.f32 %v1086, %v1229
        %v1237 = vadd.f32 %v1088, %v1231
        %v1238 = vadd.f32 %v1090, %v1233
        %v1239 = vld [vmem:[#allocation2 + $0x3] sm:$0xff]
        %v1240 = vld [vmem:[#allocation2 + $0xb] sm:$0xff]
        %v1241 = vpack.c.bf16 %v1240, %v1239
        %s1242 = scalar_lea.vmem %s4, 384
        %v1243 = vld [vmem:[%s1242] sm:$0xff]
        %v1244 = vld [vmem:[%s1242 + $0x8] sm:$0xff]
        %v1245 = vld [vmem:[%s1242 + $0x10] sm:$0xff]
        %v1246 = vld [vmem:[%s1242 + $0x18] sm:$0xff]
        %v1247 = vld [vmem:[%s1242 + $0x20] sm:$0xff]
        %v1248 = vld [vmem:[%s1242 + $0x28] sm:$0xff]
        %v1249 = vld [vmem:[%s1242 + $0x30] sm:$0xff]
        %v1250 = vld [vmem:[%s1242 + $0x38] sm:$0xff]
        %v1251 = vld [vmem:[%s1242 + $0x40] sm:$0xff]
        %v1252 = vld [vmem:[%s1242 + $0x48] sm:$0xff]
        %v1253 = vld [vmem:[%s1242 + $0x50] sm:$0xff]
        %v1254 = vld [vmem:[%s1242 + $0x58] sm:$0xff]
        %v1255 = vld [vmem:[%s1242 + $0x60] sm:$0xff]
        %v1256 = vld [vmem:[%s1242 + $0x68] sm:$0xff]
        %v1257 = vld [vmem:[%s1242 + $0x70] sm:$0xff]
        %v1258 = vld [vmem:[%s1242 + $0x78] sm:$0xff]
        %v1275 = vunpack.c.l.b16 %v1243
        %v1276 = vunpack.c.h.b16 %v1243
        %v1277 = vunpack.c.l.b16 %v1244
        %v1278 = vunpack.c.h.b16 %v1244
        %v1279 = vunpack.c.l.b16 %v1245
        %v1280 = vunpack.c.h.b16 %v1245
        %v1281 = vunpack.c.l.b16 %v1246
        %v1282 = vunpack.c.h.b16 %v1246
        %v1283 = vunpack.c.l.b16 %v1247
        %v1284 = vunpack.c.h.b16 %v1247
        %v1285 = vunpack.c.l.b16 %v1248
        %v1286 = vunpack.c.h.b16 %v1248
        %v1287 = vunpack.c.l.b16 %v1249
        %v1288 = vunpack.c.h.b16 %v1249
        %v1289 = vunpack.c.l.b16 %v1250
        %v1290 = vunpack.c.h.b16 %v1250
        %v1291 = vunpack.c.l.b16 %v1251
        %v1292 = vunpack.c.h.b16 %v1251
        %v1293 = vunpack.c.l.b16 %v1252
        %v1294 = vunpack.c.h.b16 %v1252
        %v1295 = vunpack.c.l.b16 %v1253
        %v1296 = vunpack.c.h.b16 %v1253
        %v1297 = vunpack.c.l.b16 %v1254
        %v1298 = vunpack.c.h.b16 %v1254
        %v1299 = vunpack.c.l.b16 %v1255
        %v1300 = vunpack.c.h.b16 %v1255
        %v1301 = vunpack.c.l.b16 %v1256
        %v1302 = vunpack.c.h.b16 %v1256
        %v1303 = vunpack.c.l.b16 %v1257
        %v1304 = vunpack.c.h.b16 %v1257
        %v1305 = vunpack.c.l.b16 %v1258
        %v1306 = vunpack.c.h.b16 %v1258
        %v1307 = vpack.c.b16 %v1277, %v1275
        %v1308 = vpack.c.b16 %v1278, %v1276
        %v1309 = vpack.c.b16 %v1281, %v1279
        %v1310 = vpack.c.b16 %v1282, %v1280
        %v1311 = vpack.c.b16 %v1285, %v1283
        %v1312 = vpack.c.b16 %v1286, %v1284
        %v1313 = vpack.c.b16 %v1289, %v1287
        %v1314 = vpack.c.b16 %v1290, %v1288
        %v1315 = vpack.c.b16 %v1293, %v1291
        %v1316 = vpack.c.b16 %v1294, %v1292
        %v1317 = vpack.c.b16 %v1297, %v1295
        %v1318 = vpack.c.b16 %v1298, %v1296
        %v1319 = vpack.c.b16 %v1301, %v1299
        %v1320 = vpack.c.b16 %v1302, %v1300
        %v1321 = vpack.c.b16 %v1305, %v1303
        %v1322 = vpack.c.b16 %v1306, %v1304
        %1339 = vmatprep.subr.bf16.mxu0 %v1308
        %1340 = vmatpush1.bf16.msra.mxu0 %v1307
        %1341 = vmatprep.subr.bf16.mxu0 %v1310
        %1342 = vmatpush1.bf16.msra.mxu0 %v1309
        %1343 = vmatprep.subr.bf16.mxu0 %v1312
        %1344 = vmatpush1.bf16.msra.mxu0 %v1311
        %1345 = vmatprep.subr.bf16.mxu0 %v1314
        %1346 = vmatpush1.bf16.msra.mxu0 %v1313
        %1347 = vmatprep.subr.bf16.mxu0 %v1316
        %1348 = vmatpush1.bf16.msra.mxu0 %v1315
        %1349 = vmatprep.subr.bf16.mxu0 %v1318
        %1350 = vmatpush1.bf16.msra.mxu0 %v1317
        %1351 = vmatprep.subr.bf16.mxu0 %v1320
        %1352 = vmatpush1.bf16.msra.mxu0 %v1319
        %1353 = vmatprep.subr.bf16.mxu0 %v1322
        %1354 = vmatpush1.bf16.msra.mxu0 %v1321
        %1355 = vmatprep.subr.bf16.mxu0 0
        %1356 = vmatpush1.bf16.msra.mxu0 0
        %1357 = vmatprep.subr.bf16.mxu0 0
        %1358 = vmatpush1.bf16.msra.mxu0 0
        %1359 = vmatprep.subr.bf16.mxu0 0
        %1360 = vmatpush1.bf16.msra.mxu0 0
        %1361 = vmatprep.subr.bf16.mxu0 0
        %1362 = vmatpush1.bf16.msra.mxu0 0
        %1363 = vmatprep.subr.bf16.mxu0 0
        %1364 = vmatpush1.bf16.msra.mxu0 0
        %1365 = vmatprep.subr.bf16.mxu0 0
        %1366 = vmatpush1.bf16.msra.mxu0 0
        %1367 = vmatprep.subr.bf16.mxu0 0
        %1368 = vmatpush1.bf16.msra.mxu0 0
        %1369 = vmatprep.subr.bf16.mxu0 0
        %1370 = vmatpush1.bf16.msra.mxu0 0
        %1371 = vmatprep.mubr.bf16.mxu0 0
        %1372 = vmatmul.mubr.bf16.gmra.mrb[0].mxu0 %v1241
        %v1373 = vpop.f32.mrb[0].mxu0
        %v1374 = vadd.f32 0.0, %v1373
        %v1375 = vpop.f32.mrb[0].mxu0
        %v1376 = vadd.f32 0.0, %v1375
        %v1377 = vpop.f32.mrb[0].mxu0
        %v1378 = vadd.f32 0.0, %v1377
        %v1379 = vpop.f32.mrb[0].mxu0
        %v1380 = vadd.f32 0.0, %v1379
        %1381 = vdwg.mxu0
        %v1382 = vadd.f32 %v1235, %v1374
        %v1383 = vadd.f32 %v1236, %v1376
        %v1384 = vadd.f32 %v1237, %v1378
        %v1385 = vadd.f32 %v1238, %v1380
        %v1386 = vld [vmem:[#allocation2 + $0x4] sm:$0xff]
        %v1387 = vld [vmem:[#allocation2 + $0xc] sm:$0xff]
        %v1388 = vpack.c.bf16 %v1387, %v1386
        %s1389 = scalar_lea.vmem %s4, 512
        %v1390 = vld [vmem:[%s1389] sm:$0xff]
        %v1391 = vld [vmem:[%s1389 + $0x8] sm:$0xff]
        %v1392 = vld [vmem:[%s1389 + $0x10] sm:$0xff]
        %v1393 = vld [vmem:[%s1389 + $0x18] sm:$0xff]
        %v1394 = vld [vmem:[%s1389 + $0x20] sm:$0xff]
        %v1395 = vld [vmem:[%s1389 + $0x28] sm:$0xff]
        %v1396 = vld [vmem:[%s1389 + $0x30] sm:$0xff]
        %v1397 = vld [vmem:[%s1389 + $0x38] sm:$0xff]
        %v1398 = vld [vmem:[%s1389 + $0x40] sm:$0xff]
        %v1399 = vld [vmem:[%s1389 + $0x48] sm:$0xff]
        %v1400 = vld [vmem:[%s1389 + $0x50] sm:$0xff]
        %v1401 = vld [vmem:[%s1389 + $0x58] sm:$0xff]
        %v1402 = vld [vmem:[%s1389 + $0x60] sm:$0xff]
        %v1403 = vld [vmem:[%s1389 + $0x68] sm:$0xff]
        %v1404 = vld [vmem:[%s1389 + $0x70] sm:$0xff]
        %v1405 = vld [vmem:[%s1389 + $0x78] sm:$0xff]
        %v1422 = vunpack.c.l.b16 %v1390
        %v1423 = vunpack.c.h.b16 %v1390
        %v1424 = vunpack.c.l.b16 %v1391
        %v1425 = vunpack.c.h.b16 %v1391
        %v1426 = vunpack.c.l.b16 %v1392
        %v1427 = vunpack.c.h.b16 %v1392
        %v1428 = vunpack.c.l.b16 %v1393
        %v1429 = vunpack.c.h.b16 %v1393
        %v1430 = vunpack.c.l.b16 %v1394
        %v1431 = vunpack.c.h.b16 %v1394
        %v1432 = vunpack.c.l.b16 %v1395
        %v1433 = vunpack.c.h.b16 %v1395
        %v1434 = vunpack.c.l.b16 %v1396
        %v1435 = vunpack.c.h.b16 %v1396
        %v1436 = vunpack.c.l.b16 %v1397
        %v1437 = vunpack.c.h.b16 %v1397
        %v1438 = vunpack.c.l.b16 %v1398
        %v1439 = vunpack.c.h.b16 %v1398
        %v1440 = vunpack.c.l.b16 %v1399
        %v1441 = vunpack.c.h.b16 %v1399
        %v1442 = vunpack.c.l.b16 %v1400
        %v1443 = vunpack.c.h.b16 %v1400
        %v1444 = vunpack.c.l.b16 %v1401
        %v1445 = vunpack.c.h.b16 %v1401
        %v1446 = vunpack.c.l.b16 %v1402
        %v1447 = vunpack.c.h.b16 %v1402
        %v1448 = vunpack.c.l.b16 %v1403
        %v1449 = vunpack.c.h.b16 %v1403
        %v1450 = vunpack.c.l.b16 %v1404
        %v1451 = vunpack.c.h.b16 %v1404
        %v1452 = vunpack.c.l.b16 %v1405
        %v1453 = vunpack.c.h.b16 %v1405
        %v1454 = vpack.c.b16 %v1424, %v1422
        %v1455 = vpack.c.b16 %v1425, %v1423
        %v1456 = vpack.c.b16 %v1428, %v1426
        %v1457 = vpack.c.b16 %v1429, %v1427
        %v1458 = vpack.c.b16 %v1432, %v1430
        %v1459 = vpack.c.b16 %v1433, %v1431
        %v1460 = vpack.c.b16 %v1436, %v1434
        %v1461 = vpack.c.b16 %v1437, %v1435
        %v1462 = vpack.c.b16 %v1440, %v1438
        %v1463 = vpack.c.b16 %v1441, %v1439
        %v1464 = vpack.c.b16 %v1444, %v1442
        %v1465 = vpack.c.b16 %v1445, %v1443
        %v1466 = vpack.c.b16 %v1448, %v1446
        %v1467 = vpack.c.b16 %v1449, %v1447
        %v1468 = vpack.c.b16 %v1452, %v1450
        %v1469 = vpack.c.b16 %v1453, %v1451
        %1486 = vmatprep.subr.bf16.mxu0 %v1455
        %1487 = vmatpush1.bf16.msra.mxu0 %v1454
        %1488 = vmatprep.subr.bf16.mxu0 %v1457
        %1489 = vmatpush1.bf16.msra.mxu0 %v1456
        %1490 = vmatprep.subr.bf16.mxu0 %v1459
        %1491 = vmatpush1.bf16.msra.mxu0 %v1458
        %1492 = vmatprep.subr.bf16.mxu0 %v1461
        %1493 = vmatpush1.bf16.msra.mxu0 %v1460
        %1494 = vmatprep.subr.bf16.mxu0 %v1463
        %1495 = vmatpush1.bf16.msra.mxu0 %v1462
        %1496 = vmatprep.subr.bf16.mxu0 %v1465
        %1497 = vmatpush1.bf16.msra.mxu0 %v1464
        %1498 = vmatprep.subr.bf16.mxu0 %v1467
        %1499 = vmatpush1.bf16.msra.mxu0 %v1466
        %1500 = vmatprep.subr.bf16.mxu0 %v1469
        %1501 = vmatpush1.bf16.msra.mxu0 %v1468
        %1502 = vmatprep.subr.bf16.mxu0 0
        %1503 = vmatpush1.bf16.msra.mxu0 0
        %1504 = vmatprep.subr.bf16.mxu0 0
        %1505 = vmatpush1.bf16.msra.mxu0 0
        %1506 = vmatprep.subr.bf16.mxu0 0
        %1507 = vmatpush1.bf16.msra.mxu0 0
        %1508 = vmatprep.subr.bf16.mxu0 0
        %1509 = vmatpush1.bf16.msra.mxu0 0
        %1510 = vmatprep.subr.bf16.mxu0 0
        %1511 = vmatpush1.bf16.msra.mxu0 0
        %1512 = vmatprep.subr.bf16.mxu0 0
        %1513 = vmatpush1.bf16.msra.mxu0 0
        %1514 = vmatprep.subr.bf16.mxu0 0
        %1515 = vmatpush1.bf16.msra.mxu0 0
        %1516 = vmatprep.subr.bf16.mxu0 0
        %1517 = vmatpush1.bf16.msra.mxu0 0
        %1518 = vmatprep.mubr.bf16.mxu0 0
        %1519 = vmatmul.mubr.bf16.gmra.mrb[0].mxu0 %v1388
        %v1520 = vpop.f32.mrb[0].mxu0
        %v1521 = vadd.f32 0.0, %v1520
        %v1522 = vpop.f32.mrb[0].mxu0
        %v1523 = vadd.f32 0.0, %v1522
        %v1524 = vpop.f32.mrb[0].mxu0
        %v1525 = vadd.f32 0.0, %v1524
        %v1526 = vpop.f32.mrb[0].mxu0
        %v1527 = vadd.f32 0.0, %v1526
        %1528 = vdwg.mxu0
        %v1529 = vadd.f32 %v1382, %v1521
        %v1530 = vadd.f32 %v1383, %v1523
        %v1531 = vadd.f32 %v1384, %v1525
        %v1532 = vadd.f32 %v1385, %v1527
        %v1533 = vld [vmem:[%s384 + $0x4] sm:$0xff]
        %v1534 = vld [vmem:[%s384 + $0xc] sm:$0xff]
        %v1535 = vpack.c.bf16 %v1534, %v1533
        %v1536 = vld [vmem:[%s2] sm:$0xf]
        %v1537 = vld [vmem:[%s2 + $0x4] sm:$0xf]
        %v1538 = vld [vmem:[%s2 + $0x8] sm:$0xf]
        %v1539 = vld [vmem:[%s2 + $0xc] sm:$0xf]
        %v1540 = vld [vmem:[%s2 + $0x10] sm:$0xf]
        %v1541 = vld [vmem:[%s2 + $0x14] sm:$0xf]
        %v1542 = vld [vmem:[%s2 + $0x18] sm:$0xf]
        %v1543 = vld [vmem:[%s2 + $0x1c] sm:$0xf]
        %v1544 = vld [vmem:[%s384 + $0x6] sm:$0xff]
        %v1545 = vld [vmem:[%s384 + $0xe] sm:$0xff]
        %v1546 = vpack.c.bf16 %v1545, %v1544
        %s1547 = scalar_lea.vmem %s2, 32
        %v1548 = vld [vmem:[%s1547] sm:$0xf]
        %v1549 = vld [vmem:[%s1547 + $0x4] sm:$0xf]
        %v1550 = vld [vmem:[%s1547 + $0x8] sm:$0xf]
        %v1551 = vld [vmem:[%s1547 + $0xc] sm:$0xf]
        %v1552 = vld [vmem:[%s1547 + $0x10] sm:$0xf]
        %v1553 = vld [vmem:[%s1547 + $0x14] sm:$0xf]
        %v1554 = vld [vmem:[%s1547 + $0x18] sm:$0xf]
        %v1555 = vld [vmem:[%s1547 + $0x1c] sm:$0xf]
        %v1564 = vunpack.c.l.b16 %v1548
        %v1565 = vunpack.c.l.b16 %v1549
        %v1566 = vunpack.c.l.b16 %v1550
        %v1567 = vunpack.c.l.b16 %v1551
        %v1568 = vunpack.c.l.b16 %v1552
        %v1569 = vunpack.c.l.b16 %v1553
        %v1570 = vunpack.c.l.b16 %v1554
        %v1571 = vunpack.c.l.b16 %v1555
        %v1572 = vpack.c.b16 %v1565, %v1564
        %v1573 = vpack.c.b16 %v1567, %v1566
        %v1574 = vpack.c.b16 %v1569, %v1568
        %v1575 = vpack.c.b16 %v1571, %v1570
        %v1581 = vsel %vm433, %v1546, 0
        %1583 = vmatprep.subr.bf16.mxu0 0
        %1584 = vmatpush1.bf16.msra.mxu0 %v1572
        %1585 = vmatprep.subr.bf16.mxu0 0
        %1586 = vmatpush1.bf16.msra.mxu0 %v1573
        %1587 = vmatprep.subr.bf16.mxu0 0
        %1588 = vmatpush1.bf16.msra.mxu0 %v1574
        %1589 = vmatprep.subr.bf16.mxu0 0
        %1590 = vmatpush1.bf16.msra.mxu0 %v1575
        %1591 = vmatprep.subr.bf16.mxu0 0
        %1592 = vmatpush1.bf16.msra.mxu0 0
        %1593 = vmatprep.subr.bf16.mxu0 0
        %1594 = vmatpush1.bf16.msra.mxu0 0
        %1595 = vmatprep.subr.bf16.mxu0 0
        %1596 = vmatpush1.bf16.msra.mxu0 0
        %1597 = vmatprep.subr.bf16.mxu0 0
        %1598 = vmatpush1.bf16.msra.mxu0 0
        %1599 = vmatprep.subr.bf16.mxu0 0
        %1600 = vmatpush1.bf16.msra.mxu0 0
        %1601 = vmatprep.subr.bf16.mxu0 0
        %1602 = vmatpush1.bf16.msra.mxu0 0
        %1603 = vmatprep.subr.bf16.mxu0 0
        %1604 = vmatpush1.bf16.msra.mxu0 0
        %1605 = vmatprep.subr.bf16.mxu0 0
        %1606 = vmatpush1.bf16.msra.mxu0 0
        %1607 = vmatprep.subr.bf16.mxu0 0
        %1608 = vmatpush1.bf16.msra.mxu0 0
        %1609 = vmatprep.subr.bf16.mxu0 0
        %1610 = vmatpush1.bf16.msra.mxu0 0
        %1611 = vmatprep.subr.bf16.mxu0 0
        %1612 = vmatpush1.bf16.msra.mxu0 0
        %1613 = vmatprep.subr.bf16.mxu0 0
        %1614 = vmatpush1.bf16.msra.mxu0 0
        %1615 = vmatprep.mubr.bf16.mxu0 0
        %1616 = vmatmul.mubr.bf16.gmra.mrb[0].mxu0 %v1581
        %v1617 = vpop.f32.mrb[0].mxu0
        %v1618 = vadd.f32 0.0, %v1617
        %v1619 = vpop.f32.mrb[0].mxu0
        %v1620 = vpop.f32.mrb[0].mxu0
        %v1621 = vadd.f32 0.0, %v1620
        %v1622 = vpop.f32.mrb[0].mxu0
        %1623 = vdwg.mxu0
        %v1632 = vunpack.c.l.b16 %v1536
        %v1633 = vunpack.c.l.b16 %v1537
        %v1634 = vunpack.c.l.b16 %v1538
        %v1635 = vunpack.c.l.b16 %v1539
        %v1636 = vunpack.c.l.b16 %v1540
        %v1637 = vunpack.c.l.b16 %v1541
        %v1638 = vunpack.c.l.b16 %v1542
        %v1639 = vunpack.c.l.b16 %v1543
        %v1640 = vpack.c.b16 %v1633, %v1632
        %v1641 = vpack.c.b16 %v1635, %v1634
        %v1642 = vpack.c.b16 %v1637, %v1636
        %v1643 = vpack.c.b16 %v1639, %v1638
        %v1649 = vsel %vm433, %v1535, 0
        %1651 = vmatprep.subr.bf16.mxu0 0
        %1652 = vmatpush1.bf16.msra.mxu0 %v1640
        %1653 = vmatprep.subr.bf16.mxu0 0
        %1654 = vmatpush1.bf16.msra.mxu0 %v1641
        %1655 = vmatprep.subr.bf16.mxu0 0
        %1656 = vmatpush1.bf16.msra.mxu0 %v1642
        %1657 = vmatprep.subr.bf16.mxu0 0
        %1658 = vmatpush1.bf16.msra.mxu0 %v1643
        %1659 = vmatprep.subr.bf16.mxu0 0
        %1660 = vmatpush1.bf16.msra.mxu0 0
        %1661 = vmatprep.subr.bf16.mxu0 0
        %1662 = vmatpush1.bf16.msra.mxu0 0
        %1663 = vmatprep.subr.bf16.mxu0 0
        %1664 = vmatpush1.bf16.msra.mxu0 0
        %1665 = vmatprep.subr.bf16.mxu0 0
        %1666 = vmatpush1.bf16.msra.mxu0 0
        %1667 = vmatprep.subr.bf16.mxu0 0
        %1668 = vmatpush1.bf16.msra.mxu0 0
        %1669 = vmatprep.subr.bf16.mxu0 0
        %1670 = vmatpush1.bf16.msra.mxu0 0
        %1671 = vmatprep.subr.bf16.mxu0 0
        %1672 = vmatpush1.bf16.msra.mxu0 0
        %1673 = vmatprep.subr.bf16.mxu0 0
        %1674 = vmatpush1.bf16.msra.mxu0 0
        %1675 = vmatprep.subr.bf16.mxu0 0
        %1676 = vmatpush1.bf16.msra.mxu0 0
        %1677 = vmatprep.subr.bf16.mxu0 0
        %1678 = vmatpush1.bf16.msra.mxu0 0
        %1679 = vmatprep.subr.bf16.mxu0 0
        %1680 = vmatpush1.bf16.msra.mxu0 0
        %1681 = vmatprep.subr.bf16.mxu0 0
        %1682 = vmatpush1.bf16.msra.mxu0 0
        %1683 = vmatprep.mubr.bf16.mxu0 0
        %1684 = vmatmul.mubr.bf16.gmra.mrb[0].mxu0 %v1649
        %v1685 = vpop.f32.mrb[0].mxu0
        %v1686 = vadd.f32 %v1618, %v1685
        %v1687 = vpop.f32.mrb[0].mxu0
        %v1688 = vpop.f32.mrb[0].mxu0
        %v1689 = vadd.f32 %v1621, %v1688
        %v1690 = vpop.f32.mrb[0].mxu0
        %1691 = vdwg.mxu0
        %v1692 = vld [vmem:[%s384 + $0x8] sm:$0xff]
        %v1693 = vld [vmem:[%s384 + $0x10] sm:$0xff]
        %v1694 = vpack.c.bf16 %v1693, %v1692
        %s1695 = scalar_lea.vmem %s2, 64
        %v1696 = vld [vmem:[%s1695] sm:$0xf]
        %v1697 = vld [vmem:[%s1695 + $0x4] sm:$0xf]
        %v1698 = vld [vmem:[%s1695 + $0x8] sm:$0xf]
        %v1699 = vld [vmem:[%s1695 + $0xc] sm:$0xf]
        %v1700 = vld [vmem:[%s1695 + $0x10] sm:$0xf]
        %v1701 = vld [vmem:[%s1695 + $0x14] sm:$0xf]
        %v1702 = vld [vmem:[%s1695 + $0x18] sm:$0xf]
        %v1703 = vld [vmem:[%s1695 + $0x1c] sm:$0xf]
        %v1712 = vunpack.c.l.b16 %v1696
        %v1713 = vunpack.c.l.b16 %v1697
        %v1714 = vunpack.c.l.b16 %v1698
        %v1715 = vunpack.c.l.b16 %v1699
        %v1716 = vunpack.c.l.b16 %v1700
        %v1717 = vunpack.c.l.b16 %v1701
        %v1718 = vunpack.c.l.b16 %v1702
        %v1719 = vunpack.c.l.b16 %v1703
        %v1720 = vpack.c.b16 %v1713, %v1712
        %v1721 = vpack.c.b16 %v1715, %v1714
        %v1722 = vpack.c.b16 %v1717, %v1716
        %v1723 = vpack.c.b16 %v1719, %v1718
        %v1729 = vsel %vm433, %v1694, 0
        %1731 = vmatprep.subr.bf16.mxu0 0
        %1732 = vmatpush1.bf16.msra.mxu0 %v1720
        %1733 = vmatprep.subr.bf16.mxu0 0
        %1734 = vmatpush1.bf16.msra.mxu0 %v1721
        %1735 = vmatprep.subr.bf16.mxu0 0
        %1736 = vmatpush1.bf16.msra.mxu0 %v1722
        %1737 = vmatprep.subr.bf16.mxu0 0
        %1738 = vmatpush1.bf16.msra.mxu0 %v1723
        %1739 = vmatprep.subr.bf16.mxu0 0
        %1740 = vmatpush1.bf16.msra.mxu0 0
        %1741 = vmatprep.subr.bf16.mxu0 0
        %1742 = vmatpush1.bf16.msra.mxu0 0
        %1743 = vmatprep.subr.bf16.mxu0 0
        %1744 = vmatpush1.bf16.msra.mxu0 0
        %1745 = vmatprep.subr.bf16.mxu0 0
        %1746 = vmatpush1.bf16.msra.mxu0 0
        %1747 = vmatprep.subr.bf16.mxu0 0
        %1748 = vmatpush1.bf16.msra.mxu0 0
        %1749 = vmatprep.subr.bf16.mxu0 0
        %1750 = vmatpush1.bf16.msra.mxu0 0
        %1751 = vmatprep.subr.bf16.mxu0 0
        %1752 = vmatpush1.bf16.msra.mxu0 0
        %1753 = vmatprep.subr.bf16.mxu0 0
        %1754 = vmatpush1.bf16.msra.mxu0 0
        %1755 = vmatprep.subr.bf16.mxu0 0
        %1756 = vmatpush1.bf16.msra.mxu0 0
        %1757 = vmatprep.subr.bf16.mxu0 0
        %1758 = vmatpush1.bf16.msra.mxu0 0
        %1759 = vmatprep.subr.bf16.mxu0 0
        %1760 = vmatpush1.bf16.msra.mxu0 0
        %1761 = vmatprep.subr.bf16.mxu0 0
        %1762 = vmatpush1.bf16.msra.mxu0 0
        %1763 = vmatprep.mubr.bf16.mxu0 0
        %1764 = vmatmul.mubr.bf16.gmra.mrb[0].mxu0 %v1729
        %v1765 = vpop.f32.mrb[0].mxu0
        %v1766 = vadd.f32 0.0, %v1765
        %v1767 = vpop.f32.mrb[0].mxu0
        %v1768 = vpop.f32.mrb[0].mxu0
        %v1769 = vadd.f32 0.0, %v1768
        %v1770 = vpop.f32.mrb[0].mxu0
        %1771 = vdwg.mxu0
        %v1772 = vadd.f32 %v1686, %v1766
        %v1773 = vadd.f32 %v1689, %v1769
        %v1774 = vld [vmem:[%s384 + $0xa] sm:$0xff]
        %v1775 = vld [vmem:[%s384 + $0x12] sm:$0xff]
        %v1776 = vpack.c.bf16 %v1775, %v1774
        %s1777 = scalar_lea.vmem %s2, 96
        %v1778 = vld [vmem:[%s1777] sm:$0xf]
        %v1779 = vld [vmem:[%s1777 + $0x4] sm:$0xf]
        %v1780 = vld [vmem:[%s1777 + $0x8] sm:$0xf]
        %v1781 = vld [vmem:[%s1777 + $0xc] sm:$0xf]
        %v1782 = vld [vmem:[%s1777 + $0x10] sm:$0xf]
        %v1783 = vld [vmem:[%s1777 + $0x14] sm:$0xf]
        %v1784 = vld [vmem:[%s1777 + $0x18] sm:$0xf]
        %v1785 = vld [vmem:[%s1777 + $0x1c] sm:$0xf]
        %v1794 = vunpack.c.l.b16 %v1778
        %v1795 = vunpack.c.l.b16 %v1779
        %v1796 = vunpack.c.l.b16 %v1780
        %v1797 = vunpack.c.l.b16 %v1781
        %v1798 = vunpack.c.l.b16 %v1782
        %v1799 = vunpack.c.l.b16 %v1783
        %v1800 = vunpack.c.l.b16 %v1784
        %v1801 = vunpack.c.l.b16 %v1785
        %v1802 = vpack.c.b16 %v1795, %v1794
        %v1803 = vpack.c.b16 %v1797, %v1796
        %v1804 = vpack.c.b16 %v1799, %v1798
        %v1805 = vpack.c.b16 %v1801, %v1800
        %v1811 = vsel %vm433, %v1776, 0
        %1813 = vmatprep.subr.bf16.mxu0 0
        %1814 = vmatpush1.bf16.msra.mxu0 %v1802
        %1815 = vmatprep.subr.bf16.mxu0 0
        %1816 = vmatpush1.bf16.msra.mxu0 %v1803
        %1817 = vmatprep.subr.bf16.mxu0 0
        %1818 = vmatpush1.bf16.msra.mxu0 %v1804
        %1819 = vmatprep.subr.bf16.mxu0 0
        %1820 = vmatpush1.bf16.msra.mxu0 %v1805
        %1821 = vmatprep.subr.bf16.mxu0 0
        %1822 = vmatpush1.bf16.msra.mxu0 0
        %1823 = vmatprep.subr.bf16.mxu0 0
        %1824 = vmatpush1.bf16.msra.mxu0 0
        %1825 = vmatprep.subr.bf16.mxu0 0
        %1826 = vmatpush1.bf16.msra.mxu0 0
        %1827 = vmatprep.subr.bf16.mxu0 0
        %1828 = vmatpush1.bf16.msra.mxu0 0
        %1829 = vmatprep.subr.bf16.mxu0 0
        %1830 = vmatpush1.bf16.msra.mxu0 0
        %1831 = vmatprep.subr.bf16.mxu0 0
        %1832 = vmatpush1.bf16.msra.mxu0 0
        %1833 = vmatprep.subr.bf16.mxu0 0
        %1834 = vmatpush1.bf16.msra.mxu0 0
        %1835 = vmatprep.subr.bf16.mxu0 0
        %1836 = vmatpush1.bf16.msra.mxu0 0
        %1837 = vmatprep.subr.bf16.mxu0 0
        %1838 = vmatpush1.bf16.msra.mxu0 0
        %1839 = vmatprep.subr.bf16.mxu0 0
        %1840 = vmatpush1.bf16.msra.mxu0 0
        %1841 = vmatprep.subr.bf16.mxu0 0
        %1842 = vmatpush1.bf16.msra.mxu0 0
        %1843 = vmatprep.subr.bf16.mxu0 0
        %1844 = vmatpush1.bf16.msra.mxu0 0
        %1845 = vmatprep.mubr.bf16.mxu0 0
        %1846 = vmatmul.mubr.bf16.gmra.mrb[0].mxu0 %v1811
        %v1847 = vpop.f32.mrb[0].mxu0
        %v1848 = vadd.f32 0.0, %v1847
        %v1849 = vpop.f32.mrb[0].mxu0
        %v1850 = vpop.f32.mrb[0].mxu0
        %v1851 = vadd.f32 0.0, %v1850
        %v1852 = vpop.f32.mrb[0].mxu0
        %1853 = vdwg.mxu0
        %v1854 = vadd.f32 %v1772, %v1848
        %v1855 = vadd.f32 %v1773, %v1851
        %v1856 = vld [vmem:[%s384 + $0xc] sm:$0xff]
        %v1857 = vld [vmem:[%s384 + $0x14] sm:$0xff]
        %v1858 = vpack.c.bf16 %v1857, %v1856
        %s1859 = scalar_lea.vmem %s2, 128
        %v1860 = vld [vmem:[%s1859] sm:$0xf]
        %v1861 = vld [vmem:[%s1859 + $0x4] sm:$0xf]
        %v1862 = vld [vmem:[%s1859 + $0x8] sm:$0xf]
        %v1863 = vld [vmem:[%s1859 + $0xc] sm:$0xf]
        %v1864 = vld [vmem:[%s1859 + $0x10] sm:$0xf]
        %v1865 = vld [vmem:[%s1859 + $0x14] sm:$0xf]
        %v1866 = vld [vmem:[%s1859 + $0x18] sm:$0xf]
        %v1867 = vld [vmem:[%s1859 + $0x1c] sm:$0xf]
        %v1876 = vunpack.c.l.b16 %v1860
        %v1877 = vunpack.c.l.b16 %v1861
        %v1878 = vunpack.c.l.b16 %v1862
        %v1879 = vunpack.c.l.b16 %v1863
        %v1880 = vunpack.c.l.b16 %v1864
        %v1881 = vunpack.c.l.b16 %v1865
        %v1882 = vunpack.c.l.b16 %v1866
        %v1883 = vunpack.c.l.b16 %v1867
        %v1884 = vpack.c.b16 %v1877, %v1876
        %v1885 = vpack.c.b16 %v1879, %v1878
        %v1886 = vpack.c.b16 %v1881, %v1880
        %v1887 = vpack.c.b16 %v1883, %v1882
        %v1893 = vsel %vm433, %v1858, 0
        %1895 = vmatprep.subr.bf16.mxu0 0
        %1896 = vmatpush1.bf16.msra.mxu0 %v1884
        %1897 = vmatprep.subr.bf16.mxu0 0
        %1898 = vmatpush1.bf16.msra.mxu0 %v1885
        %1899 = vmatprep.subr.bf16.mxu0 0
        %1900 = vmatpush1.bf16.msra.mxu0 %v1886
        %1901 = vmatprep.subr.bf16.mxu0 0
        %1902 = vmatpush1.bf16.msra.mxu0 %v1887
        %1903 = vmatprep.subr.bf16.mxu0 0
        %1904 = vmatpush1.bf16.msra.mxu0 0
        %1905 = vmatprep.subr.bf16.mxu0 0
        %1906 = vmatpush1.bf16.msra.mxu0 0
        %1907 = vmatprep.subr.bf16.mxu0 0
        %1908 = vmatpush1.bf16.msra.mxu0 0
        %1909 = vmatprep.subr.bf16.mxu0 0
        %1910 = vmatpush1.bf16.msra.mxu0 0
        %1911 = vmatprep.subr.bf16.mxu0 0
        %1912 = vmatpush1.bf16.msra.mxu0 0
        %1913 = vmatprep.subr.bf16.mxu0 0
        %1914 = vmatpush1.bf16.msra.mxu0 0
        %1915 = vmatprep.subr.bf16.mxu0 0
        %1916 = vmatpush1.bf16.msra.mxu0 0
        %1917 = vmatprep.subr.bf16.mxu0 0
        %1918 = vmatpush1.bf16.msra.mxu0 0
        %1919 = vmatprep.subr.bf16.mxu0 0
        %1920 = vmatpush1.bf16.msra.mxu0 0
        %1921 = vmatprep.subr.bf16.mxu0 0
        %1922 = vmatpush1.bf16.msra.mxu0 0
        %1923 = vmatprep.subr.bf16.mxu0 0
        %1924 = vmatpush1.bf16.msra.mxu0 0
        %1925 = vmatprep.subr.bf16.mxu0 0
        %1926 = vmatpush1.bf16.msra.mxu0 0
        %1927 = vmatprep.mubr.bf16.mxu0 0
        %1928 = vmatmul.mubr.bf16.gmra.mrb[0].mxu0 %v1893
        %v1929 = vpop.f32.mrb[0].mxu0
        %v1930 = vadd.f32 0.0, %v1929
        %v1931 = vpop.f32.mrb[0].mxu0
        %v1932 = vpop.f32.mrb[0].mxu0
        %v1933 = vadd.f32 0.0, %v1932
        %v1934 = vpop.f32.mrb[0].mxu0
        %1935 = vdwg.mxu0
        %v1936 = vadd.f32 %v1854, %v1930
        %v1937 = vadd.f32 %v1855, %v1933
        %v1938 = vld [vmem:[%s8] sm:$0x1]
        %v1940 = vlaneseq
        %v1941 = vshrl.u32 %v1940, 7
        %v1942 = vsub.s32 0, %v1941
        %v1943 = vrot.slane %v1938, %v1942
        %v1945 = vadd.f32 %v1936, %v1943
        %v1946 = vadd.f32 %v1937, %v1943
        %v1947 = vmax.f32 %v1945, 0.0
        %v1948 = vmax.f32 %v1946, 0.0
        %1949 = vst [vmem:[#allocation3] sm:$0xf] 0.0
        %1950 = vst [vmem:[#allocation3 + $0x14] sm:$0xf] 0.0
        %1951 = vst [vmem:[#allocation3 + $0x4] sm:$0xff] %v1947
        %1952 = vst [vmem:[#allocation3 + $0xc] sm:$0xff] %v1948
        %v1953 = vld [vmem:[#allocation3] sm:$0xff]
        %v1954 = vld [vmem:[#allocation3 + $0x8] sm:$0xff]
        %v1955 = vpack.c.bf16 %v1954, %v1953
        %v1956 = vld [vmem:[%s5] sm:$0xff]
        %v1957 = vld [vmem:[%s5 + $0x8] sm:$0xff]
        %v1958 = vld [vmem:[%s5 + $0x10] sm:$0xff]
        %v1959 = vld [vmem:[%s5 + $0x18] sm:$0xff]
        %v1960 = vld [vmem:[%s5 + $0x20] sm:$0xff]
        %v1961 = vld [vmem:[%s5 + $0x28] sm:$0xff]
        %v1962 = vld [vmem:[%s5 + $0x30] sm:$0xff]
        %v1963 = vld [vmem:[%s5 + $0x38] sm:$0xff]
        %v1964 = vld [vmem:[%s5 + $0x40] sm:$0xff]
        %v1965 = vld [vmem:[%s5 + $0x48] sm:$0xff]
        %v1966 = vld [vmem:[%s5 + $0x50] sm:$0xff]
        %v1967 = vld [vmem:[%s5 + $0x58] sm:$0xff]
        %v1968 = vld [vmem:[%s5 + $0x60] sm:$0xff]
        %v1969 = vld [vmem:[%s5 + $0x68] sm:$0xff]
        %v1970 = vld [vmem:[%s5 + $0x70] sm:$0xff]
        %v1971 = vld [vmem:[%s5 + $0x78] sm:$0xff]
        %v1988 = vunpack.c.l.b16 %v1956
        %v1989 = vunpack.c.h.b16 %v1956
        %v1990 = vunpack.c.l.b16 %v1957
        %v1991 = vunpack.c.h.b16 %v1957
        %v1992 = vunpack.c.l.b16 %v1958
        %v1993 = vunpack.c.h.b16 %v1958
        %v1994 = vunpack.c.l.b16 %v1959
        %v1995 = vunpack.c.h.b16 %v1959
        %v1996 = vunpack.c.l.b16 %v1960
        %v1997 = vunpack.c.h.b16 %v1960
        %v1998 = vunpack.c.l.b16 %v1961
        %v1999 = vunpack.c.h.b16 %v1961
        %v2000 = vunpack.c.l.b16 %v1962
        %v2001 = vunpack.c.h.b16 %v1962
        %v2002 = vunpack.c.l.b16 %v1963
        %v2003 = vunpack.c.h.b16 %v1963
        %v2004 = vunpack.c.l.b16 %v1964
        %v2005 = vunpack.c.h.b16 %v1964
        %v2006 = vunpack.c.l.b16 %v1965
        %v2007 = vunpack.c.h.b16 %v1965
        %v2008 = vunpack.c.l.b16 %v1966
        %v2009 = vunpack.c.h.b16 %v1966
        %v2010 = vunpack.c.l.b16 %v1967
        %v2011 = vunpack.c.h.b16 %v1967
        %v2012 = vunpack.c.l.b16 %v1968
        %v2013 = vunpack.c.h.b16 %v1968
        %v2014 = vunpack.c.l.b16 %v1969
        %v2015 = vunpack.c.h.b16 %v1969
        %v2016 = vunpack.c.l.b16 %v1970
        %v2017 = vunpack.c.h.b16 %v1970
        %v2018 = vunpack.c.l.b16 %v1971
        %v2019 = vunpack.c.h.b16 %v1971
        %v2020 = vpack.c.b16 %v1990, %v1988
        %v2021 = vpack.c.b16 %v1991, %v1989
        %v2022 = vpack.c.b16 %v1994, %v1992
        %v2023 = vpack.c.b16 %v1995, %v1993
        %v2024 = vpack.c.b16 %v1998, %v1996
        %v2025 = vpack.c.b16 %v1999, %v1997
        %v2026 = vpack.c.b16 %v2002, %v2000
        %v2027 = vpack.c.b16 %v2003, %v2001
        %v2028 = vpack.c.b16 %v2006, %v2004
        %v2029 = vpack.c.b16 %v2007, %v2005
        %v2030 = vpack.c.b16 %v2010, %v2008
        %v2031 = vpack.c.b16 %v2011, %v2009
        %v2032 = vpack.c.b16 %v2014, %v2012
        %v2033 = vpack.c.b16 %v2015, %v2013
        %v2034 = vpack.c.b16 %v2018, %v2016
        %v2035 = vpack.c.b16 %v2019, %v2017
        %2052 = vmatprep.subr.bf16.mxu0 %v2021
        %2053 = vmatpush1.bf16.msra.mxu0 %v2020
        %2054 = vmatprep.subr.bf16.mxu0 %v2023
        %2055 = vmatpush1.bf16.msra.mxu0 %v2022
        %2056 = vmatprep.subr.bf16.mxu0 %v2025
        %2057 = vmatpush1.bf16.msra.mxu0 %v2024
        %2058 = vmatprep.subr.bf16.mxu0 %v2027
        %2059 = vmatpush1.bf16.msra.mxu0 %v2026
        %2060 = vmatprep.subr.bf16.mxu0 %v2029
        %2061 = vmatpush1.bf16.msra.mxu0 %v2028
        %2062 = vmatprep.subr.bf16.mxu0 %v2031
        %2063 = vmatpush1.bf16.msra.mxu0 %v2030
        %2064 = vmatprep.subr.bf16.mxu0 %v2033
        %2065 = vmatpush1.bf16.msra.mxu0 %v2032
        %2066 = vmatprep.subr.bf16.mxu0 %v2035
        %2067 = vmatpush1.bf16.msra.mxu0 %v2034
        %2068 = vmatprep.subr.bf16.mxu0 0
        %2069 = vmatpush1.bf16.msra.mxu0 0
        %2070 = vmatprep.subr.bf16.mxu0 0
        %2071 = vmatpush1.bf16.msra.mxu0 0
        %2072 = vmatprep.subr.bf16.mxu0 0
        %2073 = vmatpush1.bf16.msra.mxu0 0
        %2074 = vmatprep.subr.bf16.mxu0 0
        %2075 = vmatpush1.bf16.msra.mxu0 0
        %2076 = vmatprep.subr.bf16.mxu0 0
        %2077 = vmatpush1.bf16.msra.mxu0 0
        %2078 = vmatprep.subr.bf16.mxu0 0
        %2079 = vmatpush1.bf16.msra.mxu0 0
        %2080 = vmatprep.subr.bf16.mxu0 0
        %2081 = vmatpush1.bf16.msra.mxu0 0
        %2082 = vmatprep.subr.bf16.mxu0 0
        %2083 = vmatpush1.bf16.msra.mxu0 0
        %2084 = vmatprep.mubr.bf16.mxu0 0
        %2085 = vmatmul.mubr.bf16.gmra.mrb[0].mxu0 %v1955
        %v2086 = vpop.f32.mrb[0].mxu0
        %v2087 = vadd.f32 0.0, %v2086
        %v2088 = vpop.f32.mrb[0].mxu0
        %v2089 = vadd.f32 0.0, %v2088
        %v2090 = vpop.f32.mrb[0].mxu0
        %v2091 = vadd.f32 0.0, %v2090
        %v2092 = vpop.f32.mrb[0].mxu0
        %v2093 = vadd.f32 0.0, %v2092
        %2094 = vdwg.mxu0
        %v2095 = vadd.f32 %v1529, %v2087
        %v2096 = vadd.f32 %v1530, %v2089
        %v2097 = vadd.f32 %v1531, %v2091
        %v2098 = vadd.f32 %v1532, %v2093
        %v2099 = vld [vmem:[#allocation3 + $0x2] sm:$0xff]
        %v2100 = vld [vmem:[#allocation3 + $0xa] sm:$0xff]
        %v2101 = vpack.c.bf16 %v2100, %v2099
        %s2102 = scalar_lea.vmem %s5, 128
        %v2103 = vld [vmem:[%s2102] sm:$0xff]
        %v2104 = vld [vmem:[%s2102 + $0x8] sm:$0xff]
        %v2105 = vld [vmem:[%s2102 + $0x10] sm:$0xff]
        %v2106 = vld [vmem:[%s2102 + $0x18] sm:$0xff]
        %v2107 = vld [vmem:[%s2102 + $0x20] sm:$0xff]
        %v2108 = vld [vmem:[%s2102 + $0x28] sm:$0xff]
        %v2109 = vld [vmem:[%s2102 + $0x30] sm:$0xff]
        %v2110 = vld [vmem:[%s2102 + $0x38] sm:$0xff]
        %v2111 = vld [vmem:[%s2102 + $0x40] sm:$0xff]
        %v2112 = vld [vmem:[%s2102 + $0x48] sm:$0xff]
        %v2113 = vld [vmem:[%s2102 + $0x50] sm:$0xff]
        %v2114 = vld [vmem:[%s2102 + $0x58] sm:$0xff]
        %v2115 = vld [vmem:[%s2102 + $0x60] sm:$0xff]
        %v2116 = vld [vmem:[%s2102 + $0x68] sm:$0xff]
        %v2117 = vld [vmem:[%s2102 + $0x70] sm:$0xff]
        %v2118 = vld [vmem:[%s2102 + $0x78] sm:$0xff]
        %v2135 = vunpack.c.l.b16 %v2103
        %v2136 = vunpack.c.h.b16 %v2103
        %v2137 = vunpack.c.l.b16 %v2104
        %v2138 = vunpack.c.h.b16 %v2104
        %v2139 = vunpack.c.l.b16 %v2105
        %v2140 = vunpack.c.h.b16 %v2105
        %v2141 = vunpack.c.l.b16 %v2106
        %v2142 = vunpack.c.h.b16 %v2106
        %v2143 = vunpack.c.l.b16 %v2107
        %v2144 = vunpack.c.h.b16 %v2107
        %v2145 = vunpack.c.l.b16 %v2108
        %v2146 = vunpack.c.h.b16 %v2108
        %v2147 = vunpack.c.l.b16 %v2109
        %v2148 = vunpack.c.h.b16 %v2109
        %v2149 = vunpack.c.l.b16 %v2110
        %v2150 = vunpack.c.h.b16 %v2110
        %v2151 = vunpack.c.l.b16 %v2111
        %v2152 = vunpack.c.h.b16 %v2111
        %v2153 = vunpack.c.l.b16 %v2112
        %v2154 = vunpack.c.h.b16 %v2112
        %v2155 = vunpack.c.l.b16 %v2113
        %v2156 = vunpack.c.h.b16 %v2113
        %v2157 = vunpack.c.l.b16 %v2114
        %v2158 = vunpack.c.h.b16 %v2114
        %v2159 = vunpack.c.l.b16 %v2115
        %v2160 = vunpack.c.h.b16 %v2115
        %v2161 = vunpack.c.l.b16 %v2116
        %v2162 = vunpack.c.h.b16 %v2116
        %v2163 = vunpack.c.l.b16 %v2117
        %v2164 = vunpack.c.h.b16 %v2117
        %v2165 = vunpack.c.l.b16 %v2118
        %v2166 = vunpack.c.h.b16 %v2118
        %v2167 = vpack.c.b16 %v2137, %v2135
        %v2168 = vpack.c.b16 %v2138, %v2136
        %v2169 = vpack.c.b16 %v2141, %v2139
        %v2170 = vpack.c.b16 %v2142, %v2140
        %v2171 = vpack.c.b16 %v2145, %v2143
        %v2172 = vpack.c.b16 %v2146, %v2144
        %v2173 = vpack.c.b16 %v2149, %v2147
        %v2174 = vpack.c.b16 %v2150, %v2148
        %v2175 = vpack.c.b16 %v2153, %v2151
        %v2176 = vpack.c.b16 %v2154, %v2152
        %v2177 = vpack.c.b16 %v2157, %v2155
        %v2178 = vpack.c.b16 %v2158, %v2156
        %v2179 = vpack.c.b16 %v2161, %v2159
        %v2180 = vpack.c.b16 %v2162, %v2160
        %v2181 = vpack.c.b16 %v2165, %v2163
        %v2182 = vpack.c.b16 %v2166, %v2164
        %2199 = vmatprep.subr.bf16.mxu0 %v2168
        %2200 = vmatpush1.bf16.msra.mxu0 %v2167
        %2201 = vmatprep.subr.bf16.mxu0 %v2170
        %2202 = vmatpush1.bf16.msra.mxu0 %v2169
        %2203 = vmatprep.subr.bf16.mxu0 %v2172
        %2204 = vmatpush1.bf16.msra.mxu0 %v2171
        %2205 = vmatprep.subr.bf16.mxu0 %v2174
        %2206 = vmatpush1.bf16.msra.mxu0 %v2173
        %2207 = vmatprep.subr.bf16.mxu0 %v2176
        %2208 = vmatpush1.bf16.msra.mxu0 %v2175
        %2209 = vmatprep.subr.bf16.mxu0 %v2178
        %2210 = vmatpush1.bf16.msra.mxu0 %v2177
        %2211 = vmatprep.subr.bf16.mxu0 %v2180
        %2212 = vmatpush1.bf16.msra.mxu0 %v2179
        %2213 = vmatprep.subr.bf16.mxu0 %v2182
        %2214 = vmatpush1.bf16.msra.mxu0 %v2181
        %2215 = vmatprep.subr.bf16.mxu0 0
        %2216 = vmatpush1.bf16.msra.mxu0 0
        %2217 = vmatprep.subr.bf16.mxu0 0
        %2218 = vmatpush1.bf16.msra.mxu0 0
        %2219 = vmatprep.subr.bf16.mxu0 0
        %2220 = vmatpush1.bf16.msra.mxu0 0
        %2221 = vmatprep.subr.bf16.mxu0 0
        %2222 = vmatpush1.bf16.msra.mxu0 0
        %2223 = vmatprep.subr.bf16.mxu0 0
        %2224 = vmatpush1.bf16.msra.mxu0 0
        %2225 = vmatprep.subr.bf16.mxu0 0
        %2226 = vmatpush1.bf16.msra.mxu0 0
        %2227 = vmatprep.subr.bf16.mxu0 0
        %2228 = vmatpush1.bf16.msra.mxu0 0
        %2229 = vmatprep.subr.bf16.mxu0 0
        %2230 = vmatpush1.bf16.msra.mxu0 0
        %2231 = vmatprep.mubr.bf16.mxu0 0
        %2232 = vmatmul.mubr.bf16.gmra.mrb[0].mxu0 %v2101
        %v2233 = vpop.f32.mrb[0].mxu0
        %v2234 = vadd.f32 0.0, %v2233
        %v2235 = vpop.f32.mrb[0].mxu0
        %v2236 = vadd.f32 0.0, %v2235
        %v2237 = vpop.f32.mrb[0].mxu0
        %v2238 = vadd.f32 0.0, %v2237
        %v2239 = vpop.f32.mrb[0].mxu0
        %v2240 = vadd.f32 0.0, %v2239
        %2241 = vdwg.mxu0
        %v2242 = vadd.f32 %v2095, %v2234
        %v2243 = vadd.f32 %v2096, %v2236
        %v2244 = vadd.f32 %v2097, %v2238
        %v2245 = vadd.f32 %v2098, %v2240
        %v2246 = vld [vmem:[#allocation3 + $0x4] sm:$0xff]
        %v2247 = vld [vmem:[#allocation3 + $0xc] sm:$0xff]
        %v2248 = vpack.c.bf16 %v2247, %v2246
        %s2249 = scalar_lea.vmem %s5, 256
        %v2250 = vld [vmem:[%s2249] sm:$0xff]
        %v2251 = vld [vmem:[%s2249 + $0x8] sm:$0xff]
        %v2252 = vld [vmem:[%s2249 + $0x10] sm:$0xff]
        %v2253 = vld [vmem:[%s2249 + $0x18] sm:$0xff]
        %v2254 = vld [vmem:[%s2249 + $0x20] sm:$0xff]
        %v2255 = vld [vmem:[%s2249 + $0x28] sm:$0xff]
        %v2256 = vld [vmem:[%s2249 + $0x30] sm:$0xff]
        %v2257 = vld [vmem:[%s2249 + $0x38] sm:$0xff]
        %v2258 = vld [vmem:[%s2249 + $0x40] sm:$0xff]
        %v2259 = vld [vmem:[%s2249 + $0x48] sm:$0xff]
        %v2260 = vld [vmem:[%s2249 + $0x50] sm:$0xff]
        %v2261 = vld [vmem:[%s2249 + $0x58] sm:$0xff]
        %v2262 = vld [vmem:[%s2249 + $0x60] sm:$0xff]
        %v2263 = vld [vmem:[%s2249 + $0x68] sm:$0xff]
        %v2264 = vld [vmem:[%s2249 + $0x70] sm:$0xff]
        %v2265 = vld [vmem:[%s2249 + $0x78] sm:$0xff]
        %v2282 = vunpack.c.l.b16 %v2250
        %v2283 = vunpack.c.h.b16 %v2250
        %v2284 = vunpack.c.l.b16 %v2251
        %v2285 = vunpack.c.h.b16 %v2251
        %v2286 = vunpack.c.l.b16 %v2252
        %v2287 = vunpack.c.h.b16 %v2252
        %v2288 = vunpack.c.l.b16 %v2253
        %v2289 = vunpack.c.h.b16 %v2253
        %v2290 = vunpack.c.l.b16 %v2254
        %v2291 = vunpack.c.h.b16 %v2254
        %v2292 = vunpack.c.l.b16 %v2255
        %v2293 = vunpack.c.h.b16 %v2255
        %v2294 = vunpack.c.l.b16 %v2256
        %v2295 = vunpack.c.h.b16 %v2256
        %v2296 = vunpack.c.l.b16 %v2257
        %v2297 = vunpack.c.h.b16 %v2257
        %v2298 = vunpack.c.l.b16 %v2258
        %v2299 = vunpack.c.h.b16 %v2258
        %v2300 = vunpack.c.l.b16 %v2259
        %v2301 = vunpack.c.h.b16 %v2259
        %v2302 = vunpack.c.l.b16 %v2260
        %v2303 = vunpack.c.h.b16 %v2260
        %v2304 = vunpack.c.l.b16 %v2261
        %v2305 = vunpack.c.h.b16 %v2261
        %v2306 = vunpack.c.l.b16 %v2262
        %v2307 = vunpack.c.h.b16 %v2262
        %v2308 = vunpack.c.l.b16 %v2263
        %v2309 = vunpack.c.h.b16 %v2263
        %v2310 = vunpack.c.l.b16 %v2264
        %v2311 = vunpack.c.h.b16 %v2264
        %v2312 = vunpack.c.l.b16 %v2265
        %v2313 = vunpack.c.h.b16 %v2265
        %v2314 = vpack.c.b16 %v2284, %v2282
        %v2315 = vpack.c.b16 %v2285, %v2283
        %v2316 = vpack.c.b16 %v2288, %v2286
        %v2317 = vpack.c.b16 %v2289, %v2287
        %v2318 = vpack.c.b16 %v2292, %v2290
        %v2319 = vpack.c.b16 %v2293, %v2291
        %v2320 = vpack.c.b16 %v2296, %v2294
        %v2321 = vpack.c.b16 %v2297, %v2295
        %v2322 = vpack.c.b16 %v2300, %v2298
        %v2323 = vpack.c.b16 %v2301, %v2299
        %v2324 = vpack.c.b16 %v2304, %v2302
        %v2325 = vpack.c.b16 %v2305, %v2303
        %v2326 = vpack.c.b16 %v2308, %v2306
        %v2327 = vpack.c.b16 %v2309, %v2307
        %v2328 = vpack.c.b16 %v2312, %v2310
        %v2329 = vpack.c.b16 %v2313, %v2311
        %2346 = vmatprep.subr.bf16.mxu0 %v2315
        %2347 = vmatpush1.bf16.msra.mxu0 %v2314
        %2348 = vmatprep.subr.bf16.mxu0 %v2317
        %2349 = vmatpush1.bf16.msra.mxu0 %v2316
        %2350 = vmatprep.subr.bf16.mxu0 %v2319
        %2351 = vmatpush1.bf16.msra.mxu0 %v2318
        %2352 = vmatprep.subr.bf16.mxu0 %v2321
        %2353 = vmatpush1.bf16.msra.mxu0 %v2320
        %2354 = vmatprep.subr.bf16.mxu0 %v2323
        %2355 = vmatpush1.bf16.msra.mxu0 %v2322
        %2356 = vmatprep.subr.bf16.mxu0 %v2325
        %2357 = vmatpush1.bf16.msra.mxu0 %v2324
        %2358 = vmatprep.subr.bf16.mxu0 %v2327
        %2359 = vmatpush1.bf16.msra.mxu0 %v2326
        %2360 = vmatprep.subr.bf16.mxu0 %v2329
        %2361 = vmatpush1.bf16.msra.mxu0 %v2328
        %2362 = vmatprep.subr.bf16.mxu0 0
        %2363 = vmatpush1.bf16.msra.mxu0 0
        %2364 = vmatprep.subr.bf16.mxu0 0
        %2365 = vmatpush1.bf16.msra.mxu0 0
        %2366 = vmatprep.subr.bf16.mxu0 0
        %2367 = vmatpush1.bf16.msra.mxu0 0
        %2368 = vmatprep.subr.bf16.mxu0 0
        %2369 = vmatpush1.bf16.msra.mxu0 0
        %2370 = vmatprep.subr.bf16.mxu0 0
        %2371 = vmatpush1.bf16.msra.mxu0 0
        %2372 = vmatprep.subr.bf16.mxu0 0
        %2373 = vmatpush1.bf16.msra.mxu0 0
        %2374 = vmatprep.subr.bf16.mxu0 0
        %2375 = vmatpush1.bf16.msra.mxu0 0
        %2376 = vmatprep.subr.bf16.mxu0 0
        %2377 = vmatpush1.bf16.msra.mxu0 0
        %2378 = vmatprep.mubr.bf16.mxu0 0
        %2379 = vmatmul.mubr.bf16.gmra.mrb[0].mxu0 %v2248
        %v2380 = vpop.f32.mrb[0].mxu0
        %v2381 = vadd.f32 0.0, %v2380
        %v2382 = vpop.f32.mrb[0].mxu0
        %v2383 = vadd.f32 0.0, %v2382
        %v2384 = vpop.f32.mrb[0].mxu0
        %v2385 = vadd.f32 0.0, %v2384
        %v2386 = vpop.f32.mrb[0].mxu0
        %v2387 = vadd.f32 0.0, %v2386
        %2388 = vdwg.mxu0
        %v2389 = vadd.f32 %v2242, %v2381
        %v2390 = vadd.f32 %v2243, %v2383
        %v2391 = vadd.f32 %v2244, %v2385
        %v2392 = vadd.f32 %v2245, %v2387
        %v2393 = vld [vmem:[#allocation3 + $0x6] sm:$0xff]
        %v2394 = vld [vmem:[#allocation3 + $0xe] sm:$0xff]
        %v2395 = vpack.c.bf16 %v2394, %v2393
        %s2396 = scalar_lea.vmem %s5, 384
        %v2397 = vld [vmem:[%s2396] sm:$0xff]
        %v2398 = vld [vmem:[%s2396 + $0x8] sm:$0xff]
        %v2399 = vld [vmem:[%s2396 + $0x10] sm:$0xff]
        %v2400 = vld [vmem:[%s2396 + $0x18] sm:$0xff]
        %v2401 = vld [vmem:[%s2396 + $0x20] sm:$0xff]
        %v2402 = vld [vmem:[%s2396 + $0x28] sm:$0xff]
        %v2403 = vld [vmem:[%s2396 + $0x30] sm:$0xff]
        %v2404 = vld [vmem:[%s2396 + $0x38] sm:$0xff]
        %v2405 = vld [vmem:[%s2396 + $0x40] sm:$0xff]
        %v2406 = vld [vmem:[%s2396 + $0x48] sm:$0xff]
        %v2407 = vld [vmem:[%s2396 + $0x50] sm:$0xff]
        %v2408 = vld [vmem:[%s2396 + $0x58] sm:$0xff]
        %v2409 = vld [vmem:[%s2396 + $0x60] sm:$0xff]
        %v2410 = vld [vmem:[%s2396 + $0x68] sm:$0xff]
        %v2411 = vld [vmem:[%s2396 + $0x70] sm:$0xff]
        %v2412 = vld [vmem:[%s2396 + $0x78] sm:$0xff]
        %v2429 = vunpack.c.l.b16 %v2397
        %v2430 = vunpack.c.h.b16 %v2397
        %v2431 = vunpack.c.l.b16 %v2398
        %v2432 = vunpack.c.h.b16 %v2398
        %v2433 = vunpack.c.l.b16 %v2399
        %v2434 = vunpack.c.h.b16 %v2399
        %v2435 = vunpack.c.l.b16 %v2400
        %v2436 = vunpack.c.h.b16 %v2400
        %v2437 = vunpack.c.l.b16 %v2401
        %v2438 = vunpack.c.h.b16 %v2401
        %v2439 = vunpack.c.l.b16 %v2402
        %v2440 = vunpack.c.h.b16 %v2402
        %v2441 = vunpack.c.l.b16 %v2403
        %v2442 = vunpack.c.h.b16 %v2403
        %v2443 = vunpack.c.l.b16 %v2404
        %v2444 = vunpack.c.h.b16 %v2404
        %v2445 = vunpack.c.l.b16 %v2405
        %v2446 = vunpack.c.h.b16 %v2405
        %v2447 = vunpack.c.l.b16 %v2406
        %v2448 = vunpack.c.h.b16 %v2406
        %v2449 = vunpack.c.l.b16 %v2407
        %v2450 = vunpack.c.h.b16 %v2407
        %v2451 = vunpack.c.l.b16 %v2408
        %v2452 = vunpack.c.h.b16 %v2408
        %v2453 = vunpack.c.l.b16 %v2409
        %v2454 = vunpack.c.h.b16 %v2409
        %v2455 = vunpack.c.l.b16 %v2410
        %v2456 = vunpack.c.h.b16 %v2410
        %v2457 = vunpack.c.l.b16 %v2411
        %v2458 = vunpack.c.h.b16 %v2411
        %v2459 = vunpack.c.l.b16 %v2412
        %v2460 = vunpack.c.h.b16 %v2412
        %v2461 = vpack.c.b16 %v2431, %v2429
        %v2462 = vpack.c.b16 %v2432, %v2430
        %v2463 = vpack.c.b16 %v2435, %v2433
        %v2464 = vpack.c.b16 %v2436, %v2434
        %v2465 = vpack.c.b16 %v2439, %v2437
        %v2466 = vpack.c.b16 %v2440, %v2438
        %v2467 = vpack.c.b16 %v2443, %v2441
        %v2468 = vpack.c.b16 %v2444, %v2442
        %v2469 = vpack.c.b16 %v2447, %v2445
        %v2470 = vpack.c.b16 %v2448, %v2446
        %v2471 = vpack.c.b16 %v2451, %v2449
        %v2472 = vpack.c.b16 %v2452, %v2450
        %v2473 = vpack.c.b16 %v2455, %v2453
        %v2474 = vpack.c.b16 %v2456, %v2454
        %v2475 = vpack.c.b16 %v2459, %v2457
        %v2476 = vpack.c.b16 %v2460, %v2458
        %2493 = vmatprep.subr.bf16.mxu0 %v2462
        %2494 = vmatpush1.bf16.msra.mxu0 %v2461
        %2495 = vmatprep.subr.bf16.mxu0 %v2464
        %2496 = vmatpush1.bf16.msra.mxu0 %v2463
        %2497 = vmatprep.subr.bf16.mxu0 %v2466
        %2498 = vmatpush1.bf16.msra.mxu0 %v2465
        %2499 = vmatprep.subr.bf16.mxu0 %v2468
        %2500 = vmatpush1.bf16.msra.mxu0 %v2467
        %2501 = vmatprep.subr.bf16.mxu0 %v2470
        %2502 = vmatpush1.bf16.msra.mxu0 %v2469
        %2503 = vmatprep.subr.bf16.mxu0 %v2472
        %2504 = vmatpush1.bf16.msra.mxu0 %v2471
        %2505 = vmatprep.subr.bf16.mxu0 %v2474
        %2506 = vmatpush1.bf16.msra.mxu0 %v2473
        %2507 = vmatprep.subr.bf16.mxu0 %v2476
        %2508 = vmatpush1.bf16.msra.mxu0 %v2475
        %2509 = vmatprep.subr.bf16.mxu0 0
        %2510 = vmatpush1.bf16.msra.mxu0 0
        %2511 = vmatprep.subr.bf16.mxu0 0
        %2512 = vmatpush1.bf16.msra.mxu0 0
        %2513 = vmatprep.subr.bf16.mxu0 0
        %2514 = vmatpush1.bf16.msra.mxu0 0
        %2515 = vmatprep.subr.bf16.mxu0 0
        %2516 = vmatpush1.bf16.msra.mxu0 0
        %2517 = vmatprep.subr.bf16.mxu0 0
        %2518 = vmatpush1.bf16.msra.mxu0 0
        %2519 = vmatprep.subr.bf16.mxu0 0
        %2520 = vmatpush1.bf16.msra.mxu0 0
        %2521 = vmatprep.subr.bf16.mxu0 0
        %2522 = vmatpush1.bf16.msra.mxu0 0
        %2523 = vmatprep.subr.bf16.mxu0 0
        %2524 = vmatpush1.bf16.msra.mxu0 0
        %2525 = vmatprep.mubr.bf16.mxu0 0
        %2526 = vmatmul.mubr.bf16.gmra.mrb[0].mxu0 %v2395
        %v2527 = vpop.f32.mrb[0].mxu0
        %v2528 = vadd.f32 0.0, %v2527
        %v2529 = vpop.f32.mrb[0].mxu0
        %v2530 = vadd.f32 0.0, %v2529
        %v2531 = vpop.f32.mrb[0].mxu0
        %v2532 = vadd.f32 0.0, %v2531
        %v2533 = vpop.f32.mrb[0].mxu0
        %v2534 = vadd.f32 0.0, %v2533
        %2535 = vdwg.mxu0
        %v2536 = vadd.f32 %v2389, %v2528
        %v2537 = vadd.f32 %v2390, %v2530
        %v2538 = vadd.f32 %v2391, %v2532
        %v2539 = vadd.f32 %v2392, %v2534
        %v2540 = vld [vmem:[#allocation3 + $0x8] sm:$0xff]
        %v2541 = vld [vmem:[#allocation3 + $0x10] sm:$0xff]
        %v2542 = vpack.c.bf16 %v2541, %v2540
        %s2543 = scalar_lea.vmem %s5, 512
        %v2544 = vld [vmem:[%s2543] sm:$0xff]
        %v2545 = vld [vmem:[%s2543 + $0x8] sm:$0xff]
        %v2546 = vld [vmem:[%s2543 + $0x10] sm:$0xff]
        %v2547 = vld [vmem:[%s2543 + $0x18] sm:$0xff]
        %v2548 = vld [vmem:[%s2543 + $0x20] sm:$0xff]
        %v2549 = vld [vmem:[%s2543 + $0x28] sm:$0xff]
        %v2550 = vld [vmem:[%s2543 + $0x30] sm:$0xff]
        %v2551 = vld [vmem:[%s2543 + $0x38] sm:$0xff]
        %v2552 = vld [vmem:[%s2543 + $0x40] sm:$0xff]
        %v2553 = vld [vmem:[%s2543 + $0x48] sm:$0xff]
        %v2554 = vld [vmem:[%s2543 + $0x50] sm:$0xff]
        %v2555 = vld [vmem:[%s2543 + $0x58] sm:$0xff]
        %v2556 = vld [vmem:[%s2543 + $0x60] sm:$0xff]
        %v2557 = vld [vmem:[%s2543 + $0x68] sm:$0xff]
        %v2558 = vld [vmem:[%s2543 + $0x70] sm:$0xff]
        %v2559 = vld [vmem:[%s2543 + $0x78] sm:$0xff]
        %v2576 = vunpack.c.l.b16 %v2544
        %v2577 = vunpack.c.h.b16 %v2544
        %v2578 = vunpack.c.l.b16 %v2545
        %v2579 = vunpack.c.h.b16 %v2545
        %v2580 = vunpack.c.l.b16 %v2546
        %v2581 = vunpack.c.h.b16 %v2546
        %v2582 = vunpack.c.l.b16 %v2547
        %v2583 = vunpack.c.h.b16 %v2547
        %v2584 = vunpack.c.l.b16 %v2548
        %v2585 = vunpack.c.h.b16 %v2548
        %v2586 = vunpack.c.l.b16 %v2549
        %v2587 = vunpack.c.h.b16 %v2549
        %v2588 = vunpack.c.l.b16 %v2550
        %v2589 = vunpack.c.h.b16 %v2550
        %v2590 = vunpack.c.l.b16 %v2551
        %v2591 = vunpack.c.h.b16 %v2551
        %v2592 = vunpack.c.l.b16 %v2552
        %v2593 = vunpack.c.h.b16 %v2552
        %v2594 = vunpack.c.l.b16 %v2553
        %v2595 = vunpack.c.h.b16 %v2553
        %v2596 = vunpack.c.l.b16 %v2554
        %v2597 = vunpack.c.h.b16 %v2554
        %v2598 = vunpack.c.l.b16 %v2555
        %v2599 = vunpack.c.h.b16 %v2555
        %v2600 = vunpack.c.l.b16 %v2556
        %v2601 = vunpack.c.h.b16 %v2556
        %v2602 = vunpack.c.l.b16 %v2557
        %v2603 = vunpack.c.h.b16 %v2557
        %v2604 = vunpack.c.l.b16 %v2558
        %v2605 = vunpack.c.h.b16 %v2558
        %v2606 = vunpack.c.l.b16 %v2559
        %v2607 = vunpack.c.h.b16 %v2559
        %v2608 = vpack.c.b16 %v2578, %v2576
        %v2609 = vpack.c.b16 %v2579, %v2577
        %v2610 = vpack.c.b16 %v2582, %v2580
        %v2611 = vpack.c.b16 %v2583, %v2581
        %v2612 = vpack.c.b16 %v2586, %v2584
        %v2613 = vpack.c.b16 %v2587, %v2585
        %v2614 = vpack.c.b16 %v2590, %v2588
        %v2615 = vpack.c.b16 %v2591, %v2589
        %v2616 = vpack.c.b16 %v2594, %v2592
        %v2617 = vpack.c.b16 %v2595, %v2593
        %v2618 = vpack.c.b16 %v2598, %v2596
        %v2619 = vpack.c.b16 %v2599, %v2597
        %v2620 = vpack.c.b16 %v2602, %v2600
        %v2621 = vpack.c.b16 %v2603, %v2601
        %v2622 = vpack.c.b16 %v2606, %v2604
        %v2623 = vpack.c.b16 %v2607, %v2605
        %2640 = vmatprep.subr.bf16.mxu0 %v2609
        %2641 = vmatpush1.bf16.msra.mxu0 %v2608
        %2642 = vmatprep.subr.bf16.mxu0 %v2611
        %2643 = vmatpush1.bf16.msra.mxu0 %v2610
        %2644 = vmatprep.subr.bf16.mxu0 %v2613
        %2645 = vmatpush1.bf16.msra.mxu0 %v2612
        %2646 = vmatprep.subr.bf16.mxu0 %v2615
        %2647 = vmatpush1.bf16.msra.mxu0 %v2614
        %2648 = vmatprep.subr.bf16.mxu0 %v2617
        %2649 = vmatpush1.bf16.msra.mxu0 %v2616
        %2650 = vmatprep.subr.bf16.mxu0 %v2619
        %2651 = vmatpush1.bf16.msra.mxu0 %v2618
        %2652 = vmatprep.subr.bf16.mxu0 %v2621
        %2653 = vmatpush1.bf16.msra.mxu0 %v2620
        %2654 = vmatprep.subr.bf16.mxu0 %v2623
        %2655 = vmatpush1.bf16.msra.mxu0 %v2622
        %2656 = vmatprep.subr.bf16.mxu0 0
        %2657 = vmatpush1.bf16.msra.mxu0 0
        %2658 = vmatprep.subr.bf16.mxu0 0
        %2659 = vmatpush1.bf16.msra.mxu0 0
        %2660 = vmatprep.subr.bf16.mxu0 0
        %2661 = vmatpush1.bf16.msra.mxu0 0
        %2662 = vmatprep.subr.bf16.mxu0 0
        %2663 = vmatpush1.bf16.msra.mxu0 0
        %2664 = vmatprep.subr.bf16.mxu0 0
        %2665 = vmatpush1.bf16.msra.mxu0 0
        %2666 = vmatprep.subr.bf16.mxu0 0
        %2667 = vmatpush1.bf16.msra.mxu0 0
        %2668 = vmatprep.subr.bf16.mxu0 0
        %2669 = vmatpush1.bf16.msra.mxu0 0
        %2670 = vmatprep.subr.bf16.mxu0 0
        %2671 = vmatpush1.bf16.msra.mxu0 0
        %2672 = vmatprep.mubr.bf16.mxu0 0
        %2673 = vmatmul.mubr.bf16.gmra.mrb[0].mxu0 %v2542
        %v2674 = vpop.f32.mrb[0].mxu0
        %v2675 = vadd.f32 0.0, %v2674
        %v2676 = vpop.f32.mrb[0].mxu0
        %v2677 = vadd.f32 0.0, %v2676
        %v2678 = vpop.f32.mrb[0].mxu0
        %v2679 = vadd.f32 0.0, %v2678
        %v2680 = vpop.f32.mrb[0].mxu0
        %v2681 = vadd.f32 0.0, %v2680
        %2682 = vdwg.mxu0
        %v2683 = vadd.f32 %v2536, %v2675
        %v2684 = vadd.f32 %v2537, %v2677
        %v2685 = vadd.f32 %v2538, %v2679
        %v2686 = vadd.f32 %v2539, %v2681
        %v2687 = vld [vmem:[%s384] sm:$0xff]
        %v2688 = vld [vmem:[%s384 + $0x8] sm:$0xff]
        %v2689 = vld [vmem:[%s384 + $0x10] sm:$0xf]
        %v2690 = vpack.c.bf16 %v2688, %v2687
        %v2691 = vpack.c.bf16 %v2689, %v2689
        %v2692 = vld [vmem:[%s3] sm:$0xff]
        %v2693 = vld [vmem:[%s3 + $0x8] sm:$0xff]
        %v2694 = vld [vmem:[%s3 + $0x10] sm:$0xff]
        %v2695 = vld [vmem:[%s3 + $0x18] sm:$0xff]
        %v2696 = vld [vmem:[%s3 + $0x20] sm:$0xff]
        %v2697 = vld [vmem:[%s3 + $0x28] sm:$0xff]
        %v2698 = vld [vmem:[%s3 + $0x30] sm:$0xff]
        %v2699 = vld [vmem:[%s3 + $0x38] sm:$0xff]
        %v2700 = vld [vmem:[%s384 + $0x3] sm:$0xff]
        %v2701 = vld [vmem:[%s384 + $0xb] sm:$0xff]
        %v2702 = vld [vmem:[%s384 + $0x13] sm:$0xf]
        %v2703 = vpack.c.bf16 %v2701, %v2700
        %v2704 = vpack.c.bf16 %v2702, %v2702
        %s2705 = scalar_lea.vmem %s3, 64
        %v2706 = vld [vmem:[%s2705] sm:$0xff]
        %v2707 = vld [vmem:[%s2705 + $0x8] sm:$0xff]
        %v2708 = vld [vmem:[%s2705 + $0x10] sm:$0xff]
        %v2709 = vld [vmem:[%s2705 + $0x18] sm:$0xff]
        %v2710 = vld [vmem:[%s2705 + $0x20] sm:$0xff]
        %v2711 = vld [vmem:[%s2705 + $0x28] sm:$0xff]
        %v2712 = vld [vmem:[%s2705 + $0x30] sm:$0xff]
        %v2713 = vld [vmem:[%s2705 + $0x38] sm:$0xff]
        %v2722 = vunpack.c.l.b16 %v2706
        %v2723 = vunpack.c.h.b16 %v2706
        %v2724 = vunpack.c.l.b16 %v2707
        %v2725 = vunpack.c.h.b16 %v2707
        %v2726 = vunpack.c.l.b16 %v2708
        %v2727 = vunpack.c.h.b16 %v2708
        %v2728 = vunpack.c.l.b16 %v2709
        %v2729 = vunpack.c.h.b16 %v2709
        %v2730 = vunpack.c.l.b16 %v2710
        %v2731 = vunpack.c.h.b16 %v2710
        %v2732 = vunpack.c.l.b16 %v2711
        %v2733 = vunpack.c.h.b16 %v2711
        %v2734 = vunpack.c.l.b16 %v2712
        %v2735 = vunpack.c.h.b16 %v2712
        %v2736 = vunpack.c.l.b16 %v2713
        %v2737 = vunpack.c.h.b16 %v2713
        %v2738 = vpack.c.b16 %v2724, %v2722
        %v2739 = vpack.c.b16 %v2725, %v2723
        %v2740 = vpack.c.b16 %v2728, %v2726
        %v2741 = vpack.c.b16 %v2729, %v2727
        %v2742 = vpack.c.b16 %v2732, %v2730
        %v2743 = vpack.c.b16 %v2733, %v2731
        %v2744 = vpack.c.b16 %v2736, %v2734
        %v2745 = vpack.c.b16 %v2737, %v2735
        %v2755 = vsel %vm433, %v2703, 0
        %v2758 = vsel %vm433, %v2704, 0
        %2760 = vmatprep.subr.bf16.mxu0 %v2739
        %2761 = vmatpush1.bf16.msra.mxu0 %v2738
        %2762 = vmatprep.subr.bf16.mxu0 %v2741
        %2763 = vmatpush1.bf16.msra.mxu0 %v2740
        %2764 = vmatprep.subr.bf16.mxu0 %v2743
        %2765 = vmatpush1.bf16.msra.mxu0 %v2742
        %2766 = vmatprep.subr.bf16.mxu0 %v2745
        %2767 = vmatpush1.bf16.msra.mxu0 %v2744
        %2768 = vmatprep.subr.bf16.mxu0 0
        %2769 = vmatpush1.bf16.msra.mxu0 0
        %2770 = vmatprep.subr.bf16.mxu0 0
        %2771 = vmatpush1.bf16.msra.mxu0 0
        %2772 = vmatprep.subr.bf16.mxu0 0
        %2773 = vmatpush1.bf16.msra.mxu0 0
        %2774 = vmatprep.subr.bf16.mxu0 0
        %2775 = vmatpush1.bf16.msra.mxu0 0
        %2776 = vmatprep.subr.bf16.mxu0 0
        %2777 = vmatpush1.bf16.msra.mxu0 0
        %2778 = vmatprep.subr.bf16.mxu0 0
        %2779 = vmatpush1.bf16.msra.mxu0 0
        %2780 = vmatprep.subr.bf16.mxu0 0
        %2781 = vmatpush1.bf16.msra.mxu0 0
        %2782 = vmatprep.subr.bf16.mxu0 0
        %2783 = vmatpush1.bf16.msra.mxu0 0
        %2784 = vmatprep.subr.bf16.mxu0 0
        %2785 = vmatpush1.bf16.msra.mxu0 0
        %2786 = vmatprep.subr.bf16.mxu0 0
        %2787 = vmatpush1.bf16.msra.mxu0 0
        %2788 = vmatprep.subr.bf16.mxu0 0
        %2789 = vmatpush1.bf16.msra.mxu0 0
        %2790 = vmatprep.subr.bf16.mxu0 0
        %2791 = vmatpush1.bf16.msra.mxu0 0
        %2792 = vmatprep.mubr.bf16.mxu0 0
        %2793 = vmatmul.mubr.bf16.gmra.mrb[0].mxu0 %v2755
        %v2794 = vpop.f32.mrb[0].mxu0
        %v2795 = vadd.f32 0.0, %v2794
        %v2796 = vpop.f32.mrb[0].mxu0
        %v2797 = vadd.f32 0.0, %v2796
        %v2798 = vpop.f32.mrb[0].mxu0
        %v2799 = vadd.f32 0.0, %v2798
        %v2800 = vpop.f32.mrb[0].mxu0
        %v2801 = vadd.f32 0.0, %v2800
        %2802 = vmatprep.mubr.bf16.mxu0 0
        %2803 = vmatmul.mubr.bf16.gmra.mrb[0].mxu0 %v2758
        %v2804 = vpop.f32.mrb[0].mxu0
        %v2805 = vadd.f32 0.0, %v2804
        %v2806 = vpop.f32.mrb[0].mxu0
        %v2807 = vadd.f32 0.0, %v2806
        %v2808 = vpop.f32.mrb[0].mxu0
        %v2809 = vpop.f32.mrb[0].mxu0
        %2810 = vdwg.mxu0
        %v2819 = vunpack.c.l.b16 %v2692
        %v2820 = vunpack.c.h.b16 %v2692
        %v2821 = vunpack.c.l.b16 %v2693
        %v2822 = vunpack.c.h.b16 %v2693
        %v2823 = vunpack.c.l.b16 %v2694
        %v2824 = vunpack.c.h.b16 %v2694
        %v2825 = vunpack.c.l.b16 %v2695
        %v2826 = vunpack.c.h.b16 %v2695
        %v2827 = vunpack.c.l.b16 %v2696
        %v2828 = vunpack.c.h.b16 %v2696
        %v2829 = vunpack.c.l.b16 %v2697
        %v2830 = vunpack.c.h.b16 %v2697
        %v2831 = vunpack.c.l.b16 %v2698
        %v2832 = vunpack.c.h.b16 %v2698
        %v2833 = vunpack.c.l.b16 %v2699
        %v2834 = vunpack.c.h.b16 %v2699
        %v2835 = vpack.c.b16 %v2821, %v2819
        %v2836 = vpack.c.b16 %v2822, %v2820
        %v2837 = vpack.c.b16 %v2825, %v2823
        %v2838 = vpack.c.b16 %v2826, %v2824
        %v2839 = vpack.c.b16 %v2829, %v2827
        %v2840 = vpack.c.b16 %v2830, %v2828
        %v2841 = vpack.c.b16 %v2833, %v2831
        %v2842 = vpack.c.b16 %v2834, %v2832
        %v2852 = vsel %vm433, %v2690, 0
        %v2855 = vsel %vm433, %v2691, 0
        %2857 = vmatprep.subr.bf16.mxu0 %v2836
        %2858 = vmatpush1.bf16.msra.mxu0 %v2835
        %2859 = vmatprep.subr.bf16.mxu0 %v2838
        %2860 = vmatpush1.bf16.msra.mxu0 %v2837
        %2861 = vmatprep.subr.bf16.mxu0 %v2840
        %2862 = vmatpush1.bf16.msra.mxu0 %v2839
        %2863 = vmatprep.subr.bf16.mxu0 %v2842
        %2864 = vmatpush1.bf16.msra.mxu0 %v2841
        %2865 = vmatprep.subr.bf16.mxu0 0
        %2866 = vmatpush1.bf16.msra.mxu0 0
        %2867 = vmatprep.subr.bf16.mxu0 0
        %2868 = vmatpush1.bf16.msra.mxu0 0
        %2869 = vmatprep.subr.bf16.mxu0 0
        %2870 = vmatpush1.bf16.msra.mxu0 0
        %2871 = vmatprep.subr.bf16.mxu0 0
        %2872 = vmatpush1.bf16.msra.mxu0 0
        %2873 = vmatprep.subr.bf16.mxu0 0
        %2874 = vmatpush1.bf16.msra.mxu0 0
        %2875 = vmatprep.subr.bf16.mxu0 0
        %2876 = vmatpush1.bf16.msra.mxu0 0
        %2877 = vmatprep.subr.bf16.mxu0 0
        %2878 = vmatpush1.bf16.msra.mxu0 0
        %2879 = vmatprep.subr.bf16.mxu0 0
        %2880 = vmatpush1.bf16.msra.mxu0 0
        %2881 = vmatprep.subr.bf16.mxu0 0
        %2882 = vmatpush1.bf16.msra.mxu0 0
        %2883 = vmatprep.subr.bf16.mxu0 0
        %2884 = vmatpush1.bf16.msra.mxu0 0
        %2885 = vmatprep.subr.bf16.mxu0 0
        %2886 = vmatpush1.bf16.msra.mxu0 0
        %2887 = vmatprep.subr.bf16.mxu0 0
        %2888 = vmatpush1.bf16.msra.mxu0 0
        %2889 = vmatprep.mubr.bf16.mxu0 0
        %2890 = vmatmul.mubr.bf16.gmra.mrb[0].mxu0 %v2852
        %v2891 = vpop.f32.mrb[0].mxu0
        %v2892 = vadd.f32 %v2795, %v2891
        %v2893 = vpop.f32.mrb[0].mxu0
        %v2894 = vadd.f32 %v2797, %v2893
        %v2895 = vpop.f32.mrb[0].mxu0
        %v2896 = vadd.f32 %v2799, %v2895
        %v2897 = vpop.f32.mrb[0].mxu0
        %v2898 = vadd.f32 %v2801, %v2897
        %2899 = vmatprep.mubr.bf16.mxu0 0
        %2900 = vmatmul.mubr.bf16.gmra.mrb[0].mxu0 %v2855
        %v2901 = vpop.f32.mrb[0].mxu0
        %v2902 = vadd.f32 %v2805, %v2901
        %v2903 = vpop.f32.mrb[0].mxu0
        %v2904 = vadd.f32 %v2807, %v2903
        %v2905 = vpop.f32.mrb[0].mxu0
        %v2906 = vpop.f32.mrb[0].mxu0
        %2907 = vdwg.mxu0
        %v2908 = vld [vmem:[%s384 + $0x6] sm:$0xff]
        %v2909 = vld [vmem:[%s384 + $0xe] sm:$0xff]
        %v2910 = vld [vmem:[%s384 + $0x16] sm:$0xf]
        %v2911 = vpack.c.bf16 %v2909, %v2908
        %v2912 = vpack.c.bf16 %v2910, %v2910
        %s2913 = scalar_lea.vmem %s3, 128
        %v2914 = vld [vmem:[%s2913] sm:$0xff]
        %v2915 = vld [vmem:[%s2913 + $0x8] sm:$0xff]
        %v2916 = vld [vmem:[%s2913 + $0x10] sm:$0xff]
        %v2917 = vld [vmem:[%s2913 + $0x18] sm:$0xff]
        %v2918 = vld [vmem:[%s2913 + $0x20] sm:$0xff]
        %v2919 = vld [vmem:[%s2913 + $0x28] sm:$0xff]
        %v2920 = vld [vmem:[%s2913 + $0x30] sm:$0xff]
        %v2921 = vld [vmem:[%s2913 + $0x38] sm:$0xff]
        %v2930 = vunpack.c.l.b16 %v2914
        %v2931 = vunpack.c.h.b16 %v2914
        %v2932 = vunpack.c.l.b16 %v2915
        %v2933 = vunpack.c.h.b16 %v2915
        %v2934 = vunpack.c.l.b16 %v2916
        %v2935 = vunpack.c.h.b16 %v2916
        %v2936 = vunpack.c.l.b16 %v2917
        %v2937 = vunpack.c.h.b16 %v2917
        %v2938 = vunpack.c.l.b16 %v2918
        %v2939 = vunpack.c.h.b16 %v2918
        %v2940 = vunpack.c.l.b16 %v2919
        %v2941 = vunpack.c.h.b16 %v2919
        %v2942 = vunpack.c.l.b16 %v2920
        %v2943 = vunpack.c.h.b16 %v2920
        %v2944 = vunpack.c.l.b16 %v2921
        %v2945 = vunpack.c.h.b16 %v2921
        %v2946 = vpack.c.b16 %v2932, %v2930
        %v2947 = vpack.c.b16 %v2933, %v2931
        %v2948 = vpack.c.b16 %v2936, %v2934
        %v2949 = vpack.c.b16 %v2937, %v2935
        %v2950 = vpack.c.b16 %v2940, %v2938
        %v2951 = vpack.c.b16 %v2941, %v2939
        %v2952 = vpack.c.b16 %v2944, %v2942
        %v2953 = vpack.c.b16 %v2945, %v2943
        %v2963 = vsel %vm433, %v2911, 0
        %v2966 = vsel %vm433, %v2912, 0
        %2968 = vmatprep.subr.bf16.mxu0 %v2947
        %2969 = vmatpush1.bf16.msra.mxu0 %v2946
        %2970 = vmatprep.subr.bf16.mxu0 %v2949
        %2971 = vmatpush1.bf16.msra.mxu0 %v2948
        %2972 = vmatprep.subr.bf16.mxu0 %v2951
        %2973 = vmatpush1.bf16.msra.mxu0 %v2950
        %2974 = vmatprep.subr.bf16.mxu0 %v2953
        %2975 = vmatpush1.bf16.msra.mxu0 %v2952
        %2976 = vmatprep.subr.bf16.mxu0 0
        %2977 = vmatpush1.bf16.msra.mxu0 0
        %2978 = vmatprep.subr.bf16.mxu0 0
        %2979 = vmatpush1.bf16.msra.mxu0 0
        %2980 = vmatprep.subr.bf16.mxu0 0
        %2981 = vmatpush1.bf16.msra.mxu0 0
        %2982 = vmatprep.subr.bf16.mxu0 0
        %2983 = vmatpush1.bf16.msra.mxu0 0
        %2984 = vmatprep.subr.bf16.mxu0 0
        %2985 = vmatpush1.bf16.msra.mxu0 0
        %2986 = vmatprep.subr.bf16.mxu0 0
        %2987 = vmatpush1.bf16.msra.mxu0 0
        %2988 = vmatprep.subr.bf16.mxu0 0
        %2989 = vmatpush1.bf16.msra.mxu0 0
        %2990 = vmatprep.subr.bf16.mxu0 0
        %2991 = vmatpush1.bf16.msra.mxu0 0
        %2992 = vmatprep.subr.bf16.mxu0 0
        %2993 = vmatpush1.bf16.msra.mxu0 0
        %2994 = vmatprep.subr.bf16.mxu0 0
        %2995 = vmatpush1.bf16.msra.mxu0 0
        %2996 = vmatprep.subr.bf16.mxu0 0
        %2997 = vmatpush1.bf16.msra.mxu0 0
        %2998 = vmatprep.subr.bf16.mxu0 0
        %2999 = vmatpush1.bf16.msra.mxu0 0
        %3000 = vmatprep.mubr.bf16.mxu0 0
        %3001 = vmatmul.mubr.bf16.gmra.mrb[0].mxu0 %v2963
        %v3002 = vpop.f32.mrb[0].mxu0
        %v3003 = vadd.f32 0.0, %v3002
        %v3004 = vpop.f32.mrb[0].mxu0
        %v3005 = vadd.f32 0.0, %v3004
        %v3006 = vpop.f32.mrb[0].mxu0
        %v3007 = vadd.f32 0.0, %v3006
        %v3008 = vpop.f32.mrb[0].mxu0
        %v3009 = vadd.f32 0.0, %v3008
        %3010 = vmatprep.mubr.bf16.mxu0 0
        %3011 = vmatmul.mubr.bf16.gmra.mrb[0].mxu0 %v2966
        %v3012 = vpop.f32.mrb[0].mxu0
        %v3013 = vadd.f32 0.0, %v3012
        %v3014 = vpop.f32.mrb[0].mxu0
        %v3015 = vadd.f32 0.0, %v3014
        %v3016 = vpop.f32.mrb[0].mxu0
        %v3017 = vpop.f32.mrb[0].mxu0
        %3018 = vdwg.mxu0
        %v3019 = vadd.f32 %v2892, %v3003
        %v3020 = vadd.f32 %v2894, %v3005
        %v3021 = vadd.f32 %v2896, %v3007
        %v3022 = vadd.f32 %v2898, %v3009
        %v3023 = vadd.f32 %v2902, %v3013
        %v3024 = vadd.f32 %v2904, %v3015
        %v3025 = vld [vmem:[%s384 + $0x9] sm:$0xff]
        %v3026 = vld [vmem:[%s384 + $0x11] sm:$0xff]
        %v3027 = vld [vmem:[%s384 + $0x19] sm:$0xf]
        %v3028 = vpack.c.bf16 %v3026, %v3025
        %v3029 = vpack.c.bf16 %v3027, %v3027
        %s3030 = scalar_lea.vmem %s3, 192
        %v3031 = vld [vmem:[%s3030] sm:$0xff]
        %v3032 = vld [vmem:[%s3030 + $0x8] sm:$0xff]
        %v3033 = vld [vmem:[%s3030 + $0x10] sm:$0xff]
        %v3034 = vld [vmem:[%s3030 + $0x18] sm:$0xff]
        %v3035 = vld [vmem:[%s3030 + $0x20] sm:$0xff]
        %v3036 = vld [vmem:[%s3030 + $0x28] sm:$0xff]
        %v3037 = vld [vmem:[%s3030 + $0x30] sm:$0xff]
        %v3038 = vld [vmem:[%s3030 + $0x38] sm:$0xff]
        %v3047 = vunpack.c.l.b16 %v3031
        %v3048 = vunpack.c.h.b16 %v3031
        %v3049 = vunpack.c.l.b16 %v3032
        %v3050 = vunpack.c.h.b16 %v3032
        %v3051 = vunpack.c.l.b16 %v3033
        %v3052 = vunpack.c.h.b16 %v3033
        %v3053 = vunpack.c.l.b16 %v3034
        %v3054 = vunpack.c.h.b16 %v3034
        %v3055 = vunpack.c.l.b16 %v3035
        %v3056 = vunpack.c.h.b16 %v3035
        %v3057 = vunpack.c.l.b16 %v3036
        %v3058 = vunpack.c.h.b16 %v3036
        %v3059 = vunpack.c.l.b16 %v3037
        %v3060 = vunpack.c.h.b16 %v3037
        %v3061 = vunpack.c.l.b16 %v3038
        %v3062 = vunpack.c.h.b16 %v3038
        %v3063 = vpack.c.b16 %v3049, %v3047
        %v3064 = vpack.c.b16 %v3050, %v3048
        %v3065 = vpack.c.b16 %v3053, %v3051
        %v3066 = vpack.c.b16 %v3054, %v3052
        %v3067 = vpack.c.b16 %v3057, %v3055
        %v3068 = vpack.c.b16 %v3058, %v3056
        %v3069 = vpack.c.b16 %v3061, %v3059
        %v3070 = vpack.c.b16 %v3062, %v3060
        %v3080 = vsel %vm433, %v3028, 0
        %v3083 = vsel %vm433, %v3029, 0
        %3085 = vmatprep.subr.bf16.mxu0 %v3064
        %3086 = vmatpush1.bf16.msra.mxu0 %v3063
        %3087 = vmatprep.subr.bf16.mxu0 %v3066
        %3088 = vmatpush1.bf16.msra.mxu0 %v3065
        %3089 = vmatprep.subr.bf16.mxu0 %v3068
        %3090 = vmatpush1.bf16.msra.mxu0 %v3067
        %3091 = vmatprep.subr.bf16.mxu0 %v3070
        %3092 = vmatpush1.bf16.msra.mxu0 %v3069
        %3093 = vmatprep.subr.bf16.mxu0 0
        %3094 = vmatpush1.bf16.msra.mxu0 0
        %3095 = vmatprep.subr.bf16.mxu0 0
        %3096 = vmatpush1.bf16.msra.mxu0 0
        %3097 = vmatprep.subr.bf16.mxu0 0
        %3098 = vmatpush1.bf16.msra.mxu0 0
        %3099 = vmatprep.subr.bf16.mxu0 0
        %3100 = vmatpush1.bf16.msra.mxu0 0
        %3101 = vmatprep.subr.bf16.mxu0 0
        %3102 = vmatpush1.bf16.msra.mxu0 0
        %3103 = vmatprep.subr.bf16.mxu0 0
        %3104 = vmatpush1.bf16.msra.mxu0 0
        %3105 = vmatprep.subr.bf16.mxu0 0
        %3106 = vmatpush1.bf16.msra.mxu0 0
        %3107 = vmatprep.subr.bf16.mxu0 0
        %3108 = vmatpush1.bf16.msra.mxu0 0
        %3109 = vmatprep.subr.bf16.mxu0 0
        %3110 = vmatpush1.bf16.msra.mxu0 0
        %3111 = vmatprep.subr.bf16.mxu0 0
        %3112 = vmatpush1.bf16.msra.mxu0 0
        %3113 = vmatprep.subr.bf16.mxu0 0
        %3114 = vmatpush1.bf16.msra.mxu0 0
        %3115 = vmatprep.subr.bf16.mxu0 0
        %3116 = vmatpush1.bf16.msra.mxu0 0
        %3117 = vmatprep.mubr.bf16.mxu0 0
        %3118 = vmatmul.mubr.bf16.gmra.mrb[0].mxu0 %v3080
        %v3119 = vpop.f32.mrb[0].mxu0
        %v3120 = vadd.f32 0.0, %v3119
        %v3121 = vpop.f32.mrb[0].mxu0
        %v3122 = vadd.f32 0.0, %v3121
        %v3123 = vpop.f32.mrb[0].mxu0
        %v3124 = vadd.f32 0.0, %v3123
        %v3125 = vpop.f32.mrb[0].mxu0
        %v3126 = vadd.f32 0.0, %v3125
        %3127 = vmatprep.mubr.bf16.mxu0 0
        %3128 = vmatmul.mubr.bf16.gmra.mrb[0].mxu0 %v3083
        %v3129 = vpop.f32.mrb[0].mxu0
        %v3130 = vadd.f32 0.0, %v3129
        %v3131 = vpop.f32.mrb[0].mxu0
        %v3132 = vadd.f32 0.0, %v3131
        %v3133 = vpop.f32.mrb[0].mxu0
        %v3134 = vpop.f32.mrb[0].mxu0
        %3135 = vdwg.mxu0
        %v3136 = vadd.f32 %v3019, %v3120
        %v3137 = vadd.f32 %v3020, %v3122
        %v3138 = vadd.f32 %v3021, %v3124
        %v3139 = vadd.f32 %v3022, %v3126
        %v3140 = vadd.f32 %v3023, %v3130
        %v3141 = vadd.f32 %v3024, %v3132
        %v3142 = vld [vmem:[%s384 + $0xc] sm:$0xff]
        %v3143 = vld [vmem:[%s384 + $0x14] sm:$0xff]
        %v3144 = vld [vmem:[%s384 + $0x1c] sm:$0xf]
        %v3145 = vpack.c.bf16 %v3143, %v3142
        %v3146 = vpack.c.bf16 %v3144, %v3144
        %s3147 = scalar_lea.vmem %s3, 256
        %v3148 = vld [vmem:[%s3147] sm:$0xff]
        %v3149 = vld [vmem:[%s3147 + $0x8] sm:$0xff]
        %v3150 = vld [vmem:[%s3147 + $0x10] sm:$0xff]
        %v3151 = vld [vmem:[%s3147 + $0x18] sm:$0xff]
        %v3152 = vld [vmem:[%s3147 + $0x20] sm:$0xff]
        %v3153 = vld [vmem:[%s3147 + $0x28] sm:$0xff]
        %v3154 = vld [vmem:[%s3147 + $0x30] sm:$0xff]
        %v3155 = vld [vmem:[%s3147 + $0x38] sm:$0xff]
        %v3164 = vunpack.c.l.b16 %v3148
        %v3165 = vunpack.c.h.b16 %v3148
        %v3166 = vunpack.c.l.b16 %v3149
        %v3167 = vunpack.c.h.b16 %v3149
        %v3168 = vunpack.c.l.b16 %v3150
        %v3169 = vunpack.c.h.b16 %v3150
        %v3170 = vunpack.c.l.b16 %v3151
        %v3171 = vunpack.c.h.b16 %v3151
        %v3172 = vunpack.c.l.b16 %v3152
        %v3173 = vunpack.c.h.b16 %v3152
        %v3174 = vunpack.c.l.b16 %v3153
        %v3175 = vunpack.c.h.b16 %v3153
        %v3176 = vunpack.c.l.b16 %v3154
        %v3177 = vunpack.c.h.b16 %v3154
        %v3178 = vunpack.c.l.b16 %v3155
        %v3179 = vunpack.c.h.b16 %v3155
        %v3180 = vpack.c.b16 %v3166, %v3164
        %v3181 = vpack.c.b16 %v3167, %v3165
        %v3182 = vpack.c.b16 %v3170, %v3168
        %v3183 = vpack.c.b16 %v3171, %v3169
        %v3184 = vpack.c.b16 %v3174, %v3172
        %v3185 = vpack.c.b16 %v3175, %v3173
        %v3186 = vpack.c.b16 %v3178, %v3176
        %v3187 = vpack.c.b16 %v3179, %v3177
        %v3197 = vsel %vm433, %v3145, 0
        %v3200 = vsel %vm433, %v3146, 0
        %3202 = vmatprep.subr.bf16.mxu0 %v3181
        %3203 = vmatpush1.bf16.msra.mxu0 %v3180
        %3204 = vmatprep.subr.bf16.mxu0 %v3183
        %3205 = vmatpush1.bf16.msra.mxu0 %v3182
        %3206 = vmatprep.subr.bf16.mxu0 %v3185
        %3207 = vmatpush1.bf16.msra.mxu0 %v3184
        %3208 = vmatprep.subr.bf16.mxu0 %v3187
        %3209 = vmatpush1.bf16.msra.mxu0 %v3186
        %3210 = vmatprep.subr.bf16.mxu0 0
        %3211 = vmatpush1.bf16.msra.mxu0 0
        %3212 = vmatprep.subr.bf16.mxu0 0
        %3213 = vmatpush1.bf16.msra.mxu0 0
        %3214 = vmatprep.subr.bf16.mxu0 0
        %3215 = vmatpush1.bf16.msra.mxu0 0
        %3216 = vmatprep.subr.bf16.mxu0 0
        %3217 = vmatpush1.bf16.msra.mxu0 0
        %3218 = vmatprep.subr.bf16.mxu0 0
        %3219 = vmatpush1.bf16.msra.mxu0 0
        %3220 = vmatprep.subr.bf16.mxu0 0
        %3221 = vmatpush1.bf16.msra.mxu0 0
        %3222 = vmatprep.subr.bf16.mxu0 0
        %3223 = vmatpush1.bf16.msra.mxu0 0
        %3224 = vmatprep.subr.bf16.mxu0 0
        %3225 = vmatpush1.bf16.msra.mxu0 0
        %3226 = vmatprep.subr.bf16.mxu0 0
        %3227 = vmatpush1.bf16.msra.mxu0 0
        %3228 = vmatprep.subr.bf16.mxu0 0
        %3229 = vmatpush1.bf16.msra.mxu0 0
        %3230 = vmatprep.subr.bf16.mxu0 0
        %3231 = vmatpush1.bf16.msra.mxu0 0
        %3232 = vmatprep.subr.bf16.mxu0 0
        %3233 = vmatpush1.bf16.msra.mxu0 0
        %3234 = vmatprep.mubr.bf16.mxu0 0
        %3235 = vmatmul.mubr.bf16.gmra.mrb[0].mxu0 %v3197
        %v3236 = vpop.f32.mrb[0].mxu0
        %v3237 = vadd.f32 0.0, %v3236
        %v3238 = vpop.f32.mrb[0].mxu0
        %v3239 = vadd.f32 0.0, %v3238
        %v3240 = vpop.f32.mrb[0].mxu0
        %v3241 = vadd.f32 0.0, %v3240
        %v3242 = vpop.f32.mrb[0].mxu0
        %v3243 = vadd.f32 0.0, %v3242
        %3244 = vmatprep.mubr.bf16.mxu0 0
        %3245 = vmatmul.mubr.bf16.gmra.mrb[0].mxu0 %v3200
        %v3246 = vpop.f32.mrb[0].mxu0
        %v3247 = vadd.f32 0.0, %v3246
        %v3248 = vpop.f32.mrb[0].mxu0
        %v3249 = vadd.f32 0.0, %v3248
        %v3250 = vpop.f32.mrb[0].mxu0
        %v3251 = vpop.f32.mrb[0].mxu0
        %3252 = vdwg.mxu0
        %v3253 = vadd.f32 %v3136, %v3237
        %v3254 = vadd.f32 %v3137, %v3239
        %v3255 = vadd.f32 %v3138, %v3241
        %v3256 = vadd.f32 %v3139, %v3243
        %v3257 = vadd.f32 %v3140, %v3247
        %v3258 = vadd.f32 %v3141, %v3249
        %v3259 = vld [vmem:[%s9] sm:$0x3]
        %v3261 = vlaneseq
        %v3262 = vshrl.u32 %v3261, 7
        %v3263 = vsub.s32 0, %v3262
        %v3264 = vrot.slane %v3259, %v3263
        %v3265 = vlaneseq
        %v3266 = vshrl.u32 %v3265, 7
        %v3267 = vsub.s32 1, %v3266
        %v3268 = vrot.slane %v3259, %v3267
        %v3271 = vadd.f32 %v3253, %v3264
        %v3272 = vadd.f32 %v3254, %v3268
        %v3273 = vadd.f32 %v3255, %v3264
        %v3274 = vadd.f32 %v3256, %v3268
        %v3275 = vadd.f32 %v3257, %v3264
        %v3276 = vadd.f32 %v3258, %v3268
        %v3277 = vmax.f32 %v3271, 0.0
        %v3278 = vmax.f32 %v3272, 0.0
        %v3279 = vmax.f32 %v3273, 0.0
        %v3280 = vmax.f32 %v3274, 0.0
        %v3281 = vmax.f32 %v3275, 0.0
        %v3282 = vmax.f32 %v3276, 0.0
        %3283 = vst [vmem:[#allocation4] sm:$0xf] 0.0
        %vm3284 = vcmask 257024
        %3285 = vst.msk [vmem:[#allocation4 + $0x8] sm:$0xf] %vm3284, 0.0
        %3286 = vst [vmem:[#allocation4 + $0x30] sm:$0xf] 0.0
        %3287 = vst.msk [vmem:[#allocation4 + $0x38] sm:$0xf] %vm3284, 0.0
        %vm3294 = vcmask 1043456
        %v3295 = vrot.slane %v3277, 4
        %v3296 = vrot.slane %v3278, 4
        %v3297 = vrot.slane %v3279, 4
        %v3298 = vsel %vm3294, %v3295, %v3297
        %v3299 = vrot.slane %v3280, 4
        %v3300 = vsel %vm3294, %v3296, %v3299
        %v3301 = vrot.slane %v3281, 4
        %v3302 = vsel %vm3294, %v3297, %v3301
        %v3303 = vrot.slane %v3282, 4
        %v3304 = vsel %vm3294, %v3299, %v3303
        %3311 = vst [vmem:[#allocation4] sm:$0xf0] %v3295
        %vm3312 = vcmask 261124
        %3313 = vst.msk [vmem:[#allocation4 + $0x8] sm:$0xf0] %vm3312, %v3296
        %3314 = vst [vmem:[#allocation4 + $0x10] sm:$0xff] %v3298
        %vm3315 = vcmask 261120
        %3316 = vst.msk [vmem:[#allocation4 + $0x18] sm:$0xff] %vm3315, %v3300
        %3317 = vst [vmem:[#allocation4 + $0x20] sm:$0xff] %v3302
        %3318 = vst.msk [vmem:[#allocation4 + $0x28] sm:$0xff] %vm3315, %v3304
        %v3319 = vld [vmem:[#allocation4] sm:$0xff]
        %v3320 = vld [vmem:[#allocation4 + $0x8] sm:$0xff]
        %v3321 = vld [vmem:[#allocation4 + $0x10] sm:$0xff]
        %v3322 = vld [vmem:[#allocation4 + $0x18] sm:$0xff]
        %v3323 = vpack.c.bf16 %v3321, %v3319
        %v3324 = vpack.c.bf16 %v3322, %v3320
        %v3325 = vld [vmem:[%s6] sm:$0xff]
        %v3326 = vld [vmem:[%s6 + $0x8] sm:$0xff]
        %v3327 = vld [vmem:[%s6 + $0x10] sm:$0xff]
        %v3328 = vld [vmem:[%s6 + $0x18] sm:$0xff]
        %v3329 = vld [vmem:[%s6 + $0x20] sm:$0xff]
        %v3330 = vld [vmem:[%s6 + $0x28] sm:$0xff]
        %v3331 = vld [vmem:[%s6 + $0x30] sm:$0xff]
        %v3332 = vld [vmem:[%s6 + $0x38] sm:$0xff]
        %v3333 = vld [vmem:[%s6 + $0x40] sm:$0xff]
        %v3334 = vld [vmem:[%s6 + $0x48] sm:$0xff]
        %v3335 = vld [vmem:[%s6 + $0x50] sm:$0xff]
        %v3336 = vld [vmem:[%s6 + $0x58] sm:$0xff]
        %v3337 = vld [vmem:[%s6 + $0x60] sm:$0xff]
        %v3338 = vld [vmem:[%s6 + $0x68] sm:$0xff]
        %v3339 = vld [vmem:[%s6 + $0x70] sm:$0xff]
        %v3340 = vld [vmem:[%s6 + $0x78] sm:$0xff]
        %v3341 = vld [vmem:[%s6 + $0x80] sm:$0xff]
        %v3342 = vld [vmem:[%s6 + $0x88] sm:$0xff]
        %v3343 = vld [vmem:[%s6 + $0x90] sm:$0xff]
        %v3344 = vld [vmem:[%s6 + $0x98] sm:$0xff]
        %v3365 = vunpack.c.l.b16 %v3325
        %v3366 = vunpack.c.h.b16 %v3325
        %v3367 = vunpack.c.l.b16 %v3326
        %v3368 = vunpack.c.h.b16 %v3326
        %v3369 = vunpack.c.l.b16 %v3327
        %v3370 = vunpack.c.h.b16 %v3327
        %v3371 = vunpack.c.l.b16 %v3328
        %v3372 = vunpack.c.h.b16 %v3328
        %v3373 = vunpack.c.l.b16 %v3329
        %v3374 = vunpack.c.h.b16 %v3329
        %v3375 = vunpack.c.l.b16 %v3330
        %v3376 = vunpack.c.h.b16 %v3330
        %v3377 = vunpack.c.l.b16 %v3331
        %v3378 = vunpack.c.h.b16 %v3331
        %v3379 = vunpack.c.l.b16 %v3332
        %v3380 = vunpack.c.h.b16 %v3332
        %v3381 = vunpack.c.l.b16 %v3333
        %v3382 = vunpack.c.h.b16 %v3333
        %v3383 = vunpack.c.l.b16 %v3334
        %v3384 = vunpack.c.h.b16 %v3334
        %v3385 = vunpack.c.l.b16 %v3335
        %v3386 = vunpack.c.h.b16 %v3335
        %v3387 = vunpack.c.l.b16 %v3336
        %v3388 = vunpack.c.h.b16 %v3336
        %v3389 = vunpack.c.l.b16 %v3337
        %v3390 = vunpack.c.h.b16 %v3337
        %v3391 = vunpack.c.l.b16 %v3338
        %v3392 = vunpack.c.h.b16 %v3338
        %v3393 = vunpack.c.l.b16 %v3339
        %v3394 = vunpack.c.h.b16 %v3339
        %v3395 = vunpack.c.l.b16 %v3340
        %v3396 = vunpack.c.h.b16 %v3340
        %v3397 = vunpack.c.l.b16 %v3341
        %v3398 = vunpack.c.h.b16 %v3341
        %v3399 = vunpack.c.l.b16 %v3342
        %v3400 = vunpack.c.h.b16 %v3342
        %v3401 = vunpack.c.l.b16 %v3343
        %v3402 = vunpack.c.h.b16 %v3343
        %v3403 = vunpack.c.l.b16 %v3344
        %v3404 = vunpack.c.h.b16 %v3344
        %v3405 = vpack.c.b16 %v3367, %v3365
        %v3406 = vpack.c.b16 %v3368, %v3366
        %v3407 = vpack.c.b16 %v3371, %v3369
        %v3408 = vpack.c.b16 %v3372, %v3370
        %v3409 = vpack.c.b16 %v3375, %v3373
        %v3410 = vpack.c.b16 %v3376, %v3374
        %v3411 = vpack.c.b16 %v3379, %v3377
        %v3412 = vpack.c.b16 %v3380, %v3378
        %v3413 = vpack.c.b16 %v3383, %v3381
        %v3414 = vpack.c.b16 %v3384, %v3382
        %v3415 = vpack.c.b16 %v3387, %v3385
        %v3416 = vpack.c.b16 %v3388, %v3386
        %v3417 = vpack.c.b16 %v3391, %v3389
        %v3418 = vpack.c.b16 %v3392, %v3390
        %v3419 = vpack.c.b16 %v3395, %v3393
        %v3420 = vpack.c.b16 %v3396, %v3394
        %v3421 = vpack.c.b16 %v3399, %v3397
        %v3422 = vpack.c.b16 %v3400, %v3398
        %v3423 = vpack.c.b16 %v3403, %v3401
        %v3424 = vpack.c.b16 %v3404, %v3402
        %v3446 = vsel %vm3315, %v3324, 0
        %3448 = vmatprep.subr.bf16.mxu0 %v3406
        %3449 = vmatpush1.bf16.msra.mxu0 %v3405
        %3450 = vmatprep.subr.bf16.mxu0 %v3408
        %3451 = vmatpush1.bf16.msra.mxu0 %v3407
        %3452 = vmatprep.subr.bf16.mxu0 %v3410
        %3453 = vmatpush1.bf16.msra.mxu0 %v3409
        %3454 = vmatprep.subr.bf16.mxu0 %v3412
        %3455 = vmatpush1.bf16.msra.mxu0 %v3411
        %3456 = vmatprep.subr.bf16.mxu0 %v3414
        %3457 = vmatpush1.bf16.msra.mxu0 %v3413
        %3458 = vmatprep.subr.bf16.mxu0 %v3416
        %3459 = vmatpush1.bf16.msra.mxu0 %v3415
        %3460 = vmatprep.subr.bf16.mxu0 %v3418
        %3461 = vmatpush1.bf16.msra.mxu0 %v3417
        %3462 = vmatprep.subr.bf16.mxu0 %v3420
        %3463 = vmatpush1.bf16.msra.mxu0 %v3419
        %3464 = vmatprep.subr.bf16.mxu0 %v3422
        %3465 = vmatpush1.bf16.msra.mxu0 %v3421
        %3466 = vmatprep.subr.bf16.mxu0 %v3424
        %3467 = vmatpush1.bf16.msra.mxu0 %v3423
        %3468 = vmatprep.subr.bf16.mxu0 0
        %3469 = vmatpush1.bf16.msra.mxu0 0
        %3470 = vmatprep.subr.bf16.mxu0 0
        %3471 = vmatpush1.bf16.msra.mxu0 0
        %3472 = vmatprep.subr.bf16.mxu0 0
        %3473 = vmatpush1.bf16.msra.mxu0 0
        %3474 = vmatprep.subr.bf16.mxu0 0
        %3475 = vmatpush1.bf16.msra.mxu0 0
        %3476 = vmatprep.subr.bf16.mxu0 0
        %3477 = vmatpush1.bf16.msra.mxu0 0
        %3478 = vmatprep.subr.bf16.mxu0 0
        %3479 = vmatpush1.bf16.msra.mxu0 0
        %3480 = vmatprep.mubr.bf16.mxu0 %v3446
        %3481 = vmatmul.mubr.bf16.gmra.mrb[0].mxu0 %v3323
        %v3482 = vpop.f32.mrb[0].mxu0
        %v3483 = vadd.f32 0.0, %v3482
        %v3484 = vpop.f32.mrb[0].mxu0
        %v3485 = vadd.f32 0.0, %v3484
        %v3486 = vpop.f32.mrb[0].mxu0
        %v3487 = vadd.f32 0.0, %v3486
        %v3488 = vpop.f32.mrb[0].mxu0
        %v3489 = vadd.f32 0.0, %v3488
        %3490 = vdwg.mxu0
        %v3491 = vadd.f32 %v2683, %v3483
        %v3492 = vadd.f32 %v2684, %v3485
        %v3493 = vadd.f32 %v2685, %v3487
        %v3494 = vadd.f32 %v2686, %v3489
        %v3495 = vld [vmem:[#allocation4] sm:$0xf8]
        %v3496 = vld [vmem:[#allocation4 + $0x8] sm:$0xf8]
        %v3497 = vld [vmem:[#allocation4 + $0x10] sm:$0xff]
        %v3498 = vld [vmem:[#allocation4 + $0x18] sm:$0xff]
        %v3499 = vld [vmem:[#allocation4 + $0x20] sm:$0x7]
        %v3500 = vld [vmem:[#allocation4 + $0x28] sm:$0x7]
        %v3501 = vpack.c.bf16 %v3497, %v3495
        %v3502 = vpack.c.bf16 %v3498, %v3496
        %v3503 = vpack.c.bf16 %v3499, %v3499
        %v3504 = vpack.c.bf16 %v3500, %v3500
        %s3505 = scalar_lea.vmem %s6, 160
        %v3506 = vld [vmem:[%s3505] sm:$0xff]
        %v3507 = vld [vmem:[%s3505 + $0x8] sm:$0xff]
        %v3508 = vld [vmem:[%s3505 + $0x10] sm:$0xff]
        %v3509 = vld [vmem:[%s3505 + $0x18] sm:$0xff]
        %v3510 = vld [vmem:[%s3505 + $0x20] sm:$0xff]
        %v3511 = vld [vmem:[%s3505 + $0x28] sm:$0xff]
        %v3512 = vld [vmem:[%s3505 + $0x30] sm:$0xff]
        %v3513 = vld [vmem:[%s3505 + $0x38] sm:$0xff]
        %v3514 = vld [vmem:[%s3505 + $0x40] sm:$0xff]
        %v3515 = vld [vmem:[%s3505 + $0x48] sm:$0xff]
        %v3516 = vld [vmem:[%s3505 + $0x50] sm:$0xff]
        %v3517 = vld [vmem:[%s3505 + $0x58] sm:$0xff]
        %v3518 = vld [vmem:[%s3505 + $0x60] sm:$0xff]
        %v3519 = vld [vmem:[%s3505 + $0x68] sm:$0xff]
        %v3520 = vld [vmem:[%s3505 + $0x70] sm:$0xff]
        %v3521 = vld [vmem:[%s3505 + $0x78] sm:$0xff]
        %v3522 = vld [vmem:[%s3505 + $0x80] sm:$0xff]
        %v3523 = vld [vmem:[%s3505 + $0x88] sm:$0xff]
        %v3524 = vld [vmem:[%s3505 + $0x90] sm:$0xff]
        %v3525 = vld [vmem:[%s3505 + $0x98] sm:$0xff]
        %vm3526 = vsmask.f32 6400
        %v3528 = vshrl.u32 %v3501, 16
        %v3530 = vrot.slane %v3528, 1
        %v3531 = vshll.u32 %v3501, 16
        %v3533 = vrot.slane %v3531, 2
        %v3534 = vor.u32 %v3530, %v3533
        %v3536 = vshrl.u32 %v3503, 16
        %v3538 = vrot.slane %v3536, 1
        %v3539 = vshll.u32 %v3503, 16
        %v3541 = vrot.slane %v3539, 2
        %v3542 = vor.u32 %v3538, %v3541
        %v3543 = vsel %vm3526, %v3534, %v3542
        %v3545 = vshrl.u32 %v3502, 16
        %v3547 = vrot.slane %v3545, 1
        %v3548 = vshll.u32 %v3502, 16
        %v3550 = vrot.slane %v3548, 2
        %v3551 = vor.u32 %v3547, %v3550
        %v3553 = vshrl.u32 %v3504, 16
        %v3555 = vrot.slane %v3553, 1
        %v3556 = vshll.u32 %v3504, 16
        %v3558 = vrot.slane %v3556, 2
        %v3559 = vor.u32 %v3555, %v3558
        %v3560 = vsel %vm3526, %v3551, %v3559
        %v3582 = vunpack.c.l.b16 %v3506
        %v3583 = vunpack.c.h.b16 %v3506
        %v3584 = vunpack.c.l.b16 %v3507
        %v3585 = vunpack.c.h.b16 %v3507
        %v3586 = vunpack.c.l.b16 %v3508
        %v3587 = vunpack.c.h.b16 %v3508
        %v3588 = vunpack.c.l.b16 %v3509
        %v3589 = vunpack.c.h.b16 %v3509
        %v3590 = vunpack.c.l.b16 %v3510
        %v3591 = vunpack.c.h.b16 %v3510
        %v3592 = vunpack.c.l.b16 %v3511
        %v3593 = vunpack.c.h.b16 %v3511
        %v3594 = vunpack.c.l.b16 %v3512
        %v3595 = vunpack.c.h.b16 %v3512
        %v3596 = vunpack.c.l.b16 %v3513
        %v3597 = vunpack.c.h.b16 %v3513
        %v3598 = vunpack.c.l.b16 %v3514
        %v3599 = vunpack.c.h.b16 %v3514
        %v3600 = vunpack.c.l.b16 %v3515
        %v3601 = vunpack.c.h.b16 %v3515
        %v3602 = vunpack.c.l.b16 %v3516
        %v3603 = vunpack.c.h.b16 %v3516
        %v3604 = vunpack.c.l.b16 %v3517
        %v3605 = vunpack.c.h.b16 %v3517
        %v3606 = vunpack.c.l.b16 %v3518
        %v3607 = vunpack.c.h.b16 %v3518
        %v3608 = vunpack.c.l.b16 %v3519
        %v3609 = vunpack.c.h.b16 %v3519
        %v3610 = vunpack.c.l.b16 %v3520
        %v3611 = vunpack.c.h.b16 %v3520
        %v3612 = vunpack.c.l.b16 %v3521
        %v3613 = vunpack.c.h.b16 %v3521
        %v3614 = vunpack.c.l.b16 %v3522
        %v3615 = vunpack.c.h.b16 %v3522
        %v3616 = vunpack.c.l.b16 %v3523
        %v3617 = vunpack.c.h.b16 %v3523
        %v3618 = vunpack.c.l.b16 %v3524
        %v3619 = vunpack.c.h.b16 %v3524
        %v3620 = vunpack.c.l.b16 %v3525
        %v3621 = vunpack.c.h.b16 %v3525
        %v3622 = vpack.c.b16 %v3584, %v3582
        %v3623 = vpack.c.b16 %v3585, %v3583
        %v3624 = vpack.c.b16 %v3588, %v3586
        %v3625 = vpack.c.b16 %v3589, %v3587
        %v3626 = vpack.c.b16 %v3592, %v3590
        %v3627 = vpack.c.b16 %v3593, %v3591
        %v3628 = vpack.c.b16 %v3596, %v3594
        %v3629 = vpack.c.b16 %v3597, %v3595
        %v3630 = vpack.c.b16 %v3600, %v3598
        %v3631 = vpack.c.b16 %v3601, %v3599
        %v3632 = vpack.c.b16 %v3604, %v3602
        %v3633 = vpack.c.b16 %v3605, %v3603
        %v3634 = vpack.c.b16 %v3608, %v3606
        %v3635 = vpack.c.b16 %v3609, %v3607
        %v3636 = vpack.c.b16 %v3612, %v3610
        %v3637 = vpack.c.b16 %v3613, %v3611
        %v3638 = vpack.c.b16 %v3616, %v3614
        %v3639 = vpack.c.b16 %v3617, %v3615
        %v3640 = vpack.c.b16 %v3620, %v3618
        %v3641 = vpack.c.b16 %v3621, %v3619
        %v3663 = vsel %vm3315, %v3560, 0
        %3665 = vmatprep.subr.bf16.mxu0 %v3623
        %3666 = vmatpush1.bf16.msra.mxu0 %v3622
        %3667 = vmatprep.subr.bf16.mxu0 %v3625
        %3668 = vmatpush1.bf16.msra.mxu0 %v3624
        %3669 = vmatprep.subr.bf16.mxu0 %v3627
        %3670 = vmatpush1.bf16.msra.mxu0 %v3626
        %3671 = vmatprep.subr.bf16.mxu0 %v3629
        %3672 = vmatpush1.bf16.msra.mxu0 %v3628
        %3673 = vmatprep.subr.bf16.mxu0 %v3631
        %3674 = vmatpush1.bf16.msra.mxu0 %v3630
        %3675 = vmatprep.subr.bf16.mxu0 %v3633
        %3676 = vmatpush1.bf16.msra.mxu0 %v3632
        %3677 = vmatprep.subr.bf16.mxu0 %v3635
        %3678 = vmatpush1.bf16.msra.mxu0 %v3634
        %3679 = vmatprep.subr.bf16.mxu0 %v3637
        %3680 = vmatpush1.bf16.msra.mxu0 %v3636
        %3681 = vmatprep.subr.bf16.mxu0 %v3639
        %3682 = vmatpush1.bf16.msra.mxu0 %v3638
        %3683 = vmatprep.subr.bf16.mxu0 %v3641
        %3684 = vmatpush1.bf16.msra.mxu0 %v3640
        %3685 = vmatprep.subr.bf16.mxu0 0
        %3686 = vmatpush1.bf16.msra.mxu0 0
        %3687 = vmatprep.subr.bf16.mxu0 0
        %3688 = vmatpush1.bf16.msra.mxu0 0
        %3689 = vmatprep.subr.bf16.mxu0 0
        %3690 = vmatpush1.bf16.msra.mxu0 0
        %3691 = vmatprep.subr.bf16.mxu0 0
        %3692 = vmatpush1.bf16.msra.mxu0 0
        %3693 = vmatprep.subr.bf16.mxu0 0
        %3694 = vmatpush1.bf16.msra.mxu0 0
        %3695 = vmatprep.subr.bf16.mxu0 0
        %3696 = vmatpush1.bf16.msra.mxu0 0
        %3697 = vmatprep.mubr.bf16.mxu0 %v3663
        %3698 = vmatmul.mubr.bf16.gmra.mrb[0].mxu0 %v3543
        %v3699 = vpop.f32.mrb[0].mxu0
        %v3700 = vadd.f32 0.0, %v3699
        %v3701 = vpop.f32.mrb[0].mxu0
        %v3702 = vadd.f32 0.0, %v3701
        %v3703 = vpop.f32.mrb[0].mxu0
        %v3704 = vadd.f32 0.0, %v3703
        %v3705 = vpop.f32.mrb[0].mxu0
        %v3706 = vadd.f32 0.0, %v3705
        %3707 = vdwg.mxu0
        %v3708 = vadd.f32 %v3491, %v3700
        %v3709 = vadd.f32 %v3492, %v3702
        %v3710 = vadd.f32 %v3493, %v3704
        %v3711 = vadd.f32 %v3494, %v3706
        %v3712 = vld [vmem:[#allocation4] sm:$0xc0]
        %v3713 = vld [vmem:[#allocation4 + $0x8] sm:$0xc0]
        %v3714 = vld [vmem:[#allocation4 + $0x20] sm:$0x3f]
        %v3715 = vld [vmem:[#allocation4 + $0x28] sm:$0x3f]
        %v3716 = vpack.c.bf16 %v3497, %v3712
        %v3717 = vpack.c.bf16 %v3498, %v3713
        %v3718 = vpack.c.bf16 %v3714, %v3714
        %v3719 = vpack.c.bf16 %v3715, %v3715
        %s3720 = scalar_lea.vmem %s6, 320
        %v3721 = vld [vmem:[%s3720] sm:$0xff]
        %v3722 = vld [vmem:[%s3720 + $0x8] sm:$0xff]
        %v3723 = vld [vmem:[%s3720 + $0x10] sm:$0xff]
        %v3724 = vld [vmem:[%s3720 + $0x18] sm:$0xff]
        %v3725 = vld [vmem:[%s3720 + $0x20] sm:$0xff]
        %v3726 = vld [vmem:[%s3720 + $0x28] sm:$0xff]
        %v3727 = vld [vmem:[%s3720 + $0x30] sm:$0xff]
        %v3728 = vld [vmem:[%s3720 + $0x38] sm:$0xff]
        %v3729 = vld [vmem:[%s3720 + $0x40] sm:$0xff]
        %v3730 = vld [vmem:[%s3720 + $0x48] sm:$0xff]
        %v3731 = vld [vmem:[%s3720 + $0x50] sm:$0xff]
        %v3732 = vld [vmem:[%s3720 + $0x58] sm:$0xff]
        %v3733 = vld [vmem:[%s3720 + $0x60] sm:$0xff]
        %v3734 = vld [vmem:[%s3720 + $0x68] sm:$0xff]
        %v3735 = vld [vmem:[%s3720 + $0x70] sm:$0xff]
        %v3736 = vld [vmem:[%s3720 + $0x78] sm:$0xff]
        %v3737 = vld [vmem:[%s3720 + $0x80] sm:$0xff]
        %v3738 = vld [vmem:[%s3720 + $0x88] sm:$0xff]
        %v3739 = vld [vmem:[%s3720 + $0x90] sm:$0xff]
        %v3740 = vld [vmem:[%s3720 + $0x98] sm:$0xff]
        %vm3745 = vcmask 1044480
        %v3746 = vrot.slane %v3716, 3
        %v3747 = vrot.slane %v3718, 3
        %v3748 = vsel %vm3745, %v3746, %v3747
        %v3749 = vrot.slane %v3717, 3
        %v3750 = vrot.slane %v3719, 3
        %v3751 = vsel %vm3745, %v3749, %v3750
        %v3773 = vunpack.c.l.b16 %v3721
        %v3774 = vunpack.c.h.b16 %v3721
        %v3775 = vunpack.c.l.b16 %v3722
        %v3776 = vunpack.c.h.b16 %v3722
        %v3777 = vunpack.c.l.b16 %v3723
        %v3778 = vunpack.c.h.b16 %v3723
        %v3779 = vunpack.c.l.b16 %v3724
        %v3780 = vunpack.c.h.b16 %v3724
        %v3781 = vunpack.c.l.b16 %v3725
        %v3782 = vunpack.c.h.b16 %v3725
        %v3783 = vunpack.c.l.b16 %v3726
        %v3784 = vunpack.c.h.b16 %v3726
        %v3785 = vunpack.c.l.b16 %v3727
        %v3786 = vunpack.c.h.b16 %v3727
        %v3787 = vunpack.c.l.b16 %v3728
        %v3788 = vunpack.c.h.b16 %v3728
        %v3789 = vunpack.c.l.b16 %v3729
        %v3790 = vunpack.c.h.b16 %v3729
        %v3791 = vunpack.c.l.b16 %v3730
        %v3792 = vunpack.c.h.b16 %v3730
        %v3793 = vunpack.c.l.b16 %v3731
        %v3794 = vunpack.c.h.b16 %v3731
        %v3795 = vunpack.c.l.b16 %v3732
        %v3796 = vunpack.c.h.b16 %v3732
        %v3797 = vunpack.c.l.b16 %v3733
        %v3798 = vunpack.c.h.b16 %v3733
        %v3799 = vunpack.c.l.b16 %v3734
        %v3800 = vunpack.c.h.b16 %v3734
        %v3801 = vunpack.c.l.b16 %v3735
        %v3802 = vunpack.c.h.b16 %v3735
        %v3803 = vunpack.c.l.b16 %v3736
        %v3804 = vunpack.c.h.b16 %v3736
        %v3805 = vunpack.c.l.b16 %v3737
        %v3806 = vunpack.c.h.b16 %v3737
        %v3807 = vunpack.c.l.b16 %v3738
        %v3808 = vunpack.c.h.b16 %v3738
        %v3809 = vunpack.c.l.b16 %v3739
        %v3810 = vunpack.c.h.b16 %v3739
        %v3811 = vunpack.c.l.b16 %v3740
        %v3812 = vunpack.c.h.b16 %v3740
        %v3813 = vpack.c.b16 %v3775, %v3773
        %v3814 = vpack.c.b16 %v3776, %v3774
        %v3815 = vpack.c.b16 %v3779, %v3777
        %v3816 = vpack.c.b16 %v3780, %v3778
        %v3817 = vpack.c.b16 %v3783, %v3781
        %v3818 = vpack.c.b16 %v3784, %v3782
        %v3819 = vpack.c.b16 %v3787, %v3785
        %v3820 = vpack.c.b16 %v3788, %v3786
        %v3821 = vpack.c.b16 %v3791, %v3789
        %v3822 = vpack.c.b16 %v3792, %v3790
        %v3823 = vpack.c.b16 %v3795, %v3793
        %v3824 = vpack.c.b16 %v3796, %v3794
        %v3825 = vpack.c.b16 %v3799, %v3797
        %v3826 = vpack.c.b16 %v3800, %v3798
        %v3827 = vpack.c.b16 %v3803, %v3801
        %v3828 = vpack.c.b16 %v3804, %v3802
        %v3829 = vpack.c.b16 %v3807, %v3805
        %v3830 = vpack.c.b16 %v3808, %v3806
        %v3831 = vpack.c.b16 %v3811, %v3809
        %v3832 = vpack.c.b16 %v3812, %v3810
        %v3854 = vsel %vm3315, %v3751, 0
        %3856 = vmatprep.subr.bf16.mxu0 %v3814
        %3857 = vmatpush1.bf16.msra.mxu0 %v3813
        %3858 = vmatprep.subr.bf16.mxu0 %v3816
        %3859 = vmatpush1.bf16.msra.mxu0 %v3815
        %3860 = vmatprep.subr.bf16.mxu0 %v3818
        %3861 = vmatpush1.bf16.msra.mxu0 %v3817
        %3862 = vmatprep.subr.bf16.mxu0 %v3820
        %3863 = vmatpush1.bf16.msra.mxu0 %v3819
        %3864 = vmatprep.subr.bf16.mxu0 %v3822
        %3865 = vmatpush1.bf16.msra.mxu0 %v3821
        %3866 = vmatprep.subr.bf16.mxu0 %v3824
        %3867 = vmatpush1.bf16.msra.mxu0 %v3823
        %3868 = vmatprep.subr.bf16.mxu0 %v3826
        %3869 = vmatpush1.bf16.msra.mxu0 %v3825
        %3870 = vmatprep.subr.bf16.mxu0 %v3828
        %3871 = vmatpush1.bf16.msra.mxu0 %v3827
        %3872 = vmatprep.subr.bf16.mxu0 %v3830
        %3873 = vmatpush1.bf16.msra.mxu0 %v3829
        %3874 = vmatprep.subr.bf16.mxu0 %v3832
        %3875 = vmatpush1.bf16.msra.mxu0 %v3831
        %3876 = vmatprep.subr.bf16.mxu0 0
        %3877 = vmatpush1.bf16.msra.mxu0 0
        %3878 = vmatprep.subr.bf16.mxu0 0
        %3879 = vmatpush1.bf16.msra.mxu0 0
        %3880 = vmatprep.subr.bf16.mxu0 0
        %3881 = vmatpush1.bf16.msra.mxu0 0
        %3882 = vmatprep.subr.bf16.mxu0 0
        %3883 = vmatpush1.bf16.msra.mxu0 0
        %3884 = vmatprep.subr.bf16.mxu0 0
        %3885 = vmatpush1.bf16.msra.mxu0 0
        %3886 = vmatprep.subr.bf16.mxu0 0
        %3887 = vmatpush1.bf16.msra.mxu0 0
        %3888 = vmatprep.mubr.bf16.mxu0 %v3854
        %3889 = vmatmul.mubr.bf16.gmra.mrb[0].mxu0 %v3748
        %v3890 = vpop.f32.mrb[0].mxu0
        %v3891 = vadd.f32 0.0, %v3890
        %v3892 = vpop.f32.mrb[0].mxu0
        %v3893 = vadd.f32 0.0, %v3892
        %v3894 = vpop.f32.mrb[0].mxu0
        %v3895 = vadd.f32 0.0, %v3894
        %v3896 = vpop.f32.mrb[0].mxu0
        %v3897 = vadd.f32 0.0, %v3896
        %3898 = vdwg.mxu0
        %v3899 = vadd.f32 %v3708, %v3891
        %v3900 = vadd.f32 %v3709, %v3893
        %v3901 = vadd.f32 %v3710, %v3895
        %v3902 = vadd.f32 %v3711, %v3897
        %v3903 = vld [vmem:[#allocation4 + $0x10] sm:$0xfe]
        %v3904 = vld [vmem:[#allocation4 + $0x18] sm:$0xfe]
        %v3905 = vld [vmem:[#allocation4 + $0x20] sm:$0xff]
        %v3906 = vld [vmem:[#allocation4 + $0x28] sm:$0xff]
        %v3907 = vld [vmem:[#allocation4 + $0x30] sm:$0x1]
        %v3908 = vld [vmem:[#allocation4 + $0x38] sm:$0x1]
        %v3909 = vpack.c.bf16 %v3905, %v3903
        %v3910 = vpack.c.bf16 %v3906, %v3904
        %v3911 = vpack.c.bf16 %v3907, %v3907
        %v3912 = vpack.c.bf16 %v3908, %v3908
        %s3913 = scalar_lea.vmem %s6, 480
        %v3914 = vld [vmem:[%s3913] sm:$0xff]
        %v3915 = vld [vmem:[%s3913 + $0x8] sm:$0xff]
        %v3916 = vld [vmem:[%s3913 + $0x10] sm:$0xff]
        %v3917 = vld [vmem:[%s3913 + $0x18] sm:$0xff]
        %v3918 = vld [vmem:[%s3913 + $0x20] sm:$0xff]
        %v3919 = vld [vmem:[%s3913 + $0x28] sm:$0xff]
        %v3920 = vld [vmem:[%s3913 + $0x30] sm:$0xff]
        %v3921 = vld [vmem:[%s3913 + $0x38] sm:$0xff]
        %v3922 = vld [vmem:[%s3913 + $0x40] sm:$0xff]
        %v3923 = vld [vmem:[%s3913 + $0x48] sm:$0xff]
        %v3924 = vld [vmem:[%s3913 + $0x50] sm:$0xff]
        %v3925 = vld [vmem:[%s3913 + $0x58] sm:$0xff]
        %v3926 = vld [vmem:[%s3913 + $0x60] sm:$0xff]
        %v3927 = vld [vmem:[%s3913 + $0x68] sm:$0xff]
        %v3928 = vld [vmem:[%s3913 + $0x70] sm:$0xff]
        %v3929 = vld [vmem:[%s3913 + $0x78] sm:$0xff]
        %v3930 = vld [vmem:[%s3913 + $0x80] sm:$0xff]
        %v3931 = vld [vmem:[%s3913 + $0x88] sm:$0xff]
        %v3932 = vld [vmem:[%s3913 + $0x90] sm:$0xff]
        %v3933 = vld [vmem:[%s3913 + $0x98] sm:$0xff]
        %vm3934 = vsmask.f32 7424
        %v3936 = vshrl.u32 %v3909, 16
        %v3938 = vshll.u32 %v3909, 16
        %v3940 = vrot.slane %v3938, 1
        %v3941 = vor.u32 %v3936, %v3940
        %v3943 = vshll.u32 %v3911, 16
        %v3945 = vrot.slane %v3943, 1
        %v3946 = vsel %vm3934, %v3941, %v3945
        %v3948 = vshrl.u32 %v3910, 16
        %v3950 = vshll.u32 %v3910, 16
        %v3952 = vrot.slane %v3950, 1
        %v3953 = vor.u32 %v3948, %v3952
        %v3955 = vshll.u32 %v3912, 16
        %v3957 = vrot.slane %v3955, 1
        %v3958 = vsel %vm3934, %v3953, %v3957
        %v3980 = vunpack.c.l.b16 %v3914
        %v3981 = vunpack.c.h.b16 %v3914
        %v3982 = vunpack.c.l.b16 %v3915
        %v3983 = vunpack.c.h.b16 %v3915
        %v3984 = vunpack.c.l.b16 %v3916
        %v3985 = vunpack.c.h.b16 %v3916
        %v3986 = vunpack.c.l.b16 %v3917
        %v3987 = vunpack.c.h.b16 %v3917
        %v3988 = vunpack.c.l.b16 %v3918
        %v3989 = vunpack.c.h.b16 %v3918
        %v3990 = vunpack.c.l.b16 %v3919
        %v3991 = vunpack.c.h.b16 %v3919
        %v3992 = vunpack.c.l.b16 %v3920
        %v3993 = vunpack.c.h.b16 %v3920
        %v3994 = vunpack.c.l.b16 %v3921
        %v3995 = vunpack.c.h.b16 %v3921
        %v3996 = vunpack.c.l.b16 %v3922
        %v3997 = vunpack.c.h.b16 %v3922
        %v3998 = vunpack.c.l.b16 %v3923
        %v3999 = vunpack.c.h.b16 %v3923
        %v4000 = vunpack.c.l.b16 %v3924
        %v4001 = vunpack.c.h.b16 %v3924
        %v4002 = vunpack.c.l.b16 %v3925
        %v4003 = vunpack.c.h.b16 %v3925
        %v4004 = vunpack.c.l.b16 %v3926
        %v4005 = vunpack.c.h.b16 %v3926
        %v4006 = vunpack.c.l.b16 %v3927
        %v4007 = vunpack.c.h.b16 %v3927
        %v4008 = vunpack.c.l.b16 %v3928
        %v4009 = vunpack.c.h.b16 %v3928
        %v4010 = vunpack.c.l.b16 %v3929
        %v4011 = vunpack.c.h.b16 %v3929
        %v4012 = vunpack.c.l.b16 %v3930
        %v4013 = vunpack.c.h.b16 %v3930
        %v4014 = vunpack.c.l.b16 %v3931
        %v4015 = vunpack.c.h.b16 %v3931
        %v4016 = vunpack.c.l.b16 %v3932
        %v4017 = vunpack.c.h.b16 %v3932
        %v4018 = vunpack.c.l.b16 %v3933
        %v4019 = vunpack.c.h.b16 %v3933
        %v4020 = vpack.c.b16 %v3982, %v3980
        %v4021 = vpack.c.b16 %v3983, %v3981
        %v4022 = vpack.c.b16 %v3986, %v3984
        %v4023 = vpack.c.b16 %v3987, %v3985
        %v4024 = vpack.c.b16 %v3990, %v3988
        %v4025 = vpack.c.b16 %v3991, %v3989
        %v4026 = vpack.c.b16 %v3994, %v3992
        %v4027 = vpack.c.b16 %v3995, %v3993
        %v4028 = vpack.c.b16 %v3998, %v3996
        %v4029 = vpack.c.b16 %v3999, %v3997
        %v4030 = vpack.c.b16 %v4002, %v4000
        %v4031 = vpack.c.b16 %v4003, %v4001
        %v4032 = vpack.c.b16 %v4006, %v4004
        %v4033 = vpack.c.b16 %v4007, %v4005
        %v4034 = vpack.c.b16 %v4010, %v4008
        %v4035 = vpack.c.b16 %v4011, %v4009
        %v4036 = vpack.c.b16 %v4014, %v4012
        %v4037 = vpack.c.b16 %v4015, %v4013
        %v4038 = vpack.c.b16 %v4018, %v4016
        %v4039 = vpack.c.b16 %v4019, %v4017
        %v4061 = vsel %vm3315, %v3958, 0
        %4063 = vmatprep.subr.bf16.mxu0 %v4021
        %4064 = vmatpush1.bf16.msra.mxu0 %v4020
        %4065 = vmatprep.subr.bf16.mxu0 %v4023
        %4066 = vmatpush1.bf16.msra.mxu0 %v4022
        %4067 = vmatprep.subr.bf16.mxu0 %v4025
        %4068 = vmatpush1.bf16.msra.mxu0 %v4024
        %4069 = vmatprep.subr.bf16.mxu0 %v4027
        %4070 = vmatpush1.bf16.msra.mxu0 %v4026
        %4071 = vmatprep.subr.bf16.mxu0 %v4029
        %4072 = vmatpush1.bf16.msra.mxu0 %v4028
        %4073 = vmatprep.subr.bf16.mxu0 %v4031
        %4074 = vmatpush1.bf16.msra.mxu0 %v4030
        %4075 = vmatprep.subr.bf16.mxu0 %v4033
        %4076 = vmatpush1.bf16.msra.mxu0 %v4032
        %4077 = vmatprep.subr.bf16.mxu0 %v4035
        %4078 = vmatpush1.bf16.msra.mxu0 %v4034
        %4079 = vmatprep.subr.bf16.mxu0 %v4037
        %4080 = vmatpush1.bf16.msra.mxu0 %v4036
        %4081 = vmatprep.subr.bf16.mxu0 %v4039
        %4082 = vmatpush1.bf16.msra.mxu0 %v4038
        %4083 = vmatprep.subr.bf16.mxu0 0
        %4084 = vmatpush1.bf16.msra.mxu0 0
        %4085 = vmatprep.subr.bf16.mxu0 0
        %4086 = vmatpush1.bf16.msra.mxu0 0
        %4087 = vmatprep.subr.bf16.mxu0 0
        %4088 = vmatpush1.bf16.msra.mxu0 0
        %4089 = vmatprep.subr.bf16.mxu0 0
        %4090 = vmatpush1.bf16.msra.mxu0 0
        %4091 = vmatprep.subr.bf16.mxu0 0
        %4092 = vmatpush1.bf16.msra.mxu0 0
        %4093 = vmatprep.subr.bf16.mxu0 0
        %4094 = vmatpush1.bf16.msra.mxu0 0
        %4095 = vmatprep.mubr.bf16.mxu0 %v4061
        %4096 = vmatmul.mubr.bf16.gmra.mrb[0].mxu0 %v3946
        %v4097 = vpop.f32.mrb[0].mxu0
        %v4098 = vadd.f32 0.0, %v4097
        %v4099 = vpop.f32.mrb[0].mxu0
        %v4100 = vadd.f32 0.0, %v4099
        %v4101 = vpop.f32.mrb[0].mxu0
        %v4102 = vadd.f32 0.0, %v4101
        %v4103 = vpop.f32.mrb[0].mxu0
        %v4104 = vadd.f32 0.0, %v4103
        %4105 = vdwg.mxu0
        %v4106 = vadd.f32 %v3899, %v4098
        %v4107 = vadd.f32 %v3900, %v4100
        %v4108 = vadd.f32 %v3901, %v4102
        %v4109 = vadd.f32 %v3902, %v4104
        %v4110 = vld [vmem:[#allocation4 + $0x10] sm:$0xf0]
        %v4111 = vld [vmem:[#allocation4 + $0x18] sm:$0xf0]
        %v4112 = vld [vmem:[#allocation4 + $0x30] sm:$0xf]
        %v4113 = vld [vmem:[#allocation4 + $0x38] sm:$0xf]
        %v4114 = vpack.c.bf16 %v3905, %v4110
        %v4115 = vpack.c.bf16 %v3906, %v4111
        %v4116 = vpack.c.bf16 %v4112, %v4112
        %v4117 = vpack.c.bf16 %v4113, %v4113
        %s4118 = scalar_lea.vmem %s6, 640
        %v4119 = vld [vmem:[%s4118] sm:$0xff]
        %v4120 = vld [vmem:[%s4118 + $0x8] sm:$0xff]
        %v4121 = vld [vmem:[%s4118 + $0x10] sm:$0xff]
        %v4122 = vld [vmem:[%s4118 + $0x18] sm:$0xff]
        %v4123 = vld [vmem:[%s4118 + $0x20] sm:$0xff]
        %v4124 = vld [vmem:[%s4118 + $0x28] sm:$0xff]
        %v4125 = vld [vmem:[%s4118 + $0x30] sm:$0xff]
        %v4126 = vld [vmem:[%s4118 + $0x38] sm:$0xff]
        %v4127 = vld [vmem:[%s4118 + $0x40] sm:$0xff]
        %v4128 = vld [vmem:[%s4118 + $0x48] sm:$0xff]
        %v4129 = vld [vmem:[%s4118 + $0x50] sm:$0xff]
        %v4130 = vld [vmem:[%s4118 + $0x58] sm:$0xff]
        %v4131 = vld [vmem:[%s4118 + $0x60] sm:$0xff]
        %v4132 = vld [vmem:[%s4118 + $0x68] sm:$0xff]
        %v4133 = vld [vmem:[%s4118 + $0x70] sm:$0xff]
        %v4134 = vld [vmem:[%s4118 + $0x78] sm:$0xff]
        %v4135 = vld [vmem:[%s4118 + $0x80] sm:$0xff]
        %v4136 = vld [vmem:[%s4118 + $0x88] sm:$0xff]
        %v4137 = vld [vmem:[%s4118 + $0x90] sm:$0xff]
        %v4138 = vld [vmem:[%s4118 + $0x98] sm:$0xff]
        %vm4143 = vcmask 1045504
        %v4144 = vrot.slane %v4114, 2
        %v4145 = vrot.slane %v4116, 2
        %v4146 = vsel %vm4143, %v4144, %v4145
        %v4147 = vrot.slane %v4115, 2
        %v4148 = vrot.slane %v4117, 2
        %v4149 = vsel %vm4143, %v4147, %v4148
        %v4171 = vunpack.c.l.b16 %v4119
        %v4172 = vunpack.c.h.b16 %v4119
        %v4173 = vunpack.c.l.b16 %v4120
        %v4174 = vunpack.c.h.b16 %v4120
        %v4175 = vunpack.c.l.b16 %v4121
        %v4176 = vunpack.c.h.b16 %v4121
        %v4177 = vunpack.c.l.b16 %v4122
        %v4178 = vunpack.c.h.b16 %v4122
        %v4179 = vunpack.c.l.b16 %v4123
        %v4180 = vunpack.c.h.b16 %v4123
        %v4181 = vunpack.c.l.b16 %v4124
        %v4182 = vunpack.c.h.b16 %v4124
        %v4183 = vunpack.c.l.b16 %v4125
        %v4184 = vunpack.c.h.b16 %v4125
        %v4185 = vunpack.c.l.b16 %v4126
        %v4186 = vunpack.c.h.b16 %v4126
        %v4187 = vunpack.c.l.b16 %v4127
        %v4188 = vunpack.c.h.b16 %v4127
        %v4189 = vunpack.c.l.b16 %v4128
        %v4190 = vunpack.c.h.b16 %v4128
        %v4191 = vunpack.c.l.b16 %v4129
        %v4192 = vunpack.c.h.b16 %v4129
        %v4193 = vunpack.c.l.b16 %v4130
        %v4194 = vunpack.c.h.b16 %v4130
        %v4195 = vunpack.c.l.b16 %v4131
        %v4196 = vunpack.c.h.b16 %v4131
        %v4197 = vunpack.c.l.b16 %v4132
        %v4198 = vunpack.c.h.b16 %v4132
        %v4199 = vunpack.c.l.b16 %v4133
        %v4200 = vunpack.c.h.b16 %v4133
        %v4201 = vunpack.c.l.b16 %v4134
        %v4202 = vunpack.c.h.b16 %v4134
        %v4203 = vunpack.c.l.b16 %v4135
        %v4204 = vunpack.c.h.b16 %v4135
        %v4205 = vunpack.c.l.b16 %v4136
        %v4206 = vunpack.c.h.b16 %v4136
        %v4207 = vunpack.c.l.b16 %v4137
        %v4208 = vunpack.c.h.b16 %v4137
        %v4209 = vunpack.c.l.b16 %v4138
        %v4210 = vunpack.c.h.b16 %v4138
        %v4211 = vpack.c.b16 %v4173, %v4171
        %v4212 = vpack.c.b16 %v4174, %v4172
        %v4213 = vpack.c.b16 %v4177, %v4175
        %v4214 = vpack.c.b16 %v4178, %v4176
        %v4215 = vpack.c.b16 %v4181, %v4179
        %v4216 = vpack.c.b16 %v4182, %v4180
        %v4217 = vpack.c.b16 %v4185, %v4183
        %v4218 = vpack.c.b16 %v4186, %v4184
        %v4219 = vpack.c.b16 %v4189, %v4187
        %v4220 = vpack.c.b16 %v4190, %v4188
        %v4221 = vpack.c.b16 %v4193, %v4191
        %v4222 = vpack.c.b16 %v4194, %v4192
        %v4223 = vpack.c.b16 %v4197, %v4195
        %v4224 = vpack.c.b16 %v4198, %v4196
        %v4225 = vpack.c.b16 %v4201, %v4199
        %v4226 = vpack.c.b16 %v4202, %v4200
        %v4227 = vpack.c.b16 %v4205, %v4203
        %v4228 = vpack.c.b16 %v4206, %v4204
        %v4229 = vpack.c.b16 %v4209, %v4207
        %v4230 = vpack.c.b16 %v4210, %v4208
        %v4252 = vsel %vm3315, %v4149, 0
        %4254 = vmatprep.subr.bf16.mxu0 %v4212
        %4255 = vmatpush1.bf16.msra.mxu0 %v4211
        %4256 = vmatprep.subr.bf16.mxu0 %v4214
        %4257 = vmatpush1.bf16.msra.mxu0 %v4213
        %4258 = vmatprep.subr.bf16.mxu0 %v4216
        %4259 = vmatpush1.bf16.msra.mxu0 %v4215
        %4260 = vmatprep.subr.bf16.mxu0 %v4218
        %4261 = vmatpush1.bf16.msra.mxu0 %v4217
        %4262 = vmatprep.subr.bf16.mxu0 %v4220
        %4263 = vmatpush1.bf16.msra.mxu0 %v4219
        %4264 = vmatprep.subr.bf16.mxu0 %v4222
        %4265 = vmatpush1.bf16.msra.mxu0 %v4221
        %4266 = vmatprep.subr.bf16.mxu0 %v4224
        %4267 = vmatpush1.bf16.msra.mxu0 %v4223
        %4268 = vmatprep.subr.bf16.mxu0 %v4226
        %4269 = vmatpush1.bf16.msra.mxu0 %v4225
        %4270 = vmatprep.subr.bf16.mxu0 %v4228
        %4271 = vmatpush1.bf16.msra.mxu0 %v4227
        %4272 = vmatprep.subr.bf16.mxu0 %v4230
        %4273 = vmatpush1.bf16.msra.mxu0 %v4229
        %4274 = vmatprep.subr.bf16.mxu0 0
        %4275 = vmatpush1.bf16.msra.mxu0 0
        %4276 = vmatprep.subr.bf16.mxu0 0
        %4277 = vmatpush1.bf16.msra.mxu0 0
        %4278 = vmatprep.subr.bf16.mxu0 0
        %4279 = vmatpush1.bf16.msra.mxu0 0
        %4280 = vmatprep.subr.bf16.mxu0 0
        %4281 = vmatpush1.bf16.msra.mxu0 0
        %4282 = vmatprep.subr.bf16.mxu0 0
        %4283 = vmatpush1.bf16.msra.mxu0 0
        %4284 = vmatprep.subr.bf16.mxu0 0
        %4285 = vmatpush1.bf16.msra.mxu0 0
        %4286 = vmatprep.mubr.bf16.mxu0 %v4252
        %4287 = vmatmul.mubr.bf16.gmra.mrb[0].mxu0 %v4146
        %v4288 = vpop.f32.mrb[0].mxu0
        %v4289 = vadd.f32 0.0, %v4288
        %v4290 = vpop.f32.mrb[0].mxu0
        %v4291 = vadd.f32 0.0, %v4290
        %v4292 = vpop.f32.mrb[0].mxu0
        %v4293 = vadd.f32 0.0, %v4292
        %v4294 = vpop.f32.mrb[0].mxu0
        %v4295 = vadd.f32 0.0, %v4294
        %4296 = vdwg.mxu0
        %v4297 = vadd.f32 %v4106, %v4289
        %v4298 = vadd.f32 %v4107, %v4291
        %v4299 = vadd.f32 %v4108, %v4293
        %v4300 = vadd.f32 %v4109, %v4295
        %v4301 = vld [vmem:[%s10] sm:$0x3]
        %v4303 = vlaneseq
        %v4304 = vshrl.u32 %v4303, 7
        %v4305 = vsub.s32 0, %v4304
        %v4306 = vrot.slane %v4301, %v4305
        %v4307 = vlaneseq
        %v4308 = vshrl.u32 %v4307, 7
        %v4309 = vsub.s32 1, %v4308
        %v4310 = vrot.slane %v4301, %v4309
        %v4313 = vadd.f32 %v4297, %v4306
        %v4314 = vadd.f32 %v4298, %v4310
        %v4315 = vadd.f32 %v4299, %v4306
        %v4316 = vadd.f32 %v4300, %v4310
        %v4317 = vmax.f32 %v4313, 0.0
        %v4318 = vmax.f32 %v4314, 0.0
        %v4319 = vmax.f32 %v4315, 0.0
        %v4320 = vmax.f32 %v4316, 0.0
        %4321 = vst [vmem:[%s379] sm:$0xff] %v4317
        %4322 = vst.msk [vmem:[%s379 + $0x8] sm:$0xff] %vm433, %v4318
        %4323 = vst [vmem:[%s379 + $0x10] sm:$0xff] %v4319
        %4324 = vst.msk [vmem:[%s379 + $0x18] sm:$0xff] %vm433, %v4320
        %s4325 = sand.u32 %s269, 1
        %s4326 = scalar_lea.sflag [#allocation6], %s4325
        %s4327 = sand.u32 %s269, 1
        %s4328 = smul.addr %s4327, 32
        %s4329 = scalar_lea.vmem [#allocation5], %s4328
        // Predicated region
        $region65: #{tpu_custom_call.1} parent=63 // pred_check
          %p4330 = pneg %p279
        $region66: #{tpu_custom_call.1} parent=63 // pred_check_branch
          %4332 = sbr.rel (%p4330) target = $region68
        $region67: #{tpu_custom_call.1} parent=63 // pred_region
          %s4334 = ssub.s32 512, 512
          %4335 = vsyncadd %s4326, %s4334
          %s4336 = smul.addr %s25, 4
          %s4337 = smul.addr %s4336, 128
          %s4338 = scalar_lea.hbm %s11, %s4337
          %s4339 = sshll.u32 %s4329, 4
          %s4340 = int_to_ptr.vmem [resolvable:$true] %s4339
          %4345 = dma.vmem_to_hbm [thread:$0]  %s4340, 512, %s4338, %s4326, 256, 256, 16
        $region68: #{tpu_custom_call.1} parent=63 // pred_fallthru
          _
      $region64: #{tpu_custom_call.1} parent=5 // pred_fallthru
        _
      %p4346 = scmp.le.s32.totalorder 2, %s20
      // Predicated region
      $region69: #{tpu_custom_call.1} parent=5 // pred_check
        %p4347 = pneg %p4346
      $region70: #{tpu_custom_call.1} parent=5 // pred_check_branch
        %4349 = sbr.rel (%p4347) target = $region72
      $region71: #{tpu_custom_call.1} parent=5 // pred_region
        %s4350 = ssub.s32 %s20, 2
        // Predicated region
        $region73: #{tpu_custom_call.1} parent=71 // pred_check
          %p4351 = pneg %p285
        $region74: #{tpu_custom_call.1} parent=71 // pred_check_branch
          %4353 = sbr.rel (%p4351) target = $region76
        $region75: #{tpu_custom_call.1} parent=71 // pred_region
          %s4354 = sand.u32 %s270, 1
          %s4355 = scalar_lea.sflag [#allocation6], %s4354
          %s4356 = sand.u32 %s270, 1
          %s4357 = smul.addr %s4356, 32
          %s4358 = scalar_lea.vmem [#allocation5], %s4357
          %4359 = dma.done %s4355, 512
        $region76: #{tpu_custom_call.1} parent=71 // pred_fallthru
          _
      $region72: #{tpu_custom_call.1} parent=5 // pred_fallthru
        _
    $region6: #{tpu_custom_call.1} parent=1 // loop_footer
      %s24 = sadd.s32 1, %s20
    $region7: #{tpu_custom_call.1} parent=1 // loop_footer_branch
      %19 = sbr.rel target = $region3
    $region8: #{tpu_custom_call.1} parent=1 // loop_exit
      _
    %4360 = vsyncpa [#allocation6], 1
    %s4361 = scalar_lea.sflag [#allocation6], 1
    %4362 = vsyncpa %s4361, 1

// kernel: tpu_custom_call.1
$region0: #{tpu_custom_call.1}
  #allocation0 [shape = 'u32[]', space=smem, size = 0x4, offset = 0x4, fixed_abs, tag = 'smem constant byte address 0x4 - core index']
  #allocation1 [shape = 'u32[144,128]{1,0:T(1,128)}', space=vmem, size = 0x12000, scoped, tag = 'internal scratch']
  #allocation2 [shape = 'f32[20,128]{1,0:T(8,128)}', space=vmem, size = 0x3000, scoped, tag = 'scratch operand']
  #allocation3 [shape = 'f32[24,128]{1,0:T(8,128)}', space=vmem, size = 0x3000, scoped, tag = 'scratch operand']
  #allocation4 [shape = 'f32[28,160]{1,0:T(8,128)}', space=vmem, size = 0x8000, scoped, tag = 'scratch operand']
  %s0 = inlined_call_operand.vmem [shape: f32[2,32,64], index: 0, kind: input, shape index: {}]
  %s1 = inlined_call_operand.vmem [shape: bf16[5,64,128], index: 1, kind: input, shape index: {}]
  %s2 = inlined_call_operand.vmem [shape: bf16[5,64,128], index: 2, kind: input, shape index: {}]
  %s3 = inlined_call_operand.vmem [shape: bf16[5,64,160], index: 3, kind: input, shape index: {}]
  %s4 = inlined_call_operand.vmem [shape: bf16[5,128,192], index: 4, kind: input, shape index: {}]
  %s5 = inlined_call_operand.vmem [shape: bf16[5,128,192], index: 5, kind: input, shape index: {}]
  %s6 = inlined_call_operand.vmem [shape: bf16[5,160,192], index: 6, kind: input, shape index: {}]
  %s7 = inlined_call_operand.vmem [shape: f32[1,128], index: 7, kind: input, shape index: {}]
  %s8 = inlined_call_operand.vmem [shape: f32[1,128], index: 8, kind: input, shape index: {}]
  %s9 = inlined_call_operand.vmem [shape: f32[1,160], index: 9, kind: input, shape index: {}]
  %s10 = inlined_call_operand.vmem [shape: f32[1,192], index: 10, kind: input, shape index: {}]
  %s11 = inlined_call_operand.hbm [shape: f32[2,16,192], index: 11, kind: output, shape index: {}]
  %s12 = sld [smem:[#allocation0]]
  $region77: #{tpu_custom_call.1} parent=0
    _
  %s14 = ssub.s32 1, %s12
  %s15 = scalar_select 0, %s14, %s12
  $region1: #{tpu_custom_call.1} parent=0
    #allocation5 [shape = 'u8[32768]{0}', space=vmem, size = 0x8000, scoped, tag = 'output window, operand 0']
    #allocation6 [shape = 's32[2]{0}', space=sflag, size = 0x8, scoped, tag = 'scoped memory for tpu_custom_call.1']
    %16 = vsyncpa [#allocation6], 0
    %s17 = scalar_lea.sflag [#allocation6], 1
    %18 = vsyncpa %s17, 0
    loop: start=0, step=1, limit=4
    $region2: #{tpu_custom_call.1} parent=1 // loop_pre_header
      _
    $region3: #{tpu_custom_call.1} parent=1 // loop_header
      %s20 = sphi 0, %s24
      %p21 = scmp.ge.s32.totalorder %s20, 4
      %s30 = sphi 0, %s32
      %s33 = sphi 0, %s30
      %s34 = sphi 0, %s33
      %s50 = sphi 0, %s34
      %s54 = sphi 0, %s54
      %s56 = sphi 0, %s54
      %s57 = sphi 0, %s56
      %s71 = sphi 0, %s57
      %s75 = sphi 0, %s75
      %s77 = sphi 0, %s75
      %s78 = sphi 0, %s77
      %s92 = sphi 0, %s78
      %s96 = sphi 0, %s96
      %s98 = sphi 0, %s96
      %s99 = sphi 0, %s98
      %s113 = sphi 0, %s99
      %s117 = sphi 0, %s117
      %s119 = sphi 0, %s117
      %s120 = sphi 0, %s119
      %s134 = sphi 0, %s120
      %s138 = sphi 0, %s138
      %s140 = sphi 0, %s138
      %s141 = sphi 0, %s140
      %s155 = sphi 0, %s141
      %s159 = sphi 0, %s159
      %s161 = sphi 0, %s159
      %s162 = sphi 0, %s161
      %s176 = sphi 0, %s162
      %s180 = sphi 0, %s180
      %s182 = sphi 0, %s180
      %s183 = sphi 0, %s182
      %s197 = sphi 0, %s183
      %s201 = sphi 0, %s201
      %s203 = sphi 0, %s201
      %s204 = sphi 0, %s203
      %s218 = sphi 0, %s204
      %s222 = sphi 0, %s222
      %s224 = sphi 0, %s222
      %s225 = sphi 0, %s224
      %s239 = sphi 0, %s225
      %s243 = sphi 0, %s243
      %s245 = sphi 0, %s243
      %s246 = sphi 0, %s245
      %s260 = sphi 0, %s246
      %s266 = sphi 0, %s268
      %s269 = sphi 0, %s266
      %s270 = sphi 0, %s269
      %s286 = sphi 0, %s270
    $region4: #{tpu_custom_call.1} parent=1 // loop_header_branch
      %23 = sbr.rel (%p21) target = $region8
    $region5: #{tpu_custom_call.1} parent=1 // loop_body
      %s25 = ssub.s32 %s20, 1
      %s26 = ssub.s32 %s20, 2
      %s27 = sadd.s32 %s20, 1
      %s28 = ssub.s32 %s20, %s27
      %p29 = scmp.eq.s32.totalorder %s28, 0
      %s31 = sadd.s32 %s30, 1
      %s32 = scalar_select %p29, %s30, %s31
      %p35 = pneg %p29
      %p36 = scmp.eq.s32.totalorder %s20, 1
      %p37 = por %p35, %p36
      %p38 = scmp.ne.s32.totalorder %s30, %s33
      %p39 = scmp.eq.s32.totalorder %s20, 0
      %p40 = por %p38, %p39
      %p41 = scmp.ne.s32.totalorder %s30, %s33
      %p42 = scmp.eq.s32.totalorder %s25, 1
      %p43 = por %p41, %p42
      %p44 = scmp.ne.s32.totalorder %s33, %s34
      %p45 = scmp.eq.s32.totalorder %s25, 0
      %p46 = por %p44, %p45
      %p47 = scmp.ne.s32.totalorder %s33, %s34
      %p48 = scmp.eq.s32.totalorder %s26, 1
      %p49 = por %p47, %p48
      %p51 = scmp.ne.s32.totalorder %s34, %s50
      %p52 = scmp.eq.s32.totalorder %s26, 0
      %p53 = por %p51, %p52
      %s55 = sadd.s32 %s54, 1
      %p58 = scmp.eq.s32.totalorder %s20, 1
      %p59 = scmp.ne.s32.totalorder %s54, %s56
      %p60 = scmp.eq.s32.totalorder %s20, 0
      %p61 = por %p59, %p60
      %p62 = scmp.ne.s32.totalorder %s54, %s56
      %p63 = scmp.eq.s32.totalorder %s25, 1
      %p64 = por %p62, %p63
      %p65 = scmp.ne.s32.totalorder %s56, %s57
      %p66 = scmp.eq.s32.totalorder %s25, 0
      %p67 = por %p65, %p66
      %p68 = scmp.ne.s32.totalorder %s56, %s57
      %p69 = scmp.eq.s32.totalorder %s26, 1
      %p70 = por %p68, %p69
      %p72 = scmp.ne.s32.totalorder %s57, %s71
      %p73 = scmp.eq.s32.totalorder %s26, 0
      %p74 = por %p72, %p73
      %s76 = sadd.s32 %s75, 1
      %p79 = scmp.eq.s32.totalorder %s20, 1
      %p80 = scmp.ne.s32.totalorder %s75, %s77
      %p81 = scmp.eq.s32.totalorder %s20, 0
      %p82 = por %p80, %p81
      %p83 = scmp.ne.s32.totalorder %s75, %s77
      %p84 = scmp.eq.s32.totalorder %s25, 1
      %p85 = por %p83, %p84
      %p86 = scmp.ne.s32.totalorder %s77, %s78
      %p87 = scmp.eq.s32.totalorder %s25, 0
      %p88 = por %p86, %p87
      %p89 = scmp.ne.s32.totalorder %s77, %s78
      %p90 = scmp.eq.s32.totalorder %s26, 1
      %p91 = por %p89, %p90
      %p93 = scmp.ne.s32.totalorder %s78, %s92
      %p94 = scmp.eq.s32.totalorder %s26, 0
      %p95 = por %p93, %p94
      %s97 = sadd.s32 %s96, 1
      %p100 = scmp.eq.s32.totalorder %s20, 1
      %p101 = scmp.ne.s32.totalorder %s96, %s98
      %p102 = scmp.eq.s32.totalorder %s20, 0
      %p103 = por %p101, %p102
      %p104 = scmp.ne.s32.totalorder %s96, %s98
      %p105 = scmp.eq.s32.totalorder %s25, 1
      %p106 = por %p104, %p105
      %p107 = scmp.ne.s32.totalorder %s98, %s99
      %p108 = scmp.eq.s32.totalorder %s25, 0
      %p109 = por %p107, %p108
      %p110 = scmp.ne.s32.totalorder %s98, %s99
      %p111 = scmp.eq.s32.totalorder %s26, 1
      %p112 = por %p110, %p111
      %p114 = scmp.ne.s32.totalorder %s99, %s113
      %p115 = scmp.eq.s32.totalorder %s26, 0
      %p116 = por %p114, %p115
      %s118 = sadd.s32 %s117, 1
      %p121 = scmp.eq.s32.totalorder %s20, 1
      %p122 = scmp.ne.s32.totalorder %s117, %s119
      %p123 = scmp.eq.s32.totalorder %s20, 0
      %p124 = por %p122, %p123
      %p125 = scmp.ne.s32.totalorder %s117, %s119
      %p126 = scmp.eq.s32.totalorder %s25, 1
      %p127 = por %p125, %p126
      %p128 = scmp.ne.s32.totalorder %s119, %s120
      %p129 = scmp.eq.s32.totalorder %s25, 0
      %p130 = por %p128, %p129
      %p131 = scmp.ne.s32.totalorder %s119, %s120
      %p132 = scmp.eq.s32.totalorder %s26, 1
      %p133 = por %p131, %p132
      %p135 = scmp.ne.s32.totalorder %s120, %s134
      %p136 = scmp.eq.s32.totalorder %s26, 0
      %p137 = por %p135, %p136
      %s139 = sadd.s32 %s138, 1
      %p142 = scmp.eq.s32.totalorder %s20, 1
      %p143 = scmp.ne.s32.totalorder %s138, %s140
      %p144 = scmp.eq.s32.totalorder %s20, 0
      %p145 = por %p143, %p144
      %p146 = scmp.ne.s32.totalorder %s138, %s140
      %p147 = scmp.eq.s32.totalorder %s25, 1
      %p148 = por %p146, %p147
      %p149 = scmp.ne.s32.totalorder %s140, %s141
      %p150 = scmp.eq.s32.totalorder %s25, 0
      %p151 = por %p149, %p150
      %p152 = scmp.ne.s32.totalorder %s140, %s141
      %p153 = scmp.eq.s32.totalorder %s26, 1
      %p154 = por %p152, %p153
      %p156 = scmp.ne.s32.totalorder %s141, %s155
      %p157 = scmp.eq.s32.totalorder %s26, 0
      %p158 = por %p156, %p157
      %s160 = sadd.s32 %s159, 1
      %p163 = scmp.eq.s32.totalorder %s20, 1
      %p164 = scmp.ne.s32.totalorder %s159, %s161
      %p165 = scmp.eq.s32.totalorder %s20, 0
      %p166 = por %p164, %p165
      %p167 = scmp.ne.s32.totalorder %s159, %s161
      %p168 = scmp.eq.s32.totalorder %s25, 1
      %p169 = por %p167, %p168
      %p170 = scmp.ne.s32.totalorder %s161, %s162
      %p171 = scmp.eq.s32.totalorder %s25, 0
      %p172 = por %p170, %p171
      %p173 = scmp.ne.s32.totalorder %s161, %s162
      %p174 = scmp.eq.s32.totalorder %s26, 1
      %p175 = por %p173, %p174
      %p177 = scmp.ne.s32.totalorder %s162, %s176
      %p178 = scmp.eq.s32.totalorder %s26, 0
      %p179 = por %p177, %p178
      %s181 = sadd.s32 %s180, 1
      %p184 = scmp.eq.s32.totalorder %s20, 1
      %p185 = scmp.ne.s32.totalorder %s180, %s182
      %p186 = scmp.eq.s32.totalorder %s20, 0
      %p187 = por %p185, %p186
      %p188 = scmp.ne.s32.totalorder %s180, %s182
      %p189 = scmp.eq.s32.totalorder %s25, 1
      %p190 = por %p188, %p189
      %p191 = scmp.ne.s32.totalorder %s182, %s183
      %p192 = scmp.eq.s32.totalorder %s25, 0
      %p193 = por %p191, %p192
      %p194 = scmp.ne.s32.totalorder %s182, %s183
      %p195 = scmp.eq.s32.totalorder %s26, 1
      %p196 = por %p194, %p195
      %p198 = scmp.ne.s32.totalorder %s183, %s197
      %p199 = scmp.eq.s32.totalorder %s26, 0
      %p200 = por %p198, %p199
      %s202 = sadd.s32 %s201, 1
      %p205 = scmp.eq.s32.totalorder %s20, 1
      %p206 = scmp.ne.s32.totalorder %s201, %s203
      %p207 = scmp.eq.s32.totalorder %s20, 0
      %p208 = por %p206, %p207
      %p209 = scmp.ne.s32.totalorder %s201, %s203
      %p210 = scmp.eq.s32.totalorder %s25, 1
      %p211 = por %p209, %p210
      %p212 = scmp.ne.s32.totalorder %s203, %s204
      %p213 = scmp.eq.s32.totalorder %s25, 0
      %p214 = por %p212, %p213
      %p215 = scmp.ne.s32.totalorder %s203, %s204
      %p216 = scmp.eq.s32.totalorder %s26, 1
      %p217 = por %p215, %p216
      %p219 = scmp.ne.s32.totalorder %s204, %s218
      %p220 = scmp.eq.s32.totalorder %s26, 0
      %p221 = por %p219, %p220
      %s223 = sadd.s32 %s222, 1
      %p226 = scmp.eq.s32.totalorder %s20, 1
      %p227 = scmp.ne.s32.totalorder %s222, %s224
      %p228 = scmp.eq.s32.totalorder %s20, 0
      %p229 = por %p227, %p228
      %p230 = scmp.ne.s32.totalorder %s222, %s224
      %p231 = scmp.eq.s32.totalorder %s25, 1
      %p232 = por %p230, %p231
      %p233 = scmp.ne.s32.totalorder %s224, %s225
      %p234 = scmp.eq.s32.totalorder %s25, 0
      %p235 = por %p233, %p234
      %p236 = scmp.ne.s32.totalorder %s224, %s225
      %p237 = scmp.eq.s32.totalorder %s26, 1
      %p238 = por %p236, %p237
      %p240 = scmp.ne.s32.totalorder %s225, %s239
      %p241 = scmp.eq.s32.totalorder %s26, 0
      %p242 = por %p240, %p241
      %s244 = sadd.s32 %s243, 1
      %p247 = scmp.eq.s32.totalorder %s20, 1
      %p248 = scmp.ne.s32.totalorder %s243, %s245
      %p249 = scmp.eq.s32.totalorder %s20, 0
      %p250 = por %p248, %p249
      %p251 = scmp.ne.s32.totalorder %s243, %s245
      %p252 = scmp.eq.s32.totalorder %s25, 1
      %p253 = por %p251, %p252
      %p254 = scmp.ne.s32.totalorder %s245, %s246
      %p255 = scmp.eq.s32.totalorder %s25, 0
      %p256 = por %p254, %p255
      %p257 = scmp.ne.s32.totalorder %s245, %s246
      %p258 = scmp.eq.s32.totalorder %s26, 1
      %p259 = por %p257, %p258
      %p261 = scmp.ne.s32.totalorder %s246, %s260
      %p262 = scmp.eq.s32.totalorder %s26, 0
      %p263 = por %p261, %p262
      %s264 = ssub.s32 %s20, %s27
      %p265 = scmp.eq.s32.totalorder %s264, 0
      %s267 = sadd.s32 %s266, 1
      %s268 = scalar_select %p265, %s266, %s267
      %p271 = pneg %p265
      %p272 = scmp.eq.s32.totalorder %s20, 1
      %p273 = por %p271, %p272
      %p274 = scmp.ne.s32.totalorder %s266, %s269
      %p275 = scmp.eq.s32.totalorder %s20, 0
      %p276 = por %p274, %p275
      %p277 = scmp.ne.s32.totalorder %s266, %s269
      %p278 = scmp.eq.s32.totalorder %s25, 1
      %p279 = por %p277, %p278
      %p280 = scmp.ne.s32.totalorder %s269, %s270
      %p281 = scmp.eq.s32.totalorder %s25, 0
      %p282 = por %p280, %p281
      %p283 = scmp.ne.s32.totalorder %s269, %s270
      %p284 = scmp.eq.s32.totalorder %s26, 1
      %p285 = por %p283, %p284
      %p287 = scmp.ne.s32.totalorder %s270, %s286
      %p288 = scmp.eq.s32.totalorder %s26, 0
      %p289 = por %p287, %p288
      %p290 = scmp.le.s32.totalorder 1, %s20
      %p291 = scmp.lt.s32.totalorder %s20, 3
      %p292 = pnand %p290, %p291
      %p293 = pneg %p292
      // Predicated region
      $region9: #{tpu_custom_call.1} parent=5 // pred_check
        _
      $region10: #{tpu_custom_call.1} parent=5 // pred_check_branch
        %295 = sbr.rel (%p292) target = $region12
      $region11: #{tpu_custom_call.1} parent=5 // pred_region
        %s296 = ssub.s32 %s20, 1
        // Predicated region
        $region13: #{tpu_custom_call.1} parent=11 // pred_check
          %p297 = pneg %p67
        $region14: #{tpu_custom_call.1} parent=11 // pred_check_branch
          %299 = sbr.rel (%p297) target = $region16
        $region15: #{tpu_custom_call.1} parent=11 // pred_region
          _
        $region16: #{tpu_custom_call.1} parent=11 // pred_fallthru
          _
        // Predicated region
        $region17: #{tpu_custom_call.1} parent=11 // pred_check
          %p300 = pneg %p88
        $region18: #{tpu_custom_call.1} parent=11 // pred_check_branch
          %302 = sbr.rel (%p300) target = $region20
        $region19: #{tpu_custom_call.1} parent=11 // pred_region
          _
        $region20: #{tpu_custom_call.1} parent=11 // pred_fallthru
          _
        // Predicated region
        $region21: #{tpu_custom_call.1} parent=11 // pred_check
          %p303 = pneg %p109
        $region22: #{tpu_custom_call.1} parent=11 // pred_check_branch
          %305 = sbr.rel (%p303) target = $region24
        $region23: #{tpu_custom_call.1} parent=11 // pred_region
          _
        $region24: #{tpu_custom_call.1} parent=11 // pred_fallthru
          _
        // Predicated region
        $region25: #{tpu_custom_call.1} parent=11 // pred_check
          %p306 = pneg %p130
        $region26: #{tpu_custom_call.1} parent=11 // pred_check_branch
          %308 = sbr.rel (%p306) target = $region28
        $region27: #{tpu_custom_call.1} parent=11 // pred_region
          _
        $region28: #{tpu_custom_call.1} parent=11 // pred_fallthru
          _
        // Predicated region
        $region29: #{tpu_custom_call.1} parent=11 // pred_check
          %p309 = pneg %p151
        $region30: #{tpu_custom_call.1} parent=11 // pred_check_branch
          %311 = sbr.rel (%p309) target = $region32
        $region31: #{tpu_custom_call.1} parent=11 // pred_region
          _
        $region32: #{tpu_custom_call.1} parent=11 // pred_fallthru
          _
        // Predicated region
        $region33: #{tpu_custom_call.1} parent=11 // pred_check
          %p312 = pneg %p172
        $region34: #{tpu_custom_call.1} parent=11 // pred_check_branch
          %314 = sbr.rel (%p312) target = $region36
        $region35: #{tpu_custom_call.1} parent=11 // pred_region
          _
        $region36: #{tpu_custom_call.1} parent=11 // pred_fallthru
          _
        // Predicated region
        $region37: #{tpu_custom_call.1} parent=11 // pred_check
          %p315 = pneg %p193
        $region38: #{tpu_custom_call.1} parent=11 // pred_check_branch
          %317 = sbr.rel (%p315) target = $region40
        $region39: #{tpu_custom_call.1} parent=11 // pred_region
          _
        $region40: #{tpu_custom_call.1} parent=11 // pred_fallthru
          _
        // Predicated region
        $region41: #{tpu_custom_call.1} parent=11 // pred_check
          %p318 = pneg %p214
        $region42: #{tpu_custom_call.1} parent=11 // pred_check_branch
          %320 = sbr.rel (%p318) target = $region44
        $region43: #{tpu_custom_call.1} parent=11 // pred_region
          _
        $region44: #{tpu_custom_call.1} parent=11 // pred_fallthru
          _
        // Predicated region
        $region45: #{tpu_custom_call.1} parent=11 // pred_check
          %p321 = pneg %p235
        $region46: #{tpu_custom_call.1} parent=11 // pred_check_branch
          %323 = sbr.rel (%p321) target = $region48
        $region47: #{tpu_custom_call.1} parent=11 // pred_region
          _
        $region48: #{tpu_custom_call.1} parent=11 // pred_fallthru
          _
        // Predicated region
        $region49: #{tpu_custom_call.1} parent=11 // pred_check
          %p324 = pneg %p256
        $region50: #{tpu_custom_call.1} parent=11 // pred_check_branch
          %326 = sbr.rel (%p324) target = $region52
        $region51: #{tpu_custom_call.1} parent=11 // pred_region
          _
        $region52: #{tpu_custom_call.1} parent=11 // pred_fallthru
          _
      $region12: #{tpu_custom_call.1} parent=5 // pred_fallthru
        _
      %p327 = scmp.lt.s32.totalorder %s20, 2
      // Predicated region
      $region53: #{tpu_custom_call.1} parent=5 // pred_check
        %p328 = pneg %p327
      $region54: #{tpu_custom_call.1} parent=5 // pred_check_branch
        %330 = sbr.rel (%p328) target = $region56
      $region55: #{tpu_custom_call.1} parent=5 // pred_region
        // Predicated region
        $region57: #{tpu_custom_call.1} parent=55 // pred_check
          %p331 = pneg %p40
        $region58: #{tpu_custom_call.1} parent=55 // pred_check_branch
          %333 = sbr.rel (%p331) target = $region60
        $region59: #{tpu_custom_call.1} parent=55 // pred_region
          %p334 = scmp.lt.s32.totalorder %s20, 1
          %s335 = scalar_select %p334, %s20, 1
          %s336 = smul.addr %s335, 4
          %s337 = smul.addr %s336, 8
          %s338 = scalar_lea.vmem %s0, %s337
        $region60: #{tpu_custom_call.1} parent=55 // pred_fallthru
          _
      $region56: #{tpu_custom_call.1} parent=5 // pred_fallthru
        _
      %p339 = scmp.le.s32.totalorder 1, %s20
      %p340 = scmp.lt.s32.totalorder %s20, 3
      %p341 = pnand %p339, %p340
      %p342 = pneg %p341
      // Predicated region
      $region61: #{tpu_custom_call.1} parent=5 // pred_check
        _
      $region62: #{tpu_custom_call.1} parent=5 // pred_check_branch
        %344 = sbr.rel (%p341) target = $region64
      $region63: #{tpu_custom_call.1} parent=5 // pred_region
        %s345 = ssub.s32 %s20, 1
        %p346 = scmp.lt.s32.totalorder %s25, 1
        %s347 = scalar_select %p346, %s25, 1
        %s348 = smul.addr %s347, 4
        %s349 = smul.addr %s348, 8
        %s350 = scalar_lea.vmem %s0, %s349
        %p351 = pneg %p46
        %p352 = pneg %p43
        %p353 = pneg %p67
        %p354 = pneg %p64
        %p355 = pneg %p88
        %p356 = pneg %p85
        %p357 = pneg %p109
        %p358 = pneg %p106
        %p359 = pneg %p130
        %p360 = pneg %p127
        %p361 = pneg %p151
        %p362 = pneg %p148
        %p363 = pneg %p172
        %p364 = pneg %p169
        %p365 = pneg %p193
        %p366 = pneg %p190
        %p367 = pneg %p214
        %p368 = pneg %p211
        %p369 = pneg %p235
        %p370 = pneg %p232
        %p371 = pneg %p256
        %p372 = pneg %p253
        %p373 = pneg %p282
        %p374 = pneg %p279
        %s375 = sand.u32 %s269, 1
        %s376 = scalar_lea.sflag [#allocation6], %s375
        %s377 = sand.u32 %s269, 1
        %s378 = smul.addr %s377, 32
        %s379 = scalar_lea.vmem [#allocation5], %s378
        %p380 = scmp.lt.s32.totalorder %s25, 1
        %s381 = scalar_select %p380, %s25, 1
        %s382 = smul.addr %s381, 4
        %s383 = smul.addr %s382, 8
        %s384 = scalar_lea.vmem %s0, %s383
        %v386 = vld [vmem:[%s384 + $0x6] sm:$0xff]
        %v387 = vld [vmem:[%s384 + $0xe] sm:$0xff]
        %v388 = vpack.c.bf16 %v387, %v386
        %v389 = vld [vmem:[%s1] sm:$0xf]
        %v390 = vld [vmem:[%s1 + $0x4] sm:$0xf]
        %v391 = vld [vmem:[%s1 + $0x8] sm:$0xf]
        %v392 = vld [vmem:[%s1 + $0xc] sm:$0xf]
        %v393 = vld [vmem:[%s1 + $0x10] sm:$0xf]
        %v394 = vld [vmem:[%s1 + $0x14] sm:$0xf]
        %v395 = vld [vmem:[%s1 + $0x18] sm:$0xf]
        %v396 = vld [vmem:[%s1 + $0x1c] sm:$0xf]
        %v397 = vld [vmem:[%s384 + $0x7] sm:$0xff]
        %v398 = vld [vmem:[%s384 + $0xf] sm:$0xff]
        %v399 = vpack.c.bf16 %v398, %v397
        %s400 = scalar_lea.vmem %s1, 32
        %v401 = vld [vmem:[%s400] sm:$0xf]
        %v402 = vld [vmem:[%s400 + $0x4] sm:$0xf]
        %v403 = vld [vmem:[%s400 + $0x8] sm:$0xf]
        %v404 = vld [vmem:[%s400 + $0xc] sm:$0xf]
        %v405 = vld [vmem:[%s400 + $0x10] sm:$0xf]
        %v406 = vld [vmem:[%s400 + $0x14] sm:$0xf]
        %v407 = vld [vmem:[%s400 + $0x18] sm:$0xf]
        %v408 = vld [vmem:[%s400 + $0x1c] sm:$0xf]
        %v417 = vunpack.c.l.b16 %v401
        %v418 = vunpack.c.l.b16 %v402
        %v419 = vunpack.c.l.b16 %v403
        %v420 = vunpack.c.l.b16 %v404
        %v421 = vunpack.c.l.b16 %v405
        %v422 = vunpack.c.l.b16 %v406
        %v423 = vunpack.c.l.b16 %v407
        %v424 = vunpack.c.l.b16 %v408
        %v425 = vpack.c.b16 %v418, %v417
        %v426 = vpack.c.b16 %v420, %v419
        %v427 = vpack.c.b16 %v422, %v421
        %v428 = vpack.c.b16 %v424, %v423
        %vm433 = vcmask 523264
        %v435 = vsel %vm433, %v399, 0
        %437 = vmatprep.subr.bf16.mxu0 0
        %438 = vmatpush1.bf16.msra.mxu0 %v425
        %439 = vmatprep.subr.bf16.mxu0 0
        %440 = vmatpush1.bf16.msra.mxu0 %v426
        %441 = vmatprep.subr.bf16.mxu0 0
        %442 = vmatpush1.bf16.msra.mxu0 %v427
        %443 = vmatprep.subr.bf16.mxu0 0
        %444 = vmatpush1.bf16.msra.mxu0 %v428
        %445 = vmatprep.subr.bf16.mxu0 0
        %446 = vmatpush1.bf16.msra.mxu0 0
        %447 = vmatprep.subr.bf16.mxu0 0
        %448 = vmatpush1.bf16.msra.mxu0 0
        %449 = vmatprep.subr.bf16.mxu0 0
        %450 = vmatpush1.bf16.msra.mxu0 0
        %451 = vmatprep.subr.bf16.mxu0 0
        %452 = vmatpush1.bf16.msra.mxu0 0
        %453 = vmatprep.subr.bf16.mxu0 0
        %454 = vmatpush1.bf16.msra.mxu0 0
        %455 = vmatprep.subr.bf16.mxu0 0
        %456 = vmatpush1.bf16.msra.mxu0 0
        %457 = vmatprep.subr.bf16.mxu0 0
        %458 = vmatpush1.bf16.msra.mxu0 0
        %459 = vmatprep.subr.bf16.mxu0 0
        %460 = vmatpush1.bf16.msra.mxu0 0
        %461 = vmatprep.subr.bf16.mxu0 0
        %462 = vmatpush1.bf16.msra.mxu0 0
        %463 = vmatprep.subr.bf16.mxu0 0
        %464 = vmatpush1.bf16.msra.mxu0 0
        %465 = vmatprep.subr.bf16.mxu0 0
        %466 = vmatpush1.bf16.msra.mxu0 0
        %467 = vmatprep.subr.bf16.mxu0 0
        %468 = vmatpush1.bf16.msra.mxu0 0
        %469 = vmatprep.mubr.bf16.mxu0 0
        %470 = vmatmul.mubr.bf16.gmra.mrb[0].mxu0 %v435
        %v471 = vpop.f32.mrb[0].mxu0
        %v472 = vadd.f32 0.0, %v471
        %v473 = vpop.f32.mrb[0].mxu0
        %v474 = vpop.f32.mrb[0].mxu0
        %v475 = vadd.f32 0.0, %v474
        %v476 = vpop.f32.mrb[0].mxu0
        %477 = vdwg.mxu0
        %v486 = vunpack.c.l.b16 %v389
        %v487 = vunpack.c.l.b16 %v390
        %v488 = vunpack.c.l.b16 %v391
        %v489 = vunpack.c.l.b16 %v392
        %v490 = vunpack.c.l.b16 %v393
        %v491 = vunpack.c.l.b16 %v394
        %v492 = vunpack.c.l.b16 %v395
        %v493 = vunpack.c.l.b16 %v396
        %v494 = vpack.c.b16 %v487, %v486
        %v495 = vpack.c.b16 %v489, %v488
        %v496 = vpack.c.b16 %v491, %v490
        %v497 = vpack.c.b16 %v493, %v492
        %v503 = vsel %vm433, %v388, 0
        %505 = vmatprep.subr.bf16.mxu0 0
        %506 = vmatpush1.bf16.msra.mxu0 %v494
        %507 = vmatprep.subr.bf16.mxu0 0
        %508 = vmatpush1.bf16.msra.mxu0 %v495
        %509 = vmatprep.subr.bf16.mxu0 0
        %510 = vmatpush1.bf16.msra.mxu0 %v496
        %511 = vmatprep.subr.bf16.mxu0 0
        %512 = vmatpush1.bf16.msra.mxu0 %v497
        %513 = vmatprep.subr.bf16.mxu0 0
        %514 = vmatpush1.bf16.msra.mxu0 0
        %515 = vmatprep.subr.bf16.mxu0 0
        %516 = vmatpush1.bf16.msra.mxu0 0
        %517 = vmatprep.subr.bf16.mxu0 0
        %518 = vmatpush1.bf16.msra.mxu0 0
        %519 = vmatprep.subr.bf16.mxu0 0
        %520 = vmatpush1.bf16.msra.mxu0 0
        %521 = vmatprep.subr.bf16.mxu0 0
        %522 = vmatpush1.bf16.msra.mxu0 0
        %523 = vmatprep.subr.bf16.mxu0 0
        %524 = vmatpush1.bf16.msra.mxu0 0
        %525 = vmatprep.subr.bf16.mxu0 0
        %526 = vmatpush1.bf16.msra.mxu0 0
        %527 = vmatprep.subr.bf16.mxu0 0
        %528 = vmatpush1.bf16.msra.mxu0 0
        %529 = vmatprep.subr.bf16.mxu0 0
        %530 = vmatpush1.bf16.msra.mxu0 0
        %531 = vmatprep.subr.bf16.mxu0 0
        %532 = vmatpush1.bf16.msra.mxu0 0
        %533 = vmatprep.subr.bf16.mxu0 0
        %534 = vmatpush1.bf16.msra.mxu0 0
        %535 = vmatprep.subr.bf16.mxu0 0
        %536 = vmatpush1.bf16.msra.mxu0 0
        %537 = vmatprep.mubr.bf16.mxu0 0
        %538 = vmatmul.mubr.bf16.gmra.mrb[0].mxu0 %v503
        %v539 = vpop.f32.mrb[0].mxu0
        %v540 = vadd.f32 %v472, %v539
        %v541 = vpop.f32.mrb[0].mxu0
        %v542 = vpop.f32.mrb[0].mxu0
        %v543 = vadd.f32 %v475, %v542
        %v544 = vpop.f32.mrb[0].mxu0
        %545 = vdwg.mxu0
        %v546 = vld [vmem:[%s384 + $0x8] sm:$0xff]
        %v547 = vld [vmem:[%s384 + $0x10] sm:$0xff]
        %v548 = vpack.c.bf16 %v547, %v546
        %s549 = scalar_lea.vmem %s1, 64
        %v550 = vld [vmem:[%s549] sm:$0xf]
        %v551 = vld [vmem:[%s549 + $0x4] sm:$0xf]
        %v552 = vld [vmem:[%s549 + $0x8] sm:$0xf]
        %v553 = vld [vmem:[%s549 + $0xc] sm:$0xf]
        %v554 = vld [vmem:[%s549 + $0x10] sm:$0xf]
        %v555 = vld [vmem:[%s549 + $0x14] sm:$0xf]
        %v556 = vld [vmem:[%s549 + $0x18] sm:$0xf]
        %v557 = vld [vmem:[%s549 + $0x1c] sm:$0xf]
        %v566 = vunpack.c.l.b16 %v550
        %v567 = vunpack.c.l.b16 %v551
        %v568 = vunpack.c.l.b16 %v552
        %v569 = vunpack.c.l.b16 %v553
        %v570 = vunpack.c.l.b16 %v554
        %v571 = vunpack.c.l.b16 %v555
        %v572 = vunpack.c.l.b16 %v556
        %v573 = vunpack.c.l.b16 %v557
        %v574 = vpack.c.b16 %v567, %v566
        %v575 = vpack.c.b16 %v569, %v568
        %v576 = vpack.c.b16 %v571, %v570
        %v577 = vpack.c.b16 %v573, %v572
        %v583 = vsel %vm433, %v548, 0
        %585 = vmatprep.subr.bf16.mxu0 0
        %586 = vmatpush1.bf16.msra.mxu0 %v574
        %587 = vmatprep.subr.bf16.mxu0 0
        %588 = vmatpush1.bf16.msra.mxu0 %v575
        %589 = vmatprep.subr.bf16.mxu0 0
        %590 = vmatpush1.bf16.msra.mxu0 %v576
        %591 = vmatprep.subr.bf16.mxu0 0
        %592 = vmatpush1.bf16.msra.mxu0 %v577
        %593 = vmatprep.subr.bf16.mxu0 0
        %594 = vmatpush1.bf16.msra.mxu0 0
        %595 = vmatprep.subr.bf16.mxu0 0
        %596 = vmatpush1.bf16.msra.mxu0 0
        %597 = vmatprep.subr.bf16.mxu0 0
        %598 = vmatpush1.bf16.msra.mxu0 0
        %599 = vmatprep.subr.bf16.mxu0 0
        %600 = vmatpush1.bf16.msra.mxu0 0
        %601 = vmatprep.subr.bf16.mxu0 0
        %602 = vmatpush1.bf16.msra.mxu0 0
        %603 = vmatprep.subr.bf16.mxu0 0
        %604 = vmatpush1.bf16.msra.mxu0 0
        %605 = vmatprep.subr.bf16.mxu0 0
        %606 = vmatpush1.bf16.msra.mxu0 0
        %607 = vmatprep.subr.bf16.mxu0 0
        %608 = vmatpush1.bf16.msra.mxu0 0
        %609 = vmatprep.subr.bf16.mxu0 0
        %610 = vmatpush1.bf16.msra.mxu0 0
        %611 = vmatprep.subr.bf16.mxu0 0
        %612 = vmatpush1.bf16.msra.mxu0 0
        %613 = vmatprep.subr.bf16.mxu0 0
        %614 = vmatpush1.bf16.msra.mxu0 0
        %615 = vmatprep.subr.bf16.mxu0 0
        %616 = vmatpush1.bf16.msra.mxu0 0
        %617 = vmatprep.mubr.bf16.mxu0 0
        %618 = vmatmul.mubr.bf16.gmra.mrb[0].mxu0 %v583
        %v619 = vpop.f32.mrb[0].mxu0
        %v620 = vadd.f32 0.0, %v619
        %v621 = vpop.f32.mrb[0].mxu0
        %v622 = vpop.f32.mrb[0].mxu0
        %v623 = vadd.f32 0.0, %v622
        %v624 = vpop.f32.mrb[0].mxu0
        %625 = vdwg.mxu0
        %v626 = vadd.f32 %v540, %v620
        %v627 = vadd.f32 %v543, %v623
        %v628 = vld [vmem:[%s384 + $0x9] sm:$0xff]
        %v629 = vld [vmem:[%s384 + $0x11] sm:$0xff]
        %v630 = vpack.c.bf16 %v629, %v628
        %s631 = scalar_lea.vmem %s1, 96
        %v632 = vld [vmem:[%s631] sm:$0xf]
        %v633 = vld [vmem:[%s631 + $0x4] sm:$0xf]
        %v634 = vld [vmem:[%s631 + $0x8] sm:$0xf]
        %v635 = vld [vmem:[%s631 + $0xc] sm:$0xf]
        %v636 = vld [vmem:[%s631 + $0x10] sm:$0xf]
        %v637 = vld [vmem:[%s631 + $0x14] sm:$0xf]
        %v638 = vld [vmem:[%s631 + $0x18] sm:$0xf]
        %v639 = vld [vmem:[%s631 + $0x1c] sm:$0xf]
        %v648 = vunpack.c.l.b16 %v632
        %v649 = vunpack.c.l.b16 %v633
        %v650 = vunpack.c.l.b16 %v634
        %v651 = vunpack.c.l.b16 %v635
        %v652 = vunpack.c.l.b16 %v636
        %v653 = vunpack.c.l.b16 %v637
        %v654 = vunpack.c.l.b16 %v638
        %v655 = vunpack.c.l.b16 %v639
        %v656 = vpack.c.b16 %v649, %v648
        %v657 = vpack.c.b16 %v651, %v650
        %v658 = vpack.c.b16 %v653, %v652
        %v659 = vpack.c.b16 %v655, %v654
        %v665 = vsel %vm433, %v630, 0
        %667 = vmatprep.subr.bf16.mxu0 0
        %668 = vmatpush1.bf16.msra.mxu0 %v656
        %669 = vmatprep.subr.bf16.mxu0 0
        %670 = vmatpush1.bf16.msra.mxu0 %v657
        %671 = vmatprep.subr.bf16.mxu0 0
        %672 = vmatpush1.bf16.msra.mxu0 %v658
        %673 = vmatprep.subr.bf16.mxu0 0
        %674 = vmatpush1.bf16.msra.mxu0 %v659
        %675 = vmatprep.subr.bf16.mxu0 0
        %676 = vmatpush1.bf16.msra.mxu0 0
        %677 = vmatprep.subr.bf16.mxu0 0
        %678 = vmatpush1.bf16.msra.mxu0 0
        %679 = vmatprep.subr.bf16.mxu0 0
        %680 = vmatpush1.bf16.msra.mxu0 0
        %681 = vmatprep.subr.bf16.mxu0 0
        %682 = vmatpush1.bf16.msra.mxu0 0
        %683 = vmatprep.subr.bf16.mxu0 0
        %684 = vmatpush1.bf16.msra.mxu0 0
        %685 = vmatprep.subr.bf16.mxu0 0
        %686 = vmatpush1.bf16.msra.mxu0 0
        %687 = vmatprep.subr.bf16.mxu0 0
        %688 = vmatpush1.bf16.msra.mxu0 0
        %689 = vmatprep.subr.bf16.mxu0 0
        %690 = vmatpush1.bf16.msra.mxu0 0
        %691 = vmatprep.subr.bf16.mxu0 0
        %692 = vmatpush1.bf16.msra.mxu0 0
        %693 = vmatprep.subr.bf16.mxu0 0
        %694 = vmatpush1.bf16.msra.mxu0 0
        %695 = vmatprep.subr.bf16.mxu0 0
        %696 = vmatpush1.bf16.msra.mxu0 0
        %697 = vmatprep.subr.bf16.mxu0 0
        %698 = vmatpush1.bf16.msra.mxu0 0
        %699 = vmatprep.mubr.bf16.mxu0 0
        %700 = vmatmul.mubr.bf16.gmra.mrb[0].mxu0 %v665
        %v701 = vpop.f32.mrb[0].mxu0
        %v702 = vadd.f32 0.0, %v701
        %v703 = vpop.f32.mrb[0].mxu0
        %v704 = vpop.f32.mrb[0].mxu0
        %v705 = vadd.f32 0.0, %v704
        %v706 = vpop.f32.mrb[0].mxu0
        %707 = vdwg.mxu0
        %v708 = vadd.f32 %v626, %v702
        %v709 = vadd.f32 %v627, %v705
        %v710 = vld [vmem:[%s384 + $0xa] sm:$0xff]
        %v711 = vld [vmem:[%s384 + $0x12] sm:$0xff]
        %v712 = vpack.c.bf16 %v711, %v710
        %s713 = scalar_lea.vmem %s1, 128
        %v714 = vld [vmem:[%s713] sm:$0xf]
        %v715 = vld [vmem:[%s713 + $0x4] sm:$0xf]
        %v716 = vld [vmem:[%s713 + $0x8] sm:$0xf]
        %v717 = vld [vmem:[%s713 + $0xc] sm:$0xf]
        %v718 = vld [vmem:[%s713 + $0x10] sm:$0xf]
        %v719 = vld [vmem:[%s713 + $0x14] sm:$0xf]
        %v720 = vld [vmem:[%s713 + $0x18] sm:$0xf]
        %v721 = vld [vmem:[%s713 + $0x1c] sm:$0xf]
        %v730 = vunpack.c.l.b16 %v714
        %v731 = vunpack.c.l.b16 %v715
        %v732 = vunpack.c.l.b16 %v716
        %v733 = vunpack.c.l.b16 %v717
        %v734 = vunpack.c.l.b16 %v718
        %v735 = vunpack.c.l.b16 %v719
        %v736 = vunpack.c.l.b16 %v720
        %v737 = vunpack.c.l.b16 %v721
        %v738 = vpack.c.b16 %v731, %v730
        %v739 = vpack.c.b16 %v733, %v732
        %v740 = vpack.c.b16 %v735, %v734
        %v741 = vpack.c.b16 %v737, %v736
        %v747 = vsel %vm433, %v712, 0
        %749 = vmatprep.subr.bf16.mxu0 0
        %750 = vmatpush1.bf16.msra.mxu0 %v738
        %751 = vmatprep.subr.bf16.mxu0 0
        %752 = vmatpush1.bf16.msra.mxu0 %v739
        %753 = vmatprep.subr.bf16.mxu0 0
        %754 = vmatpush1.bf16.msra.mxu0 %v740
        %755 = vmatprep.subr.bf16.mxu0 0
        %756 = vmatpush1.bf16.msra.mxu0 %v741
        %757 = vmatprep.subr.bf16.mxu0 0
        %758 = vmatpush1.bf16.msra.mxu0 0
        %759 = vmatprep.subr.bf16.mxu0 0
        %760 = vmatpush1.bf16.msra.mxu0 0
        %761 = vmatprep.subr.bf16.mxu0 0
        %762 = vmatpush1.bf16.msra.mxu0 0
        %763 = vmatprep.subr.bf16.mxu0 0
        %764 = vmatpush1.bf16.msra.mxu0 0
        %765 = vmatprep.subr.bf16.mxu0 0
        %766 = vmatpush1.bf16.msra.mxu0 0
        %767 = vmatprep.subr.bf16.mxu0 0
        %768 = vmatpush1.bf16.msra.mxu0 0
        %769 = vmatprep.subr.bf16.mxu0 0
        %770 = vmatpush1.bf16.msra.mxu0 0
        %771 = vmatprep.subr.bf16.mxu0 0
        %772 = vmatpush1.bf16.msra.mxu0 0
        %773 = vmatprep.subr.bf16.mxu0 0
        %774 = vmatpush1.bf16.msra.mxu0 0
        %775 = vmatprep.subr.bf16.mxu0 0
        %776 = vmatpush1.bf16.msra.mxu0 0
        %777 = vmatprep.subr.bf16.mxu0 0
        %778 = vmatpush1.bf16.msra.mxu0 0
        %779 = vmatprep.subr.bf16.mxu0 0
        %780 = vmatpush1.bf16.msra.mxu0 0
        %781 = vmatprep.mubr.bf16.mxu0 0
        %782 = vmatmul.mubr.bf16.gmra.mrb[0].mxu0 %v747
        %v783 = vpop.f32.mrb[0].mxu0
        %v784 = vadd.f32 0.0, %v783
        %v785 = vpop.f32.mrb[0].mxu0
        %v786 = vpop.f32.mrb[0].mxu0
        %v787 = vadd.f32 0.0, %v786
        %v788 = vpop.f32.mrb[0].mxu0
        %789 = vdwg.mxu0
        %v790 = vadd.f32 %v708, %v784
        %v791 = vadd.f32 %v709, %v787
        %v792 = vld [vmem:[%s7] sm:$0x1]
        %v794 = vlaneseq
        %v795 = vshrl.u32 %v794, 7
        %v796 = vsub.s32 0, %v795
        %v797 = vrot.slane %v792, %v796
        %v799 = vadd.f32 %v790, %v797
        %v800 = vadd.f32 %v791, %v797
        %v801 = vmax.f32 %v799, 0.0
        %v802 = vmax.f32 %v800, 0.0
        %803 = vst [vmem:[#allocation2] sm:$0x3] 0.0
        %804 = vst [vmem:[#allocation2 + $0x12] sm:$0x3] 0.0
        %805 = vst [vmem:[#allocation2 + $0x2] sm:$0xff] %v801
        %806 = vst [vmem:[#allocation2 + $0xa] sm:$0xff] %v802
        %v807 = vld [vmem:[#allocation2] sm:$0xff]
        %v808 = vld [vmem:[#allocation2 + $0x8] sm:$0xff]
        %v809 = vpack.c.bf16 %v808, %v807
        %v810 = vld [vmem:[%s4] sm:$0xff]
        %v811 = vld [vmem:[%s4 + $0x8] sm:$0xff]
        %v812 = vld [vmem:[%s4 + $0x10] sm:$0xff]
        %v813 = vld [vmem:[%s4 + $0x18] sm:$0xff]
        %v814 = vld [vmem:[%s4 + $0x20] sm:$0xff]
        %v815 = vld [vmem:[%s4 + $0x28] sm:$0xff]
        %v816 = vld [vmem:[%s4 + $0x30] sm:$0xff]
        %v817 = vld [vmem:[%s4 + $0x38] sm:$0xff]
        %v818 = vld [vmem:[%s4 + $0x40] sm:$0xff]
        %v819 = vld [vmem:[%s4 + $0x48] sm:$0xff]
        %v820 = vld [vmem:[%s4 + $0x50] sm:$0xff]
        %v821 = vld [vmem:[%s4 + $0x58] sm:$0xff]
        %v822 = vld [vmem:[%s4 + $0x60] sm:$0xff]
        %v823 = vld [vmem:[%s4 + $0x68] sm:$0xff]
        %v824 = vld [vmem:[%s4 + $0x70] sm:$0xff]
        %v825 = vld [vmem:[%s4 + $0x78] sm:$0xff]
        %v826 = vld [vmem:[#allocation2 + $0x1] sm:$0xff]
        %v827 = vld [vmem:[#allocation2 + $0x9] sm:$0xff]
        %v828 = vpack.c.bf16 %v827, %v826
        %s829 = scalar_lea.vmem %s4, 128
        %v830 = vld [vmem:[%s829] sm:$0xff]
        %v831 = vld [vmem:[%s829 + $0x8] sm:$0xff]
        %v832 = vld [vmem:[%s829 + $0x10] sm:$0xff]
        %v833 = vld [vmem:[%s829 + $0x18] sm:$0xff]
        %v834 = vld [vmem:[%s829 + $0x20] sm:$0xff]
        %v835 = vld [vmem:[%s829 + $0x28] sm:$0xff]
        %v836 = vld [vmem:[%s829 + $0x30] sm:$0xff]
        %v837 = vld [vmem:[%s829 + $0x38] sm:$0xff]
        %v838 = vld [vmem:[%s829 + $0x40] sm:$0xff]
        %v839 = vld [vmem:[%s829 + $0x48] sm:$0xff]
        %v840 = vld [vmem:[%s829 + $0x50] sm:$0xff]
        %v841 = vld [vmem:[%s829 + $0x58] sm:$0xff]
        %v842 = vld [vmem:[%s829 + $0x60] sm:$0xff]
        %v843 = vld [vmem:[%s829 + $0x68] sm:$0xff]
        %v844 = vld [vmem:[%s829 + $0x70] sm:$0xff]
        %v845 = vld [vmem:[%s829 + $0x78] sm:$0xff]
        %v862 = vunpack.c.l.b16 %v830
        %v863 = vunpack.c.h.b16 %v830
        %v864 = vunpack.c.l.b16 %v831
        %v865 = vunpack.c.h.b16 %v831
        %v866 = vunpack.c.l.b16 %v832
        %v867 = vunpack.c.h.b16 %v832
        %v868 = vunpack.c.l.b16 %v833
        %v869 = vunpack.c.h.b16 %v833
        %v870 = vunpack.c.l.b16 %v834
        %v871 = vunpack.c.h.b16 %v834
        %v872 = vunpack.c.l.b16 %v835
        %v873 = vunpack.c.h.b16 %v835
        %v874 = vunpack.c.l.b16 %v836
        %v875 = vunpack.c.h.b16 %v836
        %v876 = vunpack.c.l.b16 %v837
        %v877 = vunpack.c.h.b16 %v837
        %v878 = vunpack.c.l.b16 %v838
        %v879 = vunpack.c.h.b16 %v838
        %v880 = vunpack.c.l.b16 %v839
        %v881 = vunpack.c.h.b16 %v839
        %v882 = vunpack.c.l.b16 %v840
        %v883 = vunpack.c.h.b16 %v840
        %v884 = vunpack.c.l.b16 %v841
        %v885 = vunpack.c.h.b16 %v841
        %v886 = vunpack.c.l.b16 %v842
        %v887 = vunpack.c.h.b16 %v842
        %v888 = vunpack.c.l.b16 %v843
        %v889 = vunpack.c.h.b16 %v843
        %v890 = vunpack.c.l.b16 %v844
        %v891 = vunpack.c.h.b16 %v844
        %v892 = vunpack.c.l.b16 %v845
        %v893 = vunpack.c.h.b16 %v845
        %v894 = vpack.c.b16 %v864, %v862
        %v895 = vpack.c.b16 %v865, %v863
        %v896 = vpack.c.b16 %v868, %v866
        %v897 = vpack.c.b16 %v869, %v867
        %v898 = vpack.c.b16 %v872, %v870
        %v899 = vpack.c.b16 %v873, %v871
        %v900 = vpack.c.b16 %v876, %v874
        %v901 = vpack.c.b16 %v877, %v875
        %v902 = vpack.c.b16 %v880, %v878
        %v903 = vpack.c.b16 %v881, %v879
        %v904 = vpack.c.b16 %v884, %v882
        %v905 = vpack.c.b16 %v885, %v883
        %v906 = vpack.c.b16 %v888, %v886
        %v907 = vpack.c.b16 %v889, %v887
        %v908 = vpack.c.b16 %v892, %v890
        %v909 = vpack.c.b16 %v893, %v891
        %926 = vmatprep.subr.bf16.mxu0 %v895
        %927 = vmatpush1.bf16.msra.mxu0 %v894
        %928 = vmatprep.subr.bf16.mxu0 %v897
        %929 = vmatpush1.bf16.msra.mxu0 %v896
        %930 = vmatprep.subr.bf16.mxu0 %v899
        %931 = vmatpush1.bf16.msra.mxu0 %v898
        %932 = vmatprep.subr.bf16.mxu0 %v901
        %933 = vmatpush1.bf16.msra.mxu0 %v900
        %934 = vmatprep.subr.bf16.mxu0 %v903
        %935 = vmatpush1.bf16.msra.mxu0 %v902
        %936 = vmatprep.subr.bf16.mxu0 %v905
        %937 = vmatpush1.bf16.msra.mxu0 %v904
        %938 = vmatprep.subr.bf16.mxu0 %v907
        %939 = vmatpush1.bf16.msra.mxu0 %v906
        %940 = vmatprep.subr.bf16.mxu0 %v909
        %941 = vmatpush1.bf16.msra.mxu0 %v908
        %942 = vmatprep.subr.bf16.mxu0 0
        %943 = vmatpush1.bf16.msra.mxu0 0
        %944 = vmatprep.subr.bf16.mxu0 0
        %945 = vmatpush1.bf16.msra.mxu0 0
        %946 = vmatprep.subr.bf16.mxu0 0
        %947 = vmatpush1.bf16.msra.mxu0 0
        %948 = vmatprep.subr.bf16.mxu0 0
        %949 = vmatpush1.bf16.msra.mxu0 0
        %950 = vmatprep.subr.bf16.mxu0 0
        %951 = vmatpush1.bf16.msra.mxu0 0
        %952 = vmatprep.subr.bf16.mxu0 0
        %953 = vmatpush1.bf16.msra.mxu0 0
        %954 = vmatprep.subr.bf16.mxu0 0
        %955 = vmatpush1.bf16.msra.mxu0 0
        %956 = vmatprep.subr.bf16.mxu0 0
        %957 = vmatpush1.bf16.msra.mxu0 0
        %958 = vmatprep.mubr.bf16.mxu0 0
        %959 = vmatmul.mubr.bf16.gmra.mrb[0].mxu0 %v828
        %v960 = vpop.f32.mrb[0].mxu0
        %v961 = vadd.f32 0.0, %v960
        %v962 = vpop.f32.mrb[0].mxu0
        %v963 = vadd.f32 0.0, %v962
        %v964 = vpop.f32.mrb[0].mxu0
        %v965 = vadd.f32 0.0, %v964
        %v966 = vpop.f32.mrb[0].mxu0
        %v967 = vadd.f32 0.0, %v966
        %968 = vdwg.mxu0
        %v985 = vunpack.c.l.b16 %v810
        %v986 = vunpack.c.h.b16 %v810
        %v987 = vunpack.c.l.b16 %v811
        %v988 = vunpack.c.h.b16 %v811
        %v989 = vunpack.c.l.b16 %v812
        %v990 = vunpack.c.h.b16 %v812
        %v991 = vunpack.c.l.b16 %v813
        %v992 = vunpack.c.h.b16 %v813
        %v993 = vunpack.c.l.b16 %v814
        %v994 = vunpack.c.h.b16 %v814
        %v995 = vunpack.c.l.b16 %v815
        %v996 = vunpack.c.h.b16 %v815
        %v997 = vunpack.c.l.b16 %v816
        %v998 = vunpack.c.h.b16 %v816
        %v999 = vunpack.c.l.b16 %v817
        %v1000 = vunpack.c.h.b16 %v817
        %v1001 = vunpack.c.l.b16 %v818
        %v1002 = vunpack.c.h.b16 %v818
        %v1003 = vunpack.c.l.b16 %v819
        %v1004 = vunpack.c.h.b16 %v819
        %v1005 = vunpack.c.l.b16 %v820
        %v1006 = vunpack.c.h.b16 %v820
        %v1007 = vunpack.c.l.b16 %v821
        %v1008 = vunpack.c.h.b16 %v821
        %v1009 = vunpack.c.l.b16 %v822
        %v1010 = vunpack.c.h.b16 %v822
        %v1011 = vunpack.c.l.b16 %v823
        %v1012 = vunpack.c.h.b16 %v823
        %v1013 = vunpack.c.l.b16 %v824
        %v1014 = vunpack.c.h.b16 %v824
        %v1015 = vunpack.c.l.b16 %v825
        %v1016 = vunpack.c.h.b16 %v825
        %v1017 = vpack.c.b16 %v987, %v985
        %v1018 = vpack.c.b16 %v988, %v986
        %v1019 = vpack.c.b16 %v991, %v989
        %v1020 = vpack.c.b16 %v992, %v990
        %v1021 = vpack.c.b16 %v995, %v993
        %v1022 = vpack.c.b16 %v996, %v994
        %v1023 = vpack.c.b16 %v999, %v997
        %v1024 = vpack.c.b16 %v1000, %v998
        %v1025 = vpack.c.b16 %v1003, %v1001
        %v1026 = vpack.c.b16 %v1004, %v1002
        %v1027 = vpack.c.b16 %v1007, %v1005
        %v1028 = vpack.c.b16 %v1008, %v1006
        %v1029 = vpack.c.b16 %v1011, %v1009
        %v1030 = vpack.c.b16 %v1012, %v1010
        %v1031 = vpack.c.b16 %v1015, %v1013
        %v1032 = vpack.c.b16 %v1016, %v1014
        %1049 = vmatprep.subr.bf16.mxu0 %v1018
        %1050 = vmatpush1.bf16.msra.mxu0 %v1017
        %1051 = vmatprep.subr.bf16.mxu0 %v1020
        %1052 = vmatpush1.bf16.msra.mxu0 %v1019
        %1053 = vmatprep.subr.bf16.mxu0 %v1022
        %1054 = vmatpush1.bf16.msra.mxu0 %v1021
        %1055 = vmatprep.subr.bf16.mxu0 %v1024
        %1056 = vmatpush1.bf16.msra.mxu0 %v1023
        %1057 = vmatprep.subr.bf16.mxu0 %v1026
        %1058 = vmatpush1.bf16.msra.mxu0 %v1025
        %1059 = vmatprep.subr.bf16.mxu0 %v1028
        %1060 = vmatpush1.bf16.msra.mxu0 %v1027
        %1061 = vmatprep.subr.bf16.mxu0 %v1030
        %1062 = vmatpush1.bf16.msra.mxu0 %v1029
        %1063 = vmatprep.subr.bf16.mxu0 %v1032
        %1064 = vmatpush1.bf16.msra.mxu0 %v1031
        %1065 = vmatprep.subr.bf16.mxu0 0
        %1066 = vmatpush1.bf16.msra.mxu0 0
        %1067 = vmatprep.subr.bf16.mxu0 0
        %1068 = vmatpush1.bf16.msra.mxu0 0
        %1069 = vmatprep.subr.bf16.mxu0 0
        %1070 = vmatpush1.bf16.msra.mxu0 0
        %1071 = vmatprep.subr.bf16.mxu0 0
        %1072 = vmatpush1.bf16.msra.mxu0 0
        %1073 = vmatprep.subr.bf16.mxu0 0
        %1074 = vmatpush1.bf16.msra.mxu0 0
        %1075 = vmatprep.subr.bf16.mxu0 0
        %1076 = vmatpush1.bf16.msra.mxu0 0
        %1077 = vmatprep.subr.bf16.mxu0 0
        %1078 = vmatpush1.bf16.msra.mxu0 0
        %1079 = vmatprep.subr.bf16.mxu0 0
        %1080 = vmatpush1.bf16.msra.mxu0 0
        %1081 = vmatprep.mubr.bf16.mxu0 0
        %1082 = vmatmul.mubr.bf16.gmra.mrb[0].mxu0 %v809
        %v1083 = vpop.f32.mrb[0].mxu0
        %v1084 = vadd.f32 %v961, %v1083
        %v1085 = vpop.f32.mrb[0].mxu0
        %v1086 = vadd.f32 %v963, %v1085
        %v1087 = vpop.f32.mrb[0].mxu0
        %v1088 = vadd.f32 %v965, %v1087
        %v1089 = vpop.f32.mrb[0].mxu0
        %v1090 = vadd.f32 %v967, %v1089
        %1091 = vdwg.mxu0
        %v1092 = vld [vmem:[#allocation2 + $0x2] sm:$0xff]
        %v1093 = vld [vmem:[#allocation2 + $0xa] sm:$0xff]
        %v1094 = vpack.c.bf16 %v1093, %v1092
        %s1095 = scalar_lea.vmem %s4, 256
        %v1096 = vld [vmem:[%s1095] sm:$0xff]
        %v1097 = vld [vmem:[%s1095 + $0x8] sm:$0xff]
        %v1098 = vld [vmem:[%s1095 + $0x10] sm:$0xff]
        %v1099 = vld [vmem:[%s1095 + $0x18] sm:$0xff]
        %v1100 = vld [vmem:[%s1095 + $0x20] sm:$0xff]
        %v1101 = vld [vmem:[%s1095 + $0x28] sm:$0xff]
        %v1102 = vld [vmem:[%s1095 + $0x30] sm:$0xff]
        %v1103 = vld [vmem:[%s1095 + $0x38] sm:$0xff]
        %v1104 = vld [vmem:[%s1095 + $0x40] sm:$0xff]
        %v1105 = vld [vmem:[%s1095 + $0x48] sm:$0xff]
        %v1106 = vld [vmem:[%s1095 + $0x50] sm:$0xff]
        %v1107 = vld [vmem:[%s1095 + $0x58] sm:$0xff]
        %v1108 = vld [vmem:[%s1095 + $0x60] sm:$0xff]
        %v1109 = vld [vmem:[%s1095 + $0x68] sm:$0xff]
        %v1110 = vld [vmem:[%s1095 + $0x70] sm:$0xff]
        %v1111 = vld [vmem:[%s1095 + $0x78] sm:$0xff]
        %v1128 = vunpack.c.l.b16 %v1096
        %v1129 = vunpack.c.h.b16 %v1096
        %v1130 = vunpack.c.l.b16 %v1097
        %v1131 = vunpack.c.h.b16 %v1097
        %v1132 = vunpack.c.l.b16 %v1098
        %v1133 = vunpack.c.h.b16 %v1098
        %v1134 = vunpack.c.l.b16 %v1099
        %v1135 = vunpack.c.h.b16 %v1099
        %v1136 = vunpack.c.l.b16 %v1100
        %v1137 = vunpack.c.h.b16 %v1100
        %v1138 = vunpack.c.l.b16 %v1101
        %v1139 = vunpack.c.h.b16 %v1101
        %v1140 = vunpack.c.l.b16 %v1102
        %v1141 = vunpack.c.h.b16 %v1102
        %v1142 = vunpack.c.l.b16 %v1103
        %v1143 = vunpack.c.h.b16 %v1103
        %v1144 = vunpack.c.l.b16 %v1104
        %v1145 = vunpack.c.h.b16 %v1104
        %v1146 = vunpack.c.l.b16 %v1105
        %v1147 = vunpack.c.h.b16 %v1105
        %v1148 = vunpack.c.l.b16 %v1106
        %v1149 = vunpack.c.h.b16 %v1106
        %v1150 = vunpack.c.l.b16 %v1107
        %v1151 = vunpack.c.h.b16 %v1107
        %v1152 = vunpack.c.l.b16 %v1108
        %v1153 = vunpack.c.h.b16 %v1108
        %v1154 = vunpack.c.l.b16 %v1109
        %v1155 = vunpack.c.h.b16 %v1109
        %v1156 = vunpack.c.l.b16 %v1110
        %v1157 = vunpack.c.h.b16 %v1110
        %v1158 = vunpack.c.l.b16 %v1111
        %v1159 = vunpack.c.h.b16 %v1111
        %v1160 = vpack.c.b16 %v1130, %v1128
        %v1161 = vpack.c.b16 %v1131, %v1129
        %v1162 = vpack.c.b16 %v1134, %v1132
        %v1163 = vpack.c.b16 %v1135, %v1133
        %v1164 = vpack.c.b16 %v1138, %v1136
        %v1165 = vpack.c.b16 %v1139, %v1137
        %v1166 = vpack.c.b16 %v1142, %v1140
        %v1167 = vpack.c.b16 %v1143, %v1141
        %v1168 = vpack.c.b16 %v1146, %v1144
        %v1169 = vpack.c.b16 %v1147, %v1145
        %v1170 = vpack.c.b16 %v1150, %v1148
        %v1171 = vpack.c.b16 %v1151, %v1149
        %v1172 = vpack.c.b16 %v1154, %v1152
        %v1173 = vpack.c.b16 %v1155, %v1153
        %v1174 = vpack.c.b16 %v1158, %v1156
        %v1175 = vpack.c.b16 %v1159, %v1157
        %1192 = vmatprep.subr.bf16.mxu0 %v1161
        %1193 = vmatpush1.bf16.msra.mxu0 %v1160
        %1194 = vmatprep.subr.bf16.mxu0 %v1163
        %1195 = vmatpush1.bf16.msra.mxu0 %v1162
        %1196 = vmatprep.subr.bf16.mxu0 %v1165
        %1197 = vmatpush1.bf16.msra.mxu0 %v1164
        %1198 = vmatprep.subr.bf16.mxu0 %v1167
        %1199 = vmatpush1.bf16.msra.mxu0 %v1166
        %1200 = vmatprep.subr.bf16.mxu0 %v1169
        %1201 = vmatpush1.bf16.msra.mxu0 %v1168
        %1202 = vmatprep.subr.bf16.mxu0 %v1171
        %1203 = vmatpush1.bf16.msra.mxu0 %v1170
        %1204 = vmatprep.subr.bf16.mxu0 %v1173
        %1205 = vmatpush1.bf16.msra.mxu0 %v1172
        %1206 = vmatprep.subr.bf16.mxu0 %v1175
        %1207 = vmatpush1.bf16.msra.mxu0 %v1174
        %1208 = vmatprep.subr.bf16.mxu0 0
        %1209 = vmatpush1.bf16.msra.mxu0 0
        %1210 = vmatprep.subr.bf16.mxu0 0
        %1211 = vmatpush1.bf16.msra.mxu0 0
        %1212 = vmatprep.subr.bf16.mxu0 0
        %1213 = vmatpush1.bf16.msra.mxu0 0
        %1214 = vmatprep.subr.bf16.mxu0 0
        %1215 = vmatpush1.bf16.msra.mxu0 0
        %1216 = vmatprep.subr.bf16.mxu0 0
        %1217 = vmatpush1.bf16.msra.mxu0 0
        %1218 = vmatprep.subr.bf16.mxu0 0
        %1219 = vmatpush1.bf16.msra.mxu0 0
        %1220 = vmatprep.subr.bf16.mxu0 0
        %1221 = vmatpush1.bf16.msra.mxu0 0
        %1222 = vmatprep.subr.bf16.mxu0 0
        %1223 = vmatpush1.bf16.msra.mxu0 0
        %1224 = vmatprep.mubr.bf16.mxu0 0
        %1225 = vmatmul.mubr.bf16.gmra.mrb[0].mxu0 %v1094
        %v1226 = vpop.f32.mrb[0].mxu0
        %v1227 = vadd.f32 0.0, %v1226
        %v1228 = vpop.f32.mrb[0].mxu0
        %v1229 = vadd.f32 0.0, %v1228
        %v1230 = vpop.f32.mrb[0].mxu0
        %v1231 = vadd.f32 0.0, %v1230
        %v1232 = vpop.f32.mrb[0].mxu0
        %v1233 = vadd.f32 0.0, %v1232
        %1234 = vdwg.mxu0
        %v1235 = vadd.f32 %v1084, %v1227
        %v1236 = vadd.f32 %v1086, %v1229
        %v1237 = vadd.f32 %v1088, %v1231
        %v1238 = vadd.f32 %v1090, %v1233
        %v1239 = vld [vmem:[#allocation2 + $0x3] sm:$0xff]
        %v1240 = vld [vmem:[#allocation2 + $0xb] sm:$0xff]
        %v1241 = vpack.c.bf16 %v1240, %v1239
        %s1242 = scalar_lea.vmem %s4, 384
        %v1243 = vld [vmem:[%s1242] sm:$0xff]
        %v1244 = vld [vmem:[%s1242 + $0x8] sm:$0xff]
        %v1245 = vld [vmem:[%s1242 + $0x10] sm:$0xff]
        %v1246 = vld [vmem:[%s1242 + $0x18] sm:$0xff]
        %v1247 = vld [vmem:[%s1242 + $0x20] sm:$0xff]
        %v1248 = vld [vmem:[%s1242 + $0x28] sm:$0xff]
        %v1249 = vld [vmem:[%s1242 + $0x30] sm:$0xff]
        %v1250 = vld [vmem:[%s1242 + $0x38] sm:$0xff]
        %v1251 = vld [vmem:[%s1242 + $0x40] sm:$0xff]
        %v1252 = vld [vmem:[%s1242 + $0x48] sm:$0xff]
        %v1253 = vld [vmem:[%s1242 + $0x50] sm:$0xff]
        %v1254 = vld [vmem:[%s1242 + $0x58] sm:$0xff]
        %v1255 = vld [vmem:[%s1242 + $0x60] sm:$0xff]
        %v1256 = vld [vmem:[%s1242 + $0x68] sm:$0xff]
        %v1257 = vld [vmem:[%s1242 + $0x70] sm:$0xff]
        %v1258 = vld [vmem:[%s1242 + $0x78] sm:$0xff]
        %v1275 = vunpack.c.l.b16 %v1243
        %v1276 = vunpack.c.h.b16 %v1243
        %v1277 = vunpack.c.l.b16 %v1244
        %v1278 = vunpack.c.h.b16 %v1244
        %v1279 = vunpack.c.l.b16 %v1245
        %v1280 = vunpack.c.h.b16 %v1245
        %v1281 = vunpack.c.l.b16 %v1246
        %v1282 = vunpack.c.h.b16 %v1246
        %v1283 = vunpack.c.l.b16 %v1247
        %v1284 = vunpack.c.h.b16 %v1247
        %v1285 = vunpack.c.l.b16 %v1248
        %v1286 = vunpack.c.h.b16 %v1248
        %v1287 = vunpack.c.l.b16 %v1249
        %v1288 = vunpack.c.h.b16 %v1249
        %v1289 = vunpack.c.l.b16 %v1250
        %v1290 = vunpack.c.h.b16 %v1250
        %v1291 = vunpack.c.l.b16 %v1251
        %v1292 = vunpack.c.h.b16 %v1251
        %v1293 = vunpack.c.l.b16 %v1252
        %v1294 = vunpack.c.h.b16 %v1252
        %v1295 = vunpack.c.l.b16 %v1253
        %v1296 = vunpack.c.h.b16 %v1253
        %v1297 = vunpack.c.l.b16 %v1254
        %v1298 = vunpack.c.h.b16 %v1254
        %v1299 = vunpack.c.l.b16 %v1255
        %v1300 = vunpack.c.h.b16 %v1255
        %v1301 = vunpack.c.l.b16 %v1256
        %v1302 = vunpack.c.h.b16 %v1256
        %v1303 = vunpack.c.l.b16 %v1257
        %v1304 = vunpack.c.h.b16 %v1257
        %v1305 = vunpack.c.l.b16 %v1258
        %v1306 = vunpack.c.h.b16 %v1258
        %v1307 = vpack.c.b16 %v1277, %v1275
        %v1308 = vpack.c.b16 %v1278, %v1276
        %v1309 = vpack.c.b16 %v1281, %v1279
        %v1310 = vpack.c.b16 %v1282, %v1280
        %v1311 = vpack.c.b16 %v1285, %v1283
        %v1312 = vpack.c.b16 %v1286, %v1284
        %v1313 = vpack.c.b16 %v1289, %v1287
        %v1314 = vpack.c.b16 %v1290, %v1288
        %v1315 = vpack.c.b16 %v1293, %v1291
        %v1316 = vpack.c.b16 %v1294, %v1292
        %v1317 = vpack.c.b16 %v1297, %v1295
        %v1318 = vpack.c.b16 %v1298, %v1296
        %v1319 = vpack.c.b16 %v1301, %v1299
        %v1320 = vpack.c.b16 %v1302, %v1300
        %v1321 = vpack.c.b16 %v1305, %v1303
        %v1322 = vpack.c.b16 %v1306, %v1304
        %1339 = vmatprep.subr.bf16.mxu0 %v1308
        %1340 = vmatpush1.bf16.msra.mxu0 %v1307
        %1341 = vmatprep.subr.bf16.mxu0 %v1310
        %1342 = vmatpush1.bf16.msra.mxu0 %v1309
        %1343 = vmatprep.subr.bf16.mxu0 %v1312
        %1344 = vmatpush1.bf16.msra.mxu0 %v1311
        %1345 = vmatprep.subr.bf16.mxu0 %v1314
        %1346 = vmatpush1.bf16.msra.mxu0 %v1313
        %1347 = vmatprep.subr.bf16.mxu0 %v1316
        %1348 = vmatpush1.bf16.msra.mxu0 %v1315
        %1349 = vmatprep.subr.bf16.mxu0 %v1318
        %1350 = vmatpush1.bf16.msra.mxu0 %v1317
        %1351 = vmatprep.subr.bf16.mxu0 %v1320
        %1352 = vmatpush1.bf16.msra.mxu0 %v1319
        %1353 = vmatprep.subr.bf16.mxu0 %v1322
        %1354 = vmatpush1.bf16.msra.mxu0 %v1321
        %1355 = vmatprep.subr.bf16.mxu0 0
        %1356 = vmatpush1.bf16.msra.mxu0 0
        %1357 = vmatprep.subr.bf16.mxu0 0
        %1358 = vmatpush1.bf16.msra.mxu0 0
        %1359 = vmatprep.subr.bf16.mxu0 0
        %1360 = vmatpush1.bf16.msra.mxu0 0
        %1361 = vmatprep.subr.bf16.mxu0 0
        %1362 = vmatpush1.bf16.msra.mxu0 0
        %1363 = vmatprep.subr.bf16.mxu0 0
        %1364 = vmatpush1.bf16.msra.mxu0 0
        %1365 = vmatprep.subr.bf16.mxu0 0
        %1366 = vmatpush1.bf16.msra.mxu0 0
        %1367 = vmatprep.subr.bf16.mxu0 0
        %1368 = vmatpush1.bf16.msra.mxu0 0
        %1369 = vmatprep.subr.bf16.mxu0 0
        %1370 = vmatpush1.bf16.msra.mxu0 0
        %1371 = vmatprep.mubr.bf16.mxu0 0
        %1372 = vmatmul.mubr.bf16.gmra.mrb[0].mxu0 %v1241
        %v1373 = vpop.f32.mrb[0].mxu0
        %v1374 = vadd.f32 0.0, %v1373
        %v1375 = vpop.f32.mrb[0].mxu0
        %v1376 = vadd.f32 0.0, %v1375
        %v1377 = vpop.f32.mrb[0].mxu0
        %v1378 = vadd.f32 0.0, %v1377
        %v1379 = vpop.f32.mrb[0].mxu0
        %v1380 = vadd.f32 0.0, %v1379
        %1381 = vdwg.mxu0
        %v1382 = vadd.f32 %v1235, %v1374
        %v1383 = vadd.f32 %v1236, %v1376
        %v1384 = vadd.f32 %v1237, %v1378
        %v1385 = vadd.f32 %v1238, %v1380
        %v1386 = vld [vmem:[#allocation2 + $0x4] sm:$0xff]
        %v1387 = vld [vmem:[#allocation2 + $0xc] sm:$0xff]
        %v1388 = vpack.c.bf16 %v1387, %v1386
        %s1389 = scalar_lea.vmem %s4, 512
        %v1390 = vld [vmem:[%s1389] sm:$0xff]
        %v1391 = vld [vmem:[%s1389 + $0x8] sm:$0xff]
        %v1392 = vld [vmem:[%s1389 + $0x10] sm:$0xff]
        %v1393 = vld [vmem:[%s1389 + $0x18] sm:$0xff]
        %v1394 = vld [vmem:[%s1389 + $0x20] sm:$0xff]
        %v1395 = vld [vmem:[%s1389 + $0x28] sm:$0xff]
        %v1396 = vld [vmem:[%s1389 + $0x30] sm:$0xff]
        %v1397 = vld [vmem:[%s1389 + $0x38] sm:$0xff]
        %v1398 = vld [vmem:[%s1389 + $0x40] sm:$0xff]
        %v1399 = vld [vmem:[%s1389 + $0x48] sm:$0xff]
        %v1400 = vld [vmem:[%s1389 + $0x50] sm:$0xff]
        %v1401 = vld [vmem:[%s1389 + $0x58] sm:$0xff]
        %v1402 = vld [vmem:[%s1389 + $0x60] sm:$0xff]
        %v1403 = vld [vmem:[%s1389 + $0x68] sm:$0xff]
        %v1404 = vld [vmem:[%s1389 + $0x70] sm:$0xff]
        %v1405 = vld [vmem:[%s1389 + $0x78] sm:$0xff]
        %v1422 = vunpack.c.l.b16 %v1390
        %v1423 = vunpack.c.h.b16 %v1390
        %v1424 = vunpack.c.l.b16 %v1391
        %v1425 = vunpack.c.h.b16 %v1391
        %v1426 = vunpack.c.l.b16 %v1392
        %v1427 = vunpack.c.h.b16 %v1392
        %v1428 = vunpack.c.l.b16 %v1393
        %v1429 = vunpack.c.h.b16 %v1393
        %v1430 = vunpack.c.l.b16 %v1394
        %v1431 = vunpack.c.h.b16 %v1394
        %v1432 = vunpack.c.l.b16 %v1395
        %v1433 = vunpack.c.h.b16 %v1395
        %v1434 = vunpack.c.l.b16 %v1396
        %v1435 = vunpack.c.h.b16 %v1396
        %v1436 = vunpack.c.l.b16 %v1397
        %v1437 = vunpack.c.h.b16 %v1397
        %v1438 = vunpack.c.l.b16 %v1398
        %v1439 = vunpack.c.h.b16 %v1398
        %v1440 = vunpack.c.l.b16 %v1399
        %v1441 = vunpack.c.h.b16 %v1399
        %v1442 = vunpack.c.l.b16 %v1400
        %v1443 = vunpack.c.h.b16 %v1400
        %v1444 = vunpack.c.l.b16 %v1401
        %v1445 = vunpack.c.h.b16 %v1401
        %v1446 = vunpack.c.l.b16 %v1402
        %v1447 = vunpack.c.h.b16 %v1402
        %v1448 = vunpack.c.l.b16 %v1403
        %v1449 = vunpack.c.h.b16 %v1403
        %v1450 = vunpack.c.l.b16 %v1404
        %v1451 = vunpack.c.h.b16 %v1404
        %v1452 = vunpack.c.l.b16 %v1405
        %v1453 = vunpack.c.h.b16 %v1405
        %v1454 = vpack.c.b16 %v1424, %v1422
        %v1455 = vpack.c.b16 %v1425, %v1423
        %v1456 = vpack.c.b16 %v1428, %v1426
        %v1457 = vpack.c.b16 %v1429, %v1427
        %v1458 = vpack.c.b16 %v1432, %v1430
        %v1459 = vpack.c.b16 %v1433, %v1431
        %v1460 = vpack.c.b16 %v1436, %v1434
        %v1461 = vpack.c.b16 %v1437, %v1435
        %v1462 = vpack.c.b16 %v1440, %v1438
        %v1463 = vpack.c.b16 %v1441, %v1439
        %v1464 = vpack.c.b16 %v1444, %v1442
        %v1465 = vpack.c.b16 %v1445, %v1443
        %v1466 = vpack.c.b16 %v1448, %v1446
        %v1467 = vpack.c.b16 %v1449, %v1447
        %v1468 = vpack.c.b16 %v1452, %v1450
        %v1469 = vpack.c.b16 %v1453, %v1451
        %1486 = vmatprep.subr.bf16.mxu0 %v1455
        %1487 = vmatpush1.bf16.msra.mxu0 %v1454
        %1488 = vmatprep.subr.bf16.mxu0 %v1457
        %1489 = vmatpush1.bf16.msra.mxu0 %v1456
        %1490 = vmatprep.subr.bf16.mxu0 %v1459
        %1491 = vmatpush1.bf16.msra.mxu0 %v1458
        %1492 = vmatprep.subr.bf16.mxu0 %v1461
        %1493 = vmatpush1.bf16.msra.mxu0 %v1460
        %1494 = vmatprep.subr.bf16.mxu0 %v1463
        %1495 = vmatpush1.bf16.msra.mxu0 %v1462
        %1496 = vmatprep.subr.bf16.mxu0 %v1465
        %1497 = vmatpush1.bf16.msra.mxu0 %v1464
        %1498 = vmatprep.subr.bf16.mxu0 %v1467
        %1499 = vmatpush1.bf16.msra.mxu0 %v1466
        %1500 = vmatprep.subr.bf16.mxu0 %v1469
        %1501 = vmatpush1.bf16.msra.mxu0 %v1468
        %1502 = vmatprep.subr.bf16.mxu0 0
        %1503 = vmatpush1.bf16.msra.mxu0 0
        %1504 = vmatprep.subr.bf16.mxu0 0
        %1505 = vmatpush1.bf16.msra.mxu0 0
        %1506 = vmatprep.subr.bf16.mxu0 0
        %1507 = vmatpush1.bf16.msra.mxu0 0
        %1508 = vmatprep.subr.bf16.mxu0 0
        %1509 = vmatpush1.bf16.msra.mxu0 0
        %1510 = vmatprep.subr.bf16.mxu0 0
        %1511 = vmatpush1.bf16.msra.mxu0 0
        %1512 = vmatprep.subr.bf16.mxu0 0
        %1513 = vmatpush1.bf16.msra.mxu0 0
        %1514 = vmatprep.subr.bf16.mxu0 0
        %1515 = vmatpush1.bf16.msra.mxu0 0
        %1516 = vmatprep.subr.bf16.mxu0 0
        %1517 = vmatpush1.bf16.msra.mxu0 0
        %1518 = vmatprep.mubr.bf16.mxu0 0
        %1519 = vmatmul.mubr.bf16.gmra.mrb[0].mxu0 %v1388
        %v1520 = vpop.f32.mrb[0].mxu0
        %v1521 = vadd.f32 0.0, %v1520
        %v1522 = vpop.f32.mrb[0].mxu0
        %v1523 = vadd.f32 0.0, %v1522
        %v1524 = vpop.f32.mrb[0].mxu0
        %v1525 = vadd.f32 0.0, %v1524
        %v1526 = vpop.f32.mrb[0].mxu0
        %v1527 = vadd.f32 0.0, %v1526
        %1528 = vdwg.mxu0
        %v1529 = vadd.f32 %v1382, %v1521
        %v1530 = vadd.f32 %v1383, %v1523
        %v1531 = vadd.f32 %v1384, %v1525
        %v1532 = vadd.f32 %v1385, %v1527
        %v1533 = vld [vmem:[%s384 + $0x4] sm:$0xff]
        %v1534 = vld [vmem:[%s384 + $0xc] sm:$0xff]
        %v1535 = vpack.c.bf16 %v1534, %v1533
        %v1536 = vld [vmem:[%s2] sm:$0xf]
        %v1537 = vld [vmem:[%s2 + $0x4] sm:$0xf]
        %v1538 = vld [vmem:[%s2 + $0x8] sm:$0xf]
        %v1539 = vld [vmem:[%s2 + $0xc] sm:$0xf]
        %v1540 = vld [vmem:[%s2 + $0x10] sm:$0xf]
        %v1541 = vld [vmem:[%s2 + $0x14] sm:$0xf]
        %v1542 = vld [vmem:[%s2 + $0x18] sm:$0xf]
        %v1543 = vld [vmem:[%s2 + $0x1c] sm:$0xf]
        %v1544 = vld [vmem:[%s384 + $0x6] sm:$0xff]
        %v1545 = vld [vmem:[%s384 + $0xe] sm:$0xff]
        %v1546 = vpack.c.bf16 %v1545, %v1544
        %s1547 = scalar_lea.vmem %s2, 32
        %v1548 = vld [vmem:[%s1547] sm:$0xf]
        %v1549 = vld [vmem:[%s1547 + $0x4] sm:$0xf]
        %v1550 = vld [vmem:[%s1547 + $0x8] sm:$0xf]
        %v1551 = vld [vmem:[%s1547 + $0xc] sm:$0xf]
        %v1552 = vld [vmem:[%s1547 + $0x10] sm:$0xf]
        %v1553 = vld [vmem:[%s1547 + $0x14] sm:$0xf]
        %v1554 = vld [vmem:[%s1547 + $0x18] sm:$0xf]
        %v1555 = vld [vmem:[%s1547 + $0x1c] sm:$0xf]
        %v1564 = vunpack.c.l.b16 %v1548
        %v1565 = vunpack.c.l.b16 %v1549
        %v1566 = vunpack.c.l.b16 %v1550
        %v1567 = vunpack.c.l.b16 %v1551
        %v1568 = vunpack.c.l.b16 %v1552
        %v1569 = vunpack.c.l.b16 %v1553
        %v1570 = vunpack.c.l.b16 %v1554
        %v1571 = vunpack.c.l.b16 %v1555
        %v1572 = vpack.c.b16 %v1565, %v1564
        %v1573 = vpack.c.b16 %v1567, %v1566
        %v1574 = vpack.c.b16 %v1569, %v1568
        %v1575 = vpack.c.b16 %v1571, %v1570
        %v1581 = vsel %vm433, %v1546, 0
        %1583 = vmatprep.subr.bf16.mxu0 0
        %1584 = vmatpush1.bf16.msra.mxu0 %v1572
        %1585 = vmatprep.subr.bf16.mxu0 0
        %1586 = vmatpush1.bf16.msra.mxu0 %v1573
        %1587 = vmatprep.subr.bf16.mxu0 0
        %1588 = vmatpush1.bf16.msra.mxu0 %v1574
        %1589 = vmatprep.subr.bf16.mxu0 0
        %1590 = vmatpush1.bf16.msra.mxu0 %v1575
        %1591 = vmatprep.subr.bf16.mxu0 0
        %1592 = vmatpush1.bf16.msra.mxu0 0
        %1593 = vmatprep.subr.bf16.mxu0 0
        %1594 = vmatpush1.bf16.msra.mxu0 0
        %1595 = vmatprep.subr.bf16.mxu0 0
        %1596 = vmatpush1.bf16.msra.mxu0 0
        %1597 = vmatprep.subr.bf16.mxu0 0
        %1598 = vmatpush1.bf16.msra.mxu0 0
        %1599 = vmatprep.subr.bf16.mxu0 0
        %1600 = vmatpush1.bf16.msra.mxu0 0
        %1601 = vmatprep.subr.bf16.mxu0 0
        %1602 = vmatpush1.bf16.msra.mxu0 0
        %1603 = vmatprep.subr.bf16.mxu0 0
        %1604 = vmatpush1.bf16.msra.mxu0 0
        %1605 = vmatprep.subr.bf16.mxu0 0
        %1606 = vmatpush1.bf16.msra.mxu0 0
        %1607 = vmatprep.subr.bf16.mxu0 0
        %1608 = vmatpush1.bf16.msra.mxu0 0
        %1609 = vmatprep.subr.bf16.mxu0 0
        %1610 = vmatpush1.bf16.msra.mxu0 0
        %1611 = vmatprep.subr.bf16.mxu0 0
        %1612 = vmatpush1.bf16.msra.mxu0 0
        %1613 = vmatprep.subr.bf16.mxu0 0
        %1614 = vmatpush1.bf16.msra.mxu0 0
        %1615 = vmatprep.mubr.bf16.mxu0 0
        %1616 = vmatmul.mubr.bf16.gmra.mrb[0].mxu0 %v1581
        %v1617 = vpop.f32.mrb[0].mxu0
        %v1618 = vadd.f32 0.0, %v1617
        %v1619 = vpop.f32.mrb[0].mxu0
        %v1620 = vpop.f32.mrb[0].mxu0
        %v1621 = vadd.f32 0.0, %v1620
        %v1622 = vpop.f32.mrb[0].mxu0
        %1623 = vdwg.mxu0
        %v1632 = vunpack.c.l.b16 %v1536
        %v1633 = vunpack.c.l.b16 %v1537
        %v1634 = vunpack.c.l.b16 %v1538
        %v1635 = vunpack.c.l.b16 %v1539
        %v1636 = vunpack.c.l.b16 %v1540
        %v1637 = vunpack.c.l.b16 %v1541
        %v1638 = vunpack.c.l.b16 %v1542
        %v1639 = vunpack.c.l.b16 %v1543
        %v1640 = vpack.c.b16 %v1633, %v1632
        %v1641 = vpack.c.b16 %v1635, %v1634
        %v1642 = vpack.c.b16 %v1637, %v1636
        %v1643 = vpack.c.b16 %v1639, %v1638
        %v1649 = vsel %vm433, %v1535, 0
        %1651 = vmatprep.subr.bf16.mxu0 0
        %1652 = vmatpush1.bf16.msra.mxu0 %v1640
        %1653 = vmatprep.subr.bf16.mxu0 0
        %1654 = vmatpush1.bf16.msra.mxu0 %v1641
        %1655 = vmatprep.subr.bf16.mxu0 0
        %1656 = vmatpush1.bf16.msra.mxu0 %v1642
        %1657 = vmatprep.subr.bf16.mxu0 0
        %1658 = vmatpush1.bf16.msra.mxu0 %v1643
        %1659 = vmatprep.subr.bf16.mxu0 0
        %1660 = vmatpush1.bf16.msra.mxu0 0
        %1661 = vmatprep.subr.bf16.mxu0 0
        %1662 = vmatpush1.bf16.msra.mxu0 0
        %1663 = vmatprep.subr.bf16.mxu0 0
        %1664 = vmatpush1.bf16.msra.mxu0 0
        %1665 = vmatprep.subr.bf16.mxu0 0
        %1666 = vmatpush1.bf16.msra.mxu0 0
        %1667 = vmatprep.subr.bf16.mxu0 0
        %1668 = vmatpush1.bf16.msra.mxu0 0
        %1669 = vmatprep.subr.bf16.mxu0 0
        %1670 = vmatpush1.bf16.msra.mxu0 0
        %1671 = vmatprep.subr.bf16.mxu0 0
        %1672 = vmatpush1.bf16.msra.mxu0 0
        %1673 = vmatprep.subr.bf16.mxu0 0
        %1674 = vmatpush1.bf16.msra.mxu0 0
        %1675 = vmatprep.subr.bf16.mxu0 0
        %1676 = vmatpush1.bf16.msra.mxu0 0
        %1677 = vmatprep.subr.bf16.mxu0 0
        %1678 = vmatpush1.bf16.msra.mxu0 0
        %1679 = vmatprep.subr.bf16.mxu0 0
        %1680 = vmatpush1.bf16.msra.mxu0 0
        %1681 = vmatprep.subr.bf16.mxu0 0
        %1682 = vmatpush1.bf16.msra.mxu0 0
        %1683 = vmatprep.mubr.bf16.mxu0 0
        %1684 = vmatmul.mubr.bf16.gmra.mrb[0].mxu0 %v1649
        %v1685 = vpop.f32.mrb[0].mxu0
        %v1686 = vadd.f32 %v1618, %v1685
        %v1687 = vpop.f32.mrb[0].mxu0
        %v1688 = vpop.f32.mrb[0].mxu0
        %v1689 = vadd.f32 %v1621, %v1688
        %v1690 = vpop.f32.mrb[0].mxu0
        %1691 = vdwg.mxu0
        %v1692 = vld [vmem:[%s384 + $0x8] sm:$0xff]
        %v1693 = vld [vmem:[%s384 + $0x10] sm:$0xff]
        %v1694 = vpack.c.bf16 %v1693, %v1692
        %s1695 = scalar_lea.vmem %s2, 64
        %v1696 = vld [vmem:[%s1695] sm:$0xf]
        %v1697 = vld [vmem:[%s1695 + $0x4] sm:$0xf]
        %v1698 = vld [vmem:[%s1695 + $0x8] sm:$0xf]
        %v1699 = vld [vmem:[%s1695 + $0xc] sm:$0xf]
        %v1700 = vld [vmem:[%s1695 + $0x10] sm:$0xf]
        %v1701 = vld [vmem:[%s1695 + $0x14] sm:$0xf]
        %v1702 = vld [vmem:[%s1695 + $0x18] sm:$0xf]
        %v1703 = vld [vmem:[%s1695 + $0x1c] sm:$0xf]
        %v1712 = vunpack.c.l.b16 %v1696
        %v1713 = vunpack.c.l.b16 %v1697
        %v1714 = vunpack.c.l.b16 %v1698
        %v1715 = vunpack.c.l.b16 %v1699
        %v1716 = vunpack.c.l.b16 %v1700
        %v1717 = vunpack.c.l.b16 %v1701
        %v1718 = vunpack.c.l.b16 %v1702
        %v1719 = vunpack.c.l.b16 %v1703
        %v1720 = vpack.c.b16 %v1713, %v1712
        %v1721 = vpack.c.b16 %v1715, %v1714
        %v1722 = vpack.c.b16 %v1717, %v1716
        %v1723 = vpack.c.b16 %v1719, %v1718
        %v1729 = vsel %vm433, %v1694, 0
        %1731 = vmatprep.subr.bf16.mxu0 0
        %1732 = vmatpush1.bf16.msra.mxu0 %v1720
        %1733 = vmatprep.subr.bf16.mxu0 0
        %1734 = vmatpush1.bf16.msra.mxu0 %v1721
        %1735 = vmatprep.subr.bf16.mxu0 0
        %1736 = vmatpush1.bf16.msra.mxu0 %v1722
        %1737 = vmatprep.subr.bf16.mxu0 0
        %1738 = vmatpush1.bf16.msra.mxu0 %v1723
        %1739 = vmatprep.subr.bf16.mxu0 0
        %1740 = vmatpush1.bf16.msra.mxu0 0
        %1741 = vmatprep.subr.bf16.mxu0 0
        %1742 = vmatpush1.bf16.msra.mxu0 0
        %1743 = vmatprep.subr.bf16.mxu0 0
        %1744 = vmatpush1.bf16.msra.mxu0 0
        %1745 = vmatprep.subr.bf16.mxu0 0
        %1746 = vmatpush1.bf16.msra.mxu0 0
        %1747 = vmatprep.subr.bf16.mxu0 0
        %1748 = vmatpush1.bf16.msra.mxu0 0
        %1749 = vmatprep.subr.bf16.mxu0 0
        %1750 = vmatpush1.bf16.msra.mxu0 0
        %1751 = vmatprep.subr.bf16.mxu0 0
        %1752 = vmatpush1.bf16.msra.mxu0 0
        %1753 = vmatprep.subr.bf16.mxu0 0
        %1754 = vmatpush1.bf16.msra.mxu0 0
        %1755 = vmatprep.subr.bf16.mxu0 0
        %1756 = vmatpush1.bf16.msra.mxu0 0
        %1757 = vmatprep.subr.bf16.mxu0 0
        %1758 = vmatpush1.bf16.msra.mxu0 0
        %1759 = vmatprep.subr.bf16.mxu0 0
        %1760 = vmatpush1.bf16.msra.mxu0 0
        %1761 = vmatprep.subr.bf16.mxu0 0
        %1762 = vmatpush1.bf16.msra.mxu0 0
        %1763 = vmatprep.mubr.bf16.mxu0 0
        %1764 = vmatmul.mubr.bf16.gmra.mrb[0].mxu0 %v1729
        %v1765 = vpop.f32.mrb[0].mxu0
        %v1766 = vadd.f32 0.0, %v1765
        %v1767 = vpop.f32.mrb[0].mxu0
        %v1768 = vpop.f32.mrb[0].mxu0
        %v1769 = vadd.f32 0.0, %v1768
        %v1770 = vpop.f32.mrb[0].mxu0
        %1771 = vdwg.mxu0
        %v1772 = vadd.f32 %v1686, %v1766
        %v1773 = vadd.f32 %v1689, %v1769
        %v1774 = vld [vmem:[%s384 + $0xa] sm:$0xff]
        %v1775 = vld [vmem:[%s384 + $0x12] sm:$0xff]
        %v1776 = vpack.c.bf16 %v1775, %v1774
        %s1777 = scalar_lea.vmem %s2, 96
        %v1778 = vld [vmem:[%s1777] sm:$0xf]
        %v1779 = vld [vmem:[%s1777 + $0x4] sm:$0xf]
        %v1780 = vld [vmem:[%s1777 + $0x8] sm:$0xf]
        %v1781 = vld [vmem:[%s1777 + $0xc] sm:$0xf]
        %v1782 = vld [vmem:[%s1777 + $0x10] sm:$0xf]
        %v1783 = vld [vmem:[%s1777 + $0x14] sm:$0xf]
        %v1784 = vld [vmem:[%s1777 + $0x18] sm:$0xf]
        %v1785 = vld [vmem:[%s1777 + $0x1c] sm:$0xf]
        %v1794 = vunpack.c.l.b16 %v1778
        %v1795 = vunpack.c.l.b16 %v1779
        %v1796 = vunpack.c.l.b16 %v1780
        %v1797 = vunpack.c.l.b16 %v1781
        %v1798 = vunpack.c.l.b16 %v1782
        %v1799 = vunpack.c.l.b16 %v1783
        %v1800 = vunpack.c.l.b16 %v1784
        %v1801 = vunpack.c.l.b16 %v1785
        %v1802 = vpack.c.b16 %v1795, %v1794
        %v1803 = vpack.c.b16 %v1797, %v1796
        %v1804 = vpack.c.b16 %v1799, %v1798
        %v1805 = vpack.c.b16 %v1801, %v1800
        %v1811 = vsel %vm433, %v1776, 0
        %1813 = vmatprep.subr.bf16.mxu0 0
        %1814 = vmatpush1.bf16.msra.mxu0 %v1802
        %1815 = vmatprep.subr.bf16.mxu0 0
        %1816 = vmatpush1.bf16.msra.mxu0 %v1803
        %1817 = vmatprep.subr.bf16.mxu0 0
        %1818 = vmatpush1.bf16.msra.mxu0 %v1804
        %1819 = vmatprep.subr.bf16.mxu0 0
        %1820 = vmatpush1.bf16.msra.mxu0 %v1805
        %1821 = vmatprep.subr.bf16.mxu0 0
        %1822 = vmatpush1.bf16.msra.mxu0 0
        %1823 = vmatprep.subr.bf16.mxu0 0
        %1824 = vmatpush1.bf16.msra.mxu0 0
        %1825 = vmatprep.subr.bf16.mxu0 0
        %1826 = vmatpush1.bf16.msra.mxu0 0
        %1827 = vmatprep.subr.bf16.mxu0 0
        %1828 = vmatpush1.bf16.msra.mxu0 0
        %1829 = vmatprep.subr.bf16.mxu0 0
        %1830 = vmatpush1.bf16.msra.mxu0 0
        %1831 = vmatprep.subr.bf16.mxu0 0
        %1832 = vmatpush1.bf16.msra.mxu0 0
        %1833 = vmatprep.subr.bf16.mxu0 0
        %1834 = vmatpush1.bf16.msra.mxu0 0
        %1835 = vmatprep.subr.bf16.mxu0 0
        %1836 = vmatpush1.bf16.msra.mxu0 0
        %1837 = vmatprep.subr.bf16.mxu0 0
        %1838 = vmatpush1.bf16.msra.mxu0 0
        %1839 = vmatprep.subr.bf16.mxu0 0
        %1840 = vmatpush1.bf16.msra.mxu0 0
        %1841 = vmatprep.subr.bf16.mxu0 0
        %1842 = vmatpush1.bf16.msra.mxu0 0
        %1843 = vmatprep.subr.bf16.mxu0 0
        %1844 = vmatpush1.bf16.msra.mxu0 0
        %1845 = vmatprep.mubr.bf16.mxu0 0
        %1846 = vmatmul.mubr.bf16.gmra.mrb[0].mxu0 %v1811
        %v1847 = vpop.f32.mrb[0].mxu0
        %v1848 = vadd.f32 0.0, %v1847
        %v1849 = vpop.f32.mrb[0].mxu0
        %v1850 = vpop.f32.mrb[0].mxu0
        %v1851 = vadd.f32 0.0, %v1850
        %v1852 = vpop.f32.mrb[0].mxu0
        %1853 = vdwg.mxu0
        %v1854 = vadd.f32 %v1772, %v1848
        %v1855 = vadd.f32 %v1773, %v1851
        %v1856 = vld [vmem:[%s384 + $0xc] sm:$0xff]
        %v1857 = vld [vmem:[%s384 + $0x14] sm:$0xff]
        %v1858 = vpack.c.bf16 %v1857, %v1856
        %s1859 = scalar_lea.vmem %s2, 128
        %v1860 = vld [vmem:[%s1859] sm:$0xf]
        %v1861 = vld [vmem:[%s1859 + $0x4] sm:$0xf]
        %v1862 = vld [vmem:[%s1859 + $0x8] sm:$0xf]
        %v1863 = vld [vmem:[%s1859 + $0xc] sm:$0xf]
        %v1864 = vld [vmem:[%s1859 + $0x10] sm:$0xf]
        %v1865 = vld [vmem:[%s1859 + $0x14] sm:$0xf]
        %v1866 = vld [vmem:[%s1859 + $0x18] sm:$0xf]
        %v1867 = vld [vmem:[%s1859 + $0x1c] sm:$0xf]
        %v1876 = vunpack.c.l.b16 %v1860
        %v1877 = vunpack.c.l.b16 %v1861
        %v1878 = vunpack.c.l.b16 %v1862
        %v1879 = vunpack.c.l.b16 %v1863
        %v1880 = vunpack.c.l.b16 %v1864
        %v1881 = vunpack.c.l.b16 %v1865
        %v1882 = vunpack.c.l.b16 %v1866
        %v1883 = vunpack.c.l.b16 %v1867
        %v1884 = vpack.c.b16 %v1877, %v1876
        %v1885 = vpack.c.b16 %v1879, %v1878
        %v1886 = vpack.c.b16 %v1881, %v1880
        %v1887 = vpack.c.b16 %v1883, %v1882
        %v1893 = vsel %vm433, %v1858, 0
        %1895 = vmatprep.subr.bf16.mxu0 0
        %1896 = vmatpush1.bf16.msra.mxu0 %v1884
        %1897 = vmatprep.subr.bf16.mxu0 0
        %1898 = vmatpush1.bf16.msra.mxu0 %v1885
        %1899 = vmatprep.subr.bf16.mxu0 0
        %1900 = vmatpush1.bf16.msra.mxu0 %v1886
        %1901 = vmatprep.subr.bf16.mxu0 0
        %1902 = vmatpush1.bf16.msra.mxu0 %v1887
        %1903 = vmatprep.subr.bf16.mxu0 0
        %1904 = vmatpush1.bf16.msra.mxu0 0
        %1905 = vmatprep.subr.bf16.mxu0 0
        %1906 = vmatpush1.bf16.msra.mxu0 0
        %1907 = vmatprep.subr.bf16.mxu0 0
        %1908 = vmatpush1.bf16.msra.mxu0 0
        %1909 = vmatprep.subr.bf16.mxu0 0
        %1910 = vmatpush1.bf16.msra.mxu0 0
        %1911 = vmatprep.subr.bf16.mxu0 0
        %1912 = vmatpush1.bf16.msra.mxu0 0
        %1913 = vmatprep.subr.bf16.mxu0 0
        %1914 = vmatpush1.bf16.msra.mxu0 0
        %1915 = vmatprep.subr.bf16.mxu0 0
        %1916 = vmatpush1.bf16.msra.mxu0 0
        %1917 = vmatprep.subr.bf16.mxu0 0
        %1918 = vmatpush1.bf16.msra.mxu0 0
        %1919 = vmatprep.subr.bf16.mxu0 0
        %1920 = vmatpush1.bf16.msra.mxu0 0
        %1921 = vmatprep.subr.bf16.mxu0 0
        %1922 = vmatpush1.bf16.msra.mxu0 0
        %1923 = vmatprep.subr.bf16.mxu0 0
        %1924 = vmatpush1.bf16.msra.mxu0 0
        %1925 = vmatprep.subr.bf16.mxu0 0
        %1926 = vmatpush1.bf16.msra.mxu0 0
        %1927 = vmatprep.mubr.bf16.mxu0 0
        %1928 = vmatmul.mubr.bf16.gmra.mrb[0].mxu0 %v1893
        %v1929 = vpop.f32.mrb[0].mxu0
        %v1930 = vadd.f32 0.0, %v1929
        %v1931 = vpop.f32.mrb[0].mxu0
        %v1932 = vpop.f32.mrb[0].mxu0
        %v1933 = vadd.f32 0.0, %v1932
        %v1934 = vpop.f32.mrb[0].mxu0
        %1935 = vdwg.mxu0
        %v1936 = vadd.f32 %v1854, %v1930
        %v1937 = vadd.f32 %v1855, %v1933
        %v1938 = vld [vmem:[%s8] sm:$0x1]
        %v1940 = vlaneseq
        %v1941 = vshrl.u32 %v1940, 7
        %v1942 = vsub.s32 0, %v1941
        %v1943 = vrot.slane %v1938, %v1942
        %v1945 = vadd.f32 %v1936, %v1943
        %v1946 = vadd.f32 %v1937, %v1943
        %v1947 = vmax.f32 %v1945, 0.0
        %v1948 = vmax.f32 %v1946, 0.0
        %1949 = vst [vmem:[#allocation3] sm:$0xf] 0.0
        %1950 = vst [vmem:[#allocation3 + $0x14] sm:$0xf] 0.0
        %1951 = vst [vmem:[#allocation3 + $0x4] sm:$0xff] %v1947
        %1952 = vst [vmem:[#allocation3 + $0xc] sm:$0xff] %v1948
        %v1953 = vld [vmem:[#allocation3] sm:$0xff]
        %v1954 = vld [vmem:[#allocation3 + $0x8] sm:$0xff]
        %v1955 = vpack.c.bf16 %v1954, %v1953
        %v1956 = vld [vmem:[%s5] sm:$0xff]
        %v1957 = vld [vmem:[%s5 + $0x8] sm:$0xff]
        %v1958 = vld [vmem:[%s5 + $0x10] sm:$0xff]
        %v1959 = vld [vmem:[%s5 + $0x18] sm:$0xff]
        %v1960 = vld [vmem:[%s5 + $0x20] sm:$0xff]
        %v1961 = vld [vmem:[%s5 + $0x28] sm:$0xff]
        %v1962 = vld [vmem:[%s5 + $0x30] sm:$0xff]
        %v1963 = vld [vmem:[%s5 + $0x38] sm:$0xff]
        %v1964 = vld [vmem:[%s5 + $0x40] sm:$0xff]
        %v1965 = vld [vmem:[%s5 + $0x48] sm:$0xff]
        %v1966 = vld [vmem:[%s5 + $0x50] sm:$0xff]
        %v1967 = vld [vmem:[%s5 + $0x58] sm:$0xff]
        %v1968 = vld [vmem:[%s5 + $0x60] sm:$0xff]
        %v1969 = vld [vmem:[%s5 + $0x68] sm:$0xff]
        %v1970 = vld [vmem:[%s5 + $0x70] sm:$0xff]
        %v1971 = vld [vmem:[%s5 + $0x78] sm:$0xff]
        %v1988 = vunpack.c.l.b16 %v1956
        %v1989 = vunpack.c.h.b16 %v1956
        %v1990 = vunpack.c.l.b16 %v1957
        %v1991 = vunpack.c.h.b16 %v1957
        %v1992 = vunpack.c.l.b16 %v1958
        %v1993 = vunpack.c.h.b16 %v1958
        %v1994 = vunpack.c.l.b16 %v1959
        %v1995 = vunpack.c.h.b16 %v1959
        %v1996 = vunpack.c.l.b16 %v1960
        %v1997 = vunpack.c.h.b16 %v1960
        %v1998 = vunpack.c.l.b16 %v1961
        %v1999 = vunpack.c.h.b16 %v1961
        %v2000 = vunpack.c.l.b16 %v1962
        %v2001 = vunpack.c.h.b16 %v1962
        %v2002 = vunpack.c.l.b16 %v1963
        %v2003 = vunpack.c.h.b16 %v1963
        %v2004 = vunpack.c.l.b16 %v1964
        %v2005 = vunpack.c.h.b16 %v1964
        %v2006 = vunpack.c.l.b16 %v1965
        %v2007 = vunpack.c.h.b16 %v1965
        %v2008 = vunpack.c.l.b16 %v1966
        %v2009 = vunpack.c.h.b16 %v1966
        %v2010 = vunpack.c.l.b16 %v1967
        %v2011 = vunpack.c.h.b16 %v1967
        %v2012 = vunpack.c.l.b16 %v1968
        %v2013 = vunpack.c.h.b16 %v1968
        %v2014 = vunpack.c.l.b16 %v1969
        %v2015 = vunpack.c.h.b16 %v1969
        %v2016 = vunpack.c.l.b16 %v1970
        %v2017 = vunpack.c.h.b16 %v1970
        %v2018 = vunpack.c.l.b16 %v1971
        %v2019 = vunpack.c.h.b16 %v1971
        %v2020 = vpack.c.b16 %v1990, %v1988
        %v2021 = vpack.c.b16 %v1991, %v1989
        %v2022 = vpack.c.b16 %v1994, %v1992
        %v2023 = vpack.c.b16 %v1995, %v1993
        %v2024 = vpack.c.b16 %v1998, %v1996
        %v2025 = vpack.c.b16 %v1999, %v1997
        %v2026 = vpack.c.b16 %v2002, %v2000
        %v2027 = vpack.c.b16 %v2003, %v2001
        %v2028 = vpack.c.b16 %v2006, %v2004
        %v2029 = vpack.c.b16 %v2007, %v2005
        %v2030 = vpack.c.b16 %v2010, %v2008
        %v2031 = vpack.c.b16 %v2011, %v2009
        %v2032 = vpack.c.b16 %v2014, %v2012
        %v2033 = vpack.c.b16 %v2015, %v2013
        %v2034 = vpack.c.b16 %v2018, %v2016
        %v2035 = vpack.c.b16 %v2019, %v2017
        %2052 = vmatprep.subr.bf16.mxu0 %v2021
        %2053 = vmatpush1.bf16.msra.mxu0 %v2020
        %2054 = vmatprep.subr.bf16.mxu0 %v2023
        %2055 = vmatpush1.bf16.msra.mxu0 %v2022
        %2056 = vmatprep.subr.bf16.mxu0 %v2025
        %2057 = vmatpush1.bf16.msra.mxu0 %v2024
        %2058 = vmatprep.subr.bf16.mxu0 %v2027
        %2059 = vmatpush1.bf16.msra.mxu0 %v2026
        %2060 = vmatprep.subr.bf16.mxu0 %v2029
        %2061 = vmatpush1.bf16.msra.mxu0 %v2028
        %2062 = vmatprep.subr.bf16.mxu0 %v2031
        %2063 = vmatpush1.bf16.msra.mxu0 %v2030
        %2064 = vmatprep.subr.bf16.mxu0 %v2033
        %2065 = vmatpush1.bf16.msra.mxu0 %v2032
        %2066 = vmatprep.subr.bf16.mxu0 %v2035
        %2067 = vmatpush1.bf16.msra.mxu0 %v2034
        %2068 = vmatprep.subr.bf16.mxu0 0
        %2069 = vmatpush1.bf16.msra.mxu0 0
        %2070 = vmatprep.subr.bf16.mxu0 0
        %2071 = vmatpush1.bf16.msra.mxu0 0
        %2072 = vmatprep.subr.bf16.mxu0 0
        %2073 = vmatpush1.bf16.msra.mxu0 0
        %2074 = vmatprep.subr.bf16.mxu0 0
        %2075 = vmatpush1.bf16.msra.mxu0 0
        %2076 = vmatprep.subr.bf16.mxu0 0
        %2077 = vmatpush1.bf16.msra.mxu0 0
        %2078 = vmatprep.subr.bf16.mxu0 0
        %2079 = vmatpush1.bf16.msra.mxu0 0
        %2080 = vmatprep.subr.bf16.mxu0 0
        %2081 = vmatpush1.bf16.msra.mxu0 0
        %2082 = vmatprep.subr.bf16.mxu0 0
        %2083 = vmatpush1.bf16.msra.mxu0 0
        %2084 = vmatprep.mubr.bf16.mxu0 0
        %2085 = vmatmul.mubr.bf16.gmra.mrb[0].mxu0 %v1955
        %v2086 = vpop.f32.mrb[0].mxu0
        %v2087 = vadd.f32 0.0, %v2086
        %v2088 = vpop.f32.mrb[0].mxu0
        %v2089 = vadd.f32 0.0, %v2088
        %v2090 = vpop.f32.mrb[0].mxu0
        %v2091 = vadd.f32 0.0, %v2090
        %v2092 = vpop.f32.mrb[0].mxu0
        %v2093 = vadd.f32 0.0, %v2092
        %2094 = vdwg.mxu0
        %v2095 = vadd.f32 %v1529, %v2087
        %v2096 = vadd.f32 %v1530, %v2089
        %v2097 = vadd.f32 %v1531, %v2091
        %v2098 = vadd.f32 %v1532, %v2093
        %v2099 = vld [vmem:[#allocation3 + $0x2] sm:$0xff]
        %v2100 = vld [vmem:[#allocation3 + $0xa] sm:$0xff]
        %v2101 = vpack.c.bf16 %v2100, %v2099
        %s2102 = scalar_lea.vmem %s5, 128
        %v2103 = vld [vmem:[%s2102] sm:$0xff]
        %v2104 = vld [vmem:[%s2102 + $0x8] sm:$0xff]
        %v2105 = vld [vmem:[%s2102 + $0x10] sm:$0xff]
        %v2106 = vld [vmem:[%s2102 + $0x18] sm:$0xff]
        %v2107 = vld [vmem:[%s2102 + $0x20] sm:$0xff]
        %v2108 = vld [vmem:[%s2102 + $0x28] sm:$0xff]
        %v2109 = vld [vmem:[%s2102 + $0x30] sm:$0xff]
        %v2110 = vld [vmem:[%s2102 + $0x38] sm:$0xff]
        %v2111 = vld [vmem:[%s2102 + $0x40] sm:$0xff]
        %v2112 = vld [vmem:[%s2102 + $0x48] sm:$0xff]
        %v2113 = vld [vmem:[%s2102 + $0x50] sm:$0xff]
        %v2114 = vld [vmem:[%s2102 + $0x58] sm:$0xff]
        %v2115 = vld [vmem:[%s2102 + $0x60] sm:$0xff]
        %v2116 = vld [vmem:[%s2102 + $0x68] sm:$0xff]
        %v2117 = vld [vmem:[%s2102 + $0x70] sm:$0xff]
        %v2118 = vld [vmem:[%s2102 + $0x78] sm:$0xff]
        %v2135 = vunpack.c.l.b16 %v2103
        %v2136 = vunpack.c.h.b16 %v2103
        %v2137 = vunpack.c.l.b16 %v2104
        %v2138 = vunpack.c.h.b16 %v2104
        %v2139 = vunpack.c.l.b16 %v2105
        %v2140 = vunpack.c.h.b16 %v2105
        %v2141 = vunpack.c.l.b16 %v2106
        %v2142 = vunpack.c.h.b16 %v2106
        %v2143 = vunpack.c.l.b16 %v2107
        %v2144 = vunpack.c.h.b16 %v2107
        %v2145 = vunpack.c.l.b16 %v2108
        %v2146 = vunpack.c.h.b16 %v2108
        %v2147 = vunpack.c.l.b16 %v2109
        %v2148 = vunpack.c.h.b16 %v2109
        %v2149 = vunpack.c.l.b16 %v2110
        %v2150 = vunpack.c.h.b16 %v2110
        %v2151 = vunpack.c.l.b16 %v2111
        %v2152 = vunpack.c.h.b16 %v2111
        %v2153 = vunpack.c.l.b16 %v2112
        %v2154 = vunpack.c.h.b16 %v2112
        %v2155 = vunpack.c.l.b16 %v2113
        %v2156 = vunpack.c.h.b16 %v2113
        %v2157 = vunpack.c.l.b16 %v2114
        %v2158 = vunpack.c.h.b16 %v2114
        %v2159 = vunpack.c.l.b16 %v2115
        %v2160 = vunpack.c.h.b16 %v2115
        %v2161 = vunpack.c.l.b16 %v2116
        %v2162 = vunpack.c.h.b16 %v2116
        %v2163 = vunpack.c.l.b16 %v2117
        %v2164 = vunpack.c.h.b16 %v2117
        %v2165 = vunpack.c.l.b16 %v2118
        %v2166 = vunpack.c.h.b16 %v2118
        %v2167 = vpack.c.b16 %v2137, %v2135
        %v2168 = vpack.c.b16 %v2138, %v2136
        %v2169 = vpack.c.b16 %v2141, %v2139
        %v2170 = vpack.c.b16 %v2142, %v2140
        %v2171 = vpack.c.b16 %v2145, %v2143
        %v2172 = vpack.c.b16 %v2146, %v2144
        %v2173 = vpack.c.b16 %v2149, %v2147
        %v2174 = vpack.c.b16 %v2150, %v2148
        %v2175 = vpack.c.b16 %v2153, %v2151
        %v2176 = vpack.c.b16 %v2154, %v2152
        %v2177 = vpack.c.b16 %v2157, %v2155
        %v2178 = vpack.c.b16 %v2158, %v2156
        %v2179 = vpack.c.b16 %v2161, %v2159
        %v2180 = vpack.c.b16 %v2162, %v2160
        %v2181 = vpack.c.b16 %v2165, %v2163
        %v2182 = vpack.c.b16 %v2166, %v2164
        %2199 = vmatprep.subr.bf16.mxu0 %v2168
        %2200 = vmatpush1.bf16.msra.mxu0 %v2167
        %2201 = vmatprep.subr.bf16.mxu0 %v2170
        %2202 = vmatpush1.bf16.msra.mxu0 %v2169
        %2203 = vmatprep.subr.bf16.mxu0 %v2172
        %2204 = vmatpush1.bf16.msra.mxu0 %v2171
        %2205 = vmatprep.subr.bf16.mxu0 %v2174
        %2206 = vmatpush1.bf16.msra.mxu0 %v2173
        %2207 = vmatprep.subr.bf16.mxu0 %v2176
        %2208 = vmatpush1.bf16.msra.mxu0 %v2175
        %2209 = vmatprep.subr.bf16.mxu0 %v2178
        %2210 = vmatpush1.bf16.msra.mxu0 %v2177
        %2211 = vmatprep.subr.bf16.mxu0 %v2180
        %2212 = vmatpush1.bf16.msra.mxu0 %v2179
        %2213 = vmatprep.subr.bf16.mxu0 %v2182
        %2214 = vmatpush1.bf16.msra.mxu0 %v2181
        %2215 = vmatprep.subr.bf16.mxu0 0
        %2216 = vmatpush1.bf16.msra.mxu0 0
        %2217 = vmatprep.subr.bf16.mxu0 0
        %2218 = vmatpush1.bf16.msra.mxu0 0
        %2219 = vmatprep.subr.bf16.mxu0 0
        %2220 = vmatpush1.bf16.msra.mxu0 0
        %2221 = vmatprep.subr.bf16.mxu0 0
        %2222 = vmatpush1.bf16.msra.mxu0 0
        %2223 = vmatprep.subr.bf16.mxu0 0
        %2224 = vmatpush1.bf16.msra.mxu0 0
        %2225 = vmatprep.subr.bf16.mxu0 0
        %2226 = vmatpush1.bf16.msra.mxu0 0
        %2227 = vmatprep.subr.bf16.mxu0 0
        %2228 = vmatpush1.bf16.msra.mxu0 0
        %2229 = vmatprep.subr.bf16.mxu0 0
        %2230 = vmatpush1.bf16.msra.mxu0 0
        %2231 = vmatprep.mubr.bf16.mxu0 0
        %2232 = vmatmul.mubr.bf16.gmra.mrb[0].mxu0 %v2101
        %v2233 = vpop.f32.mrb[0].mxu0
        %v2234 = vadd.f32 0.0, %v2233
        %v2235 = vpop.f32.mrb[0].mxu0
        %v2236 = vadd.f32 0.0, %v2235
        %v2237 = vpop.f32.mrb[0].mxu0
        %v2238 = vadd.f32 0.0, %v2237
        %v2239 = vpop.f32.mrb[0].mxu0
        %v2240 = vadd.f32 0.0, %v2239
        %2241 = vdwg.mxu0
        %v2242 = vadd.f32 %v2095, %v2234
        %v2243 = vadd.f32 %v2096, %v2236
        %v2244 = vadd.f32 %v2097, %v2238
        %v2245 = vadd.f32 %v2098, %v2240
        %v2246 = vld [vmem:[#allocation3 + $0x4] sm:$0xff]
        %v2247 = vld [vmem:[#allocation3 + $0xc] sm:$0xff]
        %v2248 = vpack.c.bf16 %v2247, %v2246
        %s2249 = scalar_lea.vmem %s5, 256
        %v2250 = vld [vmem:[%s2249] sm:$0xff]
        %v2251 = vld [vmem:[%s2249 + $0x8] sm:$0xff]
        %v2252 = vld [vmem:[%s2249 + $0x10] sm:$0xff]
        %v2253 = vld [vmem:[%s2249 + $0x18] sm:$0xff]
        %v2254 = vld [vmem:[%s2249 + $0x20] sm:$0xff]
        %v2255 = vld [vmem:[%s2249 + $0x28] sm:$0xff]
        %v2256 = vld [vmem:[%s2249 + $0x30] sm:$0xff]
        %v2257 = vld [vmem:[%s2249 + $0x38] sm:$0xff]
        %v2258 = vld [vmem:[%s2249 + $0x40] sm:$0xff]
        %v2259 = vld [vmem:[%s2249 + $0x48] sm:$0xff]
        %v2260 = vld [vmem:[%s2249 + $0x50] sm:$0xff]
        %v2261 = vld [vmem:[%s2249 + $0x58] sm:$0xff]
        %v2262 = vld [vmem:[%s2249 + $0x60] sm:$0xff]
        %v2263 = vld [vmem:[%s2249 + $0x68] sm:$0xff]
        %v2264 = vld [vmem:[%s2249 + $0x70] sm:$0xff]
        %v2265 = vld [vmem:[%s2249 + $0x78] sm:$0xff]
        %v2282 = vunpack.c.l.b16 %v2250
        %v2283 = vunpack.c.h.b16 %v2250
        %v2284 = vunpack.c.l.b16 %v2251
        %v2285 = vunpack.c.h.b16 %v2251
        %v2286 = vunpack.c.l.b16 %v2252
        %v2287 = vunpack.c.h.b16 %v2252
        %v2288 = vunpack.c.l.b16 %v2253
        %v2289 = vunpack.c.h.b16 %v2253
        %v2290 = vunpack.c.l.b16 %v2254
        %v2291 = vunpack.c.h.b16 %v2254
        %v2292 = vunpack.c.l.b16 %v2255
        %v2293 = vunpack.c.h.b16 %v2255
        %v2294 = vunpack.c.l.b16 %v2256
        %v2295 = vunpack.c.h.b16 %v2256
        %v2296 = vunpack.c.l.b16 %v2257
        %v2297 = vunpack.c.h.b16 %v2257
        %v2298 = vunpack.c.l.b16 %v2258
        %v2299 = vunpack.c.h.b16 %v2258
        %v2300 = vunpack.c.l.b16 %v2259
        %v2301 = vunpack.c.h.b16 %v2259
        %v2302 = vunpack.c.l.b16 %v2260
        %v2303 = vunpack.c.h.b16 %v2260
        %v2304 = vunpack.c.l.b16 %v2261
        %v2305 = vunpack.c.h.b16 %v2261
        %v2306 = vunpack.c.l.b16 %v2262
        %v2307 = vunpack.c.h.b16 %v2262
        %v2308 = vunpack.c.l.b16 %v2263
        %v2309 = vunpack.c.h.b16 %v2263
        %v2310 = vunpack.c.l.b16 %v2264
        %v2311 = vunpack.c.h.b16 %v2264
        %v2312 = vunpack.c.l.b16 %v2265
        %v2313 = vunpack.c.h.b16 %v2265
        %v2314 = vpack.c.b16 %v2284, %v2282
        %v2315 = vpack.c.b16 %v2285, %v2283
        %v2316 = vpack.c.b16 %v2288, %v2286
        %v2317 = vpack.c.b16 %v2289, %v2287
        %v2318 = vpack.c.b16 %v2292, %v2290
        %v2319 = vpack.c.b16 %v2293, %v2291
        %v2320 = vpack.c.b16 %v2296, %v2294
        %v2321 = vpack.c.b16 %v2297, %v2295
        %v2322 = vpack.c.b16 %v2300, %v2298
        %v2323 = vpack.c.b16 %v2301, %v2299
        %v2324 = vpack.c.b16 %v2304, %v2302
        %v2325 = vpack.c.b16 %v2305, %v2303
        %v2326 = vpack.c.b16 %v2308, %v2306
        %v2327 = vpack.c.b16 %v2309, %v2307
        %v2328 = vpack.c.b16 %v2312, %v2310
        %v2329 = vpack.c.b16 %v2313, %v2311
        %2346 = vmatprep.subr.bf16.mxu0 %v2315
        %2347 = vmatpush1.bf16.msra.mxu0 %v2314
        %2348 = vmatprep.subr.bf16.mxu0 %v2317
        %2349 = vmatpush1.bf16.msra.mxu0 %v2316
        %2350 = vmatprep.subr.bf16.mxu0 %v2319
        %2351 = vmatpush1.bf16.msra.mxu0 %v2318
        %2352 = vmatprep.subr.bf16.mxu0 %v2321
        %2353 = vmatpush1.bf16.msra.mxu0 %v2320
        %2354 = vmatprep.subr.bf16.mxu0 %v2323
        %2355 = vmatpush1.bf16.msra.mxu0 %v2322
        %2356 = vmatprep.subr.bf16.mxu0 %v2325
        %2357 = vmatpush1.bf16.msra.mxu0 %v2324
        %2358 = vmatprep.subr.bf16.mxu0 %v2327
        %2359 = vmatpush1.bf16.msra.mxu0 %v2326
        %2360 = vmatprep.subr.bf16.mxu0 %v2329
        %2361 = vmatpush1.bf16.msra.mxu0 %v2328
        %2362 = vmatprep.subr.bf16.mxu0 0
        %2363 = vmatpush1.bf16.msra.mxu0 0
        %2364 = vmatprep.subr.bf16.mxu0 0
        %2365 = vmatpush1.bf16.msra.mxu0 0
        %2366 = vmatprep.subr.bf16.mxu0 0
        %2367 = vmatpush1.bf16.msra.mxu0 0
        %2368 = vmatprep.subr.bf16.mxu0 0
        %2369 = vmatpush1.bf16.msra.mxu0 0
        %2370 = vmatprep.subr.bf16.mxu0 0
        %2371 = vmatpush1.bf16.msra.mxu0 0
        %2372 = vmatprep.subr.bf16.mxu0 0
        %2373 = vmatpush1.bf16.msra.mxu0 0
        %2374 = vmatprep.subr.bf16.mxu0 0
        %2375 = vmatpush1.bf16.msra.mxu0 0
        %2376 = vmatprep.subr.bf16.mxu0 0
        %2377 = vmatpush1.bf16.msra.mxu0 0
        %2378 = vmatprep.mubr.bf16.mxu0 0
        %2379 = vmatmul.mubr.bf16.gmra.mrb[0].mxu0 %v2248
        %v2380 = vpop.f32.mrb[0].mxu0
        %v2381 = vadd.f32 0.0, %v2380
        %v2382 = vpop.f32.mrb[0].mxu0
        %v2383 = vadd.f32 0.0, %v2382
        %v2384 = vpop.f32.mrb[0].mxu0
        %v2385 = vadd.f32 0.0, %v2384
        %v2386 = vpop.f32.mrb[0].mxu0
        %v2387 = vadd.f32 0.0, %v2386
        %2388 = vdwg.mxu0
        %v2389 = vadd.f32 %v2242, %v2381
        %v2390 = vadd.f32 %v2243, %v2383
        %v2391 = vadd.f32 %v2244, %v2385
        %v2392 = vadd.f32 %v2245, %v2387
        %v2393 = vld [vmem:[#allocation3 + $0x6] sm:$0xff]
        %v2394 = vld [vmem:[#allocation3 + $0xe] sm:$0xff]
        %v2395 = vpack.c.bf16 %v2394, %v2393
        %s2396 = scalar_lea.vmem %s5, 384
        %v2397 = vld [vmem:[%s2396] sm:$0xff]
        %v2398 = vld [vmem:[%s2396 + $0x8] sm:$0xff]
        %v2399 = vld [vmem:[%s2396 + $0x10] sm:$0xff]
        %v2400 = vld [vmem:[%s2396 + $0x18] sm:$0xff]
        %v2401 = vld [vmem:[%s2396 + $0x20] sm:$0xff]
        %v2402 = vld [vmem:[%s2396 + $0x28] sm:$0xff]
        %v2403 = vld [vmem:[%s2396 + $0x30] sm:$0xff]
        %v2404 = vld [vmem:[%s2396 + $0x38] sm:$0xff]
        %v2405 = vld [vmem:[%s2396 + $0x40] sm:$0xff]
        %v2406 = vld [vmem:[%s2396 + $0x48] sm:$0xff]
        %v2407 = vld [vmem:[%s2396 + $0x50] sm:$0xff]
        %v2408 = vld [vmem:[%s2396 + $0x58] sm:$0xff]
        %v2409 = vld [vmem:[%s2396 + $0x60] sm:$0xff]
        %v2410 = vld [vmem:[%s2396 + $0x68] sm:$0xff]
        %v2411 = vld [vmem:[%s2396 + $0x70] sm:$0xff]
        %v2412 = vld [vmem:[%s2396 + $0x78] sm:$0xff]
        %v2429 = vunpack.c.l.b16 %v2397
        %v2430 = vunpack.c.h.b16 %v2397
        %v2431 = vunpack.c.l.b16 %v2398
        %v2432 = vunpack.c.h.b16 %v2398
        %v2433 = vunpack.c.l.b16 %v2399
        %v2434 = vunpack.c.h.b16 %v2399
        %v2435 = vunpack.c.l.b16 %v2400
        %v2436 = vunpack.c.h.b16 %v2400
        %v2437 = vunpack.c.l.b16 %v2401
        %v2438 = vunpack.c.h.b16 %v2401
        %v2439 = vunpack.c.l.b16 %v2402
        %v2440 = vunpack.c.h.b16 %v2402
        %v2441 = vunpack.c.l.b16 %v2403
        %v2442 = vunpack.c.h.b16 %v2403
        %v2443 = vunpack.c.l.b16 %v2404
        %v2444 = vunpack.c.h.b16 %v2404
        %v2445 = vunpack.c.l.b16 %v2405
        %v2446 = vunpack.c.h.b16 %v2405
        %v2447 = vunpack.c.l.b16 %v2406
        %v2448 = vunpack.c.h.b16 %v2406
        %v2449 = vunpack.c.l.b16 %v2407
        %v2450 = vunpack.c.h.b16 %v2407
        %v2451 = vunpack.c.l.b16 %v2408
        %v2452 = vunpack.c.h.b16 %v2408
        %v2453 = vunpack.c.l.b16 %v2409
        %v2454 = vunpack.c.h.b16 %v2409
        %v2455 = vunpack.c.l.b16 %v2410
        %v2456 = vunpack.c.h.b16 %v2410
        %v2457 = vunpack.c.l.b16 %v2411
        %v2458 = vunpack.c.h.b16 %v2411
        %v2459 = vunpack.c.l.b16 %v2412
        %v2460 = vunpack.c.h.b16 %v2412
        %v2461 = vpack.c.b16 %v2431, %v2429
        %v2462 = vpack.c.b16 %v2432, %v2430
        %v2463 = vpack.c.b16 %v2435, %v2433
        %v2464 = vpack.c.b16 %v2436, %v2434
        %v2465 = vpack.c.b16 %v2439, %v2437
        %v2466 = vpack.c.b16 %v2440, %v2438
        %v2467 = vpack.c.b16 %v2443, %v2441
        %v2468 = vpack.c.b16 %v2444, %v2442
        %v2469 = vpack.c.b16 %v2447, %v2445
        %v2470 = vpack.c.b16 %v2448, %v2446
        %v2471 = vpack.c.b16 %v2451, %v2449
        %v2472 = vpack.c.b16 %v2452, %v2450
        %v2473 = vpack.c.b16 %v2455, %v2453
        %v2474 = vpack.c.b16 %v2456, %v2454
        %v2475 = vpack.c.b16 %v2459, %v2457
        %v2476 = vpack.c.b16 %v2460, %v2458
        %2493 = vmatprep.subr.bf16.mxu0 %v2462
        %2494 = vmatpush1.bf16.msra.mxu0 %v2461
        %2495 = vmatprep.subr.bf16.mxu0 %v2464
        %2496 = vmatpush1.bf16.msra.mxu0 %v2463
        %2497 = vmatprep.subr.bf16.mxu0 %v2466
        %2498 = vmatpush1.bf16.msra.mxu0 %v2465
        %2499 = vmatprep.subr.bf16.mxu0 %v2468
        %2500 = vmatpush1.bf16.msra.mxu0 %v2467
        %2501 = vmatprep.subr.bf16.mxu0 %v2470
        %2502 = vmatpush1.bf16.msra.mxu0 %v2469
        %2503 = vmatprep.subr.bf16.mxu0 %v2472
        %2504 = vmatpush1.bf16.msra.mxu0 %v2471
        %2505 = vmatprep.subr.bf16.mxu0 %v2474
        %2506 = vmatpush1.bf16.msra.mxu0 %v2473
        %2507 = vmatprep.subr.bf16.mxu0 %v2476
        %2508 = vmatpush1.bf16.msra.mxu0 %v2475
        %2509 = vmatprep.subr.bf16.mxu0 0
        %2510 = vmatpush1.bf16.msra.mxu0 0
        %2511 = vmatprep.subr.bf16.mxu0 0
        %2512 = vmatpush1.bf16.msra.mxu0 0
        %2513 = vmatprep.subr.bf16.mxu0 0
        %2514 = vmatpush1.bf16.msra.mxu0 0
        %2515 = vmatprep.subr.bf16.mxu0 0
        %2516 = vmatpush1.bf16.msra.mxu0 0
        %2517 = vmatprep.subr.bf16.mxu0 0
        %2518 = vmatpush1.bf16.msra.mxu0 0
        %2519 = vmatprep.subr.bf16.mxu0 0
        %2520 = vmatpush1.bf16.msra.mxu0 0
        %2521 = vmatprep.subr.bf16.mxu0 0
        %2522 = vmatpush1.bf16.msra.mxu0 0
        %2523 = vmatprep.subr.bf16.mxu0 0
        %2524 = vmatpush1.bf16.msra.mxu0 0
        %2525 = vmatprep.mubr.bf16.mxu0 0
        %2526 = vmatmul.mubr.bf16.gmra.mrb[0].mxu0 %v2395
        %v2527 = vpop.f32.mrb[0].mxu0
        %v2528 = vadd.f32 0.0, %v2527
        %v2529 = vpop.f32.mrb[0].mxu0
        %v2530 = vadd.f32 0.0, %v2529
        %v2531 = vpop.f32.mrb[0].mxu0
        %v2532 = vadd.f32 0.0, %v2531
        %v2533 = vpop.f32.mrb[0].mxu0
        %v2534 = vadd.f32 0.0, %v2533
        %2535 = vdwg.mxu0
        %v2536 = vadd.f32 %v2389, %v2528
        %v2537 = vadd.f32 %v2390, %v2530
        %v2538 = vadd.f32 %v2391, %v2532
        %v2539 = vadd.f32 %v2392, %v2534
        %v2540 = vld [vmem:[#allocation3 + $0x8] sm:$0xff]
        %v2541 = vld [vmem:[#allocation3 + $0x10] sm:$0xff]
        %v2542 = vpack.c.bf16 %v2541, %v2540
        %s2543 = scalar_lea.vmem %s5, 512
        %v2544 = vld [vmem:[%s2543] sm:$0xff]
        %v2545 = vld [vmem:[%s2543 + $0x8] sm:$0xff]
        %v2546 = vld [vmem:[%s2543 + $0x10] sm:$0xff]
        %v2547 = vld [vmem:[%s2543 + $0x18] sm:$0xff]
        %v2548 = vld [vmem:[%s2543 + $0x20] sm:$0xff]
        %v2549 = vld [vmem:[%s2543 + $0x28] sm:$0xff]
        %v2550 = vld [vmem:[%s2543 + $0x30] sm:$0xff]
        %v2551 = vld [vmem:[%s2543 + $0x38] sm:$0xff]
        %v2552 = vld [vmem:[%s2543 + $0x40] sm:$0xff]
        %v2553 = vld [vmem:[%s2543 + $0x48] sm:$0xff]
        %v2554 = vld [vmem:[%s2543 + $0x50] sm:$0xff]
        %v2555 = vld [vmem:[%s2543 + $0x58] sm:$0xff]
        %v2556 = vld [vmem:[%s2543 + $0x60] sm:$0xff]
        %v2557 = vld [vmem:[%s2543 + $0x68] sm:$0xff]
        %v2558 = vld [vmem:[%s2543 + $0x70] sm:$0xff]
        %v2559 = vld [vmem:[%s2543 + $0x78] sm:$0xff]
        %v2576 = vunpack.c.l.b16 %v2544
        %v2577 = vunpack.c.h.b16 %v2544
        %v2578 = vunpack.c.l.b16 %v2545
        %v2579 = vunpack.c.h.b16 %v2545
        %v2580 = vunpack.c.l.b16 %v2546
        %v2581 = vunpack.c.h.b16 %v2546
        %v2582 = vunpack.c.l.b16 %v2547
        %v2583 = vunpack.c.h.b16 %v2547
        %v2584 = vunpack.c.l.b16 %v2548
        %v2585 = vunpack.c.h.b16 %v2548
        %v2586 = vunpack.c.l.b16 %v2549
        %v2587 = vunpack.c.h.b16 %v2549
        %v2588 = vunpack.c.l.b16 %v2550
        %v2589 = vunpack.c.h.b16 %v2550
        %v2590 = vunpack.c.l.b16 %v2551
        %v2591 = vunpack.c.h.b16 %v2551
        %v2592 = vunpack.c.l.b16 %v2552
        %v2593 = vunpack.c.h.b16 %v2552
        %v2594 = vunpack.c.l.b16 %v2553
        %v2595 = vunpack.c.h.b16 %v2553
        %v2596 = vunpack.c.l.b16 %v2554
        %v2597 = vunpack.c.h.b16 %v2554
        %v2598 = vunpack.c.l.b16 %v2555
        %v2599 = vunpack.c.h.b16 %v2555
        %v2600 = vunpack.c.l.b16 %v2556
        %v2601 = vunpack.c.h.b16 %v2556
        %v2602 = vunpack.c.l.b16 %v2557
        %v2603 = vunpack.c.h.b16 %v2557
        %v2604 = vunpack.c.l.b16 %v2558
        %v2605 = vunpack.c.h.b16 %v2558
        %v2606 = vunpack.c.l.b16 %v2559
        %v2607 = vunpack.c.h.b16 %v2559
        %v2608 = vpack.c.b16 %v2578, %v2576
        %v2609 = vpack.c.b16 %v2579, %v2577
        %v2610 = vpack.c.b16 %v2582, %v2580
        %v2611 = vpack.c.b16 %v2583, %v2581
        %v2612 = vpack.c.b16 %v2586, %v2584
        %v2613 = vpack.c.b16 %v2587, %v2585
        %v2614 = vpack.c.b16 %v2590, %v2588
        %v2615 = vpack.c.b16 %v2591, %v2589
        %v2616 = vpack.c.b16 %v2594, %v2592
        %v2617 = vpack.c.b16 %v2595, %v2593
        %v2618 = vpack.c.b16 %v2598, %v2596
        %v2619 = vpack.c.b16 %v2599, %v2597
        %v2620 = vpack.c.b16 %v2602, %v2600
        %v2621 = vpack.c.b16 %v2603, %v2601
        %v2622 = vpack.c.b16 %v2606, %v2604
        %v2623 = vpack.c.b16 %v2607, %v2605
        %2640 = vmatprep.subr.bf16.mxu0 %v2609
        %2641 = vmatpush1.bf16.msra.mxu0 %v2608
        %2642 = vmatprep.subr.bf16.mxu0 %v2611
        %2643 = vmatpush1.bf16.msra.mxu0 %v2610
        %2644 = vmatprep.subr.bf16.mxu0 %v2613
        %2645 = vmatpush1.bf16.msra.mxu0 %v2612
        %2646 = vmatprep.subr.bf16.mxu0 %v2615
        %2647 = vmatpush1.bf16.msra.mxu0 %v2614
        %2648 = vmatprep.subr.bf16.mxu0 %v2617
        %2649 = vmatpush1.bf16.msra.mxu0 %v2616
        %2650 = vmatprep.subr.bf16.mxu0 %v2619
        %2651 = vmatpush1.bf16.msra.mxu0 %v2618
        %2652 = vmatprep.subr.bf16.mxu0 %v2621
        %2653 = vmatpush1.bf16.msra.mxu0 %v2620
        %2654 = vmatprep.subr.bf16.mxu0 %v2623
        %2655 = vmatpush1.bf16.msra.mxu0 %v2622
        %2656 = vmatprep.subr.bf16.mxu0 0
        %2657 = vmatpush1.bf16.msra.mxu0 0
        %2658 = vmatprep.subr.bf16.mxu0 0
        %2659 = vmatpush1.bf16.msra.mxu0 0
        %2660 = vmatprep.subr.bf16.mxu0 0
        %2661 = vmatpush1.bf16.msra.mxu0 0
        %2662 = vmatprep.subr.bf16.mxu0 0
        %2663 = vmatpush1.bf16.msra.mxu0 0
        %2664 = vmatprep.subr.bf16.mxu0 0
        %2665 = vmatpush1.bf16.msra.mxu0 0
        %2666 = vmatprep.subr.bf16.mxu0 0
        %2667 = vmatpush1.bf16.msra.mxu0 0
        %2668 = vmatprep.subr.bf16.mxu0 0
        %2669 = vmatpush1.bf16.msra.mxu0 0
        %2670 = vmatprep.subr.bf16.mxu0 0
        %2671 = vmatpush1.bf16.msra.mxu0 0
        %2672 = vmatprep.mubr.bf16.mxu0 0
        %2673 = vmatmul.mubr.bf16.gmra.mrb[0].mxu0 %v2542
        %v2674 = vpop.f32.mrb[0].mxu0
        %v2675 = vadd.f32 0.0, %v2674
        %v2676 = vpop.f32.mrb[0].mxu0
        %v2677 = vadd.f32 0.0, %v2676
        %v2678 = vpop.f32.mrb[0].mxu0
        %v2679 = vadd.f32 0.0, %v2678
        %v2680 = vpop.f32.mrb[0].mxu0
        %v2681 = vadd.f32 0.0, %v2680
        %2682 = vdwg.mxu0
        %v2683 = vadd.f32 %v2536, %v2675
        %v2684 = vadd.f32 %v2537, %v2677
        %v2685 = vadd.f32 %v2538, %v2679
        %v2686 = vadd.f32 %v2539, %v2681
        %v2687 = vld [vmem:[%s384] sm:$0xff]
        %v2688 = vld [vmem:[%s384 + $0x8] sm:$0xff]
        %v2689 = vld [vmem:[%s384 + $0x10] sm:$0xf]
        %v2690 = vpack.c.bf16 %v2688, %v2687
        %v2691 = vpack.c.bf16 %v2689, %v2689
        %v2692 = vld [vmem:[%s3] sm:$0xff]
        %v2693 = vld [vmem:[%s3 + $0x8] sm:$0xff]
        %v2694 = vld [vmem:[%s3 + $0x10] sm:$0xff]
        %v2695 = vld [vmem:[%s3 + $0x18] sm:$0xff]
        %v2696 = vld [vmem:[%s3 + $0x20] sm:$0xff]
        %v2697 = vld [vmem:[%s3 + $0x28] sm:$0xff]
        %v2698 = vld [vmem:[%s3 + $0x30] sm:$0xff]
        %v2699 = vld [vmem:[%s3 + $0x38] sm:$0xff]
        %v2700 = vld [vmem:[%s384 + $0x3] sm:$0xff]
        %v2701 = vld [vmem:[%s384 + $0xb] sm:$0xff]
        %v2702 = vld [vmem:[%s384 + $0x13] sm:$0xf]
        %v2703 = vpack.c.bf16 %v2701, %v2700
        %v2704 = vpack.c.bf16 %v2702, %v2702
        %s2705 = scalar_lea.vmem %s3, 64
        %v2706 = vld [vmem:[%s2705] sm:$0xff]
        %v2707 = vld [vmem:[%s2705 + $0x8] sm:$0xff]
        %v2708 = vld [vmem:[%s2705 + $0x10] sm:$0xff]
        %v2709 = vld [vmem:[%s2705 + $0x18] sm:$0xff]
        %v2710 = vld [vmem:[%s2705 + $0x20] sm:$0xff]
        %v2711 = vld [vmem:[%s2705 + $0x28] sm:$0xff]
        %v2712 = vld [vmem:[%s2705 + $0x30] sm:$0xff]
        %v2713 = vld [vmem:[%s2705 + $0x38] sm:$0xff]
        %v2722 = vunpack.c.l.b16 %v2706
        %v2723 = vunpack.c.h.b16 %v2706
        %v2724 = vunpack.c.l.b16 %v2707
        %v2725 = vunpack.c.h.b16 %v2707
        %v2726 = vunpack.c.l.b16 %v2708
        %v2727 = vunpack.c.h.b16 %v2708
        %v2728 = vunpack.c.l.b16 %v2709
        %v2729 = vunpack.c.h.b16 %v2709
        %v2730 = vunpack.c.l.b16 %v2710
        %v2731 = vunpack.c.h.b16 %v2710
        %v2732 = vunpack.c.l.b16 %v2711
        %v2733 = vunpack.c.h.b16 %v2711
        %v2734 = vunpack.c.l.b16 %v2712
        %v2735 = vunpack.c.h.b16 %v2712
        %v2736 = vunpack.c.l.b16 %v2713
        %v2737 = vunpack.c.h.b16 %v2713
        %v2738 = vpack.c.b16 %v2724, %v2722
        %v2739 = vpack.c.b16 %v2725, %v2723
        %v2740 = vpack.c.b16 %v2728, %v2726
        %v2741 = vpack.c.b16 %v2729, %v2727
        %v2742 = vpack.c.b16 %v2732, %v2730
        %v2743 = vpack.c.b16 %v2733, %v2731
        %v2744 = vpack.c.b16 %v2736, %v2734
        %v2745 = vpack.c.b16 %v2737, %v2735
        %v2755 = vsel %vm433, %v2703, 0
        %v2758 = vsel %vm433, %v2704, 0
        %2760 = vmatprep.subr.bf16.mxu0 %v2739
        %2761 = vmatpush1.bf16.msra.mxu0 %v2738
        %2762 = vmatprep.subr.bf16.mxu0 %v2741
        %2763 = vmatpush1.bf16.msra.mxu0 %v2740
        %2764 = vmatprep.subr.bf16.mxu0 %v2743
        %2765 = vmatpush1.bf16.msra.mxu0 %v2742
        %2766 = vmatprep.subr.bf16.mxu0 %v2745
        %2767 = vmatpush1.bf16.msra.mxu0 %v2744
        %2768 = vmatprep.subr.bf16.mxu0 0
        %2769 = vmatpush1.bf16.msra.mxu0 0
        %2770 = vmatprep.subr.bf16.mxu0 0
        %2771 = vmatpush1.bf16.msra.mxu0 0
        %2772 = vmatprep.subr.bf16.mxu0 0
        %2773 = vmatpush1.bf16.msra.mxu0 0
        %2774 = vmatprep.subr.bf16.mxu0 0
        %2775 = vmatpush1.bf16.msra.mxu0 0
        %2776 = vmatprep.subr.bf16.mxu0 0
        %2777 = vmatpush1.bf16.msra.mxu0 0
        %2778 = vmatprep.subr.bf16.mxu0 0
        %2779 = vmatpush1.bf16.msra.mxu0 0
        %2780 = vmatprep.subr.bf16.mxu0 0
        %2781 = vmatpush1.bf16.msra.mxu0 0
        %2782 = vmatprep.subr.bf16.mxu0 0
        %2783 = vmatpush1.bf16.msra.mxu0 0
        %2784 = vmatprep.subr.bf16.mxu0 0
        %2785 = vmatpush1.bf16.msra.mxu0 0
        %2786 = vmatprep.subr.bf16.mxu0 0
        %2787 = vmatpush1.bf16.msra.mxu0 0
        %2788 = vmatprep.subr.bf16.mxu0 0
        %2789 = vmatpush1.bf16.msra.mxu0 0
        %2790 = vmatprep.subr.bf16.mxu0 0
        %2791 = vmatpush1.bf16.msra.mxu0 0
        %2792 = vmatprep.mubr.bf16.mxu0 0
        %2793 = vmatmul.mubr.bf16.gmra.mrb[0].mxu0 %v2755
        %v2794 = vpop.f32.mrb[0].mxu0
        %v2795 = vadd.f32 0.0, %v2794
        %v2796 = vpop.f32.mrb[0].mxu0
        %v2797 = vadd.f32 0.0, %v2796
        %v2798 = vpop.f32.mrb[0].mxu0
        %v2799 = vadd.f32 0.0, %v2798
        %v2800 = vpop.f32.mrb[0].mxu0
        %v2801 = vadd.f32 0.0, %v2800
        %2802 = vmatprep.mubr.bf16.mxu0 0
        %2803 = vmatmul.mubr.bf16.gmra.mrb[0].mxu0 %v2758
        %v2804 = vpop.f32.mrb[0].mxu0
        %v2805 = vadd.f32 0.0, %v2804
        %v2806 = vpop.f32.mrb[0].mxu0
        %v2807 = vadd.f32 0.0, %v2806
        %v2808 = vpop.f32.mrb[0].mxu0
        %v2809 = vpop.f32.mrb[0].mxu0
        %2810 = vdwg.mxu0
        %v2819 = vunpack.c.l.b16 %v2692
        %v2820 = vunpack.c.h.b16 %v2692
        %v2821 = vunpack.c.l.b16 %v2693
        %v2822 = vunpack.c.h.b16 %v2693
        %v2823 = vunpack.c.l.b16 %v2694
        %v2824 = vunpack.c.h.b16 %v2694
        %v2825 = vunpack.c.l.b16 %v2695
        %v2826 = vunpack.c.h.b16 %v2695
        %v2827 = vunpack.c.l.b16 %v2696
        %v2828 = vunpack.c.h.b16 %v2696
        %v2829 = vunpack.c.l.b16 %v2697
        %v2830 = vunpack.c.h.b16 %v2697
        %v2831 = vunpack.c.l.b16 %v2698
        %v2832 = vunpack.c.h.b16 %v2698
        %v2833 = vunpack.c.l.b16 %v2699
        %v2834 = vunpack.c.h.b16 %v2699
        %v2835 = vpack.c.b16 %v2821, %v2819
        %v2836 = vpack.c.b16 %v2822, %v2820
        %v2837 = vpack.c.b16 %v2825, %v2823
        %v2838 = vpack.c.b16 %v2826, %v2824
        %v2839 = vpack.c.b16 %v2829, %v2827
        %v2840 = vpack.c.b16 %v2830, %v2828
        %v2841 = vpack.c.b16 %v2833, %v2831
        %v2842 = vpack.c.b16 %v2834, %v2832
        %v2852 = vsel %vm433, %v2690, 0
        %v2855 = vsel %vm433, %v2691, 0
        %2857 = vmatprep.subr.bf16.mxu0 %v2836
        %2858 = vmatpush1.bf16.msra.mxu0 %v2835
        %2859 = vmatprep.subr.bf16.mxu0 %v2838
        %2860 = vmatpush1.bf16.msra.mxu0 %v2837
        %2861 = vmatprep.subr.bf16.mxu0 %v2840
        %2862 = vmatpush1.bf16.msra.mxu0 %v2839
        %2863 = vmatprep.subr.bf16.mxu0 %v2842
        %2864 = vmatpush1.bf16.msra.mxu0 %v2841
        %2865 = vmatprep.subr.bf16.mxu0 0
        %2866 = vmatpush1.bf16.msra.mxu0 0
        %2867 = vmatprep.subr.bf16.mxu0 0
        %2868 = vmatpush1.bf16.msra.mxu0 0
        %2869 = vmatprep.subr.bf16.mxu0 0
        %2870 = vmatpush1.bf16.msra.mxu0 0
        %2871 = vmatprep.subr.bf16.mxu0 0
        %2872 = vmatpush1.bf16.msra.mxu0 0
        %2873 = vmatprep.subr.bf16.mxu0 0
        %2874 = vmatpush1.bf16.msra.mxu0 0
        %2875 = vmatprep.subr.bf16.mxu0 0
        %2876 = vmatpush1.bf16.msra.mxu0 0
        %2877 = vmatprep.subr.bf16.mxu0 0
        %2878 = vmatpush1.bf16.msra.mxu0 0
        %2879 = vmatprep.subr.bf16.mxu0 0
        %2880 = vmatpush1.bf16.msra.mxu0 0
        %2881 = vmatprep.subr.bf16.mxu0 0
        %2882 = vmatpush1.bf16.msra.mxu0 0
        %2883 = vmatprep.subr.bf16.mxu0 0
        %2884 = vmatpush1.bf16.msra.mxu0 0
        %2885 = vmatprep.subr.bf16.mxu0 0
        %2886 = vmatpush1.bf16.msra.mxu0 0
        %2887 = vmatprep.subr.bf16.mxu0 0
        %2888 = vmatpush1.bf16.msra.mxu0 0
        %2889 = vmatprep.mubr.bf16.mxu0 0
        %2890 = vmatmul.mubr.bf16.gmra.mrb[0].mxu0 %v2852
        %v2891 = vpop.f32.mrb[0].mxu0
        %v2892 = vadd.f32 %v2795, %v2891
        %v2893 = vpop.f32.mrb[0].mxu0
        %v2894 = vadd.f32 %v2797, %v2893
        %v2895 = vpop.f32.mrb[0].mxu0
        %v2896 = vadd.f32 %v2799, %v2895
        %v2897 = vpop.f32.mrb[0].mxu0
        %v2898 = vadd.f32 %v2801, %v2897
        %2899 = vmatprep.mubr.bf16.mxu0 0
        %2900 = vmatmul.mubr.bf16.gmra.mrb[0].mxu0 %v2855
        %v2901 = vpop.f32.mrb[0].mxu0
        %v2902 = vadd.f32 %v2805, %v2901
        %v2903 = vpop.f32.mrb[0].mxu0
        %v2904 = vadd.f32 %v2807, %v2903
        %v2905 = vpop.f32.mrb[0].mxu0
        %v2906 = vpop.f32.mrb[0].mxu0
        %2907 = vdwg.mxu0
        %v2908 = vld [vmem:[%s384 + $0x6] sm:$0xff]
        %v2909 = vld [vmem:[%s384 + $0xe] sm:$0xff]
        %v2910 = vld [vmem:[%s384 + $0x16] sm:$0xf]
        %v2911 = vpack.c.bf16 %v2909, %v2908
        %v2912 = vpack.c.bf16 %v2910, %v2910
        %s2913 = scalar_lea.vmem %s3, 128
        %v2914 = vld [vmem:[%s2913] sm:$0xff]
        %v2915 = vld [vmem:[%s2913 + $0x8] sm:$0xff]
        %v2916 = vld [vmem:[%s2913 + $0x10] sm:$0xff]
        %v2917 = vld [vmem:[%s2913 + $0x18] sm:$0xff]
        %v2918 = vld [vmem:[%s2913 + $0x20] sm:$0xff]
        %v2919 = vld [vmem:[%s2913 + $0x28] sm:$0xff]
        %v2920 = vld [vmem:[%s2913 + $0x30] sm:$0xff]
        %v2921 = vld [vmem:[%s2913 + $0x38] sm:$0xff]
        %v2930 = vunpack.c.l.b16 %v2914
        %v2931 = vunpack.c.h.b16 %v2914
        %v2932 = vunpack.c.l.b16 %v2915
        %v2933 = vunpack.c.h.b16 %v2915
        %v2934 = vunpack.c.l.b16 %v2916
        %v2935 = vunpack.c.h.b16 %v2916
        %v2936 = vunpack.c.l.b16 %v2917
        %v2937 = vunpack.c.h.b16 %v2917
        %v2938 = vunpack.c.l.b16 %v2918
        %v2939 = vunpack.c.h.b16 %v2918
        %v2940 = vunpack.c.l.b16 %v2919
        %v2941 = vunpack.c.h.b16 %v2919
        %v2942 = vunpack.c.l.b16 %v2920
        %v2943 = vunpack.c.h.b16 %v2920
        %v2944 = vunpack.c.l.b16 %v2921
        %v2945 = vunpack.c.h.b16 %v2921
        %v2946 = vpack.c.b16 %v2932, %v2930
        %v2947 = vpack.c.b16 %v2933, %v2931
        %v2948 = vpack.c.b16 %v2936, %v2934
        %v2949 = vpack.c.b16 %v2937, %v2935
        %v2950 = vpack.c.b16 %v2940, %v2938
        %v2951 = vpack.c.b16 %v2941, %v2939
        %v2952 = vpack.c.b16 %v2944, %v2942
        %v2953 = vpack.c.b16 %v2945, %v2943
        %v2963 = vsel %vm433, %v2911, 0
        %v2966 = vsel %vm433, %v2912, 0
        %2968 = vmatprep.subr.bf16.mxu0 %v2947
        %2969 = vmatpush1.bf16.msra.mxu0 %v2946
        %2970 = vmatprep.subr.bf16.mxu0 %v2949
        %2971 = vmatpush1.bf16.msra.mxu0 %v2948
        %2972 = vmatprep.subr.bf16.mxu0 %v2951
        %2973 = vmatpush1.bf16.msra.mxu0 %v2950
        %2974 = vmatprep.subr.bf16.mxu0 %v2953
        %2975 = vmatpush1.bf16.msra.mxu0 %v2952
        %2976 = vmatprep.subr.bf16.mxu0 0
        %2977 = vmatpush1.bf16.msra.mxu0 0
        %2978 = vmatprep.subr.bf16.mxu0 0
        %2979 = vmatpush1.bf16.msra.mxu0 0
        %2980 = vmatprep.subr.bf16.mxu0 0
        %2981 = vmatpush1.bf16.msra.mxu0 0
        %2982 = vmatprep.subr.bf16.mxu0 0
        %2983 = vmatpush1.bf16.msra.mxu0 0
        %2984 = vmatprep.subr.bf16.mxu0 0
        %2985 = vmatpush1.bf16.msra.mxu0 0
        %2986 = vmatprep.subr.bf16.mxu0 0
        %2987 = vmatpush1.bf16.msra.mxu0 0
        %2988 = vmatprep.subr.bf16.mxu0 0
        %2989 = vmatpush1.bf16.msra.mxu0 0
        %2990 = vmatprep.subr.bf16.mxu0 0
        %2991 = vmatpush1.bf16.msra.mxu0 0
        %2992 = vmatprep.subr.bf16.mxu0 0
        %2993 = vmatpush1.bf16.msra.mxu0 0
        %2994 = vmatprep.subr.bf16.mxu0 0
        %2995 = vmatpush1.bf16.msra.mxu0 0
        %2996 = vmatprep.subr.bf16.mxu0 0
        %2997 = vmatpush1.bf16.msra.mxu0 0
        %2998 = vmatprep.subr.bf16.mxu0 0
        %2999 = vmatpush1.bf16.msra.mxu0 0
        %3000 = vmatprep.mubr.bf16.mxu0 0
        %3001 = vmatmul.mubr.bf16.gmra.mrb[0].mxu0 %v2963
        %v3002 = vpop.f32.mrb[0].mxu0
        %v3003 = vadd.f32 0.0, %v3002
        %v3004 = vpop.f32.mrb[0].mxu0
        %v3005 = vadd.f32 0.0, %v3004
        %v3006 = vpop.f32.mrb[0].mxu0
        %v3007 = vadd.f32 0.0, %v3006
        %v3008 = vpop.f32.mrb[0].mxu0
        %v3009 = vadd.f32 0.0, %v3008
        %3010 = vmatprep.mubr.bf16.mxu0 0
        %3011 = vmatmul.mubr.bf16.gmra.mrb[0].mxu0 %v2966
        %v3012 = vpop.f32.mrb[0].mxu0
        %v3013 = vadd.f32 0.0, %v3012
        %v3014 = vpop.f32.mrb[0].mxu0
        %v3015 = vadd.f32 0.0, %v3014
        %v3016 = vpop.f32.mrb[0].mxu0
        %v3017 = vpop.f32.mrb[0].mxu0
        %3018 = vdwg.mxu0
        %v3019 = vadd.f32 %v2892, %v3003
        %v3020 = vadd.f32 %v2894, %v3005
        %v3021 = vadd.f32 %v2896, %v3007
        %v3022 = vadd.f32 %v2898, %v3009
        %v3023 = vadd.f32 %v2902, %v3013
        %v3024 = vadd.f32 %v2904, %v3015
        %v3025 = vld [vmem:[%s384 + $0x9] sm:$0xff]
        %v3026 = vld [vmem:[%s384 + $0x11] sm:$0xff]
        %v3027 = vld [vmem:[%s384 + $0x19] sm:$0xf]
        %v3028 = vpack.c.bf16 %v3026, %v3025
        %v3029 = vpack.c.bf16 %v3027, %v3027
        %s3030 = scalar_lea.vmem %s3, 192
        %v3031 = vld [vmem:[%s3030] sm:$0xff]
        %v3032 = vld [vmem:[%s3030 + $0x8] sm:$0xff]
        %v3033 = vld [vmem:[%s3030 + $0x10] sm:$0xff]
        %v3034 = vld [vmem:[%s3030 + $0x18] sm:$0xff]
        %v3035 = vld [vmem:[%s3030 + $0x20] sm:$0xff]
        %v3036 = vld [vmem:[%s3030 + $0x28] sm:$0xff]
        %v3037 = vld [vmem:[%s3030 + $0x30] sm:$0xff]
        %v3038 = vld [vmem:[%s3030 + $0x38] sm:$0xff]
        %v3047 = vunpack.c.l.b16 %v3031
        %v3048 = vunpack.c.h.b16 %v3031
        %v3049 = vunpack.c.l.b16 %v3032
        %v3050 = vunpack.c.h.b16 %v3032
        %v3051 = vunpack.c.l.b16 %v3033
        %v3052 = vunpack.c.h.b16 %v3033
        %v3053 = vunpack.c.l.b16 %v3034
        %v3054 = vunpack.c.h.b16 %v3034
        %v3055 = vunpack.c.l.b16 %v3035
        %v3056 = vunpack.c.h.b16 %v3035
        %v3057 = vunpack.c.l.b16 %v3036
        %v3058 = vunpack.c.h.b16 %v3036
        %v3059 = vunpack.c.l.b16 %v3037
        %v3060 = vunpack.c.h.b16 %v3037
        %v3061 = vunpack.c.l.b16 %v3038
        %v3062 = vunpack.c.h.b16 %v3038
        %v3063 = vpack.c.b16 %v3049, %v3047
        %v3064 = vpack.c.b16 %v3050, %v3048
        %v3065 = vpack.c.b16 %v3053, %v3051
        %v3066 = vpack.c.b16 %v3054, %v3052
        %v3067 = vpack.c.b16 %v3057, %v3055
        %v3068 = vpack.c.b16 %v3058, %v3056
        %v3069 = vpack.c.b16 %v3061, %v3059
        %v3070 = vpack.c.b16 %v3062, %v3060
        %v3080 = vsel %vm433, %v3028, 0
        %v3083 = vsel %vm433, %v3029, 0
        %3085 = vmatprep.subr.bf16.mxu0 %v3064
        %3086 = vmatpush1.bf16.msra.mxu0 %v3063
        %3087 = vmatprep.subr.bf16.mxu0 %v3066
        %3088 = vmatpush1.bf16.msra.mxu0 %v3065
        %3089 = vmatprep.subr.bf16.mxu0 %v3068
        %3090 = vmatpush1.bf16.msra.mxu0 %v3067
        %3091 = vmatprep.subr.bf16.mxu0 %v3070
        %3092 = vmatpush1.bf16.msra.mxu0 %v3069
        %3093 = vmatprep.subr.bf16.mxu0 0
        %3094 = vmatpush1.bf16.msra.mxu0 0
        %3095 = vmatprep.subr.bf16.mxu0 0
        %3096 = vmatpush1.bf16.msra.mxu0 0
        %3097 = vmatprep.subr.bf16.mxu0 0
        %3098 = vmatpush1.bf16.msra.mxu0 0
        %3099 = vmatprep.subr.bf16.mxu0 0
        %3100 = vmatpush1.bf16.msra.mxu0 0
        %3101 = vmatprep.subr.bf16.mxu0 0
        %3102 = vmatpush1.bf16.msra.mxu0 0
        %3103 = vmatprep.subr.bf16.mxu0 0
        %3104 = vmatpush1.bf16.msra.mxu0 0
        %3105 = vmatprep.subr.bf16.mxu0 0
        %3106 = vmatpush1.bf16.msra.mxu0 0
        %3107 = vmatprep.subr.bf16.mxu0 0
        %3108 = vmatpush1.bf16.msra.mxu0 0
        %3109 = vmatprep.subr.bf16.mxu0 0
        %3110 = vmatpush1.bf16.msra.mxu0 0
        %3111 = vmatprep.subr.bf16.mxu0 0
        %3112 = vmatpush1.bf16.msra.mxu0 0
        %3113 = vmatprep.subr.bf16.mxu0 0
        %3114 = vmatpush1.bf16.msra.mxu0 0
        %3115 = vmatprep.subr.bf16.mxu0 0
        %3116 = vmatpush1.bf16.msra.mxu0 0
        %3117 = vmatprep.mubr.bf16.mxu0 0
        %3118 = vmatmul.mubr.bf16.gmra.mrb[0].mxu0 %v3080
        %v3119 = vpop.f32.mrb[0].mxu0
        %v3120 = vadd.f32 0.0, %v3119
        %v3121 = vpop.f32.mrb[0].mxu0
        %v3122 = vadd.f32 0.0, %v3121
        %v3123 = vpop.f32.mrb[0].mxu0
        %v3124 = vadd.f32 0.0, %v3123
        %v3125 = vpop.f32.mrb[0].mxu0
        %v3126 = vadd.f32 0.0, %v3125
        %3127 = vmatprep.mubr.bf16.mxu0 0
        %3128 = vmatmul.mubr.bf16.gmra.mrb[0].mxu0 %v3083
        %v3129 = vpop.f32.mrb[0].mxu0
        %v3130 = vadd.f32 0.0, %v3129
        %v3131 = vpop.f32.mrb[0].mxu0
        %v3132 = vadd.f32 0.0, %v3131
        %v3133 = vpop.f32.mrb[0].mxu0
        %v3134 = vpop.f32.mrb[0].mxu0
        %3135 = vdwg.mxu0
        %v3136 = vadd.f32 %v3019, %v3120
        %v3137 = vadd.f32 %v3020, %v3122
        %v3138 = vadd.f32 %v3021, %v3124
        %v3139 = vadd.f32 %v3022, %v3126
        %v3140 = vadd.f32 %v3023, %v3130
        %v3141 = vadd.f32 %v3024, %v3132
        %v3142 = vld [vmem:[%s384 + $0xc] sm:$0xff]
        %v3143 = vld [vmem:[%s384 + $0x14] sm:$0xff]
        %v3144 = vld [vmem:[%s384 + $0x1c] sm:$0xf]
        %v3145 = vpack.c.bf16 %v3143, %v3142
        %v3146 = vpack.c.bf16 %v3144, %v3144
        %s3147 = scalar_lea.vmem %s3, 256
        %v3148 = vld [vmem:[%s3147] sm:$0xff]
        %v3149 = vld [vmem:[%s3147 + $0x8] sm:$0xff]
        %v3150 = vld [vmem:[%s3147 + $0x10] sm:$0xff]
        %v3151 = vld [vmem:[%s3147 + $0x18] sm:$0xff]
        %v3152 = vld [vmem:[%s3147 + $0x20] sm:$0xff]
        %v3153 = vld [vmem:[%s3147 + $0x28] sm:$0xff]
        %v3154 = vld [vmem:[%s3147 + $0x30] sm:$0xff]
        %v3155 = vld [vmem:[%s3147 + $0x38] sm:$0xff]
        %v3164 = vunpack.c.l.b16 %v3148
        %v3165 = vunpack.c.h.b16 %v3148
        %v3166 = vunpack.c.l.b16 %v3149
        %v3167 = vunpack.c.h.b16 %v3149
        %v3168 = vunpack.c.l.b16 %v3150
        %v3169 = vunpack.c.h.b16 %v3150
        %v3170 = vunpack.c.l.b16 %v3151
        %v3171 = vunpack.c.h.b16 %v3151
        %v3172 = vunpack.c.l.b16 %v3152
        %v3173 = vunpack.c.h.b16 %v3152
        %v3174 = vunpack.c.l.b16 %v3153
        %v3175 = vunpack.c.h.b16 %v3153
        %v3176 = vunpack.c.l.b16 %v3154
        %v3177 = vunpack.c.h.b16 %v3154
        %v3178 = vunpack.c.l.b16 %v3155
        %v3179 = vunpack.c.h.b16 %v3155
        %v3180 = vpack.c.b16 %v3166, %v3164
        %v3181 = vpack.c.b16 %v3167, %v3165
        %v3182 = vpack.c.b16 %v3170, %v3168
        %v3183 = vpack.c.b16 %v3171, %v3169
        %v3184 = vpack.c.b16 %v3174, %v3172
        %v3185 = vpack.c.b16 %v3175, %v3173
        %v3186 = vpack.c.b16 %v3178, %v3176
        %v3187 = vpack.c.b16 %v3179, %v3177
        %v3197 = vsel %vm433, %v3145, 0
        %v3200 = vsel %vm433, %v3146, 0
        %3202 = vmatprep.subr.bf16.mxu0 %v3181
        %3203 = vmatpush1.bf16.msra.mxu0 %v3180
        %3204 = vmatprep.subr.bf16.mxu0 %v3183
        %3205 = vmatpush1.bf16.msra.mxu0 %v3182
        %3206 = vmatprep.subr.bf16.mxu0 %v3185
        %3207 = vmatpush1.bf16.msra.mxu0 %v3184
        %3208 = vmatprep.subr.bf16.mxu0 %v3187
        %3209 = vmatpush1.bf16.msra.mxu0 %v3186
        %3210 = vmatprep.subr.bf16.mxu0 0
        %3211 = vmatpush1.bf16.msra.mxu0 0
        %3212 = vmatprep.subr.bf16.mxu0 0
        %3213 = vmatpush1.bf16.msra.mxu0 0
        %3214 = vmatprep.subr.bf16.mxu0 0
        %3215 = vmatpush1.bf16.msra.mxu0 0
        %3216 = vmatprep.subr.bf16.mxu0 0
        %3217 = vmatpush1.bf16.msra.mxu0 0
        %3218 = vmatprep.subr.bf16.mxu0 0
        %3219 = vmatpush1.bf16.msra.mxu0 0
        %3220 = vmatprep.subr.bf16.mxu0 0
        %3221 = vmatpush1.bf16.msra.mxu0 0
        %3222 = vmatprep.subr.bf16.mxu0 0
        %3223 = vmatpush1.bf16.msra.mxu0 0
        %3224 = vmatprep.subr.bf16.mxu0 0
        %3225 = vmatpush1.bf16.msra.mxu0 0
        %3226 = vmatprep.subr.bf16.mxu0 0
        %3227 = vmatpush1.bf16.msra.mxu0 0
        %3228 = vmatprep.subr.bf16.mxu0 0
        %3229 = vmatpush1.bf16.msra.mxu0 0
        %3230 = vmatprep.subr.bf16.mxu0 0
        %3231 = vmatpush1.bf16.msra.mxu0 0
        %3232 = vmatprep.subr.bf16.mxu0 0
        %3233 = vmatpush1.bf16.msra.mxu0 0
        %3234 = vmatprep.mubr.bf16.mxu0 0
        %3235 = vmatmul.mubr.bf16.gmra.mrb[0].mxu0 %v3197
        %v3236 = vpop.f32.mrb[0].mxu0
        %v3237 = vadd.f32 0.0, %v3236
        %v3238 = vpop.f32.mrb[0].mxu0
        %v3239 = vadd.f32 0.0, %v3238
        %v3240 = vpop.f32.mrb[0].mxu0
        %v3241 = vadd.f32 0.0, %v3240
        %v3242 = vpop.f32.mrb[0].mxu0
        %v3243 = vadd.f32 0.0, %v3242
        %3244 = vmatprep.mubr.bf16.mxu0 0
        %3245 = vmatmul.mubr.bf16.gmra.mrb[0].mxu0 %v3200
        %v3246 = vpop.f32.mrb[0].mxu0
        %v3247 = vadd.f32 0.0, %v3246
        %v3248 = vpop.f32.mrb[0].mxu0
        %v3249 = vadd.f32 0.0, %v3248
        %v3250 = vpop.f32.mrb[0].mxu0
        %v3251 = vpop.f32.mrb[0].mxu0
        %3252 = vdwg.mxu0
        %v3253 = vadd.f32 %v3136, %v3237
        %v3254 = vadd.f32 %v3137, %v3239
        %v3255 = vadd.f32 %v3138, %v3241
        %v3256 = vadd.f32 %v3139, %v3243
        %v3257 = vadd.f32 %v3140, %v3247
        %v3258 = vadd.f32 %v3141, %v3249
        %v3259 = vld [vmem:[%s9] sm:$0x3]
        %v3261 = vlaneseq
        %v3262 = vshrl.u32 %v3261, 7
        %v3263 = vsub.s32 0, %v3262
        %v3264 = vrot.slane %v3259, %v3263
        %v3265 = vlaneseq
        %v3266 = vshrl.u32 %v3265, 7
        %v3267 = vsub.s32 1, %v3266
        %v3268 = vrot.slane %v3259, %v3267
        %v3271 = vadd.f32 %v3253, %v3264
        %v3272 = vadd.f32 %v3254, %v3268
        %v3273 = vadd.f32 %v3255, %v3264
        %v3274 = vadd.f32 %v3256, %v3268
        %v3275 = vadd.f32 %v3257, %v3264
        %v3276 = vadd.f32 %v3258, %v3268
        %v3277 = vmax.f32 %v3271, 0.0
        %v3278 = vmax.f32 %v3272, 0.0
        %v3279 = vmax.f32 %v3273, 0.0
        %v3280 = vmax.f32 %v3274, 0.0
        %v3281 = vmax.f32 %v3275, 0.0
        %v3282 = vmax.f32 %v3276, 0.0
        %3283 = vst [vmem:[#allocation4] sm:$0xf] 0.0
        %vm3284 = vcmask 257024
        %3285 = vst.msk [vmem:[#allocation4 + $0x8] sm:$0xf] %vm3284, 0.0
        %3286 = vst [vmem:[#allocation4 + $0x30] sm:$0xf] 0.0
        %3287 = vst.msk [vmem:[#allocation4 + $0x38] sm:$0xf] %vm3284, 0.0
        %vm3294 = vcmask 1043456
        %v3295 = vrot.slane %v3277, 4
        %v3296 = vrot.slane %v3278, 4
        %v3297 = vrot.slane %v3279, 4
        %v3298 = vsel %vm3294, %v3295, %v3297
        %v3299 = vrot.slane %v3280, 4
        %v3300 = vsel %vm3294, %v3296, %v3299
        %v3301 = vrot.slane %v3281, 4
        %v3302 = vsel %vm3294, %v3297, %v3301
        %v3303 = vrot.slane %v3282, 4
        %v3304 = vsel %vm3294, %v3299, %v3303
        %3311 = vst [vmem:[#allocation4] sm:$0xf0] %v3295
        %vm3312 = vcmask 261124
        %3313 = vst.msk [vmem:[#allocation4 + $0x8] sm:$0xf0] %vm3312, %v3296
        %3314 = vst [vmem:[#allocation4 + $0x10] sm:$0xff] %v3298
        %vm3315 = vcmask 261120
        %3316 = vst.msk [vmem:[#allocation4 + $0x18] sm:$0xff] %vm3315, %v3300
        %3317 = vst [vmem:[#allocation4 + $0x20] sm:$0xff] %v3302
        %3318 = vst.msk [vmem:[#allocation4 + $0x28] sm:$0xff] %vm3315, %v3304
        %v3319 = vld [vmem:[#allocation4] sm:$0xff]
        %v3320 = vld [vmem:[#allocation4 + $0x8] sm:$0xff]
        %v3321 = vld [vmem:[#allocation4 + $0x10] sm:$0xff]
        %v3322 = vld [vmem:[#allocation4 + $0x18] sm:$0xff]
        %v3323 = vpack.c.bf16 %v3321, %v3319
        %v3324 = vpack.c.bf16 %v3322, %v3320
        %v3325 = vld [vmem:[%s6] sm:$0xff]
        %v3326 = vld [vmem:[%s6 + $0x8] sm:$0xff]
        %v3327 = vld [vmem:[%s6 + $0x10] sm:$0xff]
        %v3328 = vld [vmem:[%s6 + $0x18] sm:$0xff]
        %v3329 = vld [vmem:[%s6 + $0x20] sm:$0xff]
        %v3330 = vld [vmem:[%s6 + $0x28] sm:$0xff]
        %v3331 = vld [vmem:[%s6 + $0x30] sm:$0xff]
        %v3332 = vld [vmem:[%s6 + $0x38] sm:$0xff]
        %v3333 = vld [vmem:[%s6 + $0x40] sm:$0xff]
        %v3334 = vld [vmem:[%s6 + $0x48] sm:$0xff]
        %v3335 = vld [vmem:[%s6 + $0x50] sm:$0xff]
        %v3336 = vld [vmem:[%s6 + $0x58] sm:$0xff]
        %v3337 = vld [vmem:[%s6 + $0x60] sm:$0xff]
        %v3338 = vld [vmem:[%s6 + $0x68] sm:$0xff]
        %v3339 = vld [vmem:[%s6 + $0x70] sm:$0xff]
        %v3340 = vld [vmem:[%s6 + $0x78] sm:$0xff]
        %v3341 = vld [vmem:[%s6 + $0x80] sm:$0xff]
        %v3342 = vld [vmem:[%s6 + $0x88] sm:$0xff]
        %v3343 = vld [vmem:[%s6 + $0x90] sm:$0xff]
        %v3344 = vld [vmem:[%s6 + $0x98] sm:$0xff]
        %v3365 = vunpack.c.l.b16 %v3325
        %v3366 = vunpack.c.h.b16 %v3325
        %v3367 = vunpack.c.l.b16 %v3326
        %v3368 = vunpack.c.h.b16 %v3326
        %v3369 = vunpack.c.l.b16 %v3327
        %v3370 = vunpack.c.h.b16 %v3327
        %v3371 = vunpack.c.l.b16 %v3328
        %v3372 = vunpack.c.h.b16 %v3328
        %v3373 = vunpack.c.l.b16 %v3329
        %v3374 = vunpack.c.h.b16 %v3329
        %v3375 = vunpack.c.l.b16 %v3330
        %v3376 = vunpack.c.h.b16 %v3330
        %v3377 = vunpack.c.l.b16 %v3331
        %v3378 = vunpack.c.h.b16 %v3331
        %v3379 = vunpack.c.l.b16 %v3332
        %v3380 = vunpack.c.h.b16 %v3332
        %v3381 = vunpack.c.l.b16 %v3333
        %v3382 = vunpack.c.h.b16 %v3333
        %v3383 = vunpack.c.l.b16 %v3334
        %v3384 = vunpack.c.h.b16 %v3334
        %v3385 = vunpack.c.l.b16 %v3335
        %v3386 = vunpack.c.h.b16 %v3335
        %v3387 = vunpack.c.l.b16 %v3336
        %v3388 = vunpack.c.h.b16 %v3336
        %v3389 = vunpack.c.l.b16 %v3337
        %v3390 = vunpack.c.h.b16 %v3337
        %v3391 = vunpack.c.l.b16 %v3338
        %v3392 = vunpack.c.h.b16 %v3338
        %v3393 = vunpack.c.l.b16 %v3339
        %v3394 = vunpack.c.h.b16 %v3339
        %v3395 = vunpack.c.l.b16 %v3340
        %v3396 = vunpack.c.h.b16 %v3340
        %v3397 = vunpack.c.l.b16 %v3341
        %v3398 = vunpack.c.h.b16 %v3341
        %v3399 = vunpack.c.l.b16 %v3342
        %v3400 = vunpack.c.h.b16 %v3342
        %v3401 = vunpack.c.l.b16 %v3343
        %v3402 = vunpack.c.h.b16 %v3343
        %v3403 = vunpack.c.l.b16 %v3344
        %v3404 = vunpack.c.h.b16 %v3344
        %v3405 = vpack.c.b16 %v3367, %v3365
        %v3406 = vpack.c.b16 %v3368, %v3366
        %v3407 = vpack.c.b16 %v3371, %v3369
        %v3408 = vpack.c.b16 %v3372, %v3370
        %v3409 = vpack.c.b16 %v3375, %v3373
        %v3410 = vpack.c.b16 %v3376, %v3374
        %v3411 = vpack.c.b16 %v3379, %v3377
        %v3412 = vpack.c.b16 %v3380, %v3378
        %v3413 = vpack.c.b16 %v3383, %v3381
        %v3414 = vpack.c.b16 %v3384, %v3382
        %v3415 = vpack.c.b16 %v3387, %v3385
        %v3416 = vpack.c.b16 %v3388, %v3386
        %v3417 = vpack.c.b16 %v3391, %v3389
        %v3418 = vpack.c.b16 %v3392, %v3390
        %v3419 = vpack.c.b16 %v3395, %v3393
        %v3420 = vpack.c.b16 %v3396, %v3394
        %v3421 = vpack.c.b16 %v3399, %v3397
        %v3422 = vpack.c.b16 %v3400, %v3398
        %v3423 = vpack.c.b16 %v3403, %v3401
        %v3424 = vpack.c.b16 %v3404, %v3402
        %v3446 = vsel %vm3315, %v3324, 0
        %3448 = vmatprep.subr.bf16.mxu0 %v3406
        %3449 = vmatpush1.bf16.msra.mxu0 %v3405
        %3450 = vmatprep.subr.bf16.mxu0 %v3408
        %3451 = vmatpush1.bf16.msra.mxu0 %v3407
        %3452 = vmatprep.subr.bf16.mxu0 %v3410
        %3453 = vmatpush1.bf16.msra.mxu0 %v3409
        %3454 = vmatprep.subr.bf16.mxu0 %v3412
        %3455 = vmatpush1.bf16.msra.mxu0 %v3411
        %3456 = vmatprep.subr.bf16.mxu0 %v3414
        %3457 = vmatpush1.bf16.msra.mxu0 %v3413
        %3458 = vmatprep.subr.bf16.mxu0 %v3416
        %3459 = vmatpush1.bf16.msra.mxu0 %v3415
        %3460 = vmatprep.subr.bf16.mxu0 %v3418
        %3461 = vmatpush1.bf16.msra.mxu0 %v3417
        %3462 = vmatprep.subr.bf16.mxu0 %v3420
        %3463 = vmatpush1.bf16.msra.mxu0 %v3419
        %3464 = vmatprep.subr.bf16.mxu0 %v3422
        %3465 = vmatpush1.bf16.msra.mxu0 %v3421
        %3466 = vmatprep.subr.bf16.mxu0 %v3424
        %3467 = vmatpush1.bf16.msra.mxu0 %v3423
        %3468 = vmatprep.subr.bf16.mxu0 0
        %3469 = vmatpush1.bf16.msra.mxu0 0
        %3470 = vmatprep.subr.bf16.mxu0 0
        %3471 = vmatpush1.bf16.msra.mxu0 0
        %3472 = vmatprep.subr.bf16.mxu0 0
        %3473 = vmatpush1.bf16.msra.mxu0 0
        %3474 = vmatprep.subr.bf16.mxu0 0
        %3475 = vmatpush1.bf16.msra.mxu0 0
        %3476 = vmatprep.subr.bf16.mxu0 0
        %3477 = vmatpush1.bf16.msra.mxu0 0
        %3478 = vmatprep.subr.bf16.mxu0 0
        %3479 = vmatpush1.bf16.msra.mxu0 0
        %3480 = vmatprep.mubr.bf16.mxu0 %v3446
        %3481 = vmatmul.mubr.bf16.gmra.mrb[0].mxu0 %v3323
        %v3482 = vpop.f32.mrb[0].mxu0
        %v3483 = vadd.f32 0.0, %v3482
        %v3484 = vpop.f32.mrb[0].mxu0
        %v3485 = vadd.f32 0.0, %v3484
        %v3486 = vpop.f32.mrb[0].mxu0
        %v3487 = vadd.f32 0.0, %v3486
        %v3488 = vpop.f32.mrb[0].mxu0
        %v3489 = vadd.f32 0.0, %v3488
        %3490 = vdwg.mxu0
        %v3491 = vadd.f32 %v2683, %v3483
        %v3492 = vadd.f32 %v2684, %v3485
        %v3493 = vadd.f32 %v2685, %v3487
        %v3494 = vadd.f32 %v2686, %v3489
        %v3495 = vld [vmem:[#allocation4] sm:$0xf8]
        %v3496 = vld [vmem:[#allocation4 + $0x8] sm:$0xf8]
        %v3497 = vld [vmem:[#allocation4 + $0x10] sm:$0xff]
        %v3498 = vld [vmem:[#allocation4 + $0x18] sm:$0xff]
        %v3499 = vld [vmem:[#allocation4 + $0x20] sm:$0x7]
        %v3500 = vld [vmem:[#allocation4 + $0x28] sm:$0x7]
        %v3501 = vpack.c.bf16 %v3497, %v3495
        %v3502 = vpack.c.bf16 %v3498, %v3496
        %v3503 = vpack.c.bf16 %v3499, %v3499
        %v3504 = vpack.c.bf16 %v3500, %v3500
        %s3505 = scalar_lea.vmem %s6, 160
        %v3506 = vld [vmem:[%s3505] sm:$0xff]
        %v3507 = vld [vmem:[%s3505 + $0x8] sm:$0xff]
        %v3508 = vld [vmem:[%s3505 + $0x10] sm:$0xff]
        %v3509 = vld [vmem:[%s3505 + $0x18] sm:$0xff]
        %v3510 = vld [vmem:[%s3505 + $0x20] sm:$0xff]
        %v3511 = vld [vmem:[%s3505 + $0x28] sm:$0xff]
        %v3512 = vld [vmem:[%s3505 + $0x30] sm:$0xff]
        %v3513 = vld [vmem:[%s3505 + $0x38] sm:$0xff]
        %v3514 = vld [vmem:[%s3505 + $0x40] sm:$0xff]
        %v3515 = vld [vmem:[%s3505 + $0x48] sm:$0xff]
        %v3516 = vld [vmem:[%s3505 + $0x50] sm:$0xff]
        %v3517 = vld [vmem:[%s3505 + $0x58] sm:$0xff]
        %v3518 = vld [vmem:[%s3505 + $0x60] sm:$0xff]
        %v3519 = vld [vmem:[%s3505 + $0x68] sm:$0xff]
        %v3520 = vld [vmem:[%s3505 + $0x70] sm:$0xff]
        %v3521 = vld [vmem:[%s3505 + $0x78] sm:$0xff]
        %v3522 = vld [vmem:[%s3505 + $0x80] sm:$0xff]
        %v3523 = vld [vmem:[%s3505 + $0x88] sm:$0xff]
        %v3524 = vld [vmem:[%s3505 + $0x90] sm:$0xff]
        %v3525 = vld [vmem:[%s3505 + $0x98] sm:$0xff]
        %vm3526 = vsmask.f32 6400
        %v3528 = vshrl.u32 %v3501, 16
        %v3530 = vrot.slane %v3528, 1
        %v3531 = vshll.u32 %v3501, 16
        %v3533 = vrot.slane %v3531, 2
        %v3534 = vor.u32 %v3530, %v3533
        %v3536 = vshrl.u32 %v3503, 16
        %v3538 = vrot.slane %v3536, 1
        %v3539 = vshll.u32 %v3503, 16
        %v3541 = vrot.slane %v3539, 2
        %v3542 = vor.u32 %v3538, %v3541
        %v3543 = vsel %vm3526, %v3534, %v3542
        %v3545 = vshrl.u32 %v3502, 16
        %v3547 = vrot.slane %v3545, 1
        %v3548 = vshll.u32 %v3502, 16
        %v3550 = vrot.slane %v3548, 2
        %v3551 = vor.u32 %v3547, %v3550
        %v3553 = vshrl.u32 %v3504, 16
        %v3555 = vrot.slane %v3553, 1
        %v3556 = vshll.u32 %v3504, 16
        %v3558 = vrot.slane %v3556, 2
        %v3559 = vor.u32 %v3555, %v3558
        %v3560 = vsel %vm3526, %v3551, %v3559
        %v3582 = vunpack.c.l.b16 %v3506
        %v3583 = vunpack.c.h.b16 %v3506
        %v3584 = vunpack.c.l.b16 %v3507
        %v3585 = vunpack.c.h.b16 %v3507
        %v3586 = vunpack.c.l.b16 %v3508
        %v3587 = vunpack.c.h.b16 %v3508
        %v3588 = vunpack.c.l.b16 %v3509
        %v3589 = vunpack.c.h.b16 %v3509
        %v3590 = vunpack.c.l.b16 %v3510
        %v3591 = vunpack.c.h.b16 %v3510
        %v3592 = vunpack.c.l.b16 %v3511
        %v3593 = vunpack.c.h.b16 %v3511
        %v3594 = vunpack.c.l.b16 %v3512
        %v3595 = vunpack.c.h.b16 %v3512
        %v3596 = vunpack.c.l.b16 %v3513
        %v3597 = vunpack.c.h.b16 %v3513
        %v3598 = vunpack.c.l.b16 %v3514
        %v3599 = vunpack.c.h.b16 %v3514
        %v3600 = vunpack.c.l.b16 %v3515
        %v3601 = vunpack.c.h.b16 %v3515
        %v3602 = vunpack.c.l.b16 %v3516
        %v3603 = vunpack.c.h.b16 %v3516
        %v3604 = vunpack.c.l.b16 %v3517
        %v3605 = vunpack.c.h.b16 %v3517
        %v3606 = vunpack.c.l.b16 %v3518
        %v3607 = vunpack.c.h.b16 %v3518
        %v3608 = vunpack.c.l.b16 %v3519
        %v3609 = vunpack.c.h.b16 %v3519
        %v3610 = vunpack.c.l.b16 %v3520
        %v3611 = vunpack.c.h.b16 %v3520
        %v3612 = vunpack.c.l.b16 %v3521
        %v3613 = vunpack.c.h.b16 %v3521
        %v3614 = vunpack.c.l.b16 %v3522
        %v3615 = vunpack.c.h.b16 %v3522
        %v3616 = vunpack.c.l.b16 %v3523
        %v3617 = vunpack.c.h.b16 %v3523
        %v3618 = vunpack.c.l.b16 %v3524
        %v3619 = vunpack.c.h.b16 %v3524
        %v3620 = vunpack.c.l.b16 %v3525
        %v3621 = vunpack.c.h.b16 %v3525
        %v3622 = vpack.c.b16 %v3584, %v3582
        %v3623 = vpack.c.b16 %v3585, %v3583
        %v3624 = vpack.c.b16 %v3588, %v3586
        %v3625 = vpack.c.b16 %v3589, %v3587
        %v3626 = vpack.c.b16 %v3592, %v3590
        %v3627 = vpack.c.b16 %v3593, %v3591
        %v3628 = vpack.c.b16 %v3596, %v3594
        %v3629 = vpack.c.b16 %v3597, %v3595
        %v3630 = vpack.c.b16 %v3600, %v3598
        %v3631 = vpack.c.b16 %v3601, %v3599
        %v3632 = vpack.c.b16 %v3604, %v3602
        %v3633 = vpack.c.b16 %v3605, %v3603
        %v3634 = vpack.c.b16 %v3608, %v3606
        %v3635 = vpack.c.b16 %v3609, %v3607
        %v3636 = vpack.c.b16 %v3612, %v3610
        %v3637 = vpack.c.b16 %v3613, %v3611
        %v3638 = vpack.c.b16 %v3616, %v3614
        %v3639 = vpack.c.b16 %v3617, %v3615
        %v3640 = vpack.c.b16 %v3620, %v3618
        %v3641 = vpack.c.b16 %v3621, %v3619
        %v3663 = vsel %vm3315, %v3560, 0
        %3665 = vmatprep.subr.bf16.mxu0 %v3623
        %3666 = vmatpush1.bf16.msra.mxu0 %v3622
        %3667 = vmatprep.subr.bf16.mxu0 %v3625
        %3668 = vmatpush1.bf16.msra.mxu0 %v3624
        %3669 = vmatprep.subr.bf16.mxu0 %v3627
        %3670 = vmatpush1.bf16.msra.mxu0 %v3626
        %3671 = vmatprep.subr.bf16.mxu0 %v3629
        %3672 = vmatpush1.bf16.msra.mxu0 %v3628
        %3673 = vmatprep.subr.bf16.mxu0 %v3631
        %3674 = vmatpush1.bf16.msra.mxu0 %v3630
        %3675 = vmatprep.subr.bf16.mxu0 %v3633
        %3676 = vmatpush1.bf16.msra.mxu0 %v3632
        %3677 = vmatprep.subr.bf16.mxu0 %v3635
        %3678 = vmatpush1.bf16.msra.mxu0 %v3634
        %3679 = vmatprep.subr.bf16.mxu0 %v3637
        %3680 = vmatpush1.bf16.msra.mxu0 %v3636
        %3681 = vmatprep.subr.bf16.mxu0 %v3639
        %3682 = vmatpush1.bf16.msra.mxu0 %v3638
        %3683 = vmatprep.subr.bf16.mxu0 %v3641
        %3684 = vmatpush1.bf16.msra.mxu0 %v3640
        %3685 = vmatprep.subr.bf16.mxu0 0
        %3686 = vmatpush1.bf16.msra.mxu0 0
        %3687 = vmatprep.subr.bf16.mxu0 0
        %3688 = vmatpush1.bf16.msra.mxu0 0
        %3689 = vmatprep.subr.bf16.mxu0 0
        %3690 = vmatpush1.bf16.msra.mxu0 0
        %3691 = vmatprep.subr.bf16.mxu0 0
        %3692 = vmatpush1.bf16.msra.mxu0 0
        %3693 = vmatprep.subr.bf16.mxu0 0
        %3694 = vmatpush1.bf16.msra.mxu0 0
        %3695 = vmatprep.subr.bf16.mxu0 0
        %3696 = vmatpush1.bf16.msra.mxu0 0
        %3697 = vmatprep.mubr.bf16.mxu0 %v3663
        %3698 = vmatmul.mubr.bf16.gmra.mrb[0].mxu0 %v3543
        %v3699 = vpop.f32.mrb[0].mxu0
        %v3700 = vadd.f32 0.0, %v3699
        %v3701 = vpop.f32.mrb[0].mxu0
        %v3702 = vadd.f32 0.0, %v3701
        %v3703 = vpop.f32.mrb[0].mxu0
        %v3704 = vadd.f32 0.0, %v3703
        %v3705 = vpop.f32.mrb[0].mxu0
        %v3706 = vadd.f32 0.0, %v3705
        %3707 = vdwg.mxu0
        %v3708 = vadd.f32 %v3491, %v3700
        %v3709 = vadd.f32 %v3492, %v3702
        %v3710 = vadd.f32 %v3493, %v3704
        %v3711 = vadd.f32 %v3494, %v3706
        %v3712 = vld [vmem:[#allocation4] sm:$0xc0]
        %v3713 = vld [vmem:[#allocation4 + $0x8] sm:$0xc0]
        %v3714 = vld [vmem:[#allocation4 + $0x20] sm:$0x3f]
        %v3715 = vld [vmem:[#allocation4 + $0x28] sm:$0x3f]
        %v3716 = vpack.c.bf16 %v3497, %v3712
        %v3717 = vpack.c.bf16 %v3498, %v3713
        %v3718 = vpack.c.bf16 %v3714, %v3714
        %v3719 = vpack.c.bf16 %v3715, %v3715
        %s3720 = scalar_lea.vmem %s6, 320
        %v3721 = vld [vmem:[%s3720] sm:$0xff]
        %v3722 = vld [vmem:[%s3720 + $0x8] sm:$0xff]
        %v3723 = vld [vmem:[%s3720 + $0x10] sm:$0xff]
        %v3724 = vld [vmem:[%s3720 + $0x18] sm:$0xff]
        %v3725 = vld [vmem:[%s3720 + $0x20] sm:$0xff]
        %v3726 = vld [vmem:[%s3720 + $0x28] sm:$0xff]
        %v3727 = vld [vmem:[%s3720 + $0x30] sm:$0xff]
        %v3728 = vld [vmem:[%s3720 + $0x38] sm:$0xff]
        %v3729 = vld [vmem:[%s3720 + $0x40] sm:$0xff]
        %v3730 = vld [vmem:[%s3720 + $0x48] sm:$0xff]
        %v3731 = vld [vmem:[%s3720 + $0x50] sm:$0xff]
        %v3732 = vld [vmem:[%s3720 + $0x58] sm:$0xff]
        %v3733 = vld [vmem:[%s3720 + $0x60] sm:$0xff]
        %v3734 = vld [vmem:[%s3720 + $0x68] sm:$0xff]
        %v3735 = vld [vmem:[%s3720 + $0x70] sm:$0xff]
        %v3736 = vld [vmem:[%s3720 + $0x78] sm:$0xff]
        %v3737 = vld [vmem:[%s3720 + $0x80] sm:$0xff]
        %v3738 = vld [vmem:[%s3720 + $0x88] sm:$0xff]
        %v3739 = vld [vmem:[%s3720 + $0x90] sm:$0xff]
        %v3740 = vld [vmem:[%s3720 + $0x98] sm:$0xff]
        %vm3745 = vcmask 1044480
        %v3746 = vrot.slane %v3716, 3
        %v3747 = vrot.slane %v3718, 3
        %v3748 = vsel %vm3745, %v3746, %v3747
        %v3749 = vrot.slane %v3717, 3
        %v3750 = vrot.slane %v3719, 3
        %v3751 = vsel %vm3745, %v3749, %v3750
        %v3773 = vunpack.c.l.b16 %v3721
        %v3774 = vunpack.c.h.b16 %v3721
        %v3775 = vunpack.c.l.b16 %v3722
        %v3776 = vunpack.c.h.b16 %v3722
        %v3777 = vunpack.c.l.b16 %v3723
        %v3778 = vunpack.c.h.b16 %v3723
        %v3779 = vunpack.c.l.b16 %v3724
        %v3780 = vunpack.c.h.b16 %v3724
        %v3781 = vunpack.c.l.b16 %v3725
        %v3782 = vunpack.c.h.b16 %v3725
        %v3783 = vunpack.c.l.b16 %v3726
        %v3784 = vunpack.c.h.b16 %v3726
        %v3785 = vunpack.c.l.b16 %v3727
        %v3786 = vunpack.c.h.b16 %v3727
        %v3787 = vunpack.c.l.b16 %v3728
        %v3788 = vunpack.c.h.b16 %v3728
        %v3789 = vunpack.c.l.b16 %v3729
        %v3790 = vunpack.c.h.b16 %v3729
        %v3791 = vunpack.c.l.b16 %v3730
        %v3792 = vunpack.c.h.b16 %v3730
        %v3793 = vunpack.c.l.b16 %v3731
        %v3794 = vunpack.c.h.b16 %v3731
        %v3795 = vunpack.c.l.b16 %v3732
        %v3796 = vunpack.c.h.b16 %v3732
        %v3797 = vunpack.c.l.b16 %v3733
        %v3798 = vunpack.c.h.b16 %v3733
        %v3799 = vunpack.c.l.b16 %v3734
        %v3800 = vunpack.c.h.b16 %v3734
        %v3801 = vunpack.c.l.b16 %v3735
        %v3802 = vunpack.c.h.b16 %v3735
        %v3803 = vunpack.c.l.b16 %v3736
        %v3804 = vunpack.c.h.b16 %v3736
        %v3805 = vunpack.c.l.b16 %v3737
        %v3806 = vunpack.c.h.b16 %v3737
        %v3807 = vunpack.c.l.b16 %v3738
        %v3808 = vunpack.c.h.b16 %v3738
        %v3809 = vunpack.c.l.b16 %v3739
        %v3810 = vunpack.c.h.b16 %v3739
        %v3811 = vunpack.c.l.b16 %v3740
        %v3812 = vunpack.c.h.b16 %v3740
        %v3813 = vpack.c.b16 %v3775, %v3773
        %v3814 = vpack.c.b16 %v3776, %v3774
        %v3815 = vpack.c.b16 %v3779, %v3777
        %v3816 = vpack.c.b16 %v3780, %v3778
        %v3817 = vpack.c.b16 %v3783, %v3781
        %v3818 = vpack.c.b16 %v3784, %v3782
        %v3819 = vpack.c.b16 %v3787, %v3785
        %v3820 = vpack.c.b16 %v3788, %v3786
        %v3821 = vpack.c.b16 %v3791, %v3789
        %v3822 = vpack.c.b16 %v3792, %v3790
        %v3823 = vpack.c.b16 %v3795, %v3793
        %v3824 = vpack.c.b16 %v3796, %v3794
        %v3825 = vpack.c.b16 %v3799, %v3797
        %v3826 = vpack.c.b16 %v3800, %v3798
        %v3827 = vpack.c.b16 %v3803, %v3801
        %v3828 = vpack.c.b16 %v3804, %v3802
        %v3829 = vpack.c.b16 %v3807, %v3805
        %v3830 = vpack.c.b16 %v3808, %v3806
        %v3831 = vpack.c.b16 %v3811, %v3809
        %v3832 = vpack.c.b16 %v3812, %v3810
        %v3854 = vsel %vm3315, %v3751, 0
        %3856 = vmatprep.subr.bf16.mxu0 %v3814
        %3857 = vmatpush1.bf16.msra.mxu0 %v3813
        %3858 = vmatprep.subr.bf16.mxu0 %v3816
        %3859 = vmatpush1.bf16.msra.mxu0 %v3815
        %3860 = vmatprep.subr.bf16.mxu0 %v3818
        %3861 = vmatpush1.bf16.msra.mxu0 %v3817
        %3862 = vmatprep.subr.bf16.mxu0 %v3820
        %3863 = vmatpush1.bf16.msra.mxu0 %v3819
        %3864 = vmatprep.subr.bf16.mxu0 %v3822
        %3865 = vmatpush1.bf16.msra.mxu0 %v3821
        %3866 = vmatprep.subr.bf16.mxu0 %v3824
        %3867 = vmatpush1.bf16.msra.mxu0 %v3823
        %3868 = vmatprep.subr.bf16.mxu0 %v3826
        %3869 = vmatpush1.bf16.msra.mxu0 %v3825
        %3870 = vmatprep.subr.bf16.mxu0 %v3828
        %3871 = vmatpush1.bf16.msra.mxu0 %v3827
        %3872 = vmatprep.subr.bf16.mxu0 %v3830
        %3873 = vmatpush1.bf16.msra.mxu0 %v3829
        %3874 = vmatprep.subr.bf16.mxu0 %v3832
        %3875 = vmatpush1.bf16.msra.mxu0 %v3831
        %3876 = vmatprep.subr.bf16.mxu0 0
        %3877 = vmatpush1.bf16.msra.mxu0 0
        %3878 = vmatprep.subr.bf16.mxu0 0
        %3879 = vmatpush1.bf16.msra.mxu0 0
        %3880 = vmatprep.subr.bf16.mxu0 0
        %3881 = vmatpush1.bf16.msra.mxu0 0
        %3882 = vmatprep.subr.bf16.mxu0 0
        %3883 = vmatpush1.bf16.msra.mxu0 0
        %3884 = vmatprep.subr.bf16.mxu0 0
        %3885 = vmatpush1.bf16.msra.mxu0 0
        %3886 = vmatprep.subr.bf16.mxu0 0
        %3887 = vmatpush1.bf16.msra.mxu0 0
        %3888 = vmatprep.mubr.bf16.mxu0 %v3854
        %3889 = vmatmul.mubr.bf16.gmra.mrb[0].mxu0 %v3748
        %v3890 = vpop.f32.mrb[0].mxu0
        %v3891 = vadd.f32 0.0, %v3890
        %v3892 = vpop.f32.mrb[0].mxu0
        %v3893 = vadd.f32 0.0, %v3892
        %v3894 = vpop.f32.mrb[0].mxu0
        %v3895 = vadd.f32 0.0, %v3894
        %v3896 = vpop.f32.mrb[0].mxu0
        %v3897 = vadd.f32 0.0, %v3896
        %3898 = vdwg.mxu0
        %v3899 = vadd.f32 %v3708, %v3891
        %v3900 = vadd.f32 %v3709, %v3893
        %v3901 = vadd.f32 %v3710, %v3895
        %v3902 = vadd.f32 %v3711, %v3897
        %v3903 = vld [vmem:[#allocation4 + $0x10] sm:$0xfe]
        %v3904 = vld [vmem:[#allocation4 + $0x18] sm:$0xfe]
        %v3905 = vld [vmem:[#allocation4 + $0x20] sm:$0xff]
        %v3906 = vld [vmem:[#allocation4 + $0x28] sm:$0xff]
        %v3907 = vld [vmem:[#allocation4 + $0x30] sm:$0x1]
        %v3908 = vld [vmem:[#allocation4 + $0x38] sm:$0x1]
        %v3909 = vpack.c.bf16 %v3905, %v3903
        %v3910 = vpack.c.bf16 %v3906, %v3904
        %v3911 = vpack.c.bf16 %v3907, %v3907
        %v3912 = vpack.c.bf16 %v3908, %v3908
        %s3913 = scalar_lea.vmem %s6, 480
        %v3914 = vld [vmem:[%s3913] sm:$0xff]
        %v3915 = vld [vmem:[%s3913 + $0x8] sm:$0xff]
        %v3916 = vld [vmem:[%s3913 + $0x10] sm:$0xff]
        %v3917 = vld [vmem:[%s3913 + $0x18] sm:$0xff]
        %v3918 = vld [vmem:[%s3913 + $0x20] sm:$0xff]
        %v3919 = vld [vmem:[%s3913 + $0x28] sm:$0xff]
        %v3920 = vld [vmem:[%s3913 + $0x30] sm:$0xff]
        %v3921 = vld [vmem:[%s3913 + $0x38] sm:$0xff]
        %v3922 = vld [vmem:[%s3913 + $0x40] sm:$0xff]
        %v3923 = vld [vmem:[%s3913 + $0x48] sm:$0xff]
        %v3924 = vld [vmem:[%s3913 + $0x50] sm:$0xff]
        %v3925 = vld [vmem:[%s3913 + $0x58] sm:$0xff]
        %v3926 = vld [vmem:[%s3913 + $0x60] sm:$0xff]
        %v3927 = vld [vmem:[%s3913 + $0x68] sm:$0xff]
        %v3928 = vld [vmem:[%s3913 + $0x70] sm:$0xff]
        %v3929 = vld [vmem:[%s3913 + $0x78] sm:$0xff]
        %v3930 = vld [vmem:[%s3913 + $0x80] sm:$0xff]
        %v3931 = vld [vmem:[%s3913 + $0x88] sm:$0xff]
        %v3932 = vld [vmem:[%s3913 + $0x90] sm:$0xff]
        %v3933 = vld [vmem:[%s3913 + $0x98] sm:$0xff]
        %vm3934 = vsmask.f32 7424
        %v3936 = vshrl.u32 %v3909, 16
        %v3938 = vshll.u32 %v3909, 16
        %v3940 = vrot.slane %v3938, 1
        %v3941 = vor.u32 %v3936, %v3940
        %v3943 = vshll.u32 %v3911, 16
        %v3945 = vrot.slane %v3943, 1
        %v3946 = vsel %vm3934, %v3941, %v3945
        %v3948 = vshrl.u32 %v3910, 16
        %v3950 = vshll.u32 %v3910, 16
        %v3952 = vrot.slane %v3950, 1
        %v3953 = vor.u32 %v3948, %v3952
        %v3955 = vshll.u32 %v3912, 16
        %v3957 = vrot.slane %v3955, 1
        %v3958 = vsel %vm3934, %v3953, %v3957
        %v3980 = vunpack.c.l.b16 %v3914
        %v3981 = vunpack.c.h.b16 %v3914
        %v3982 = vunpack.c.l.b16 %v3915
        %v3983 = vunpack.c.h.b16 %v3915
        %v3984 = vunpack.c.l.b16 %v3916
        %v3985 = vunpack.c.h.b16 %v3916
        %v3986 = vunpack.c.l.b16 %v3917
        %v3987 = vunpack.c.h.b16 %v3917
        %v3988 = vunpack.c.l.b16 %v3918
        %v3989 = vunpack.c.h.b16 %v3918
        %v3990 = vunpack.c.l.b16 %v3919
        %v3991 = vunpack.c.h.b16 %v3919
        %v3992 = vunpack.c.l.b16 %v3920
        %v3993 = vunpack.c.h.b16 %v3920
        %v3994 = vunpack.c.l.b16 %v3921
        %v3995 = vunpack.c.h.b16 %v3921
        %v3996 = vunpack.c.l.b16 %v3922
        %v3997 = vunpack.c.h.b16 %v3922
        %v3998 = vunpack.c.l.b16 %v3923
        %v3999 = vunpack.c.h.b16 %v3923
        %v4000 = vunpack.c.l.b16 %v3924
        %v4001 = vunpack.c.h.b16 %v3924
        %v4002 = vunpack.c.l.b16 %v3925
        %v4003 = vunpack.c.h.b16 %v3925
        %v4004 = vunpack.c.l.b16 %v3926
        %v4005 = vunpack.c.h.b16 %v3926
        %v4006 = vunpack.c.l.b16 %v3927
        %v4007 = vunpack.c.h.b16 %v3927
        %v4008 = vunpack.c.l.b16 %v3928
        %v4009 = vunpack.c.h.b16 %v3928
        %v4010 = vunpack.c.l.b16 %v3929
        %v4011 = vunpack.c.h.b16 %v3929
        %v4012 = vunpack.c.l.b16 %v3930
        %v4013 = vunpack.c.h.b16 %v3930
        %v4014 = vunpack.c.l.b16 %v3931
        %v4015 = vunpack.c.h.b16 %v3931
        %v4016 = vunpack.c.l.b16 %v3932
        %v4017 = vunpack.c.h.b16 %v3932
        %v4018 = vunpack.c.l.b16 %v3933
        %v4019 = vunpack.c.h.b16 %v3933
        %v4020 = vpack.c.b16 %v3982, %v3980
        %v4021 = vpack.c.b16 %v3983, %v3981
        %v4022 = vpack.c.b16 %v3986, %v3984
        %v4023 = vpack.c.b16 %v3987, %v3985
        %v4024 = vpack.c.b16 %v3990, %v3988
        %v4025 = vpack.c.b16 %v3991, %v3989
        %v4026 = vpack.c.b16 %v3994, %v3992
        %v4027 = vpack.c.b16 %v3995, %v3993
        %v4028 = vpack.c.b16 %v3998, %v3996
        %v4029 = vpack.c.b16 %v3999, %v3997
        %v4030 = vpack.c.b16 %v4002, %v4000
        %v4031 = vpack.c.b16 %v4003, %v4001
        %v4032 = vpack.c.b16 %v4006, %v4004
        %v4033 = vpack.c.b16 %v4007, %v4005
        %v4034 = vpack.c.b16 %v4010, %v4008
        %v4035 = vpack.c.b16 %v4011, %v4009
        %v4036 = vpack.c.b16 %v4014, %v4012
        %v4037 = vpack.c.b16 %v4015, %v4013
        %v4038 = vpack.c.b16 %v4018, %v4016
        %v4039 = vpack.c.b16 %v4019, %v4017
        %v4061 = vsel %vm3315, %v3958, 0
        %4063 = vmatprep.subr.bf16.mxu0 %v4021
        %4064 = vmatpush1.bf16.msra.mxu0 %v4020
        %4065 = vmatprep.subr.bf16.mxu0 %v4023
        %4066 = vmatpush1.bf16.msra.mxu0 %v4022
        %4067 = vmatprep.subr.bf16.mxu0 %v4025
        %4068 = vmatpush1.bf16.msra.mxu0 %v4024
        %4069 = vmatprep.subr.bf16.mxu0 %v4027
        %4070 = vmatpush1.bf16.msra.mxu0 %v4026
        %4071 = vmatprep.subr.bf16.mxu0 %v4029
        %4072 = vmatpush1.bf16.msra.mxu0 %v4028
        %4073 = vmatprep.subr.bf16.mxu0 %v4031
        %4074 = vmatpush1.bf16.msra.mxu0 %v4030
        %4075 = vmatprep.subr.bf16.mxu0 %v4033
        %4076 = vmatpush1.bf16.msra.mxu0 %v4032
        %4077 = vmatprep.subr.bf16.mxu0 %v4035
        %4078 = vmatpush1.bf16.msra.mxu0 %v4034
        %4079 = vmatprep.subr.bf16.mxu0 %v4037
        %4080 = vmatpush1.bf16.msra.mxu0 %v4036
        %4081 = vmatprep.subr.bf16.mxu0 %v4039
        %4082 = vmatpush1.bf16.msra.mxu0 %v4038
        %4083 = vmatprep.subr.bf16.mxu0 0
        %4084 = vmatpush1.bf16.msra.mxu0 0
        %4085 = vmatprep.subr.bf16.mxu0 0
        %4086 = vmatpush1.bf16.msra.mxu0 0
        %4087 = vmatprep.subr.bf16.mxu0 0
        %4088 = vmatpush1.bf16.msra.mxu0 0
        %4089 = vmatprep.subr.bf16.mxu0 0
        %4090 = vmatpush1.bf16.msra.mxu0 0
        %4091 = vmatprep.subr.bf16.mxu0 0
        %4092 = vmatpush1.bf16.msra.mxu0 0
        %4093 = vmatprep.subr.bf16.mxu0 0
        %4094 = vmatpush1.bf16.msra.mxu0 0
        %4095 = vmatprep.mubr.bf16.mxu0 %v4061
        %4096 = vmatmul.mubr.bf16.gmra.mrb[0].mxu0 %v3946
        %v4097 = vpop.f32.mrb[0].mxu0
        %v4098 = vadd.f32 0.0, %v4097
        %v4099 = vpop.f32.mrb[0].mxu0
        %v4100 = vadd.f32 0.0, %v4099
        %v4101 = vpop.f32.mrb[0].mxu0
        %v4102 = vadd.f32 0.0, %v4101
        %v4103 = vpop.f32.mrb[0].mxu0
        %v4104 = vadd.f32 0.0, %v4103
        %4105 = vdwg.mxu0
        %v4106 = vadd.f32 %v3899, %v4098
        %v4107 = vadd.f32 %v3900, %v4100
        %v4108 = vadd.f32 %v3901, %v4102
        %v4109 = vadd.f32 %v3902, %v4104
        %v4110 = vld [vmem:[#allocation4 + $0x10] sm:$0xf0]
        %v4111 = vld [vmem:[#allocation4 + $0x18] sm:$0xf0]
        %v4112 = vld [vmem:[#allocation4 + $0x30] sm:$0xf]
        %v4113 = vld [vmem:[#allocation4 + $0x38] sm:$0xf]
        %v4114 = vpack.c.bf16 %v3905, %v4110
        %v4115 = vpack.c.bf16 %v3906, %v4111
        %v4116 = vpack.c.bf16 %v4112, %v4112
        %v4117 = vpack.c.bf16 %v4113, %v4113
        %s4118 = scalar_lea.vmem %s6, 640
        %v4119 = vld [vmem:[%s4118] sm:$0xff]
        %v4120 = vld [vmem:[%s4118 + $0x8] sm:$0xff]
        %v4121 = vld [vmem:[%s4118 + $0x10] sm:$0xff]
        %v4122 = vld [vmem:[%s4118 + $0x18] sm:$0xff]
        %v4123 = vld [vmem:[%s4118 + $0x20] sm:$0xff]
        %v4124 = vld [vmem:[%s4118 + $0x28] sm:$0xff]
        %v4125 = vld [vmem:[%s4118 + $0x30] sm:$0xff]
        %v4126 = vld [vmem:[%s4118 + $0x38] sm:$0xff]
        %v4127 = vld [vmem:[%s4118 + $0x40] sm:$0xff]
        %v4128 = vld [vmem:[%s4118 + $0x48] sm:$0xff]
        %v4129 = vld [vmem:[%s4118 + $0x50] sm:$0xff]
        %v4130 = vld [vmem:[%s4118 + $0x58] sm:$0xff]
        %v4131 = vld [vmem:[%s4118 + $0x60] sm:$0xff]
        %v4132 = vld [vmem:[%s4118 + $0x68] sm:$0xff]
        %v4133 = vld [vmem:[%s4118 + $0x70] sm:$0xff]
        %v4134 = vld [vmem:[%s4118 + $0x78] sm:$0xff]
        %v4135 = vld [vmem:[%s4118 + $0x80] sm:$0xff]
        %v4136 = vld [vmem:[%s4118 + $0x88] sm:$0xff]
        %v4137 = vld [vmem:[%s4118 + $0x90] sm:$0xff]
        %v4138 = vld [vmem:[%s4118 + $0x98] sm:$0xff]
        %vm4143 = vcmask 1045504
        %v4144 = vrot.slane %v4114, 2
        %v4145 = vrot.slane %v4116, 2
        %v4146 = vsel %vm4143, %v4144, %v4145
        %v4147 = vrot.slane %v4115, 2
        %v4148 = vrot.slane %v4117, 2
        %v4149 = vsel %vm4143, %v4147, %v4148
        %v4171 = vunpack.c.l.b16 %v4119
        %v4172 = vunpack.c.h.b16 %v4119
        %v4173 = vunpack.c.l.b16 %v4120
        %v4174 = vunpack.c.h.b16 %v4120
        %v4175 = vunpack.c.l.b16 %v4121
        %v4176 = vunpack.c.h.b16 %v4121
        %v4177 = vunpack.c.l.b16 %v4122
        %v4178 = vunpack.c.h.b16 %v4122
        %v4179 = vunpack.c.l.b16 %v4123
        %v4180 = vunpack.c.h.b16 %v4123
        %v4181 = vunpack.c.l.b16 %v4124
        %v4182 = vunpack.c.h.b16 %v4124
        %v4183 = vunpack.c.l.b16 %v4125
        %v4184 = vunpack.c.h.b16 %v4125
        %v4185 = vunpack.c.l.b16 %v4126
        %v4186 = vunpack.c.h.b16 %v4126
        %v4187 = vunpack.c.l.b16 %v4127
        %v4188 = vunpack.c.h.b16 %v4127
        %v4189 = vunpack.c.l.b16 %v4128
        %v4190 = vunpack.c.h.b16 %v4128
        %v4191 = vunpack.c.l.b16 %v4129
        %v4192 = vunpack.c.h.b16 %v4129
        %v4193 = vunpack.c.l.b16 %v4130
        %v4194 = vunpack.c.h.b16 %v4130
        %v4195 = vunpack.c.l.b16 %v4131
        %v4196 = vunpack.c.h.b16 %v4131
        %v4197 = vunpack.c.l.b16 %v4132
        %v4198 = vunpack.c.h.b16 %v4132
        %v4199 = vunpack.c.l.b16 %v4133
        %v4200 = vunpack.c.h.b16 %v4133
        %v4201 = vunpack.c.l.b16 %v4134
        %v4202 = vunpack.c.h.b16 %v4134
        %v4203 = vunpack.c.l.b16 %v4135
        %v4204 = vunpack.c.h.b16 %v4135
        %v4205 = vunpack.c.l.b16 %v4136
        %v4206 = vunpack.c.h.b16 %v4136
        %v4207 = vunpack.c.l.b16 %v4137
        %v4208 = vunpack.c.h.b16 %v4137
        %v4209 = vunpack.c.l.b16 %v4138
        %v4210 = vunpack.c.h.b16 %v4138
        %v4211 = vpack.c.b16 %v4173, %v4171
        %v4212 = vpack.c.b16 %v4174, %v4172
        %v4213 = vpack.c.b16 %v4177, %v4175
        %v4214 = vpack.c.b16 %v4178, %v4176
        %v4215 = vpack.c.b16 %v4181, %v4179
        %v4216 = vpack.c.b16 %v4182, %v4180
        %v4217 = vpack.c.b16 %v4185, %v4183
        %v4218 = vpack.c.b16 %v4186, %v4184
        %v4219 = vpack.c.b16 %v4189, %v4187
        %v4220 = vpack.c.b16 %v4190, %v4188
        %v4221 = vpack.c.b16 %v4193, %v4191
        %v4222 = vpack.c.b16 %v4194, %v4192
        %v4223 = vpack.c.b16 %v4197, %v4195
        %v4224 = vpack.c.b16 %v4198, %v4196
        %v4225 = vpack.c.b16 %v4201, %v4199
        %v4226 = vpack.c.b16 %v4202, %v4200
        %v4227 = vpack.c.b16 %v4205, %v4203
        %v4228 = vpack.c.b16 %v4206, %v4204
        %v4229 = vpack.c.b16 %v4209, %v4207
        %v4230 = vpack.c.b16 %v4210, %v4208
        %v4252 = vsel %vm3315, %v4149, 0
        %4254 = vmatprep.subr.bf16.mxu0 %v4212
        %4255 = vmatpush1.bf16.msra.mxu0 %v4211
        %4256 = vmatprep.subr.bf16.mxu0 %v4214
        %4257 = vmatpush1.bf16.msra.mxu0 %v4213
        %4258 = vmatprep.subr.bf16.mxu0 %v4216
        %4259 = vmatpush1.bf16.msra.mxu0 %v4215
        %4260 = vmatprep.subr.bf16.mxu0 %v4218
        %4261 = vmatpush1.bf16.msra.mxu0 %v4217
        %4262 = vmatprep.subr.bf16.mxu0 %v4220
        %4263 = vmatpush1.bf16.msra.mxu0 %v4219
        %4264 = vmatprep.subr.bf16.mxu0 %v4222
        %4265 = vmatpush1.bf16.msra.mxu0 %v4221
        %4266 = vmatprep.subr.bf16.mxu0 %v4224
        %4267 = vmatpush1.bf16.msra.mxu0 %v4223
        %4268 = vmatprep.subr.bf16.mxu0 %v4226
        %4269 = vmatpush1.bf16.msra.mxu0 %v4225
        %4270 = vmatprep.subr.bf16.mxu0 %v4228
        %4271 = vmatpush1.bf16.msra.mxu0 %v4227
        %4272 = vmatprep.subr.bf16.mxu0 %v4230
        %4273 = vmatpush1.bf16.msra.mxu0 %v4229
        %4274 = vmatprep.subr.bf16.mxu0 0
        %4275 = vmatpush1.bf16.msra.mxu0 0
        %4276 = vmatprep.subr.bf16.mxu0 0
        %4277 = vmatpush1.bf16.msra.mxu0 0
        %4278 = vmatprep.subr.bf16.mxu0 0
        %4279 = vmatpush1.bf16.msra.mxu0 0
        %4280 = vmatprep.subr.bf16.mxu0 0
        %4281 = vmatpush1.bf16.msra.mxu0 0
        %4282 = vmatprep.subr.bf16.mxu0 0
        %4283 = vmatpush1.bf16.msra.mxu0 0
        %4284 = vmatprep.subr.bf16.mxu0 0
        %4285 = vmatpush1.bf16.msra.mxu0 0
        %4286 = vmatprep.mubr.bf16.mxu0 %v4252
        %4287 = vmatmul.mubr.bf16.gmra.mrb[0].mxu0 %v4146
        %v4288 = vpop.f32.mrb[0].mxu0
        %v4289 = vadd.f32 0.0, %v4288
        %v4290 = vpop.f32.mrb[0].mxu0
        %v4291 = vadd.f32 0.0, %v4290
        %v4292 = vpop.f32.mrb[0].mxu0
        %v4293 = vadd.f32 0.0, %v4292
        %v4294 = vpop.f32.mrb[0].mxu0
        %v4295 = vadd.f32 0.0, %v4294
        %4296 = vdwg.mxu0
        %v4297 = vadd.f32 %v4106, %v4289
        %v4298 = vadd.f32 %v4107, %v4291
        %v4299 = vadd.f32 %v4108, %v4293
        %v4300 = vadd.f32 %v4109, %v4295
        %v4301 = vld [vmem:[%s10] sm:$0x3]
        %v4303 = vlaneseq
        %v4304 = vshrl.u32 %v4303, 7
        %v4305 = vsub.s32 0, %v4304
        %v4306 = vrot.slane %v4301, %v4305
        %v4307 = vlaneseq
        %v4308 = vshrl.u32 %v4307, 7
        %v4309 = vsub.s32 1, %v4308
        %v4310 = vrot.slane %v4301, %v4309
        %v4313 = vadd.f32 %v4297, %v4306
        %v4314 = vadd.f32 %v4298, %v4310
        %v4315 = vadd.f32 %v4299, %v4306
        %v4316 = vadd.f32 %v4300, %v4310
        %v4317 = vmax.f32 %v4313, 0.0
        %v4318 = vmax.f32 %v4314, 0.0
        %v4319 = vmax.f32 %v4315, 0.0
        %v4320 = vmax.f32 %v4316, 0.0
        %4321 = vst [vmem:[%s379] sm:$0xff] %v4317
        %4322 = vst.msk [vmem:[%s379 + $0x8] sm:$0xff] %vm433, %v4318
        %4323 = vst [vmem:[%s379 + $0x10] sm:$0xff] %v4319
        %4324 = vst.msk [vmem:[%s379 + $0x18] sm:$0xff] %vm433, %v4320
        %s4325 = sand.u32 %s269, 1
        %s4326 = scalar_lea.sflag [#allocation6], %s4325
        %s4327 = sand.u32 %s269, 1
        %s4328 = smul.addr %s4327, 32
        %s4329 = scalar_lea.vmem [#allocation5], %s4328
        // Predicated region
        $region65: #{tpu_custom_call.1} parent=63 // pred_check
          %p4330 = pneg %p279
        $region66: #{tpu_custom_call.1} parent=63 // pred_check_branch
          %4332 = sbr.rel (%p4330) target = $region68
        $region67: #{tpu_custom_call.1} parent=63 // pred_region
          %s4334 = ssub.s32 512, 512
          %4335 = vsyncadd %s4326, %s4334
          %s4336 = smul.addr %s25, 4
          %s4337 = smul.addr %s4336, 128
          %s4338 = scalar_lea.hbm %s11, %s4337
          %s4339 = sshll.u32 %s4329, 4
          %s4340 = int_to_ptr.vmem [resolvable:$true] %s4339
          %4345 = dma.vmem_to_hbm [thread:$0]  %s4340, 512, %s4338, %s4326, 256, 256, 16
        $region68: #{tpu_custom_call.1} parent=63 // pred_fallthru
          _
      $region64: #{tpu_custom_call.1} parent=5 // pred_fallthru
        _
      %p4346 = scmp.le.s32.totalorder 2, %s20
      // Predicated region
      $region69: #{tpu_custom_call.1} parent=5 // pred_check
        %p4347 = pneg %p4346
      $region70: #{tpu_custom_call.1} parent=5 // pred_check_branch
        %4349 = sbr.rel (%p4347) target = $region72
      $region71: #{tpu_custom_call.1} parent=5 // pred_region
        %s4350 = ssub.s32 %s20, 2
        // Predicated region
        $region73: #{tpu_custom_call.1} parent=71 // pred_check
          %p4351 = pneg %p285
        $region74: #{tpu_custom_call.1} parent=71 // pred_check_branch
          %4353 = sbr.rel (%p4351) target = $region76
        $region75: #{tpu_custom_call.1} parent=71 // pred_region
          %s4354 = sand.u32 %s270, 1
          %s4355 = scalar_lea.sflag [#allocation6], %s4354
          %s4356 = sand.u32 %s270, 1
          %s4357 = smul.addr %s4356, 32
          %s4358 = scalar_lea.vmem [#allocation5], %s4357
          %4359 = dma.done %s4355, 512
        $region76: #{tpu_custom_call.1} parent=71 // pred_fallthru
          _
      $region72: #{tpu_custom_call.1} parent=5 // pred_fallthru
        _
    $region6: #{tpu_custom_call.1} parent=1 // loop_footer
      %s24 = sadd.s32 1, %s20
    $region7: #{tpu_custom_call.1} parent=1 // loop_footer_branch
      %19 = sbr.rel target = $region3
    $region8: #{tpu_custom_call.1} parent=1 // loop_exit
      _
    %4360 = vsyncpa [#allocation6], 1
    %s4361 = scalar_lea.sflag [#allocation6], 1
    %4362 = vsyncpa %s4361, 1

</llo_original>
